<compile_context>
chip_gen: v7x
topology: tpu7x:2x2x1
jax: 0.10.0
libtpu: 0.0.40
codegen_flags: <defaults>
</compile_context>

<pallas_src>
import numpy as np

import jax
import jax.numpy as jnp
from jax import lax
from jax.experimental import pallas as pl
from jax.experimental.pallas import tpu as pltpu

ROWS = 28              # input spatial size (MNIST)
STRIDE = 32            # padded row stride for the flattened spatial layout
FLAT = ROWS * STRIDE   # 896: lane extent every conv stage works on
BUF = FLAT + 128       # scratch width; leaves room for shifted (tap) views
C1, C2 = 32, 64        # conv channel counts
POOL = 12 * 12         # pooled spatial size per channel (144)


# --------------------------------- fused kernel ---------------------------------
def _net_kernel(x_ref, w1c_ref, b1c_ref, w2c_ref, b2c_ref, sel_ref,
                w1fc_hbm_ref, b1fc_ref, w2fc_ref, b2fc_ref,
                o_ref,
                xpad_ref, y1_ref, o2_ref, flat_ref, w1fc_vmem, dma_sem):
    f32, bf16 = jnp.float32, jnp.bfloat16

    # Start the big fc1-weight HBM->VMEM DMA right away so it overlaps the convs.
    # (Re-issued every grid step: redundant for later steps but always correct
    #  under "parallel" megacore partitioning, and fully hidden behind compute.)
    w1_copy = pltpu.make_async_copy(w1fc_hbm_ref, w1fc_vmem, dma_sem)
    w1_copy.start()

    # ---- stage the 28x28 image as one zero-padded lane row (stride 32) -----
    xpad_ref[...] = jnp.zeros((1, BUF), f32)
    img = x_ref[0, 0]                                        # (28, 28) f32
    for r in range(ROWS):
        xpad_ref[:, r * STRIDE:r * STRIDE + ROWS] = img[r:r + 1, :]

    # ---- conv1 (1->32, 3x3, valid): channel-major (32, 896), VPU MACs ------
    acc1 = jnp.zeros((C1, FLAT), f32)
    for kh in range(3):
        for kw in range(3):
            t = kh * 3 + kw
            s = kh * STRIDE + kw
            xs = xpad_ref[:, s:s + FLAT]                     # (1, 896)
            acc1 = acc1 + w1c_ref[t] * xs                    # (32,1)*(1,896)
    y1 = jnp.maximum(acc1 + b1c_ref[...], 0.0)               # ReLU, (32, 896)

    # ---- conv2 (32->64): im2col along K (9 shifted maps), one MXU matmul ---
    y1_ref[:, 0:FLAT] = y1.astype(bf16)
    y1_ref[:, FLAT:BUF] = jnp.zeros((C1, BUF - FLAT), bf16)
    taps = []
    for kh in range(3):
        for kw in range(3):
            s = kh * STRIDE + kw
            taps.append(y1_ref[:, s:s + FLAT])               # (32, 896) bf16
    rhs = jnp.concatenate(taps, axis=0)                      # (288, 896) bf16
    out2 = jnp.dot(w2c_ref[...], rhs,
                   preferred_element_type=f32)               # (64, 896) f32
    out2 = out2 + b2c_ref[...]

    # ---- 2x2 max pool (stride 2): max of four shifted views ----------------
    o2_ref[:, 0:FLAT] = out2
    o2_ref[:, FLAT:BUF] = jnp.zeros((C2, BUF - FLAT), f32)
    m = jnp.maximum(
        jnp.maximum(out2, o2_ref[:, 1:1 + FLAT]),
        jnp.maximum(o2_ref[:, STRIDE:STRIDE + FLAT],
                    o2_ref[:, STRIDE + 1:STRIDE + 1 + FLAT]))  # (64, 896)

    # ---- compact the 144 valid pooled columns with a 0/1 selection matmul --
    pooled = jnp.dot(m.astype(bf16), sel_ref[...],
                     preferred_element_type=f32)             # (64, 144)

    # ---- flatten in torch NCHW order: flat[c*144 + h*12 + w] ---------------
    for c in range(C2):
        flat_ref[:, c * POOL:(c + 1) * POOL] = pooled[c:c + 1, :]

    # ---- fused fc1 (+ReLU) and fc2 ------------------------------------------
    w1_copy.wait()                                           # fc1 weight is ready
    h = jnp.dot(flat_ref[...].astype(bf16), w1fc_vmem[...],
                preferred_element_type=f32)                  # (1, 128)
    h = jnp.maximum(h + b1fc_ref[...], 0.0)
    logits = jnp.dot(h, w2fc_ref[...],
                     preferred_element_type=f32) + b2fc_ref[...]   # (1, 10)
    o_ref[0] = logits.astype(o_ref.dtype)


# ----------------------- one-time host-side weight re-layout --------------------
def prepare_params(c1w, c1b, c2w, c2b, f1w, f1b, f2w, f2b):
    """Run once (outside the jitted forward): PyTorch layouts -> kernel layouts."""
    # conv1 OIHW (32,1,3,3) -> (tap, out_channel, 1) for VPU broadcast MACs
    w1c = c1w.reshape(C1, 9).T.reshape(9, C1, 1)
    b1c = c1b.reshape(C1, 1)
    # conv2 OIHW (64,32,3,3) -> (64, 9*32) with K ordered (tap, in_channel), bf16
    w2c = jnp.transpose(c2w, (0, 2, 3, 1)).reshape(C2, 9 * C1).astype(jnp.bfloat16)
    b2c = c2b.reshape(C2, 1)
    # constant 0/1 matrix that gathers the strided pooled columns on the MXU
    sel = np.zeros((FLAT, POOL), np.float32)
    for hh in range(12):
        for ww in range(12):
            sel[2 * hh * STRIDE + 2 * ww, 12 * hh + ww] = 1.0
    sel = jnp.asarray(sel, dtype=jnp.bfloat16)
    # fc weights: torch Linear stores (out, in); kernel wants (in, out)
    w1fc = jnp.asarray(f1w.T, dtype=jnp.bfloat16)   # (9216, 128), bf16 halves DMA
    b1fc = f1b.reshape(1, 128)
    w2fc = f2w.T                                    # (128, 10), tiny -> keep f32
    b2fc = f2b.reshape(1, 10)
    return w1c, b1c, w2c, b2c, sel, w1fc, b1fc, w2fc, b2fc


# ----------------------------------- forward ------------------------------------
@jax.jit
def net_forward(x_nchw, w1c, b1c, w2c, b2c, sel, w1fc, b1fc, w2fc, b2fc):
    n = x_nchw.shape[0]
    out = pl.pallas_call(
        _net_kernel,
        out_shape=jax.ShapeDtypeStruct((n, 1, 10), jnp.float32),
        grid_spec=pltpu.PrefetchScalarGridSpec(
            num_scalar_prefetch=0,
            grid=(n,),
            in_specs=[
                pl.BlockSpec((1, 1, ROWS, ROWS), lambda i: (i, 0, 0, 0)),  # x
                pl.BlockSpec((9, C1, 1), lambda i: (0, 0, 0)),             # conv1 w
                pl.BlockSpec((C1, 1), lambda i: (0, 0)),                   # conv1 b
                pl.BlockSpec((C2, 9 * C1), lambda i: (0, 0)),              # conv2 w
                pl.BlockSpec((C2, 1), lambda i: (0, 0)),                   # conv2 b
                pl.BlockSpec((FLAT, POOL), lambda i: (0, 0)),              # pool select
                pl.BlockSpec(memory_space=pl.ANY),                         # fc1 w (HBM)
                pl.BlockSpec((1, 128), lambda i: (0, 0)),                  # fc1 b
                pl.BlockSpec((128, 10), lambda i: (0, 0)),                 # fc2 w
                pl.BlockSpec((1, 10), lambda i: (0, 0)),                   # fc2 b
            ],
            out_specs=pl.BlockSpec((1, 1, 10), lambda i: (i, 0, 0)),
            scratch_shapes=[
                pltpu.VMEM((1, BUF), jnp.float32),           # padded input row
                pltpu.VMEM((C1, BUF), jnp.bfloat16),         # conv1 output (padded)
                pltpu.VMEM((C2, BUF), jnp.float32),          # conv2 output (padded)
                pltpu.VMEM((1, C2 * POOL), jnp.float32),     # flattened fc1 input
                pltpu.VMEM((C2 * POOL, 128), jnp.bfloat16),  # fc1 weight (DMA dest)
                pltpu.SemaphoreType.DMA(()),                 # fc1 weight DMA sem
            ],
        ),
        compiler_params=pltpu.CompilerParams(
            dimension_semantics=("parallel",),        # v7x: batch elems across cores
            vmem_limit_bytes=32 * 1024 * 1024,        # headroom over v5e 16MiB default
        ),
    )(x_nchw, w1c, b1c, w2c, b2c, sel, w1fc, b1fc, w2fc, b2fc)
    # TODO(synk): for large batches, tile the batch (M>=128 fc1 tiles) instead of
    # one element per grid step.
    return out.reshape(n, 10)


# ------------------------------ pure-JAX reference -------------------------------
def reference_forward(x, c1w, c1b, c2w, c2b, f1w, f1b, f2w, f2b):
    dn = ("NCHW", "OIHW", "NCHW")
    hp = lax.Precision.HIGHEST
    y = lax.conv_general_dilated(x, c1w, (1, 1), "VALID",
                                 dimension_numbers=dn, precision=hp)
    y = jnp.maximum(y + c1b[None, :, None, None], 0.0)
    y = lax.conv_general_dilated(y, c2w, (1, 1), "VALID",
                                 dimension_numbers=dn, precision=hp)
    y = y + c2b[None, :, None, None]
    N, C, H, W = y.shape
    y = y.reshape(N, C, H // 2, 2, W // 2, 2).max(axis=(3, 5))
    y = y.reshape(N, -1)
    y = jnp.maximum(jnp.dot(y, f1w.T, precision=hp) + f1b, 0.0)
    return jnp.dot(y, f2w.T, precision=hp) + f2b


if __name__ == "__main__":
    key = jax.random.PRNGKey(0)
    ks = jax.random.split(key, 9)
    N = 2
    # fc1 expects 9216 = 64*12*12 features -> spatial must be 28x28, Cin=1 (MNIST).
    x = jax.random.normal(ks[0], (N, 1, 28, 28), dtype=jnp.float32)
    c1w = jax.random.normal(ks[1], (32, 1, 3, 3), jnp.float32) / 3.0
    c1b = 0.1 * jax.random.normal(ks[2], (32,), jnp.float32)
    c2w = jax.random.normal(ks[3], (64, 32, 3, 3), jnp.float32) / jnp.sqrt(288.0)
    c2b = 0.1 * jax.random.normal(ks[4], (64,), jnp.float32)
    f1w = jax.random.normal(ks[5], (128, 9216), jnp.float32) / jnp.sqrt(9216.0)
    f1b = 0.1 * jax.random.normal(ks[6], (128,), jnp.float32)
    f2w = jax.random.normal(ks[7], (10, 128), jnp.float32) / jnp.sqrt(128.0)
    f2b = 0.1 * jax.random.normal(ks[8], (10,), jnp.float32)

    # One-time weight re-layout (hoisted out of the per-call forward path).
    params = prepare_params(c1w, c1b, c2w, c2b, f1w, f1b, f2w, f2b)

    out = net_forward(x, *params)
    out = jax.block_until_ready(out)
    assert out.shape == (N, 10) and out.dtype == jnp.float32

    ref = reference_forward(x, c1w, c1b, c2w, c2b, f1w, f1b, f2w, f2b)
    max_err = float(jnp.max(jnp.abs(out - ref)))
    if not bool(jnp.allclose(out, ref, atol=5e-2, rtol=5e-2)):
        raise RuntimeError(f"Pallas output mismatch vs reference (max abs err {max_err})")
    print("KERNEL_OK")
</pallas_src>

<mosaic_0001>
module attributes {stable_mosaic.version = 11 : i64} {
  func.func @_net_kernel(%arg0: i32, %arg1: memref<1x1x28x28xf32, #tpu.memory_space<vmem>>, %arg2: memref<9x32x1xf32, #tpu.memory_space<vmem>>, %arg3: memref<32x1xf32, #tpu.memory_space<vmem>>, %arg4: memref<64x288xbf16, #tpu.memory_space<vmem>>, %arg5: memref<64x1xf32, #tpu.memory_space<vmem>>, %arg6: memref<896x144xbf16, #tpu.memory_space<vmem>>, %arg7: memref<9216x128xbf16, #tpu.memory_space<any>>, %arg8: memref<1x128xf32, #tpu.memory_space<vmem>>, %arg9: memref<128x10xf32, #tpu.memory_space<vmem>>, %arg10: memref<1x10xf32, #tpu.memory_space<vmem>>, %arg11: memref<1x1x10xf32, #tpu.memory_space<vmem>>, %arg12: memref<1x1024xf32, #tpu.memory_space<vmem>>, %arg13: memref<32x1024xbf16, #tpu.memory_space<vmem>>, %arg14: memref<64x1024xf32, #tpu.memory_space<vmem>>, %arg15: memref<1x9216xf32, #tpu.memory_space<vmem>>, %arg16: memref<9216x128xbf16, #tpu.memory_space<vmem>>, %arg17: memref<!tpu.dma_semaphore, #tpu.memory_space<semaphore_mem>>) attributes {dimension_semantics = [#tpu.dimension_semantics<parallel>], iteration_bounds = array<i64: 2>, scalar_prefetch = 0 : i64, scratch_operands = 6 : i64, tpu.core_type = #tpu.core_type<tc>, window_params = [{transform_indices = @transform_0, window_bounds = array<i64: 1, 1, 28, 28>}, {pipeline_mode = #tpu.pipeline_mode<synchronous>, transform_indices = @transform_1, window_bounds = array<i64: 9, 32, 1>}, {pipeline_mode = #tpu.pipeline_mode<synchronous>, transform_indices = @transform_2, window_bounds = array<i64: 32, 1>}, {pipeline_mode = #tpu.pipeline_mode<synchronous>, transform_indices = @transform_3, window_bounds = array<i64: 64, 288>}, {pipeline_mode = #tpu.pipeline_mode<synchronous>, transform_indices = @transform_4, window_bounds = array<i64: 64, 1>}, {pipeline_mode = #tpu.pipeline_mode<synchronous>, transform_indices = @transform_5, window_bounds = array<i64: 896, 144>}, {}, {pipeline_mode = #tpu.pipeline_mode<synchronous>, transform_indices = @transform_7, window_bounds = array<i64: 1, 128>}, {pipeline_mode = #tpu.pipeline_mode<synchronous>, transform_indices = @transform_8, window_bounds = array<i64: 128, 10>}, {pipeline_mode = #tpu.pipeline_mode<synchronous>, transform_indices = @transform_9, window_bounds = array<i64: 1, 10>}, {transform_indices = @transform_10, window_bounds = array<i64: 1, 1, 10>}]} {
    tpu.enqueue_dma source(%arg7 : memref<9216x128xbf16, #tpu.memory_space<any>>) target(%arg16 : memref<9216x128xbf16, #tpu.memory_space<vmem>>) target_semaphore(%arg17 : memref<!tpu.dma_semaphore, #tpu.memory_space<semaphore_mem>>)
    %cst = arith.constant 0.000000e+00 : f32
    %0 = vector.broadcast %cst : f32 to vector<1x1024xf32>
    %c0 = arith.constant 0 : index
    %c0_0 = arith.constant 0 : index
    %1 = vector.load %arg12[%c0, %c0_0] : memref<1x1024xf32, #tpu.memory_space<vmem>>, vector<1x1024xf32>
    tpu.vector_store %arg12[%c0, %c0_0], %0 {strides = array<i32>} : memref<1x1024xf32, #tpu.memory_space<vmem>>, vector<1x1024xf32>,
    %c0_1 = arith.constant 0 : index
    %c0_2 = arith.constant 0 : index
    %c0_3 = arith.constant 0 : index
    %c0_4 = arith.constant 0 : index
    %2 = vector.load %arg1[%c0_1, %c0_2, %c0_3, %c0_4] : memref<1x1x28x28xf32, #tpu.memory_space<vmem>>, vector<1x1x28x28xf32>
    %3 = vector.shape_cast %2 : vector<1x1x28x28xf32> to vector<28x28xf32>
    %4 = vector.extract_strided_slice %3 {offsets = [0, 0], sizes = [1, 28], strides = [1, 1]} : vector<28x28xf32> to vector<1x28xf32>
    %c0_5 = arith.constant 0 : index
    %c0_6 = arith.constant 0 : index
    %5 = vector.load %arg12[%c0_5, %c0_6] : memref<1x1024xf32, #tpu.memory_space<vmem>>, vector<1x28xf32>
    tpu.vector_store %arg12[%c0_5, %c0_6], %4 {strides = array<i32>} : memref<1x1024xf32, #tpu.memory_space<vmem>>, vector<1x28xf32>,
    %6 = vector.extract_strided_slice %3 {offsets = [1, 0], sizes = [1, 28], strides = [1, 1]} : vector<28x28xf32> to vector<1x28xf32>
    %c0_7 = arith.constant 0 : index
    %c32 = arith.constant 32 : index
    %7 = vector.load %arg12[%c0_7, %c32] : memref<1x1024xf32, #tpu.memory_space<vmem>>, vector<1x28xf32>
    tpu.vector_store %arg12[%c0_7, %c32], %6 {strides = array<i32>} : memref<1x1024xf32, #tpu.memory_space<vmem>>, vector<1x28xf32>,
    %8 = vector.extract_strided_slice %3 {offsets = [2, 0], sizes = [1, 28], strides = [1, 1]} : vector<28x28xf32> to vector<1x28xf32>
    %c0_8 = arith.constant 0 : index
    %c64 = arith.constant 64 : index
    %9 = vector.load %arg12[%c0_8, %c64] : memref<1x1024xf32, #tpu.memory_space<vmem>>, vector<1x28xf32>
    tpu.vector_store %arg12[%c0_8, %c64], %8 {strides = array<i32>} : memref<1x1024xf32, #tpu.memory_space<vmem>>, vector<1x28xf32>,
    %10 = vector.extract_strided_slice %3 {offsets = [3, 0], sizes = [1, 28], strides = [1, 1]} : vector<28x28xf32> to vector<1x28xf32>
    %c0_9 = arith.constant 0 : index
    %c96 = arith.constant 96 : index
    %11 = vector.load %arg12[%c0_9, %c96] : memref<1x1024xf32, #tpu.memory_space<vmem>>, vector<1x28xf32>
    tpu.vector_store %arg12[%c0_9, %c96], %10 {strides = array<i32>} : memref<1x1024xf32, #tpu.memory_space<vmem>>, vector<1x28xf32>,
    %12 = vector.extract_strided_slice %3 {offsets = [4, 0], sizes = [1, 28], strides = [1, 1]} : vector<28x28xf32> to vector<1x28xf32>
    %c0_10 = arith.constant 0 : index
    %c128 = arith.constant 128 : index
    %13 = vector.load %arg12[%c0_10, %c128] : memref<1x1024xf32, #tpu.memory_space<vmem>>, vector<1x28xf32>
    tpu.vector_store %arg12[%c0_10, %c128], %12 {strides = array<i32>} : memref<1x1024xf32, #tpu.memory_space<vmem>>, vector<1x28xf32>,
    %14 = vector.extract_strided_slice %3 {offsets = [5, 0], sizes = [1, 28], strides = [1, 1]} : vector<28x28xf32> to vector<1x28xf32>
    %c0_11 = arith.constant 0 : index
    %c160 = arith.constant 160 : index
    %15 = vector.load %arg12[%c0_11, %c160] : memref<1x1024xf32, #tpu.memory_space<vmem>>, vector<1x28xf32>
    tpu.vector_store %arg12[%c0_11, %c160], %14 {strides = array<i32>} : memref<1x1024xf32, #tpu.memory_space<vmem>>, vector<1x28xf32>,
    %16 = vector.extract_strided_slice %3 {offsets = [6, 0], sizes = [1, 28], strides = [1, 1]} : vector<28x28xf32> to vector<1x28xf32>
    %c0_12 = arith.constant 0 : index
    %c192 = arith.constant 192 : index
    %17 = vector.load %arg12[%c0_12, %c192] : memref<1x1024xf32, #tpu.memory_space<vmem>>, vector<1x28xf32>
    tpu.vector_store %arg12[%c0_12, %c192], %16 {strides = array<i32>} : memref<1x1024xf32, #tpu.memory_space<vmem>>, vector<1x28xf32>,
    %18 = vector.extract_strided_slice %3 {offsets = [7, 0], sizes = [1, 28], strides = [1, 1]} : vector<28x28xf32> to vector<1x28xf32>
    %c0_13 = arith.constant 0 : index
    %c224 = arith.constant 224 : index
    %19 = vector.load %arg12[%c0_13, %c224] : memref<1x1024xf32, #tpu.memory_space<vmem>>, vector<1x28xf32>
    tpu.vector_store %arg12[%c0_13, %c224], %18 {strides = array<i32>} : memref<1x1024xf32, #tpu.memory_space<vmem>>, vector<1x28xf32>,
    %20 = vector.extract_strided_slice %3 {offsets = [8, 0], sizes = [1, 28], strides = [1, 1]} : vector<28x28xf32> to vector<1x28xf32>
    %c0_14 = arith.constant 0 : index
    %c256 = arith.constant 256 : index
    %21 = vector.load %arg12[%c0_14, %c256] : memref<1x1024xf32, #tpu.memory_space<vmem>>, vector<1x28xf32>
    tpu.vector_store %arg12[%c0_14, %c256], %20 {strides = array<i32>} : memref<1x1024xf32, #tpu.memory_space<vmem>>, vector<1x28xf32>,
    %22 = vector.extract_strided_slice %3 {offsets = [9, 0], sizes = [1, 28], strides = [1, 1]} : vector<28x28xf32> to vector<1x28xf32>
    %c0_15 = arith.constant 0 : index
    %c288 = arith.constant 288 : index
    %23 = vector.load %arg12[%c0_15, %c288] : memref<1x1024xf32, #tpu.memory_space<vmem>>, vector<1x28xf32>
    tpu.vector_store %arg12[%c0_15, %c288], %22 {strides = array<i32>} : memref<1x1024xf32, #tpu.memory_space<vmem>>, vector<1x28xf32>,
    %24 = vector.extract_strided_slice %3 {offsets = [10, 0], sizes = [1, 28], strides = [1, 1]} : vector<28x28xf32> to vector<1x28xf32>
    %c0_16 = arith.constant 0 : index
    %c320 = arith.constant 320 : index
    %25 = vector.load %arg12[%c0_16, %c320] : memref<1x1024xf32, #tpu.memory_space<vmem>>, vector<1x28xf32>
    tpu.vector_store %arg12[%c0_16, %c320], %24 {strides = array<i32>} : memref<1x1024xf32, #tpu.memory_space<vmem>>, vector<1x28xf32>,
    %26 = vector.extract_strided_slice %3 {offsets = [11, 0], sizes = [1, 28], strides = [1, 1]} : vector<28x28xf32> to vector<1x28xf32>
    %c0_17 = arith.constant 0 : index
    %c352 = arith.constant 352 : index
    %27 = vector.load %arg12[%c0_17, %c352] : memref<1x1024xf32, #tpu.memory_space<vmem>>, vector<1x28xf32>
    tpu.vector_store %arg12[%c0_17, %c352], %26 {strides = array<i32>} : memref<1x1024xf32, #tpu.memory_space<vmem>>, vector<1x28xf32>,
    %28 = vector.extract_strided_slice %3 {offsets = [12, 0], sizes = [1, 28], strides = [1, 1]} : vector<28x28xf32> to vector<1x28xf32>
    %c0_18 = arith.constant 0 : index
    %c384 = arith.constant 384 : index
    %29 = vector.load %arg12[%c0_18, %c384] : memref<1x1024xf32, #tpu.memory_space<vmem>>, vector<1x28xf32>
    tpu.vector_store %arg12[%c0_18, %c384], %28 {strides = array<i32>} : memref<1x1024xf32, #tpu.memory_space<vmem>>, vector<1x28xf32>,
    %30 = vector.extract_strided_slice %3 {offsets = [13, 0], sizes = [1, 28], strides = [1, 1]} : vector<28x28xf32> to vector<1x28xf32>
    %c0_19 = arith.constant 0 : index
    %c416 = arith.constant 416 : index
    %31 = vector.load %arg12[%c0_19, %c416] : memref<1x1024xf32, #tpu.memory_space<vmem>>, vector<1x28xf32>
    tpu.vector_store %arg12[%c0_19, %c416], %30 {strides = array<i32>} : memref<1x1024xf32, #tpu.memory_space<vmem>>, vector<1x28xf32>,
    %32 = vector.extract_strided_slice %3 {offsets = [14, 0], sizes = [1, 28], strides = [1, 1]} : vector<28x28xf32> to vector<1x28xf32>
    %c0_20 = arith.constant 0 : index
    %c448 = arith.constant 448 : index
    %33 = vector.load %arg12[%c0_20, %c448] : memref<1x1024xf32, #tpu.memory_space<vmem>>, vector<1x28xf32>
    tpu.vector_store %arg12[%c0_20, %c448], %32 {strides = array<i32>} : memref<1x1024xf32, #tpu.memory_space<vmem>>, vector<1x28xf32>,
    %34 = vector.extract_strided_slice %3 {offsets = [15, 0], sizes = [1, 28], strides = [1, 1]} : vector<28x28xf32> to vector<1x28xf32>
    %c0_21 = arith.constant 0 : index
    %c480 = arith.constant 480 : index
    %35 = vector.load %arg12[%c0_21, %c480] : memref<1x1024xf32, #tpu.memory_space<vmem>>, vector<1x28xf32>
    tpu.vector_store %arg12[%c0_21, %c480], %34 {strides = array<i32>} : memref<1x1024xf32, #tpu.memory_space<vmem>>, vector<1x28xf32>,
    %36 = vector.extract_strided_slice %3 {offsets = [16, 0], sizes = [1, 28], strides = [1, 1]} : vector<28x28xf32> to vector<1x28xf32>
    %c0_22 = arith.constant 0 : index
    %c512 = arith.constant 512 : index
    %37 = vector.load %arg12[%c0_22, %c512] : memref<1x1024xf32, #tpu.memory_space<vmem>>, vector<1x28xf32>
    tpu.vector_store %arg12[%c0_22, %c512], %36 {strides = array<i32>} : memref<1x1024xf32, #tpu.memory_space<vmem>>, vector<1x28xf32>,
    %38 = vector.extract_strided_slice %3 {offsets = [17, 0], sizes = [1, 28], strides = [1, 1]} : vector<28x28xf32> to vector<1x28xf32>
    %c0_23 = arith.constant 0 : index
    %c544 = arith.constant 544 : index
    %39 = vector.load %arg12[%c0_23, %c544] : memref<1x1024xf32, #tpu.memory_space<vmem>>, vector<1x28xf32>
    tpu.vector_store %arg12[%c0_23, %c544], %38 {strides = array<i32>} : memref<1x1024xf32, #tpu.memory_space<vmem>>, vector<1x28xf32>,
    %40 = vector.extract_strided_slice %3 {offsets = [18, 0], sizes = [1, 28], strides = [1, 1]} : vector<28x28xf32> to vector<1x28xf32>
    %c0_24 = arith.constant 0 : index
    %c576 = arith.constant 576 : index
    %41 = vector.load %arg12[%c0_24, %c576] : memref<1x1024xf32, #tpu.memory_space<vmem>>, vector<1x28xf32>
    tpu.vector_store %arg12[%c0_24, %c576], %40 {strides = array<i32>} : memref<1x1024xf32, #tpu.memory_space<vmem>>, vector<1x28xf32>,
    %42 = vector.extract_strided_slice %3 {offsets = [19, 0], sizes = [1, 28], strides = [1, 1]} : vector<28x28xf32> to vector<1x28xf32>
    %c0_25 = arith.constant 0 : index
    %c608 = arith.constant 608 : index
    %43 = vector.load %arg12[%c0_25, %c608] : memref<1x1024xf32, #tpu.memory_space<vmem>>, vector<1x28xf32>
    tpu.vector_store %arg12[%c0_25, %c608], %42 {strides = array<i32>} : memref<1x1024xf32, #tpu.memory_space<vmem>>, vector<1x28xf32>,
    %44 = vector.extract_strided_slice %3 {offsets = [20, 0], sizes = [1, 28], strides = [1, 1]} : vector<28x28xf32> to vector<1x28xf32>
    %c0_26 = arith.constant 0 : index
    %c640 = arith.constant 640 : index
    %45 = vector.load %arg12[%c0_26, %c640] : memref<1x1024xf32, #tpu.memory_space<vmem>>, vector<1x28xf32>
    tpu.vector_store %arg12[%c0_26, %c640], %44 {strides = array<i32>} : memref<1x1024xf32, #tpu.memory_space<vmem>>, vector<1x28xf32>,
    %46 = vector.extract_strided_slice %3 {offsets = [21, 0], sizes = [1, 28], strides = [1, 1]} : vector<28x28xf32> to vector<1x28xf32>
    %c0_27 = arith.constant 0 : index
    %c672 = arith.constant 672 : index
    %47 = vector.load %arg12[%c0_27, %c672] : memref<1x1024xf32, #tpu.memory_space<vmem>>, vector<1x28xf32>
    tpu.vector_store %arg12[%c0_27, %c672], %46 {strides = array<i32>} : memref<1x1024xf32, #tpu.memory_space<vmem>>, vector<1x28xf32>,
    %48 = vector.extract_strided_slice %3 {offsets = [22, 0], sizes = [1, 28], strides = [1, 1]} : vector<28x28xf32> to vector<1x28xf32>
    %c0_28 = arith.constant 0 : index
    %c704 = arith.constant 704 : index
    %49 = vector.load %arg12[%c0_28, %c704] : memref<1x1024xf32, #tpu.memory_space<vmem>>, vector<1x28xf32>
    tpu.vector_store %arg12[%c0_28, %c704], %48 {strides = array<i32>} : memref<1x1024xf32, #tpu.memory_space<vmem>>, vector<1x28xf32>,
    %50 = vector.extract_strided_slice %3 {offsets = [23, 0], sizes = [1, 28], strides = [1, 1]} : vector<28x28xf32> to vector<1x28xf32>
    %c0_29 = arith.constant 0 : index
    %c736 = arith.constant 736 : index
    %51 = vector.load %arg12[%c0_29, %c736] : memref<1x1024xf32, #tpu.memory_space<vmem>>, vector<1x28xf32>
    tpu.vector_store %arg12[%c0_29, %c736], %50 {strides = array<i32>} : memref<1x1024xf32, #tpu.memory_space<vmem>>, vector<1x28xf32>,
    %52 = vector.extract_strided_slice %3 {offsets = [24, 0], sizes = [1, 28], strides = [1, 1]} : vector<28x28xf32> to vector<1x28xf32>
    %c0_30 = arith.constant 0 : index
    %c768 = arith.constant 768 : index
    %53 = vector.load %arg12[%c0_30, %c768] : memref<1x1024xf32, #tpu.memory_space<vmem>>, vector<1x28xf32>
    tpu.vector_store %arg12[%c0_30, %c768], %52 {strides = array<i32>} : memref<1x1024xf32, #tpu.memory_space<vmem>>, vector<1x28xf32>,
    %54 = vector.extract_strided_slice %3 {offsets = [25, 0], sizes = [1, 28], strides = [1, 1]} : vector<28x28xf32> to vector<1x28xf32>
    %c0_31 = arith.constant 0 : index
    %c800 = arith.constant 800 : index
    %55 = vector.load %arg12[%c0_31, %c800] : memref<1x1024xf32, #tpu.memory_space<vmem>>, vector<1x28xf32>
    tpu.vector_store %arg12[%c0_31, %c800], %54 {strides = array<i32>} : memref<1x1024xf32, #tpu.memory_space<vmem>>, vector<1x28xf32>,
    %56 = vector.extract_strided_slice %3 {offsets = [26, 0], sizes = [1, 28], strides = [1, 1]} : vector<28x28xf32> to vector<1x28xf32>
    %c0_32 = arith.constant 0 : index
    %c832 = arith.constant 832 : index
    %57 = vector.load %arg12[%c0_32, %c832] : memref<1x1024xf32, #tpu.memory_space<vmem>>, vector<1x28xf32>
    tpu.vector_store %arg12[%c0_32, %c832], %56 {strides = array<i32>} : memref<1x1024xf32, #tpu.memory_space<vmem>>, vector<1x28xf32>,
    %58 = vector.extract_strided_slice %3 {offsets = [27, 0], sizes = [1, 28], strides = [1, 1]} : vector<28x28xf32> to vector<1x28xf32>
    %c0_33 = arith.constant 0 : index
    %c864 = arith.constant 864 : index
    %59 = vector.load %arg12[%c0_33, %c864] : memref<1x1024xf32, #tpu.memory_space<vmem>>, vector<1x28xf32>
    tpu.vector_store %arg12[%c0_33, %c864], %58 {strides = array<i32>} : memref<1x1024xf32, #tpu.memory_space<vmem>>, vector<1x28xf32>,
    %cst_34 = arith.constant 0.000000e+00 : f32
    %60 = vector.broadcast %cst_34 : f32 to vector<32x896xf32>
    %c0_35 = arith.constant 0 : index
    %c0_36 = arith.constant 0 : index
    %61 = vector.load %arg12[%c0_35, %c0_36] : memref<1x1024xf32, #tpu.memory_space<vmem>>, vector<1x896xf32>
    %c0_37 = arith.constant 0 : index
    %c0_38 = arith.constant 0 : index
    %c0_39 = arith.constant 0 : index
    %62 = vector.load %arg2[%c0_37, %c0_38, %c0_39] : memref<9x32x1xf32, #tpu.memory_space<vmem>>, vector<1x32x1xf32>
    %63 = vector.shape_cast %62 : vector<1x32x1xf32> to vector<32x1xf32>
    %64 = vector.broadcast %63 : vector<32x1xf32> to vector<32x896xf32>
    %65 = vector.broadcast %61 : vector<1x896xf32> to vector<32x896xf32>
    %66 = arith.mulf %64, %65 : vector<32x896xf32>
    %67 = arith.addf %60, %66 : vector<32x896xf32>
    %c0_40 = arith.constant 0 : index
    %c1 = arith.constant 1 : index
    %68 = vector.load %arg12[%c0_40, %c1] : memref<1x1024xf32, #tpu.memory_space<vmem>>, vector<1x896xf32>
    %c1_41 = arith.constant 1 : index
    %c0_42 = arith.constant 0 : index
    %c0_43 = arith.constant 0 : index
    %69 = vector.load %arg2[%c1_41, %c0_42, %c0_43] : memref<9x32x1xf32, #tpu.memory_space<vmem>>, vector<1x32x1xf32>
    %70 = vector.shape_cast %69 : vector<1x32x1xf32> to vector<32x1xf32>
    %71 = vector.broadcast %70 : vector<32x1xf32> to vector<32x896xf32>
    %72 = vector.broadcast %68 : vector<1x896xf32> to vector<32x896xf32>
    %73 = arith.mulf %71, %72 : vector<32x896xf32>
    %74 = arith.addf %67, %73 : vector<32x896xf32>
    %c0_44 = arith.constant 0 : index
    %c2 = arith.constant 2 : index
    %75 = vector.load %arg12[%c0_44, %c2] : memref<1x1024xf32, #tpu.memory_space<vmem>>, vector<1x896xf32>
    %c2_45 = arith.constant 2 : index
    %c0_46 = arith.constant 0 : index
    %c0_47 = arith.constant 0 : index
    %76 = vector.load %arg2[%c2_45, %c0_46, %c0_47] : memref<9x32x1xf32, #tpu.memory_space<vmem>>, vector<1x32x1xf32>
    %77 = vector.shape_cast %76 : vector<1x32x1xf32> to vector<32x1xf32>
    %78 = vector.broadcast %77 : vector<32x1xf32> to vector<32x896xf32>
    %79 = vector.broadcast %75 : vector<1x896xf32> to vector<32x896xf32>
    %80 = arith.mulf %78, %79 : vector<32x896xf32>
    %81 = arith.addf %74, %80 : vector<32x896xf32>
    %c0_48 = arith.constant 0 : index
    %c32_49 = arith.constant 32 : index
    %82 = vector.load %arg12[%c0_48, %c32_49] : memref<1x1024xf32, #tpu.memory_space<vmem>>, vector<1x896xf32>
    %c3 = arith.constant 3 : index
    %c0_50 = arith.constant 0 : index
    %c0_51 = arith.constant 0 : index
    %83 = vector.load %arg2[%c3, %c0_50, %c0_51] : memref<9x32x1xf32, #tpu.memory_space<vmem>>, vector<1x32x1xf32>
    %84 = vector.shape_cast %83 : vector<1x32x1xf32> to vector<32x1xf32>
    %85 = vector.broadcast %84 : vector<32x1xf32> to vector<32x896xf32>
    %86 = vector.broadcast %82 : vector<1x896xf32> to vector<32x896xf32>
    %87 = arith.mulf %85, %86 : vector<32x896xf32>
    %88 = arith.addf %81, %87 : vector<32x896xf32>
    %c0_52 = arith.constant 0 : index
    %c33 = arith.constant 33 : index
    %89 = vector.load %arg12[%c0_52, %c33] : memref<1x1024xf32, #tpu.memory_space<vmem>>, vector<1x896xf32>
    %c4 = arith.constant 4 : index
    %c0_53 = arith.constant 0 : index
    %c0_54 = arith.constant 0 : index
    %90 = vector.load %arg2[%c4, %c0_53, %c0_54] : memref<9x32x1xf32, #tpu.memory_space<vmem>>, vector<1x32x1xf32>
    %91 = vector.shape_cast %90 : vector<1x32x1xf32> to vector<32x1xf32>
    %92 = vector.broadcast %91 : vector<32x1xf32> to vector<32x896xf32>
    %93 = vector.broadcast %89 : vector<1x896xf32> to vector<32x896xf32>
    %94 = arith.mulf %92, %93 : vector<32x896xf32>
    %95 = arith.addf %88, %94 : vector<32x896xf32>
    %c0_55 = arith.constant 0 : index
    %c34 = arith.constant 34 : index
    %96 = vector.load %arg12[%c0_55, %c34] : memref<1x1024xf32, #tpu.memory_space<vmem>>, vector<1x896xf32>
    %c5 = arith.constant 5 : index
    %c0_56 = arith.constant 0 : index
    %c0_57 = arith.constant 0 : index
    %97 = vector.load %arg2[%c5, %c0_56, %c0_57] : memref<9x32x1xf32, #tpu.memory_space<vmem>>, vector<1x32x1xf32>
    %98 = vector.shape_cast %97 : vector<1x32x1xf32> to vector<32x1xf32>
    %99 = vector.broadcast %98 : vector<32x1xf32> to vector<32x896xf32>
    %100 = vector.broadcast %96 : vector<1x896xf32> to vector<32x896xf32>
    %101 = arith.mulf %99, %100 : vector<32x896xf32>
    %102 = arith.addf %95, %101 : vector<32x896xf32>
    %c0_58 = arith.constant 0 : index
    %c64_59 = arith.constant 64 : index
    %103 = vector.load %arg12[%c0_58, %c64_59] : memref<1x1024xf32, #tpu.memory_space<vmem>>, vector<1x896xf32>
    %c6 = arith.constant 6 : index
    %c0_60 = arith.constant 0 : index
    %c0_61 = arith.constant 0 : index
    %104 = vector.load %arg2[%c6, %c0_60, %c0_61] : memref<9x32x1xf32, #tpu.memory_space<vmem>>, vector<1x32x1xf32>
    %105 = vector.shape_cast %104 : vector<1x32x1xf32> to vector<32x1xf32>
    %106 = vector.broadcast %105 : vector<32x1xf32> to vector<32x896xf32>
    %107 = vector.broadcast %103 : vector<1x896xf32> to vector<32x896xf32>
    %108 = arith.mulf %106, %107 : vector<32x896xf32>
    %109 = arith.addf %102, %108 : vector<32x896xf32>
    %c0_62 = arith.constant 0 : index
    %c65 = arith.constant 65 : index
    %110 = vector.load %arg12[%c0_62, %c65] : memref<1x1024xf32, #tpu.memory_space<vmem>>, vector<1x896xf32>
    %c7 = arith.constant 7 : index
    %c0_63 = arith.constant 0 : index
    %c0_64 = arith.constant 0 : index
    %111 = vector.load %arg2[%c7, %c0_63, %c0_64] : memref<9x32x1xf32, #tpu.memory_space<vmem>>, vector<1x32x1xf32>
    %112 = vector.shape_cast %111 : vector<1x32x1xf32> to vector<32x1xf32>
    %113 = vector.broadcast %112 : vector<32x1xf32> to vector<32x896xf32>
    %114 = vector.broadcast %110 : vector<1x896xf32> to vector<32x896xf32>
    %115 = arith.mulf %113, %114 : vector<32x896xf32>
    %116 = arith.addf %109, %115 : vector<32x896xf32>
    %c0_65 = arith.constant 0 : index
    %c66 = arith.constant 66 : index
    %117 = vector.load %arg12[%c0_65, %c66] : memref<1x1024xf32, #tpu.memory_space<vmem>>, vector<1x896xf32>
    %c8 = arith.constant 8 : index
    %c0_66 = arith.constant 0 : index
    %c0_67 = arith.constant 0 : index
    %118 = vector.load %arg2[%c8, %c0_66, %c0_67] : memref<9x32x1xf32, #tpu.memory_space<vmem>>, vector<1x32x1xf32>
    %119 = vector.shape_cast %118 : vector<1x32x1xf32> to vector<32x1xf32>
    %120 = vector.broadcast %119 : vector<32x1xf32> to vector<32x896xf32>
    %121 = vector.broadcast %117 : vector<1x896xf32> to vector<32x896xf32>
    %122 = arith.mulf %120, %121 : vector<32x896xf32>
    %123 = arith.addf %116, %122 : vector<32x896xf32>
    %c0_68 = arith.constant 0 : index
    %c0_69 = arith.constant 0 : index
    %124 = vector.load %arg3[%c0_68, %c0_69] : memref<32x1xf32, #tpu.memory_space<vmem>>, vector<32x1xf32>
    %125 = vector.broadcast %124 : vector<32x1xf32> to vector<32x896xf32>
    %126 = arith.addf %123, %125 : vector<32x896xf32>
    %cst_70 = arith.constant 0.000000e+00 : f32
    %127 = vector.broadcast %cst_70 : f32 to vector<32x896xf32>
    %128 = arith.maximumf %126, %127 : vector<32x896xf32>
    %129 = arith.truncf %128 : vector<32x896xf32> to vector<32x896xbf16>
    %c0_71 = arith.constant 0 : index
    %c0_72 = arith.constant 0 : index
    %130 = vector.load %arg13[%c0_71, %c0_72] : memref<32x1024xbf16, #tpu.memory_space<vmem>>, vector<32x896xbf16>
    tpu.vector_store %arg13[%c0_71, %c0_72], %129 {strides = array<i32>} : memref<32x1024xbf16, #tpu.memory_space<vmem>>, vector<32x896xbf16>,
    %cst_73 = arith.constant 0.000000e+00 : bf16
    %131 = vector.broadcast %cst_73 : bf16 to vector<32x128xbf16>
    %c0_74 = arith.constant 0 : index
    %c896 = arith.constant 896 : index
    %132 = vector.load %arg13[%c0_74, %c896] : memref<32x1024xbf16, #tpu.memory_space<vmem>>, vector<32x128xbf16>
    tpu.vector_store %arg13[%c0_74, %c896], %131 {strides = array<i32>} : memref<32x1024xbf16, #tpu.memory_space<vmem>>, vector<32x128xbf16>,
    %c0_75 = arith.constant 0 : index
    %c0_76 = arith.constant 0 : index
    %133 = vector.load %arg13[%c0_75, %c0_76] : memref<32x1024xbf16, #tpu.memory_space<vmem>>, vector<32x896xbf16>
    %c0_77 = arith.constant 0 : index
    %c1_78 = arith.constant 1 : index
    %134 = vector.load %arg13[%c0_77, %c1_78] : memref<32x1024xbf16, #tpu.memory_space<vmem>>, vector<32x896xbf16>
    %c0_79 = arith.constant 0 : index
    %c2_80 = arith.constant 2 : index
    %135 = vector.load %arg13[%c0_79, %c2_80] : memref<32x1024xbf16, #tpu.memory_space<vmem>>, vector<32x896xbf16>
    %c0_81 = arith.constant 0 : index
    %c32_82 = arith.constant 32 : index
    %136 = vector.load %arg13[%c0_81, %c32_82] : memref<32x1024xbf16, #tpu.memory_space<vmem>>, vector<32x896xbf16>
    %c0_83 = arith.constant 0 : index
    %c33_84 = arith.constant 33 : index
    %137 = vector.load %arg13[%c0_83, %c33_84] : memref<32x1024xbf16, #tpu.memory_space<vmem>>, vector<32x896xbf16>
    %c0_85 = arith.constant 0 : index
    %c34_86 = arith.constant 34 : index
    %138 = vector.load %arg13[%c0_85, %c34_86] : memref<32x1024xbf16, #tpu.memory_space<vmem>>, vector<32x896xbf16>
    %c0_87 = arith.constant 0 : index
    %c64_88 = arith.constant 64 : index
    %139 = vector.load %arg13[%c0_87, %c64_88] : memref<32x1024xbf16, #tpu.memory_space<vmem>>, vector<32x896xbf16>
    %c0_89 = arith.constant 0 : index
    %c65_90 = arith.constant 65 : index
    %140 = vector.load %arg13[%c0_89, %c65_90] : memref<32x1024xbf16, #tpu.memory_space<vmem>>, vector<32x896xbf16>
    %c0_91 = arith.constant 0 : index
    %c66_92 = arith.constant 66 : index
    %141 = vector.load %arg13[%c0_91, %c66_92] : memref<32x1024xbf16, #tpu.memory_space<vmem>>, vector<32x896xbf16>
    %142 = tpu.concatenate %133, %134, %135, %136, %137, %138, %139, %140, %141 in 0 : vector<32x896xbf16>, vector<32x896xbf16>, vector<32x896xbf16>, vector<32x896xbf16>, vector<32x896xbf16>, vector<32x896xbf16>, vector<32x896xbf16>, vector<32x896xbf16>, vector<32x896xbf16> -> vector<288x896xbf16>
    %c0_93 = arith.constant 0 : index
    %c0_94 = arith.constant 0 : index
    %143 = vector.load %arg4[%c0_93, %c0_94] : memref<64x288xbf16, #tpu.memory_space<vmem>>, vector<64x288xbf16>
    %cst_95 = arith.constant dense<0.000000e+00> : vector<64x896xf32>
    %144 = tpu.matmul %143, %142, %cst_95 {dimension_numbers = #tpu.dot_dimension_numbers<[1], [0], [0], [1], [0, 0, 1, 1], [], []>} : vector<64x288xbf16>, vector<288x896xbf16>, vector<64x896xf32> -> vector<64x896xf32>
    %c0_96 = arith.constant 0 : index
    %c0_97 = arith.constant 0 : index
    %145 = vector.load %arg5[%c0_96, %c0_97] : memref<64x1xf32, #tpu.memory_space<vmem>>, vector<64x1xf32>
    %146 = vector.broadcast %145 : vector<64x1xf32> to vector<64x896xf32>
    %147 = arith.addf %144, %146 : vector<64x896xf32>
    %c0_98 = arith.constant 0 : index
    %c0_99 = arith.constant 0 : index
    %148 = vector.load %arg14[%c0_98, %c0_99] : memref<64x1024xf32, #tpu.memory_space<vmem>>, vector<64x896xf32>
    tpu.vector_store %arg14[%c0_98, %c0_99], %147 {strides = array<i32>} : memref<64x1024xf32, #tpu.memory_space<vmem>>, vector<64x896xf32>,
    %cst_100 = arith.constant 0.000000e+00 : f32
    %149 = vector.broadcast %cst_100 : f32 to vector<64x128xf32>
    %c0_101 = arith.constant 0 : index
    %c896_102 = arith.constant 896 : index
    %150 = vector.load %arg14[%c0_101, %c896_102] : memref<64x1024xf32, #tpu.memory_space<vmem>>, vector<64x128xf32>
    tpu.vector_store %arg14[%c0_101, %c896_102], %149 {strides = array<i32>} : memref<64x1024xf32, #tpu.memory_space<vmem>>, vector<64x128xf32>,
    %c0_103 = arith.constant 0 : index
    %c1_104 = arith.constant 1 : index
    %151 = vector.load %arg14[%c0_103, %c1_104] : memref<64x1024xf32, #tpu.memory_space<vmem>>, vector<64x896xf32>
    %152 = arith.maximumf %147, %151 : vector<64x896xf32>
    %c0_105 = arith.constant 0 : index
    %c32_106 = arith.constant 32 : index
    %153 = vector.load %arg14[%c0_105, %c32_106] : memref<64x1024xf32, #tpu.memory_space<vmem>>, vector<64x896xf32>
    %c0_107 = arith.constant 0 : index
    %c33_108 = arith.constant 33 : index
    %154 = vector.load %arg14[%c0_107, %c33_108] : memref<64x1024xf32, #tpu.memory_space<vmem>>, vector<64x896xf32>
    %155 = arith.maximumf %153, %154 : vector<64x896xf32>
    %156 = arith.maximumf %152, %155 : vector<64x896xf32>
    %157 = arith.truncf %156 : vector<64x896xf32> to vector<64x896xbf16>
    %c0_109 = arith.constant 0 : index
    %c0_110 = arith.constant 0 : index
    %158 = vector.load %arg6[%c0_109, %c0_110] : memref<896x144xbf16, #tpu.memory_space<vmem>>, vector<896x144xbf16>
    %cst_111 = arith.constant dense<0.000000e+00> : vector<64x144xf32>
    %159 = tpu.matmul %157, %158, %cst_111 {dimension_numbers = #tpu.dot_dimension_numbers<[1], [0], [0], [1], [0, 0, 1, 1], [], []>} : vector<64x896xbf16>, vector<896x144xbf16>, vector<64x144xf32> -> vector<64x144xf32>
    %160 = vector.extract_strided_slice %159 {offsets = [0, 0], sizes = [1, 144], strides = [1, 1]} : vector<64x144xf32> to vector<1x144xf32>
    %c0_112 = arith.constant 0 : index
    %c0_113 = arith.constant 0 : index
    %161 = vector.load %arg15[%c0_112, %c0_113] : memref<1x9216xf32, #tpu.memory_space<vmem>>, vector<1x144xf32>
    tpu.vector_store %arg15[%c0_112, %c0_113], %160 {strides = array<i32>} : memref<1x9216xf32, #tpu.memory_space<vmem>>, vector<1x144xf32>,
    %162 = vector.extract_strided_slice %159 {offsets = [1, 0], sizes = [1, 144], strides = [1, 1]} : vector<64x144xf32> to vector<1x144xf32>
    %c0_114 = arith.constant 0 : index
    %c144 = arith.constant 144 : index
    %163 = vector.load %arg15[%c0_114, %c144] : memref<1x9216xf32, #tpu.memory_space<vmem>>, vector<1x144xf32>
    tpu.vector_store %arg15[%c0_114, %c144], %162 {strides = array<i32>} : memref<1x9216xf32, #tpu.memory_space<vmem>>, vector<1x144xf32>,
    %164 = vector.extract_strided_slice %159 {offsets = [2, 0], sizes = [1, 144], strides = [1, 1]} : vector<64x144xf32> to vector<1x144xf32>
    %c0_115 = arith.constant 0 : index
    %c288_116 = arith.constant 288 : index
    %165 = vector.load %arg15[%c0_115, %c288_116] : memref<1x9216xf32, #tpu.memory_space<vmem>>, vector<1x144xf32>
    tpu.vector_store %arg15[%c0_115, %c288_116], %164 {strides = array<i32>} : memref<1x9216xf32, #tpu.memory_space<vmem>>, vector<1x144xf32>,
    %166 = vector.extract_strided_slice %159 {offsets = [3, 0], sizes = [1, 144], strides = [1, 1]} : vector<64x144xf32> to vector<1x144xf32>
    %c0_117 = arith.constant 0 : index
    %c432 = arith.constant 432 : index
    %167 = vector.load %arg15[%c0_117, %c432] : memref<1x9216xf32, #tpu.memory_space<vmem>>, vector<1x144xf32>
    tpu.vector_store %arg15[%c0_117, %c432], %166 {strides = array<i32>} : memref<1x9216xf32, #tpu.memory_space<vmem>>, vector<1x144xf32>,
    %168 = vector.extract_strided_slice %159 {offsets = [4, 0], sizes = [1, 144], strides = [1, 1]} : vector<64x144xf32> to vector<1x144xf32>
    %c0_118 = arith.constant 0 : index
    %c576_119 = arith.constant 576 : index
    %169 = vector.load %arg15[%c0_118, %c576_119] : memref<1x9216xf32, #tpu.memory_space<vmem>>, vector<1x144xf32>
    tpu.vector_store %arg15[%c0_118, %c576_119], %168 {strides = array<i32>} : memref<1x9216xf32, #tpu.memory_space<vmem>>, vector<1x144xf32>,
    %170 = vector.extract_strided_slice %159 {offsets = [5, 0], sizes = [1, 144], strides = [1, 1]} : vector<64x144xf32> to vector<1x144xf32>
    %c0_120 = arith.constant 0 : index
    %c720 = arith.constant 720 : index
    %171 = vector.load %arg15[%c0_120, %c720] : memref<1x9216xf32, #tpu.memory_space<vmem>>, vector<1x144xf32>
    tpu.vector_store %arg15[%c0_120, %c720], %170 {strides = array<i32>} : memref<1x9216xf32, #tpu.memory_space<vmem>>, vector<1x144xf32>,
    %172 = vector.extract_strided_slice %159 {offsets = [6, 0], sizes = [1, 144], strides = [1, 1]} : vector<64x144xf32> to vector<1x144xf32>
    %c0_121 = arith.constant 0 : index
    %c864_122 = arith.constant 864 : index
    %173 = vector.load %arg15[%c0_121, %c864_122] : memref<1x9216xf32, #tpu.memory_space<vmem>>, vector<1x144xf32>
    tpu.vector_store %arg15[%c0_121, %c864_122], %172 {strides = array<i32>} : memref<1x9216xf32, #tpu.memory_space<vmem>>, vector<1x144xf32>,
    %174 = vector.extract_strided_slice %159 {offsets = [7, 0], sizes = [1, 144], strides = [1, 1]} : vector<64x144xf32> to vector<1x144xf32>
    %c0_123 = arith.constant 0 : index
    %c1008 = arith.constant 1008 : index
    %175 = vector.load %arg15[%c0_123, %c1008] : memref<1x9216xf32, #tpu.memory_space<vmem>>, vector<1x144xf32>
    tpu.vector_store %arg15[%c0_123, %c1008], %174 {strides = array<i32>} : memref<1x9216xf32, #tpu.memory_space<vmem>>, vector<1x144xf32>,
    %176 = vector.extract_strided_slice %159 {offsets = [8, 0], sizes = [1, 144], strides = [1, 1]} : vector<64x144xf32> to vector<1x144xf32>
    %c0_124 = arith.constant 0 : index
    %c1152 = arith.constant 1152 : index
    %177 = vector.load %arg15[%c0_124, %c1152] : memref<1x9216xf32, #tpu.memory_space<vmem>>, vector<1x144xf32>
    tpu.vector_store %arg15[%c0_124, %c1152], %176 {strides = array<i32>} : memref<1x9216xf32, #tpu.memory_space<vmem>>, vector<1x144xf32>,
    %178 = vector.extract_strided_slice %159 {offsets = [9, 0], sizes = [1, 144], strides = [1, 1]} : vector<64x144xf32> to vector<1x144xf32>
    %c0_125 = arith.constant 0 : index
    %c1296 = arith.constant 1296 : index
    %179 = vector.load %arg15[%c0_125, %c1296] : memref<1x9216xf32, #tpu.memory_space<vmem>>, vector<1x144xf32>
    tpu.vector_store %arg15[%c0_125, %c1296], %178 {strides = array<i32>} : memref<1x9216xf32, #tpu.memory_space<vmem>>, vector<1x144xf32>,
    %180 = vector.extract_strided_slice %159 {offsets = [10, 0], sizes = [1, 144], strides = [1, 1]} : vector<64x144xf32> to vector<1x144xf32>
    %c0_126 = arith.constant 0 : index
    %c1440 = arith.constant 1440 : index
    %181 = vector.load %arg15[%c0_126, %c1440] : memref<1x9216xf32, #tpu.memory_space<vmem>>, vector<1x144xf32>
    tpu.vector_store %arg15[%c0_126, %c1440], %180 {strides = array<i32>} : memref<1x9216xf32, #tpu.memory_space<vmem>>, vector<1x144xf32>,
    %182 = vector.extract_strided_slice %159 {offsets = [11, 0], sizes = [1, 144], strides = [1, 1]} : vector<64x144xf32> to vector<1x144xf32>
    %c0_127 = arith.constant 0 : index
    %c1584 = arith.constant 1584 : index
    %183 = vector.load %arg15[%c0_127, %c1584] : memref<1x9216xf32, #tpu.memory_space<vmem>>, vector<1x144xf32>
    tpu.vector_store %arg15[%c0_127, %c1584], %182 {strides = array<i32>} : memref<1x9216xf32, #tpu.memory_space<vmem>>, vector<1x144xf32>,
    %184 = vector.extract_strided_slice %159 {offsets = [12, 0], sizes = [1, 144], strides = [1, 1]} : vector<64x144xf32> to vector<1x144xf32>
    %c0_128 = arith.constant 0 : index
    %c1728 = arith.constant 1728 : index
    %185 = vector.load %arg15[%c0_128, %c1728] : memref<1x9216xf32, #tpu.memory_space<vmem>>, vector<1x144xf32>
    tpu.vector_store %arg15[%c0_128, %c1728], %184 {strides = array<i32>} : memref<1x9216xf32, #tpu.memory_space<vmem>>, vector<1x144xf32>,
    %186 = vector.extract_strided_slice %159 {offsets = [13, 0], sizes = [1, 144], strides = [1, 1]} : vector<64x144xf32> to vector<1x144xf32>
    %c0_129 = arith.constant 0 : index
    %c1872 = arith.constant 1872 : index
    %187 = vector.load %arg15[%c0_129, %c1872] : memref<1x9216xf32, #tpu.memory_space<vmem>>, vector<1x144xf32>
    tpu.vector_store %arg15[%c0_129, %c1872], %186 {strides = array<i32>} : memref<1x9216xf32, #tpu.memory_space<vmem>>, vector<1x144xf32>,
    %188 = vector.extract_strided_slice %159 {offsets = [14, 0], sizes = [1, 144], strides = [1, 1]} : vector<64x144xf32> to vector<1x144xf32>
    %c0_130 = arith.constant 0 : index
    %c2016 = arith.constant 2016 : index
    %189 = vector.load %arg15[%c0_130, %c2016] : memref<1x9216xf32, #tpu.memory_space<vmem>>, vector<1x144xf32>
    tpu.vector_store %arg15[%c0_130, %c2016], %188 {strides = array<i32>} : memref<1x9216xf32, #tpu.memory_space<vmem>>, vector<1x144xf32>,
    %190 = vector.extract_strided_slice %159 {offsets = [15, 0], sizes = [1, 144], strides = [1, 1]} : vector<64x144xf32> to vector<1x144xf32>
    %c0_131 = arith.constant 0 : index
    %c2160 = arith.constant 2160 : index
    %191 = vector.load %arg15[%c0_131, %c2160] : memref<1x9216xf32, #tpu.memory_space<vmem>>, vector<1x144xf32>
    tpu.vector_store %arg15[%c0_131, %c2160], %190 {strides = array<i32>} : memref<1x9216xf32, #tpu.memory_space<vmem>>, vector<1x144xf32>,
    %192 = vector.extract_strided_slice %159 {offsets = [16, 0], sizes = [1, 144], strides = [1, 1]} : vector<64x144xf32> to vector<1x144xf32>
    %c0_132 = arith.constant 0 : index
    %c2304 = arith.constant 2304 : index
    %193 = vector.load %arg15[%c0_132, %c2304] : memref<1x9216xf32, #tpu.memory_space<vmem>>, vector<1x144xf32>
    tpu.vector_store %arg15[%c0_132, %c2304], %192 {strides = array<i32>} : memref<1x9216xf32, #tpu.memory_space<vmem>>, vector<1x144xf32>,
    %194 = vector.extract_strided_slice %159 {offsets = [17, 0], sizes = [1, 144], strides = [1, 1]} : vector<64x144xf32> to vector<1x144xf32>
    %c0_133 = arith.constant 0 : index
    %c2448 = arith.constant 2448 : index
    %195 = vector.load %arg15[%c0_133, %c2448] : memref<1x9216xf32, #tpu.memory_space<vmem>>, vector<1x144xf32>
    tpu.vector_store %arg15[%c0_133, %c2448], %194 {strides = array<i32>} : memref<1x9216xf32, #tpu.memory_space<vmem>>, vector<1x144xf32>,
    %196 = vector.extract_strided_slice %159 {offsets = [18, 0], sizes = [1, 144], strides = [1, 1]} : vector<64x144xf32> to vector<1x144xf32>
    %c0_134 = arith.constant 0 : index
    %c2592 = arith.constant 2592 : index
    %197 = vector.load %arg15[%c0_134, %c2592] : memref<1x9216xf32, #tpu.memory_space<vmem>>, vector<1x144xf32>
    tpu.vector_store %arg15[%c0_134, %c2592], %196 {strides = array<i32>} : memref<1x9216xf32, #tpu.memory_space<vmem>>, vector<1x144xf32>,
    %198 = vector.extract_strided_slice %159 {offsets = [19, 0], sizes = [1, 144], strides = [1, 1]} : vector<64x144xf32> to vector<1x144xf32>
    %c0_135 = arith.constant 0 : index
    %c2736 = arith.constant 2736 : index
    %199 = vector.load %arg15[%c0_135, %c2736] : memref<1x9216xf32, #tpu.memory_space<vmem>>, vector<1x144xf32>
    tpu.vector_store %arg15[%c0_135, %c2736], %198 {strides = array<i32>} : memref<1x9216xf32, #tpu.memory_space<vmem>>, vector<1x144xf32>,
    %200 = vector.extract_strided_slice %159 {offsets = [20, 0], sizes = [1, 144], strides = [1, 1]} : vector<64x144xf32> to vector<1x144xf32>
    %c0_136 = arith.constant 0 : index
    %c2880 = arith.constant 2880 : index
    %201 = vector.load %arg15[%c0_136, %c2880] : memref<1x9216xf32, #tpu.memory_space<vmem>>, vector<1x144xf32>
    tpu.vector_store %arg15[%c0_136, %c2880], %200 {strides = array<i32>} : memref<1x9216xf32, #tpu.memory_space<vmem>>, vector<1x144xf32>,
    %202 = vector.extract_strided_slice %159 {offsets = [21, 0], sizes = [1, 144], strides = [1, 1]} : vector<64x144xf32> to vector<1x144xf32>
    %c0_137 = arith.constant 0 : index
    %c3024 = arith.constant 3024 : index
    %203 = vector.load %arg15[%c0_137, %c3024] : memref<1x9216xf32, #tpu.memory_space<vmem>>, vector<1x144xf32>
    tpu.vector_store %arg15[%c0_137, %c3024], %202 {strides = array<i32>} : memref<1x9216xf32, #tpu.memory_space<vmem>>, vector<1x144xf32>,
    %204 = vector.extract_strided_slice %159 {offsets = [22, 0], sizes = [1, 144], strides = [1, 1]} : vector<64x144xf32> to vector<1x144xf32>
    %c0_138 = arith.constant 0 : index
    %c3168 = arith.constant 3168 : index
    %205 = vector.load %arg15[%c0_138, %c3168] : memref<1x9216xf32, #tpu.memory_space<vmem>>, vector<1x144xf32>
    tpu.vector_store %arg15[%c0_138, %c3168], %204 {strides = array<i32>} : memref<1x9216xf32, #tpu.memory_space<vmem>>, vector<1x144xf32>,
    %206 = vector.extract_strided_slice %159 {offsets = [23, 0], sizes = [1, 144], strides = [1, 1]} : vector<64x144xf32> to vector<1x144xf32>
    %c0_139 = arith.constant 0 : index
    %c3312 = arith.constant 3312 : index
    %207 = vector.load %arg15[%c0_139, %c3312] : memref<1x9216xf32, #tpu.memory_space<vmem>>, vector<1x144xf32>
    tpu.vector_store %arg15[%c0_139, %c3312], %206 {strides = array<i32>} : memref<1x9216xf32, #tpu.memory_space<vmem>>, vector<1x144xf32>,
    %208 = vector.extract_strided_slice %159 {offsets = [24, 0], sizes = [1, 144], strides = [1, 1]} : vector<64x144xf32> to vector<1x144xf32>
    %c0_140 = arith.constant 0 : index
    %c3456 = arith.constant 3456 : index
    %209 = vector.load %arg15[%c0_140, %c3456] : memref<1x9216xf32, #tpu.memory_space<vmem>>, vector<1x144xf32>
    tpu.vector_store %arg15[%c0_140, %c3456], %208 {strides = array<i32>} : memref<1x9216xf32, #tpu.memory_space<vmem>>, vector<1x144xf32>,
    %210 = vector.extract_strided_slice %159 {offsets = [25, 0], sizes = [1, 144], strides = [1, 1]} : vector<64x144xf32> to vector<1x144xf32>
    %c0_141 = arith.constant 0 : index
    %c3600 = arith.constant 3600 : index
    %211 = vector.load %arg15[%c0_141, %c3600] : memref<1x9216xf32, #tpu.memory_space<vmem>>, vector<1x144xf32>
    tpu.vector_store %arg15[%c0_141, %c3600], %210 {strides = array<i32>} : memref<1x9216xf32, #tpu.memory_space<vmem>>, vector<1x144xf32>,
    %212 = vector.extract_strided_slice %159 {offsets = [26, 0], sizes = [1, 144], strides = [1, 1]} : vector<64x144xf32> to vector<1x144xf32>
    %c0_142 = arith.constant 0 : index
    %c3744 = arith.constant 3744 : index
    %213 = vector.load %arg15[%c0_142, %c3744] : memref<1x9216xf32, #tpu.memory_space<vmem>>, vector<1x144xf32>
    tpu.vector_store %arg15[%c0_142, %c3744], %212 {strides = array<i32>} : memref<1x9216xf32, #tpu.memory_space<vmem>>, vector<1x144xf32>,
    %214 = vector.extract_strided_slice %159 {offsets = [27, 0], sizes = [1, 144], strides = [1, 1]} : vector<64x144xf32> to vector<1x144xf32>
    %c0_143 = arith.constant 0 : index
    %c3888 = arith.constant 3888 : index
    %215 = vector.load %arg15[%c0_143, %c3888] : memref<1x9216xf32, #tpu.memory_space<vmem>>, vector<1x144xf32>
    tpu.vector_store %arg15[%c0_143, %c3888], %214 {strides = array<i32>} : memref<1x9216xf32, #tpu.memory_space<vmem>>, vector<1x144xf32>,
    %216 = vector.extract_strided_slice %159 {offsets = [28, 0], sizes = [1, 144], strides = [1, 1]} : vector<64x144xf32> to vector<1x144xf32>
    %c0_144 = arith.constant 0 : index
    %c4032 = arith.constant 4032 : index
    %217 = vector.load %arg15[%c0_144, %c4032] : memref<1x9216xf32, #tpu.memory_space<vmem>>, vector<1x144xf32>
    tpu.vector_store %arg15[%c0_144, %c4032], %216 {strides = array<i32>} : memref<1x9216xf32, #tpu.memory_space<vmem>>, vector<1x144xf32>,
    %218 = vector.extract_strided_slice %159 {offsets = [29, 0], sizes = [1, 144], strides = [1, 1]} : vector<64x144xf32> to vector<1x144xf32>
    %c0_145 = arith.constant 0 : index
    %c4176 = arith.constant 4176 : index
    %219 = vector.load %arg15[%c0_145, %c4176] : memref<1x9216xf32, #tpu.memory_space<vmem>>, vector<1x144xf32>
    tpu.vector_store %arg15[%c0_145, %c4176], %218 {strides = array<i32>} : memref<1x9216xf32, #tpu.memory_space<vmem>>, vector<1x144xf32>,
    %220 = vector.extract_strided_slice %159 {offsets = [30, 0], sizes = [1, 144], strides = [1, 1]} : vector<64x144xf32> to vector<1x144xf32>
    %c0_146 = arith.constant 0 : index
    %c4320 = arith.constant 4320 : index
    %221 = vector.load %arg15[%c0_146, %c4320] : memref<1x9216xf32, #tpu.memory_space<vmem>>, vector<1x144xf32>
    tpu.vector_store %arg15[%c0_146, %c4320], %220 {strides = array<i32>} : memref<1x9216xf32, #tpu.memory_space<vmem>>, vector<1x144xf32>,
    %222 = vector.extract_strided_slice %159 {offsets = [31, 0], sizes = [1, 144], strides = [1, 1]} : vector<64x144xf32> to vector<1x144xf32>
    %c0_147 = arith.constant 0 : index
    %c4464 = arith.constant 4464 : index
    %223 = vector.load %arg15[%c0_147, %c4464] : memref<1x9216xf32, #tpu.memory_space<vmem>>, vector<1x144xf32>
    tpu.vector_store %arg15[%c0_147, %c4464], %222 {strides = array<i32>} : memref<1x9216xf32, #tpu.memory_space<vmem>>, vector<1x144xf32>,
    %224 = vector.extract_strided_slice %159 {offsets = [32, 0], sizes = [1, 144], strides = [1, 1]} : vector<64x144xf32> to vector<1x144xf32>
    %c0_148 = arith.constant 0 : index
    %c4608 = arith.constant 4608 : index
    %225 = vector.load %arg15[%c0_148, %c4608] : memref<1x9216xf32, #tpu.memory_space<vmem>>, vector<1x144xf32>
    tpu.vector_store %arg15[%c0_148, %c4608], %224 {strides = array<i32>} : memref<1x9216xf32, #tpu.memory_space<vmem>>, vector<1x144xf32>,
    %226 = vector.extract_strided_slice %159 {offsets = [33, 0], sizes = [1, 144], strides = [1, 1]} : vector<64x144xf32> to vector<1x144xf32>
    %c0_149 = arith.constant 0 : index
    %c4752 = arith.constant 4752 : index
    %227 = vector.load %arg15[%c0_149, %c4752] : memref<1x9216xf32, #tpu.memory_space<vmem>>, vector<1x144xf32>
    tpu.vector_store %arg15[%c0_149, %c4752], %226 {strides = array<i32>} : memref<1x9216xf32, #tpu.memory_space<vmem>>, vector<1x144xf32>,
    %228 = vector.extract_strided_slice %159 {offsets = [34, 0], sizes = [1, 144], strides = [1, 1]} : vector<64x144xf32> to vector<1x144xf32>
    %c0_150 = arith.constant 0 : index
    %c4896 = arith.constant 4896 : index
    %229 = vector.load %arg15[%c0_150, %c4896] : memref<1x9216xf32, #tpu.memory_space<vmem>>, vector<1x144xf32>
    tpu.vector_store %arg15[%c0_150, %c4896], %228 {strides = array<i32>} : memref<1x9216xf32, #tpu.memory_space<vmem>>, vector<1x144xf32>,
    %230 = vector.extract_strided_slice %159 {offsets = [35, 0], sizes = [1, 144], strides = [1, 1]} : vector<64x144xf32> to vector<1x144xf32>
    %c0_151 = arith.constant 0 : index
    %c5040 = arith.constant 5040 : index
    %231 = vector.load %arg15[%c0_151, %c5040] : memref<1x9216xf32, #tpu.memory_space<vmem>>, vector<1x144xf32>
    tpu.vector_store %arg15[%c0_151, %c5040], %230 {strides = array<i32>} : memref<1x9216xf32, #tpu.memory_space<vmem>>, vector<1x144xf32>,
    %232 = vector.extract_strided_slice %159 {offsets = [36, 0], sizes = [1, 144], strides = [1, 1]} : vector<64x144xf32> to vector<1x144xf32>
    %c0_152 = arith.constant 0 : index
    %c5184 = arith.constant 5184 : index
    %233 = vector.load %arg15[%c0_152, %c5184] : memref<1x9216xf32, #tpu.memory_space<vmem>>, vector<1x144xf32>
    tpu.vector_store %arg15[%c0_152, %c5184], %232 {strides = array<i32>} : memref<1x9216xf32, #tpu.memory_space<vmem>>, vector<1x144xf32>,
    %234 = vector.extract_strided_slice %159 {offsets = [37, 0], sizes = [1, 144], strides = [1, 1]} : vector<64x144xf32> to vector<1x144xf32>
    %c0_153 = arith.constant 0 : index
    %c5328 = arith.constant 5328 : index
    %235 = vector.load %arg15[%c0_153, %c5328] : memref<1x9216xf32, #tpu.memory_space<vmem>>, vector<1x144xf32>
    tpu.vector_store %arg15[%c0_153, %c5328], %234 {strides = array<i32>} : memref<1x9216xf32, #tpu.memory_space<vmem>>, vector<1x144xf32>,
    %236 = vector.extract_strided_slice %159 {offsets = [38, 0], sizes = [1, 144], strides = [1, 1]} : vector<64x144xf32> to vector<1x144xf32>
    %c0_154 = arith.constant 0 : index
    %c5472 = arith.constant 5472 : index
    %237 = vector.load %arg15[%c0_154, %c5472] : memref<1x9216xf32, #tpu.memory_space<vmem>>, vector<1x144xf32>
    tpu.vector_store %arg15[%c0_154, %c5472], %236 {strides = array<i32>} : memref<1x9216xf32, #tpu.memory_space<vmem>>, vector<1x144xf32>,
    %238 = vector.extract_strided_slice %159 {offsets = [39, 0], sizes = [1, 144], strides = [1, 1]} : vector<64x144xf32> to vector<1x144xf32>
    %c0_155 = arith.constant 0 : index
    %c5616 = arith.constant 5616 : index
    %239 = vector.load %arg15[%c0_155, %c5616] : memref<1x9216xf32, #tpu.memory_space<vmem>>, vector<1x144xf32>
    tpu.vector_store %arg15[%c0_155, %c5616], %238 {strides = array<i32>} : memref<1x9216xf32, #tpu.memory_space<vmem>>, vector<1x144xf32>,
    %240 = vector.extract_strided_slice %159 {offsets = [40, 0], sizes = [1, 144], strides = [1, 1]} : vector<64x144xf32> to vector<1x144xf32>
    %c0_156 = arith.constant 0 : index
    %c5760 = arith.constant 5760 : index
    %241 = vector.load %arg15[%c0_156, %c5760] : memref<1x9216xf32, #tpu.memory_space<vmem>>, vector<1x144xf32>
    tpu.vector_store %arg15[%c0_156, %c5760], %240 {strides = array<i32>} : memref<1x9216xf32, #tpu.memory_space<vmem>>, vector<1x144xf32>,
    %242 = vector.extract_strided_slice %159 {offsets = [41, 0], sizes = [1, 144], strides = [1, 1]} : vector<64x144xf32> to vector<1x144xf32>
    %c0_157 = arith.constant 0 : index
    %c5904 = arith.constant 5904 : index
    %243 = vector.load %arg15[%c0_157, %c5904] : memref<1x9216xf32, #tpu.memory_space<vmem>>, vector<1x144xf32>
    tpu.vector_store %arg15[%c0_157, %c5904], %242 {strides = array<i32>} : memref<1x9216xf32, #tpu.memory_space<vmem>>, vector<1x144xf32>,
    %244 = vector.extract_strided_slice %159 {offsets = [42, 0], sizes = [1, 144], strides = [1, 1]} : vector<64x144xf32> to vector<1x144xf32>
    %c0_158 = arith.constant 0 : index
    %c6048 = arith.constant 6048 : index
    %245 = vector.load %arg15[%c0_158, %c6048] : memref<1x9216xf32, #tpu.memory_space<vmem>>, vector<1x144xf32>
    tpu.vector_store %arg15[%c0_158, %c6048], %244 {strides = array<i32>} : memref<1x9216xf32, #tpu.memory_space<vmem>>, vector<1x144xf32>,
    %246 = vector.extract_strided_slice %159 {offsets = [43, 0], sizes = [1, 144], strides = [1, 1]} : vector<64x144xf32> to vector<1x144xf32>
    %c0_159 = arith.constant 0 : index
    %c6192 = arith.constant 6192 : index
    %247 = vector.load %arg15[%c0_159, %c6192] : memref<1x9216xf32, #tpu.memory_space<vmem>>, vector<1x144xf32>
    tpu.vector_store %arg15[%c0_159, %c6192], %246 {strides = array<i32>} : memref<1x9216xf32, #tpu.memory_space<vmem>>, vector<1x144xf32>,
    %248 = vector.extract_strided_slice %159 {offsets = [44, 0], sizes = [1, 144], strides = [1, 1]} : vector<64x144xf32> to vector<1x144xf32>
    %c0_160 = arith.constant 0 : index
    %c6336 = arith.constant 6336 : index
    %249 = vector.load %arg15[%c0_160, %c6336] : memref<1x9216xf32, #tpu.memory_space<vmem>>, vector<1x144xf32>
    tpu.vector_store %arg15[%c0_160, %c6336], %248 {strides = array<i32>} : memref<1x9216xf32, #tpu.memory_space<vmem>>, vector<1x144xf32>,
    %250 = vector.extract_strided_slice %159 {offsets = [45, 0], sizes = [1, 144], strides = [1, 1]} : vector<64x144xf32> to vector<1x144xf32>
    %c0_161 = arith.constant 0 : index
    %c6480 = arith.constant 6480 : index
    %251 = vector.load %arg15[%c0_161, %c6480] : memref<1x9216xf32, #tpu.memory_space<vmem>>, vector<1x144xf32>
    tpu.vector_store %arg15[%c0_161, %c6480], %250 {strides = array<i32>} : memref<1x9216xf32, #tpu.memory_space<vmem>>, vector<1x144xf32>,
    %252 = vector.extract_strided_slice %159 {offsets = [46, 0], sizes = [1, 144], strides = [1, 1]} : vector<64x144xf32> to vector<1x144xf32>
    %c0_162 = arith.constant 0 : index
    %c6624 = arith.constant 6624 : index
    %253 = vector.load %arg15[%c0_162, %c6624] : memref<1x9216xf32, #tpu.memory_space<vmem>>, vector<1x144xf32>
    tpu.vector_store %arg15[%c0_162, %c6624], %252 {strides = array<i32>} : memref<1x9216xf32, #tpu.memory_space<vmem>>, vector<1x144xf32>,
    %254 = vector.extract_strided_slice %159 {offsets = [47, 0], sizes = [1, 144], strides = [1, 1]} : vector<64x144xf32> to vector<1x144xf32>
    %c0_163 = arith.constant 0 : index
    %c6768 = arith.constant 6768 : index
    %255 = vector.load %arg15[%c0_163, %c6768] : memref<1x9216xf32, #tpu.memory_space<vmem>>, vector<1x144xf32>
    tpu.vector_store %arg15[%c0_163, %c6768], %254 {strides = array<i32>} : memref<1x9216xf32, #tpu.memory_space<vmem>>, vector<1x144xf32>,
    %256 = vector.extract_strided_slice %159 {offsets = [48, 0], sizes = [1, 144], strides = [1, 1]} : vector<64x144xf32> to vector<1x144xf32>
    %c0_164 = arith.constant 0 : index
    %c6912 = arith.constant 6912 : index
    %257 = vector.load %arg15[%c0_164, %c6912] : memref<1x9216xf32, #tpu.memory_space<vmem>>, vector<1x144xf32>
    tpu.vector_store %arg15[%c0_164, %c6912], %256 {strides = array<i32>} : memref<1x9216xf32, #tpu.memory_space<vmem>>, vector<1x144xf32>,
    %258 = vector.extract_strided_slice %159 {offsets = [49, 0], sizes = [1, 144], strides = [1, 1]} : vector<64x144xf32> to vector<1x144xf32>
    %c0_165 = arith.constant 0 : index
    %c7056 = arith.constant 7056 : index
    %259 = vector.load %arg15[%c0_165, %c7056] : memref<1x9216xf32, #tpu.memory_space<vmem>>, vector<1x144xf32>
    tpu.vector_store %arg15[%c0_165, %c7056], %258 {strides = array<i32>} : memref<1x9216xf32, #tpu.memory_space<vmem>>, vector<1x144xf32>,
    %260 = vector.extract_strided_slice %159 {offsets = [50, 0], sizes = [1, 144], strides = [1, 1]} : vector<64x144xf32> to vector<1x144xf32>
    %c0_166 = arith.constant 0 : index
    %c7200 = arith.constant 7200 : index
    %261 = vector.load %arg15[%c0_166, %c7200] : memref<1x9216xf32, #tpu.memory_space<vmem>>, vector<1x144xf32>
    tpu.vector_store %arg15[%c0_166, %c7200], %260 {strides = array<i32>} : memref<1x9216xf32, #tpu.memory_space<vmem>>, vector<1x144xf32>,
    %262 = vector.extract_strided_slice %159 {offsets = [51, 0], sizes = [1, 144], strides = [1, 1]} : vector<64x144xf32> to vector<1x144xf32>
    %c0_167 = arith.constant 0 : index
    %c7344 = arith.constant 7344 : index
    %263 = vector.load %arg15[%c0_167, %c7344] : memref<1x9216xf32, #tpu.memory_space<vmem>>, vector<1x144xf32>
    tpu.vector_store %arg15[%c0_167, %c7344], %262 {strides = array<i32>} : memref<1x9216xf32, #tpu.memory_space<vmem>>, vector<1x144xf32>,
    %264 = vector.extract_strided_slice %159 {offsets = [52, 0], sizes = [1, 144], strides = [1, 1]} : vector<64x144xf32> to vector<1x144xf32>
    %c0_168 = arith.constant 0 : index
    %c7488 = arith.constant 7488 : index
    %265 = vector.load %arg15[%c0_168, %c7488] : memref<1x9216xf32, #tpu.memory_space<vmem>>, vector<1x144xf32>
    tpu.vector_store %arg15[%c0_168, %c7488], %264 {strides = array<i32>} : memref<1x9216xf32, #tpu.memory_space<vmem>>, vector<1x144xf32>,
    %266 = vector.extract_strided_slice %159 {offsets = [53, 0], sizes = [1, 144], strides = [1, 1]} : vector<64x144xf32> to vector<1x144xf32>
    %c0_169 = arith.constant 0 : index
    %c7632 = arith.constant 7632 : index
    %267 = vector.load %arg15[%c0_169, %c7632] : memref<1x9216xf32, #tpu.memory_space<vmem>>, vector<1x144xf32>
    tpu.vector_store %arg15[%c0_169, %c7632], %266 {strides = array<i32>} : memref<1x9216xf32, #tpu.memory_space<vmem>>, vector<1x144xf32>,
    %268 = vector.extract_strided_slice %159 {offsets = [54, 0], sizes = [1, 144], strides = [1, 1]} : vector<64x144xf32> to vector<1x144xf32>
    %c0_170 = arith.constant 0 : index
    %c7776 = arith.constant 7776 : index
    %269 = vector.load %arg15[%c0_170, %c7776] : memref<1x9216xf32, #tpu.memory_space<vmem>>, vector<1x144xf32>
    tpu.vector_store %arg15[%c0_170, %c7776], %268 {strides = array<i32>} : memref<1x9216xf32, #tpu.memory_space<vmem>>, vector<1x144xf32>,
    %270 = vector.extract_strided_slice %159 {offsets = [55, 0], sizes = [1, 144], strides = [1, 1]} : vector<64x144xf32> to vector<1x144xf32>
    %c0_171 = arith.constant 0 : index
    %c7920 = arith.constant 7920 : index
    %271 = vector.load %arg15[%c0_171, %c7920] : memref<1x9216xf32, #tpu.memory_space<vmem>>, vector<1x144xf32>
    tpu.vector_store %arg15[%c0_171, %c7920], %270 {strides = array<i32>} : memref<1x9216xf32, #tpu.memory_space<vmem>>, vector<1x144xf32>,
    %272 = vector.extract_strided_slice %159 {offsets = [56, 0], sizes = [1, 144], strides = [1, 1]} : vector<64x144xf32> to vector<1x144xf32>
    %c0_172 = arith.constant 0 : index
    %c8064 = arith.constant 8064 : index
    %273 = vector.load %arg15[%c0_172, %c8064] : memref<1x9216xf32, #tpu.memory_space<vmem>>, vector<1x144xf32>
    tpu.vector_store %arg15[%c0_172, %c8064], %272 {strides = array<i32>} : memref<1x9216xf32, #tpu.memory_space<vmem>>, vector<1x144xf32>,
    %274 = vector.extract_strided_slice %159 {offsets = [57, 0], sizes = [1, 144], strides = [1, 1]} : vector<64x144xf32> to vector<1x144xf32>
    %c0_173 = arith.constant 0 : index
    %c8208 = arith.constant 8208 : index
    %275 = vector.load %arg15[%c0_173, %c8208] : memref<1x9216xf32, #tpu.memory_space<vmem>>, vector<1x144xf32>
    tpu.vector_store %arg15[%c0_173, %c8208], %274 {strides = array<i32>} : memref<1x9216xf32, #tpu.memory_space<vmem>>, vector<1x144xf32>,
    %276 = vector.extract_strided_slice %159 {offsets = [58, 0], sizes = [1, 144], strides = [1, 1]} : vector<64x144xf32> to vector<1x144xf32>
    %c0_174 = arith.constant 0 : index
    %c8352 = arith.constant 8352 : index
    %277 = vector.load %arg15[%c0_174, %c8352] : memref<1x9216xf32, #tpu.memory_space<vmem>>, vector<1x144xf32>
    tpu.vector_store %arg15[%c0_174, %c8352], %276 {strides = array<i32>} : memref<1x9216xf32, #tpu.memory_space<vmem>>, vector<1x144xf32>,
    %278 = vector.extract_strided_slice %159 {offsets = [59, 0], sizes = [1, 144], strides = [1, 1]} : vector<64x144xf32> to vector<1x144xf32>
    %c0_175 = arith.constant 0 : index
    %c8496 = arith.constant 8496 : index
    %279 = vector.load %arg15[%c0_175, %c8496] : memref<1x9216xf32, #tpu.memory_space<vmem>>, vector<1x144xf32>
    tpu.vector_store %arg15[%c0_175, %c8496], %278 {strides = array<i32>} : memref<1x9216xf32, #tpu.memory_space<vmem>>, vector<1x144xf32>,
    %280 = vector.extract_strided_slice %159 {offsets = [60, 0], sizes = [1, 144], strides = [1, 1]} : vector<64x144xf32> to vector<1x144xf32>
    %c0_176 = arith.constant 0 : index
    %c8640 = arith.constant 8640 : index
    %281 = vector.load %arg15[%c0_176, %c8640] : memref<1x9216xf32, #tpu.memory_space<vmem>>, vector<1x144xf32>
    tpu.vector_store %arg15[%c0_176, %c8640], %280 {strides = array<i32>} : memref<1x9216xf32, #tpu.memory_space<vmem>>, vector<1x144xf32>,
    %282 = vector.extract_strided_slice %159 {offsets = [61, 0], sizes = [1, 144], strides = [1, 1]} : vector<64x144xf32> to vector<1x144xf32>
    %c0_177 = arith.constant 0 : index
    %c8784 = arith.constant 8784 : index
    %283 = vector.load %arg15[%c0_177, %c8784] : memref<1x9216xf32, #tpu.memory_space<vmem>>, vector<1x144xf32>
    tpu.vector_store %arg15[%c0_177, %c8784], %282 {strides = array<i32>} : memref<1x9216xf32, #tpu.memory_space<vmem>>, vector<1x144xf32>,
    %284 = vector.extract_strided_slice %159 {offsets = [62, 0], sizes = [1, 144], strides = [1, 1]} : vector<64x144xf32> to vector<1x144xf32>
    %c0_178 = arith.constant 0 : index
    %c8928 = arith.constant 8928 : index
    %285 = vector.load %arg15[%c0_178, %c8928] : memref<1x9216xf32, #tpu.memory_space<vmem>>, vector<1x144xf32>
    tpu.vector_store %arg15[%c0_178, %c8928], %284 {strides = array<i32>} : memref<1x9216xf32, #tpu.memory_space<vmem>>, vector<1x144xf32>,
    %286 = vector.extract_strided_slice %159 {offsets = [63, 0], sizes = [1, 144], strides = [1, 1]} : vector<64x144xf32> to vector<1x144xf32>
    %c0_179 = arith.constant 0 : index
    %c9072 = arith.constant 9072 : index
    %287 = vector.load %arg15[%c0_179, %c9072] : memref<1x9216xf32, #tpu.memory_space<vmem>>, vector<1x144xf32>
    tpu.vector_store %arg15[%c0_179, %c9072], %286 {strides = array<i32>} : memref<1x9216xf32, #tpu.memory_space<vmem>>, vector<1x144xf32>,
    tpu.wait_dma2 semaphore(%arg17 : memref<!tpu.dma_semaphore, #tpu.memory_space<semaphore_mem>>) src(%arg7 : memref<9216x128xbf16, #tpu.memory_space<any>>) dst(%arg16 : memref<9216x128xbf16, #tpu.memory_space<vmem>>)
    %c0_180 = arith.constant 0 : index
    %c0_181 = arith.constant 0 : index
    %288 = vector.load %arg15[%c0_180, %c0_181] : memref<1x9216xf32, #tpu.memory_space<vmem>>, vector<1x9216xf32>
    %289 = arith.truncf %288 : vector<1x9216xf32> to vector<1x9216xbf16>
    %c0_182 = arith.constant 0 : index
    %c0_183 = arith.constant 0 : index
    %290 = vector.load %arg16[%c0_182, %c0_183] : memref<9216x128xbf16, #tpu.memory_space<vmem>>, vector<9216x128xbf16>
    %cst_184 = arith.constant dense<0.000000e+00> : vector<1x128xf32>
    %291 = tpu.matmul %289, %290, %cst_184 {dimension_numbers = #tpu.dot_dimension_numbers<[1], [0], [0], [1], [0, 0, 1, 1], [], []>} : vector<1x9216xbf16>, vector<9216x128xbf16>, vector<1x128xf32> -> vector<1x128xf32>
    %c0_185 = arith.constant 0 : index
    %c0_186 = arith.constant 0 : index
    %292 = vector.load %arg8[%c0_185, %c0_186] : memref<1x128xf32, #tpu.memory_space<vmem>>, vector<1x128xf32>
    %293 = arith.addf %291, %292 : vector<1x128xf32>
    %cst_187 = arith.constant 0.000000e+00 : f32
    %294 = vector.broadcast %cst_187 : f32 to vector<1x128xf32>
    %295 = arith.maximumf %293, %294 : vector<1x128xf32>
    %c0_188 = arith.constant 0 : index
    %c0_189 = arith.constant 0 : index
    %296 = vector.load %arg9[%c0_188, %c0_189] : memref<128x10xf32, #tpu.memory_space<vmem>>, vector<128x10xf32>
    %cst_190 = arith.constant dense<0.000000e+00> : vector<1x10xf32>
    %297 = tpu.matmul %295, %296, %cst_190 {dimension_numbers = #tpu.dot_dimension_numbers<[1], [0], [0], [1], [0, 0, 1, 1], [], []>} : vector<1x128xf32>, vector<128x10xf32>, vector<1x10xf32> -> vector<1x10xf32>
    %c0_191 = arith.constant 0 : index
    %c0_192 = arith.constant 0 : index
    %298 = vector.load %arg10[%c0_191, %c0_192] : memref<1x10xf32, #tpu.memory_space<vmem>>, vector<1x10xf32>
    %299 = arith.addf %297, %298 : vector<1x10xf32>
    %c0_193 = arith.constant 0 : index
    %c0_194 = arith.constant 0 : index
    %c0_195 = arith.constant 0 : index
    %300 = vector.load %arg11[%c0_193, %c0_194, %c0_195] : memref<1x1x10xf32, #tpu.memory_space<vmem>>, vector<1x1x10xf32>
    %301 = vector.shape_cast %300 : vector<1x1x10xf32> to vector<1x10xf32>
    %302 = vector.shape_cast %299 : vector<1x10xf32> to vector<1x1x10xf32>
    tpu.vector_store %arg11[%c0_193, %c0_194, %c0_195], %302 {strides = array<i32>} : memref<1x1x10xf32, #tpu.memory_space<vmem>>, vector<1x1x10xf32>,
    return
  }
  func.func @transform_0(%arg0: i32) -> (i32, i32, i32, i32) {
    %c0_i32 = arith.constant 0 : i32
    %c0_i32_0 = arith.constant 0 : i32
    %c0_i32_1 = arith.constant 0 : i32
    %c0_i32_2 = arith.constant 0 : i32
    return %arg0, %c0_i32, %c0_i32_0, %c0_i32_1 : i32, i32, i32, i32
  }
  func.func @transform_1(%arg0: i32) -> (i32, i32, i32) {
    %c0_i32 = arith.constant 0 : i32
    %c0_i32_0 = arith.constant 0 : i32
    %c0_i32_1 = arith.constant 0 : i32
    %c0_i32_2 = arith.constant 0 : i32
    return %c0_i32, %c0_i32_0, %c0_i32_1 : i32, i32, i32
  }
  func.func @transform_2(%arg0: i32) -> (i32, i32) {
    %c0_i32 = arith.constant 0 : i32
    %c0_i32_0 = arith.constant 0 : i32
    %c0_i32_1 = arith.constant 0 : i32
    return %c0_i32, %c0_i32_0 : i32, i32
  }
  func.func @transform_3(%arg0: i32) -> (i32, i32) {
    %c0_i32 = arith.constant 0 : i32
    %c0_i32_0 = arith.constant 0 : i32
    %c0_i32_1 = arith.constant 0 : i32
    return %c0_i32, %c0_i32_0 : i32, i32
  }
  func.func @transform_4(%arg0: i32) -> (i32, i32) {
    %c0_i32 = arith.constant 0 : i32
    %c0_i32_0 = arith.constant 0 : i32
    %c0_i32_1 = arith.constant 0 : i32
    return %c0_i32, %c0_i32_0 : i32, i32
  }
  func.func @transform_5(%arg0: i32) -> (i32, i32) {
    %c0_i32 = arith.constant 0 : i32
    %c0_i32_0 = arith.constant 0 : i32
    %c0_i32_1 = arith.constant 0 : i32
    return %c0_i32, %c0_i32_0 : i32, i32
  }
  func.func @transform_7(%arg0: i32) -> (i32, i32) {
    %c0_i32 = arith.constant 0 : i32
    %c0_i32_0 = arith.constant 0 : i32
    %c0_i32_1 = arith.constant 0 : i32
    return %c0_i32, %c0_i32_0 : i32, i32
  }
  func.func @transform_8(%arg0: i32) -> (i32, i32) {
    %c0_i32 = arith.constant 0 : i32
    %c0_i32_0 = arith.constant 0 : i32
    %c0_i32_1 = arith.constant 0 : i32
    return %c0_i32, %c0_i32_0 : i32, i32
  }
  func.func @transform_9(%arg0: i32) -> (i32, i32) {
    %c0_i32 = arith.constant 0 : i32
    %c0_i32_0 = arith.constant 0 : i32
    %c0_i32_1 = arith.constant 0 : i32
    return %c0_i32, %c0_i32_0 : i32, i32
  }
  func.func @transform_10(%arg0: i32) -> (i32, i32, i32) {
    %c0_i32 = arith.constant 0 : i32
    %c0_i32_0 = arith.constant 0 : i32
    %c0_i32_1 = arith.constant 0 : i32
    return %arg0, %c0_i32, %c0_i32_0 : i32, i32, i32
  }
}

</mosaic_0001>

<llo_original>
// kernel: net_forward.1
$region0: #{net_forward.1}
  #allocation0 [shape = 'u32[]', space=smem, size = 0x4, offset = 0x4, fixed_abs, tag = 'smem constant byte address 0x4 - core index']
  #allocation1 [shape = 'u32[144,128]{1,0:T(1,128)}', space=vmem, size = 0x12000, scoped, tag = 'internal scratch']
  #allocation2 [shape = 'f32[1,1024]{1,0:T(1,128)}', space=vmem, size = 0x1000, scoped, tag = 'scratch operand']
  #allocation3 [shape = 'bf16[32,1024]{1,0:T(16,128)(2,1)}', space=vmem, size = 0x10000, scoped, tag = 'scratch operand']
  #allocation4 [shape = 'f32[64,1024]{1,0:T(8,128)}', space=vmem, size = 0x40000, scoped, tag = 'scratch operand']
  #allocation5 [shape = 'f32[1,9216]{1,0:T(1,128)}', space=vmem, size = 0x9000, scoped, tag = 'scratch operand']
  #allocation6 [shape = 'bf16[9216,128]{1,0:T(16,128)(2,1)}', space=vmem, size = 0x240000, scoped, tag = 'scratch operand']
  #allocation7 [shape = 's32[1]{0}', space=sflag, size = 0x4, scoped, tag = 'scratch operand']
  #allocation15 [shape = 's32[]', space=sflag, size = 0x4, offset = 0, fixed_abs, tag = 'sflag constant byte address 0x0 - dummy sync flag']
  #allocation16 [shape = 's32[]', space=sflag, size = 0x4, offset = 0, fixed_abs, tag = 'sflag constant byte address 0x0 - dummy sync flag']
  #allocation17 [shape = 'u32[]', space=smem, size = 0x4, offset = 0x44, fixed_abs, tag = 'smem constant byte address 0x44 - assertion arg 0']
  #allocation18 [shape = 'u32[]', space=smem, size = 0x4, offset = 0x48, fixed_abs, tag = 'smem constant byte address 0x48 - assertion arg 1']
  %s0 = inlined_call_operand.vmem [shape: f32[2,1,28,28], index: 0, kind: input, shape index: {}]
  %s1 = inlined_call_operand.vmem [shape: f32[9,32,1], index: 1, kind: input, shape index: {}]
  %s2 = inlined_call_operand.vmem [shape: f32[32,1], index: 2, kind: input, shape index: {}]
  %s3 = inlined_call_operand.hbm [shape: bf16[64,288], index: 3, kind: input, shape index: {}]
  %s4 = inlined_call_operand.vmem [shape: f32[64,1], index: 4, kind: input, shape index: {}]
  %s5 = inlined_call_operand.vmem [shape: bf16[896,144], index: 5, kind: input, shape index: {}]
  %s6 = inlined_call_operand.hbm [shape: bf16[9216,128], index: 6, kind: input, shape index: {}]
  %s7 = inlined_call_operand.hbm [shape: f32[1,128], index: 7, kind: input, shape index: {}]
  %s8 = inlined_call_operand.vmem [shape: f32[128,10], index: 8, kind: input, shape index: {}]
  %s9 = inlined_call_operand.hbm [shape: f32[1,10], index: 9, kind: input, shape index: {}]
  %s10 = inlined_call_operand.hbm [shape: f32[2,1,10], index: 10, kind: output, shape index: {}]
  %s11 = sld [smem:[#allocation0]]
  $region85: #{net_forward.1} parent=0
    _
  %s13 = ssub.s32 1, %s11
  %s14 = scalar_select 0, %s13, %s11
  $region1: #{net_forward.1} parent=0
    #allocation8 [shape = 'u8[49152]{0}', space=vmem, size = 0xc000, scoped, tag = 'input window, operand 3, single buffered']
    #allocation9 [shape = 's32[2]{0}', space=sflag, size = 0x8, scoped, tag = 'scoped memory for net_forward.1']
    #allocation10 [shape = 's32[2]{0}', space=sflag, size = 0x8, scoped, tag = 'scoped memory for net_forward.1']
    #allocation11 [shape = 'u8[512]{0}', space=vmem, size = 0x400, scoped, tag = 'input window, operand 7, single buffered']
    #allocation12 [shape = 's32[1]{0}', space=sflag, size = 0x4, scoped, tag = 'scoped memory for net_forward.1']
    #allocation13 [shape = 'u8[512]{0}', space=vmem, size = 0x400, scoped, tag = 'input window, operand 9, single buffered']
    #allocation14 [shape = 'u8[1024]{0}', space=vmem, size = 0x400, scoped, tag = 'output window, operand 0']
    %15 = vsyncpa [#allocation9], 0
    %16 = vsyncpa [#allocation12], 0
    %17 = vsyncpa [#allocation10], 0
    %s18 = scalar_lea.sflag [#allocation10], 1
    %19 = vsyncpa %s18, 0
    loop: start=0, step=1, limit=4
    $region2: #{net_forward.1} parent=1 // loop_pre_header
      _
    $region3: #{net_forward.1} parent=1 // loop_header
      %s21 = sphi 0, %s25
      %p22 = scmp.ge.s32.totalorder %s21, 4
      %s31 = sphi 0, %s33
      %s34 = sphi 0, %s31
      %s35 = sphi 0, %s34
      %s51 = sphi 0, %s35
      %s55 = sphi 0, %s55
      %s57 = sphi 0, %s55
      %s58 = sphi 0, %s57
      %s72 = sphi 0, %s58
      %s76 = sphi 0, %s76
      %s78 = sphi 0, %s76
      %s79 = sphi 0, %s78
      %s93 = sphi 0, %s79
      %s97 = sphi 0, %s97
      %s99 = sphi 0, %s97
      %s100 = sphi 0, %s99
      %s114 = sphi 0, %s100
      %s118 = sphi 0, %s118
      %s120 = sphi 0, %s118
      %s121 = sphi 0, %s120
      %s135 = sphi 0, %s121
      %s139 = sphi 0, %s139
      %s141 = sphi 0, %s139
      %s142 = sphi 0, %s141
      %s156 = sphi 0, %s142
      %s160 = sphi 0, %s160
      %s162 = sphi 0, %s160
      %s163 = sphi 0, %s162
      %s177 = sphi 0, %s163
      %s181 = sphi 0, %s181
      %s183 = sphi 0, %s181
      %s184 = sphi 0, %s183
      %s198 = sphi 0, %s184
      %s202 = sphi 0, %s202
      %s204 = sphi 0, %s202
      %s205 = sphi 0, %s204
      %s219 = sphi 0, %s205
      %s225 = sphi 0, %s227
      %s228 = sphi 0, %s225
      %s229 = sphi 0, %s228
      %s245 = sphi 0, %s229
    $region4: #{net_forward.1} parent=1 // loop_header_branch
      %24 = sbr.rel (%p22) target = $region8
    $region5: #{net_forward.1} parent=1 // loop_body
      %s26 = ssub.s32 %s21, 1
      %s27 = ssub.s32 %s21, 2
      %s28 = sadd.s32 %s21, 1
      %s29 = ssub.s32 %s21, %s28
      %p30 = scmp.eq.s32.totalorder %s29, 0
      %s32 = sadd.s32 %s31, 1
      %s33 = scalar_select %p30, %s31, %s32
      %p36 = pneg %p30
      %p37 = scmp.eq.s32.totalorder %s21, 1
      %p38 = por %p36, %p37
      %p39 = scmp.ne.s32.totalorder %s31, %s34
      %p40 = scmp.eq.s32.totalorder %s21, 0
      %p41 = por %p39, %p40
      %p42 = scmp.ne.s32.totalorder %s31, %s34
      %p43 = scmp.eq.s32.totalorder %s26, 1
      %p44 = por %p42, %p43
      %p45 = scmp.ne.s32.totalorder %s34, %s35
      %p46 = scmp.eq.s32.totalorder %s26, 0
      %p47 = por %p45, %p46
      %p48 = scmp.ne.s32.totalorder %s34, %s35
      %p49 = scmp.eq.s32.totalorder %s27, 1
      %p50 = por %p48, %p49
      %p52 = scmp.ne.s32.totalorder %s35, %s51
      %p53 = scmp.eq.s32.totalorder %s27, 0
      %p54 = por %p52, %p53
      %s56 = sadd.s32 %s55, 1
      %p59 = scmp.eq.s32.totalorder %s21, 1
      %p60 = scmp.ne.s32.totalorder %s55, %s57
      %p61 = scmp.eq.s32.totalorder %s21, 0
      %p62 = por %p60, %p61
      %p63 = scmp.ne.s32.totalorder %s55, %s57
      %p64 = scmp.eq.s32.totalorder %s26, 1
      %p65 = por %p63, %p64
      %p66 = scmp.ne.s32.totalorder %s57, %s58
      %p67 = scmp.eq.s32.totalorder %s26, 0
      %p68 = por %p66, %p67
      %p69 = scmp.ne.s32.totalorder %s57, %s58
      %p70 = scmp.eq.s32.totalorder %s27, 1
      %p71 = por %p69, %p70
      %p73 = scmp.ne.s32.totalorder %s58, %s72
      %p74 = scmp.eq.s32.totalorder %s27, 0
      %p75 = por %p73, %p74
      %s77 = sadd.s32 %s76, 1
      %p80 = scmp.eq.s32.totalorder %s21, 1
      %p81 = scmp.ne.s32.totalorder %s76, %s78
      %p82 = scmp.eq.s32.totalorder %s21, 0
      %p83 = por %p81, %p82
      %p84 = scmp.ne.s32.totalorder %s76, %s78
      %p85 = scmp.eq.s32.totalorder %s26, 1
      %p86 = por %p84, %p85
      %p87 = scmp.ne.s32.totalorder %s78, %s79
      %p88 = scmp.eq.s32.totalorder %s26, 0
      %p89 = por %p87, %p88
      %p90 = scmp.ne.s32.totalorder %s78, %s79
      %p91 = scmp.eq.s32.totalorder %s27, 1
      %p92 = por %p90, %p91
      %p94 = scmp.ne.s32.totalorder %s79, %s93
      %p95 = scmp.eq.s32.totalorder %s27, 0
      %p96 = por %p94, %p95
      %s98 = sadd.s32 %s97, 1
      %p101 = scmp.eq.s32.totalorder %s21, 1
      %p102 = scmp.ne.s32.totalorder %s97, %s99
      %p103 = scmp.eq.s32.totalorder %s21, 0
      %p104 = por %p102, %p103
      %p105 = scmp.ne.s32.totalorder %s97, %s99
      %p106 = scmp.eq.s32.totalorder %s26, 1
      %p107 = por %p105, %p106
      %p108 = scmp.ne.s32.totalorder %s99, %s100
      %p109 = scmp.eq.s32.totalorder %s26, 0
      %p110 = por %p108, %p109
      %p111 = scmp.ne.s32.totalorder %s99, %s100
      %p112 = scmp.eq.s32.totalorder %s27, 1
      %p113 = por %p111, %p112
      %p115 = scmp.ne.s32.totalorder %s100, %s114
      %p116 = scmp.eq.s32.totalorder %s27, 0
      %p117 = por %p115, %p116
      %s119 = sadd.s32 %s118, 1
      %p122 = scmp.eq.s32.totalorder %s21, 1
      %p123 = scmp.ne.s32.totalorder %s118, %s120
      %p124 = scmp.eq.s32.totalorder %s21, 0
      %p125 = por %p123, %p124
      %p126 = scmp.ne.s32.totalorder %s118, %s120
      %p127 = scmp.eq.s32.totalorder %s26, 1
      %p128 = por %p126, %p127
      %p129 = scmp.ne.s32.totalorder %s120, %s121
      %p130 = scmp.eq.s32.totalorder %s26, 0
      %p131 = por %p129, %p130
      %p132 = scmp.ne.s32.totalorder %s120, %s121
      %p133 = scmp.eq.s32.totalorder %s27, 1
      %p134 = por %p132, %p133
      %p136 = scmp.ne.s32.totalorder %s121, %s135
      %p137 = scmp.eq.s32.totalorder %s27, 0
      %p138 = por %p136, %p137
      %s140 = sadd.s32 %s139, 1
      %p143 = scmp.eq.s32.totalorder %s21, 1
      %p144 = scmp.ne.s32.totalorder %s139, %s141
      %p145 = scmp.eq.s32.totalorder %s21, 0
      %p146 = por %p144, %p145
      %p147 = scmp.ne.s32.totalorder %s139, %s141
      %p148 = scmp.eq.s32.totalorder %s26, 1
      %p149 = por %p147, %p148
      %p150 = scmp.ne.s32.totalorder %s141, %s142
      %p151 = scmp.eq.s32.totalorder %s26, 0
      %p152 = por %p150, %p151
      %p153 = scmp.ne.s32.totalorder %s141, %s142
      %p154 = scmp.eq.s32.totalorder %s27, 1
      %p155 = por %p153, %p154
      %p157 = scmp.ne.s32.totalorder %s142, %s156
      %p158 = scmp.eq.s32.totalorder %s27, 0
      %p159 = por %p157, %p158
      %s161 = sadd.s32 %s160, 1
      %p164 = scmp.eq.s32.totalorder %s21, 1
      %p165 = scmp.ne.s32.totalorder %s160, %s162
      %p166 = scmp.eq.s32.totalorder %s21, 0
      %p167 = por %p165, %p166
      %p168 = scmp.ne.s32.totalorder %s160, %s162
      %p169 = scmp.eq.s32.totalorder %s26, 1
      %p170 = por %p168, %p169
      %p171 = scmp.ne.s32.totalorder %s162, %s163
      %p172 = scmp.eq.s32.totalorder %s26, 0
      %p173 = por %p171, %p172
      %p174 = scmp.ne.s32.totalorder %s162, %s163
      %p175 = scmp.eq.s32.totalorder %s27, 1
      %p176 = por %p174, %p175
      %p178 = scmp.ne.s32.totalorder %s163, %s177
      %p179 = scmp.eq.s32.totalorder %s27, 0
      %p180 = por %p178, %p179
      %s182 = sadd.s32 %s181, 1
      %p185 = scmp.eq.s32.totalorder %s21, 1
      %p186 = scmp.ne.s32.totalorder %s181, %s183
      %p187 = scmp.eq.s32.totalorder %s21, 0
      %p188 = por %p186, %p187
      %p189 = scmp.ne.s32.totalorder %s181, %s183
      %p190 = scmp.eq.s32.totalorder %s26, 1
      %p191 = por %p189, %p190
      %p192 = scmp.ne.s32.totalorder %s183, %s184
      %p193 = scmp.eq.s32.totalorder %s26, 0
      %p194 = por %p192, %p193
      %p195 = scmp.ne.s32.totalorder %s183, %s184
      %p196 = scmp.eq.s32.totalorder %s27, 1
      %p197 = por %p195, %p196
      %p199 = scmp.ne.s32.totalorder %s184, %s198
      %p200 = scmp.eq.s32.totalorder %s27, 0
      %p201 = por %p199, %p200
      %s203 = sadd.s32 %s202, 1
      %p206 = scmp.eq.s32.totalorder %s21, 1
      %p207 = scmp.ne.s32.totalorder %s202, %s204
      %p208 = scmp.eq.s32.totalorder %s21, 0
      %p209 = por %p207, %p208
      %p210 = scmp.ne.s32.totalorder %s202, %s204
      %p211 = scmp.eq.s32.totalorder %s26, 1
      %p212 = por %p210, %p211
      %p213 = scmp.ne.s32.totalorder %s204, %s205
      %p214 = scmp.eq.s32.totalorder %s26, 0
      %p215 = por %p213, %p214
      %p216 = scmp.ne.s32.totalorder %s204, %s205
      %p217 = scmp.eq.s32.totalorder %s27, 1
      %p218 = por %p216, %p217
      %p220 = scmp.ne.s32.totalorder %s205, %s219
      %p221 = scmp.eq.s32.totalorder %s27, 0
      %p222 = por %p220, %p221
      %s223 = ssub.s32 %s21, %s28
      %p224 = scmp.eq.s32.totalorder %s223, 0
      %s226 = sadd.s32 %s225, 1
      %s227 = scalar_select %p224, %s225, %s226
      %p230 = pneg %p224
      %p231 = scmp.eq.s32.totalorder %s21, 1
      %p232 = por %p230, %p231
      %p233 = scmp.ne.s32.totalorder %s225, %s228
      %p234 = scmp.eq.s32.totalorder %s21, 0
      %p235 = por %p233, %p234
      %p236 = scmp.ne.s32.totalorder %s225, %s228
      %p237 = scmp.eq.s32.totalorder %s26, 1
      %p238 = por %p236, %p237
      %p239 = scmp.ne.s32.totalorder %s228, %s229
      %p240 = scmp.eq.s32.totalorder %s26, 0
      %p241 = por %p239, %p240
      %p242 = scmp.ne.s32.totalorder %s228, %s229
      %p243 = scmp.eq.s32.totalorder %s27, 1
      %p244 = por %p242, %p243
      %p246 = scmp.ne.s32.totalorder %s229, %s245
      %p247 = scmp.eq.s32.totalorder %s27, 0
      %p248 = por %p246, %p247
      %p249 = scmp.le.s32.totalorder 1, %s21
      %p250 = scmp.lt.s32.totalorder %s21, 3
      %p251 = pnand %p249, %p250
      %p252 = pneg %p251
      // Predicated region
      $region9: #{net_forward.1} parent=5 // pred_check
        _
      $region10: #{net_forward.1} parent=5 // pred_check_branch
        %254 = sbr.rel (%p251) target = $region12
      $region11: #{net_forward.1} parent=5 // pred_region
        %s255 = ssub.s32 %s21, 1
        // Predicated region
        $region13: #{net_forward.1} parent=11 // pred_check
          %p256 = pneg %p68
        $region14: #{net_forward.1} parent=11 // pred_check_branch
          %258 = sbr.rel (%p256) target = $region16
        $region15: #{net_forward.1} parent=11 // pred_region
          _
        $region16: #{net_forward.1} parent=11 // pred_fallthru
          _
        // Predicated region
        $region17: #{net_forward.1} parent=11 // pred_check
          %p259 = pneg %p89
        $region18: #{net_forward.1} parent=11 // pred_check_branch
          %261 = sbr.rel (%p259) target = $region20
        $region19: #{net_forward.1} parent=11 // pred_region
          _
        $region20: #{net_forward.1} parent=11 // pred_fallthru
          _
        // Predicated region
        $region21: #{net_forward.1} parent=11 // pred_check
          %p262 = pneg %p110
        $region22: #{net_forward.1} parent=11 // pred_check_branch
          %264 = sbr.rel (%p262) target = $region24
        $region23: #{net_forward.1} parent=11 // pred_region
          %s266 = ssub.s32 1536, 1536
          %267 = vsyncadd [#allocation9], %s266
          %s268 = sshll.u32 [#allocation8], 4
          %s269 = int_to_ptr.vmem [resolvable:$true] %s268
          %274 = dma.hbm_to_vmem [thread:$0]  %s3, 1536, %s269, [#allocation9], 192, 192, 12
        $region24: #{net_forward.1} parent=11 // pred_fallthru
          _
        // Predicated region
        $region25: #{net_forward.1} parent=11 // pred_check
          %p275 = pneg %p131
        $region26: #{net_forward.1} parent=11 // pred_check_branch
          %277 = sbr.rel (%p275) target = $region28
        $region27: #{net_forward.1} parent=11 // pred_region
          _
        $region28: #{net_forward.1} parent=11 // pred_fallthru
          _
        // Predicated region
        $region29: #{net_forward.1} parent=11 // pred_check
          %p278 = pneg %p152
        $region30: #{net_forward.1} parent=11 // pred_check_branch
          %280 = sbr.rel (%p278) target = $region32
        $region31: #{net_forward.1} parent=11 // pred_region
          _
        $region32: #{net_forward.1} parent=11 // pred_fallthru
          _
        // Predicated region
        $region33: #{net_forward.1} parent=11 // pred_check
          %p281 = pneg %p173
        $region34: #{net_forward.1} parent=11 // pred_check_branch
          %283 = sbr.rel (%p281) target = $region36
        $region35: #{net_forward.1} parent=11 // pred_region
          %s285 = ssub.s32 16, 16
          %286 = vsyncadd [#allocation12], %s285
          %s288 = sshll.u32 [#allocation11], 4
          %s289 = int_to_ptr.vmem [resolvable:$true] %s288
          %291 = dma.hbm_to_vmem [thread:$0]  %s7, 16, %s289, [#allocation12]
        $region36: #{net_forward.1} parent=11 // pred_fallthru
          _
        // Predicated region
        $region37: #{net_forward.1} parent=11 // pred_check
          %p292 = pneg %p194
        $region38: #{net_forward.1} parent=11 // pred_check_branch
          %294 = sbr.rel (%p292) target = $region40
        $region39: #{net_forward.1} parent=11 // pred_region
          _
        $region40: #{net_forward.1} parent=11 // pred_fallthru
          _
        // Predicated region
        $region41: #{net_forward.1} parent=11 // pred_check
          %p295 = pneg %p215
        $region42: #{net_forward.1} parent=11 // pred_check_branch
          %297 = sbr.rel (%p295) target = $region44
        $region43: #{net_forward.1} parent=11 // pred_region
          %s299 = ssub.s32 16, 16
          %300 = vsyncadd [#allocation12], %s299
          %s302 = sshll.u32 [#allocation13], 4
          %s303 = int_to_ptr.vmem [resolvable:$true] %s302
          %305 = dma.hbm_to_vmem [thread:$0]  %s9, 16, %s303, [#allocation12]
        $region44: #{net_forward.1} parent=11 // pred_fallthru
          _
      $region12: #{net_forward.1} parent=5 // pred_fallthru
        _
      %p306 = scmp.lt.s32.totalorder %s21, 2
      // Predicated region
      $region45: #{net_forward.1} parent=5 // pred_check
        %p307 = pneg %p306
      $region46: #{net_forward.1} parent=5 // pred_check_branch
        %309 = sbr.rel (%p307) target = $region48
      $region47: #{net_forward.1} parent=5 // pred_region
        // Predicated region
        $region49: #{net_forward.1} parent=47 // pred_check
          %p310 = pneg %p41
        $region50: #{net_forward.1} parent=47 // pred_check_branch
          %312 = sbr.rel (%p310) target = $region52
        $region51: #{net_forward.1} parent=47 // pred_region
          %p313 = scmp.lt.s32.totalorder %s21, 1
          %s314 = scalar_select %p313, %s21, 1
          %s315 = smul.addr %s314, 4
          %s316 = smul.addr %s315, 8
          %s317 = scalar_lea.vmem %s0, %s316
        $region52: #{net_forward.1} parent=47 // pred_fallthru
          _
      $region48: #{net_forward.1} parent=5 // pred_fallthru
        _
      %p318 = scmp.le.s32.totalorder 1, %s21
      %p319 = scmp.lt.s32.totalorder %s21, 3
      %p320 = pnand %p318, %p319
      %p321 = pneg %p320
      // Predicated region
      $region53: #{net_forward.1} parent=5 // pred_check
        _
      $region54: #{net_forward.1} parent=5 // pred_check_branch
        %323 = sbr.rel (%p320) target = $region56
      $region55: #{net_forward.1} parent=5 // pred_region
        %s324 = ssub.s32 %s21, 1
        // Predicated region
        $region57: #{net_forward.1} parent=55 // pred_check
          %p325 = pneg %p110
        $region58: #{net_forward.1} parent=55 // pred_check_branch
          %327 = sbr.rel (%p325) target = $region60
        $region59: #{net_forward.1} parent=55 // pred_region
          %328 = dma.done [#allocation9], 1536
        $region60: #{net_forward.1} parent=55 // pred_fallthru
          _
        // Predicated region
        $region61: #{net_forward.1} parent=55 // pred_check
          %p329 = pneg %p173
        $region62: #{net_forward.1} parent=55 // pred_check_branch
          %331 = sbr.rel (%p329) target = $region64
        $region63: #{net_forward.1} parent=55 // pred_region
          %332 = dma.done [#allocation12], 16
        $region64: #{net_forward.1} parent=55 // pred_fallthru
          _
        // Predicated region
        $region65: #{net_forward.1} parent=55 // pred_check
          %p333 = pneg %p215
        $region66: #{net_forward.1} parent=55 // pred_check_branch
          %335 = sbr.rel (%p333) target = $region68
        $region67: #{net_forward.1} parent=55 // pred_region
          %336 = dma.done [#allocation12], 16
        $region68: #{net_forward.1} parent=55 // pred_fallthru
          _
        %p337 = scmp.lt.s32.totalorder %s26, 1
        %s338 = scalar_select %p337, %s26, 1
        %s339 = smul.addr %s338, 4
        %s340 = smul.addr %s339, 8
        %s341 = scalar_lea.vmem %s0, %s340
        %p342 = pneg %p47
        %p343 = pneg %p44
        %p344 = pneg %p68
        %p345 = pneg %p65
        %p346 = pneg %p89
        %p347 = pneg %p86
        %p348 = pneg %p110
        %p349 = pneg %p107
        %p350 = pneg %p131
        %p351 = pneg %p128
        %p352 = pneg %p152
        %p353 = pneg %p149
        %p354 = pneg %p173
        %p355 = pneg %p170
        %p356 = pneg %p194
        %p357 = pneg %p191
        %p358 = pneg %p215
        %p359 = pneg %p212
        %p360 = pneg %p241
        %p361 = pneg %p238
        %s362 = sand.u32 %s228, 1
        %s363 = scalar_lea.sflag [#allocation10], %s362
        %s364 = sand.u32 %s228, 1
        %s365 = scalar_lea.vmem [#allocation14], %s364
        %p366 = scmp.lt.s32.totalorder %s26, 1
        %s367 = scalar_select %p366, %s26, 1
        %s368 = smul.addr %s367, 4
        %s369 = smul.addr %s368, 8
        %s370 = scalar_lea.vmem %s0, %s369
        // Predicated region
        $region69: #{net_forward.1} parent=55 // pred_check
          _
        $region70: #{net_forward.1} parent=55 // pred_check_branch
          %373 = sbr.rel target = $region72
        $region71: #{net_forward.1} parent=55 // pred_region
          %374 = sst [smem:[#allocation17]] [#allocation16]
          %375 = sst [smem:[#allocation18]] [#allocation15]
        $region72: #{net_forward.1} parent=55 // pred_fallthru
          _
        %377 = shalt.err (0)
        %s379 = sshll.u32 [#allocation6], 4
        %s380 = int_to_ptr.vmem [resolvable:$true] %s379
        %382 = dma.hbm_to_vmem [thread:$0]  %s6, 73728, %s380, [#allocation7]
        %383 = vst [vmem:[#allocation2] sm:$0xff] 0.0
        %v384 = vld [vmem:[%s370] sm:$0xff]
        %v385 = vld [vmem:[%s370 + $0x8] sm:$0xff]
        %v386 = vld [vmem:[%s370 + $0x10] sm:$0xff]
        %v387 = vld [vmem:[%s370 + $0x18] sm:$0xf]
        %v388 = vlaneseq
        %vm389 = vcmp.ge.s32.totalorder %v388, 0
        %vm390 = vcmp.lt.s32.totalorder %v388, 28
        %vm391 = vmand %vm389, %vm390
        %392 = vst.msk [vmem:[#allocation2] sm:$0x1] %vm391, %v384
        %v395 = vunpack.c.l.s4 1966171168
        %v396 = vunpack.c.0.s8 %v395
        %v397 = vlaneseq
        %v398 = vshrl.u32 %v397, 7
        %v399 = vsub.s32 %v396, %v398
        %v400 = vrot.slane %v384, %v399
        %v401 = vcombine.high %v400, %v400
        %v403 = vunpack.c.l.s4 1966171168
        %v404 = vunpack.c.0.s8 %v403
        %v405 = vlaneseq
        %v406 = vshrl.u32 %v405, 7
        %v407 = vsub.s32 %v404, %v406
        %v408 = vrot.slane %v400, %v407
        %v410 = vunpack.c.l.s4 1966171168
        %v411 = vunpack.c.0.s8 %v410
        %v412 = vlaneseq
        %v413 = vshrl.u32 %v412, 7
        %v414 = vsub.s32 %v411, %v413
        %v415 = vrot.slane %v401, %v414
        %416 = vrot.lane.b32.xlu0 %v415, 32
        %v417 = vpop.permute.xlu0 %416
        %vm419 = vcmp.ge.s32.totalorder %v388, 32
        %vm420 = vcmp.lt.s32.totalorder %v388, 60
        %vm421 = vmand %vm419, %vm420
        %422 = vst.msk [vmem:[#allocation2] sm:$0x1] %vm421, %v417
        %v423 = vcombine.high %v408, %v408
        %424 = vrot.lane.b32.xlu0 %v423, 64
        %v425 = vpop.permute.xlu0 %424
        %vm427 = vcmp.ge.s32.totalorder %v388, 64
        %vm428 = vcmp.lt.s32.totalorder %v388, 92
        %vm429 = vmand %vm427, %vm428
        %430 = vst.msk [vmem:[#allocation2] sm:$0x1] %vm429, %v425
        %v431 = vcombine.high %v415, %v415
        %432 = vrot.lane.b32.xlu0 %v431, 96
        %v433 = vpop.permute.xlu0 %432
        %vm435 = vcmp.ge.s32.totalorder %v388, 96
        %vm436 = vcmp.lt.s32.totalorder %v388, 124
        %vm437 = vmand %vm435, %vm436
        %438 = vst.msk [vmem:[#allocation2] sm:$0x1] %vm437, %v433
        %v439 = vcombine.high %v384, %v384
        %v441 = vunpack.c.l.s4 1966171168
        %v442 = vunpack.c.0.s8 %v441
        %v443 = vlaneseq
        %v444 = vshrl.u32 %v443, 7
        %v445 = vsub.s32 %v442, %v444
        %v446 = vrot.slane %v439, %v445
        %v448 = vunpack.c.l.s4 1966171168
        %v449 = vunpack.c.0.s8 %v448
        %v450 = vlaneseq
        %v451 = vshrl.u32 %v450, 7
        %v452 = vsub.s32 %v449, %v451
        %v453 = vrot.slane %v446, %v452
        %455 = vst.msk [vmem:[#allocation2 + $0x1] sm:$0x1] %vm391, %v453
        %v456 = vcombine.high %v446, %v446
        %v458 = vunpack.c.l.s4 1966171168
        %v459 = vunpack.c.0.s8 %v458
        %v460 = vlaneseq
        %v461 = vshrl.u32 %v460, 7
        %v462 = vsub.s32 %v459, %v461
        %v463 = vrot.slane %v456, %v462
        %464 = vrot.lane.b32.xlu0 %v463, 32
        %v465 = vpop.permute.xlu0 %464
        %467 = vst.msk [vmem:[#allocation2 + $0x1] sm:$0x1] %vm421, %v465
        %v468 = vcombine.high %v453, %v453
        %469 = vrot.lane.b32.xlu0 %v468, 64
        %v470 = vpop.permute.xlu0 %469
        %472 = vst.msk [vmem:[#allocation2 + $0x1] sm:$0x1] %vm429, %v470
        %v473 = vcombine.high %v463, %v463
        %474 = vrot.lane.b32.xlu0 %v473, 96
        %v475 = vpop.permute.xlu0 %474
        %477 = vst.msk [vmem:[#allocation2 + $0x1] sm:$0x1] %vm437, %v475
        %478 = vst.msk [vmem:[#allocation2 + $0x2] sm:$0x1] %vm391, %v385
        %v481 = vunpack.c.l.s4 1966171168
        %v482 = vunpack.c.0.s8 %v481
        %v483 = vlaneseq
        %v484 = vshrl.u32 %v483, 7
        %v485 = vsub.s32 %v482, %v484
        %v486 = vrot.slane %v385, %v485
        %v487 = vcombine.high %v486, %v486
        %v489 = vunpack.c.l.s4 1966171168
        %v490 = vunpack.c.0.s8 %v489
        %v491 = vlaneseq
        %v492 = vshrl.u32 %v491, 7
        %v493 = vsub.s32 %v490, %v492
        %v494 = vrot.slane %v486, %v493
        %v496 = vunpack.c.l.s4 1966171168
        %v497 = vunpack.c.0.s8 %v496
        %v498 = vlaneseq
        %v499 = vshrl.u32 %v498, 7
        %v500 = vsub.s32 %v497, %v499
        %v501 = vrot.slane %v487, %v500
        %502 = vrot.lane.b32.xlu0 %v501, 32
        %v503 = vpop.permute.xlu0 %502
        %505 = vst.msk [vmem:[#allocation2 + $0x2] sm:$0x1] %vm421, %v503
        %v506 = vcombine.high %v494, %v494
        %507 = vrot.lane.b32.xlu0 %v506, 64
        %v508 = vpop.permute.xlu0 %507
        %510 = vst.msk [vmem:[#allocation2 + $0x2] sm:$0x1] %vm429, %v508
        %v511 = vcombine.high %v501, %v501
        %512 = vrot.lane.b32.xlu0 %v511, 96
        %v513 = vpop.permute.xlu0 %512
        %515 = vst.msk [vmem:[#allocation2 + $0x2] sm:$0x1] %vm437, %v513
        %v516 = vcombine.high %v385, %v385
        %v518 = vunpack.c.l.s4 1966171168
        %v519 = vunpack.c.0.s8 %v518
        %v520 = vlaneseq
        %v521 = vshrl.u32 %v520, 7
        %v522 = vsub.s32 %v519, %v521
        %v523 = vrot.slane %v516, %v522
        %v525 = vunpack.c.l.s4 1966171168
        %v526 = vunpack.c.0.s8 %v525
        %v527 = vlaneseq
        %v528 = vshrl.u32 %v527, 7
        %v529 = vsub.s32 %v526, %v528
        %v530 = vrot.slane %v523, %v529
        %532 = vst.msk [vmem:[#allocation2 + $0x3] sm:$0x1] %vm391, %v530
        %v533 = vcombine.high %v523, %v523
        %v535 = vunpack.c.l.s4 1966171168
        %v536 = vunpack.c.0.s8 %v535
        %v537 = vlaneseq
        %v538 = vshrl.u32 %v537, 7
        %v539 = vsub.s32 %v536, %v538
        %v540 = vrot.slane %v533, %v539
        %541 = vrot.lane.b32.xlu0 %v540, 32
        %v542 = vpop.permute.xlu0 %541
        %544 = vst.msk [vmem:[#allocation2 + $0x3] sm:$0x1] %vm421, %v542
        %v545 = vcombine.high %v530, %v530
        %546 = vrot.lane.b32.xlu0 %v545, 64
        %v547 = vpop.permute.xlu0 %546
        %549 = vst.msk [vmem:[#allocation2 + $0x3] sm:$0x1] %vm429, %v547
        %v550 = vcombine.high %v540, %v540
        %551 = vrot.lane.b32.xlu0 %v550, 96
        %v552 = vpop.permute.xlu0 %551
        %554 = vst.msk [vmem:[#allocation2 + $0x3] sm:$0x1] %vm437, %v552
        %555 = vst.msk [vmem:[#allocation2 + $0x4] sm:$0x1] %vm391, %v386
        %v558 = vunpack.c.l.s4 1966171168
        %v559 = vunpack.c.0.s8 %v558
        %v560 = vlaneseq
        %v561 = vshrl.u32 %v560, 7
        %v562 = vsub.s32 %v559, %v561
        %v563 = vrot.slane %v386, %v562
        %v564 = vcombine.high %v563, %v563
        %v566 = vunpack.c.l.s4 1966171168
        %v567 = vunpack.c.0.s8 %v566
        %v568 = vlaneseq
        %v569 = vshrl.u32 %v568, 7
        %v570 = vsub.s32 %v567, %v569
        %v571 = vrot.slane %v563, %v570
        %v573 = vunpack.c.l.s4 1966171168
        %v574 = vunpack.c.0.s8 %v573
        %v575 = vlaneseq
        %v576 = vshrl.u32 %v575, 7
        %v577 = vsub.s32 %v574, %v576
        %v578 = vrot.slane %v564, %v577
        %579 = vrot.lane.b32.xlu0 %v578, 32
        %v580 = vpop.permute.xlu0 %579
        %582 = vst.msk [vmem:[#allocation2 + $0x4] sm:$0x1] %vm421, %v580
        %v583 = vcombine.high %v571, %v571
        %584 = vrot.lane.b32.xlu0 %v583, 64
        %v585 = vpop.permute.xlu0 %584
        %587 = vst.msk [vmem:[#allocation2 + $0x4] sm:$0x1] %vm429, %v585
        %v588 = vcombine.high %v578, %v578
        %589 = vrot.lane.b32.xlu0 %v588, 96
        %v590 = vpop.permute.xlu0 %589
        %592 = vst.msk [vmem:[#allocation2 + $0x4] sm:$0x1] %vm437, %v590
        %v593 = vcombine.high %v386, %v386
        %v595 = vunpack.c.l.s4 1966171168
        %v596 = vunpack.c.0.s8 %v595
        %v597 = vlaneseq
        %v598 = vshrl.u32 %v597, 7
        %v599 = vsub.s32 %v596, %v598
        %v600 = vrot.slane %v593, %v599
        %v602 = vunpack.c.l.s4 1966171168
        %v603 = vunpack.c.0.s8 %v602
        %v604 = vlaneseq
        %v605 = vshrl.u32 %v604, 7
        %v606 = vsub.s32 %v603, %v605
        %v607 = vrot.slane %v600, %v606
        %609 = vst.msk [vmem:[#allocation2 + $0x5] sm:$0x1] %vm391, %v607
        %v610 = vcombine.high %v600, %v600
        %v612 = vunpack.c.l.s4 1966171168
        %v613 = vunpack.c.0.s8 %v612
        %v614 = vlaneseq
        %v615 = vshrl.u32 %v614, 7
        %v616 = vsub.s32 %v613, %v615
        %v617 = vrot.slane %v610, %v616
        %618 = vrot.lane.b32.xlu0 %v617, 32
        %v619 = vpop.permute.xlu0 %618
        %621 = vst.msk [vmem:[#allocation2 + $0x5] sm:$0x1] %vm421, %v619
        %v622 = vcombine.high %v607, %v607
        %623 = vrot.lane.b32.xlu0 %v622, 64
        %v624 = vpop.permute.xlu0 %623
        %626 = vst.msk [vmem:[#allocation2 + $0x5] sm:$0x1] %vm429, %v624
        %v627 = vcombine.high %v617, %v617
        %628 = vrot.lane.b32.xlu0 %v627, 96
        %v629 = vpop.permute.xlu0 %628
        %631 = vst.msk [vmem:[#allocation2 + $0x5] sm:$0x1] %vm437, %v629
        %632 = vst.msk [vmem:[#allocation2 + $0x6] sm:$0x1] %vm391, %v387
        %v635 = vunpack.c.l.s4 1966171168
        %v636 = vunpack.c.0.s8 %v635
        %v637 = vlaneseq
        %v638 = vshrl.u32 %v637, 7
        %v639 = vsub.s32 %v636, %v638
        %v640 = vrot.slane %v387, %v639
        %v641 = vcombine.high %v640, %v640
        %v643 = vunpack.c.l.s4 1966171168
        %v644 = vunpack.c.0.s8 %v643
        %v645 = vlaneseq
        %v646 = vshrl.u32 %v645, 7
        %v647 = vsub.s32 %v644, %v646
        %v648 = vrot.slane %v640, %v647
        %v650 = vunpack.c.l.s4 1966171168
        %v651 = vunpack.c.0.s8 %v650
        %v652 = vlaneseq
        %v653 = vshrl.u32 %v652, 7
        %v654 = vsub.s32 %v651, %v653
        %v655 = vrot.slane %v641, %v654
        %656 = vrot.lane.b32.xlu0 %v655, 32
        %v657 = vpop.permute.xlu0 %656
        %659 = vst.msk [vmem:[#allocation2 + $0x6] sm:$0x1] %vm421, %v657
        %v660 = vcombine.high %v648, %v648
        %661 = vrot.lane.b32.xlu0 %v660, 64
        %v662 = vpop.permute.xlu0 %661
        %664 = vst.msk [vmem:[#allocation2 + $0x6] sm:$0x1] %vm429, %v662
        %v665 = vcombine.high %v655, %v655
        %666 = vrot.lane.b32.xlu0 %v665, 96
        %v667 = vpop.permute.xlu0 %666
        %669 = vst.msk [vmem:[#allocation2 + $0x6] sm:$0x1] %vm437, %v667
        %v670 = vld [vmem:[#allocation2] sm:$0xff]
        %v671 = vld [vmem:[%s1] sm:$0xff]
        %v672 = vld [vmem:[%s1 + $0x8] sm:$0xff]
        %v673 = vld [vmem:[%s1 + $0x10] sm:$0xff]
        %v674 = vld [vmem:[%s1 + $0x18] sm:$0xff]
        %676 = vset.pattern.permute.xlu0 0
        %677 = vperm.xlu0 %676, %v671
        %v678 = vpop.permute.xlu0 %677
        %681 = vset.pattern.permute.xlu0 0
        %682 = vperm.xlu0 %681, %v672
        %v683 = vpop.permute.xlu0 %682
        %686 = vset.pattern.permute.xlu0 0
        %687 = vperm.xlu0 %686, %v673
        %v688 = vpop.permute.xlu0 %687
        %691 = vset.pattern.permute.xlu0 0
        %692 = vperm.xlu0 %691, %v674
        %v693 = vpop.permute.xlu0 %692
        %v696 = vlaneseq
        %v697 = vshrl.u32 %v696, 7
        %v698 = vsub.s32 0, %v697
        %v699 = vrot.slane %v670, %v698
        %v700 = vlaneseq
        %v701 = vshrl.u32 %v700, 7
        %v702 = vsub.s32 1, %v701
        %v703 = vrot.slane %v670, %v702
        %v704 = vlaneseq
        %v705 = vshrl.u32 %v704, 7
        %v706 = vsub.s32 2, %v705
        %v707 = vrot.slane %v670, %v706
        %v708 = vlaneseq
        %v709 = vshrl.u32 %v708, 7
        %v710 = vsub.s32 3, %v709
        %v711 = vrot.slane %v670, %v710
        %v712 = vlaneseq
        %v713 = vshrl.u32 %v712, 7
        %v714 = vsub.s32 4, %v713
        %v715 = vrot.slane %v670, %v714
        %v716 = vlaneseq
        %v717 = vshrl.u32 %v716, 7
        %v718 = vsub.s32 5, %v717
        %v719 = vrot.slane %v670, %v718
        %v720 = vlaneseq
        %v721 = vshrl.u32 %v720, 7
        %v722 = vsub.s32 6, %v721
        %v723 = vrot.slane %v670, %v722
        %v731 = vmul.f32 %v678, %v699
        %v732 = vmul.f32 %v678, %v703
        %v733 = vmul.f32 %v678, %v707
        %v734 = vmul.f32 %v678, %v711
        %v735 = vmul.f32 %v678, %v715
        %v736 = vmul.f32 %v678, %v719
        %v737 = vmul.f32 %v678, %v723
        %v738 = vmul.f32 %v683, %v699
        %v739 = vmul.f32 %v683, %v703
        %v740 = vmul.f32 %v683, %v707
        %v741 = vmul.f32 %v683, %v711
        %v742 = vmul.f32 %v683, %v715
        %v743 = vmul.f32 %v683, %v719
        %v744 = vmul.f32 %v683, %v723
        %v745 = vmul.f32 %v688, %v699
        %v746 = vmul.f32 %v688, %v703
        %v747 = vmul.f32 %v688, %v707
        %v748 = vmul.f32 %v688, %v711
        %v749 = vmul.f32 %v688, %v715
        %v750 = vmul.f32 %v688, %v719
        %v751 = vmul.f32 %v688, %v723
        %v752 = vmul.f32 %v693, %v699
        %v753 = vmul.f32 %v693, %v703
        %v754 = vmul.f32 %v693, %v707
        %v755 = vmul.f32 %v693, %v711
        %v756 = vmul.f32 %v693, %v715
        %v757 = vmul.f32 %v693, %v719
        %v758 = vmul.f32 %v693, %v723
        %v759 = vadd.f32 %v731, 0.0
        %v760 = vadd.f32 %v732, 0.0
        %v761 = vadd.f32 %v733, 0.0
        %v762 = vadd.f32 %v734, 0.0
        %v763 = vadd.f32 %v735, 0.0
        %v764 = vadd.f32 %v736, 0.0
        %v765 = vadd.f32 %v737, 0.0
        %v766 = vadd.f32 %v738, 0.0
        %v767 = vadd.f32 %v739, 0.0
        %v768 = vadd.f32 %v740, 0.0
        %v769 = vadd.f32 %v741, 0.0
        %v770 = vadd.f32 %v742, 0.0
        %v771 = vadd.f32 %v743, 0.0
        %v772 = vadd.f32 %v744, 0.0
        %v773 = vadd.f32 %v745, 0.0
        %v774 = vadd.f32 %v746, 0.0
        %v775 = vadd.f32 %v747, 0.0
        %v776 = vadd.f32 %v748, 0.0
        %v777 = vadd.f32 %v749, 0.0
        %v778 = vadd.f32 %v750, 0.0
        %v779 = vadd.f32 %v751, 0.0
        %v780 = vadd.f32 %v752, 0.0
        %v781 = vadd.f32 %v753, 0.0
        %v782 = vadd.f32 %v754, 0.0
        %v783 = vadd.f32 %v755, 0.0
        %v784 = vadd.f32 %v756, 0.0
        %v785 = vadd.f32 %v757, 0.0
        %v786 = vadd.f32 %v758, 0.0
        %v787 = vld [vmem:[#allocation2] sm:$0xff]
        %s788 = scalar_lea.vmem %s1, 32
        %v789 = vld [vmem:[%s788] sm:$0xff]
        %v790 = vld [vmem:[%s788 + $0x8] sm:$0xff]
        %v791 = vld [vmem:[%s788 + $0x10] sm:$0xff]
        %v792 = vld [vmem:[%s788 + $0x18] sm:$0xff]
        %794 = vset.pattern.permute.xlu0 0
        %795 = vperm.xlu0 %794, %v789
        %v796 = vpop.permute.xlu0 %795
        %799 = vset.pattern.permute.xlu0 0
        %800 = vperm.xlu0 %799, %v790
        %v801 = vpop.permute.xlu0 %800
        %804 = vset.pattern.permute.xlu0 0
        %805 = vperm.xlu0 %804, %v791
        %v806 = vpop.permute.xlu0 %805
        %809 = vset.pattern.permute.xlu0 0
        %810 = vperm.xlu0 %809, %v792
        %v811 = vpop.permute.xlu0 %810
        %v814 = vlaneseq
        %v815 = vshrl.u32 %v814, 7
        %v816 = vsub.s32 0, %v815
        %v817 = vrot.slane %v787, %v816
        %v818 = vlaneseq
        %v819 = vshrl.u32 %v818, 7
        %v820 = vsub.s32 1, %v819
        %v821 = vrot.slane %v787, %v820
        %v822 = vlaneseq
        %v823 = vshrl.u32 %v822, 7
        %v824 = vsub.s32 2, %v823
        %v825 = vrot.slane %v787, %v824
        %v826 = vlaneseq
        %v827 = vshrl.u32 %v826, 7
        %v828 = vsub.s32 3, %v827
        %v829 = vrot.slane %v787, %v828
        %v830 = vlaneseq
        %v831 = vshrl.u32 %v830, 7
        %v832 = vsub.s32 4, %v831
        %v833 = vrot.slane %v787, %v832
        %v834 = vlaneseq
        %v835 = vshrl.u32 %v834, 7
        %v836 = vsub.s32 5, %v835
        %v837 = vrot.slane %v787, %v836
        %v838 = vlaneseq
        %v839 = vshrl.u32 %v838, 7
        %v840 = vsub.s32 6, %v839
        %v841 = vrot.slane %v787, %v840
        %v842 = vlaneseq
        %v843 = vshrl.u32 %v842, 7
        %v844 = vsub.s32 7, %v843
        %v845 = vrot.slane %v787, %v844
        %v854 = vmul.f32 %v796, %v817
        %v855 = vmul.f32 %v796, %v821
        %v856 = vmul.f32 %v796, %v825
        %v857 = vmul.f32 %v796, %v829
        %v858 = vmul.f32 %v796, %v833
        %v859 = vmul.f32 %v796, %v837
        %v860 = vmul.f32 %v796, %v841
        %v861 = vmul.f32 %v796, %v845
        %v862 = vmul.f32 %v801, %v817
        %v863 = vmul.f32 %v801, %v821
        %v864 = vmul.f32 %v801, %v825
        %v865 = vmul.f32 %v801, %v829
        %v866 = vmul.f32 %v801, %v833
        %v867 = vmul.f32 %v801, %v837
        %v868 = vmul.f32 %v801, %v841
        %v869 = vmul.f32 %v801, %v845
        %v870 = vmul.f32 %v806, %v817
        %v871 = vmul.f32 %v806, %v821
        %v872 = vmul.f32 %v806, %v825
        %v873 = vmul.f32 %v806, %v829
        %v874 = vmul.f32 %v806, %v833
        %v875 = vmul.f32 %v806, %v837
        %v876 = vmul.f32 %v806, %v841
        %v877 = vmul.f32 %v806, %v845
        %v878 = vmul.f32 %v811, %v817
        %v879 = vmul.f32 %v811, %v821
        %v880 = vmul.f32 %v811, %v825
        %v881 = vmul.f32 %v811, %v829
        %v882 = vmul.f32 %v811, %v833
        %v883 = vmul.f32 %v811, %v837
        %v884 = vmul.f32 %v811, %v841
        %v885 = vmul.f32 %v811, %v845
        %918 = vrot.lane.b32.xlu0 %v854, 127
        %v919 = vpop.permute.xlu0 %918
        %920 = vrot.lane.b32.xlu0 %v855, 127
        %v921 = vpop.permute.xlu0 %920
        %922 = vrot.lane.b32.xlu0 %v856, 127
        %v923 = vpop.permute.xlu0 %922
        %924 = vrot.lane.b32.xlu0 %v857, 127
        %v925 = vpop.permute.xlu0 %924
        %926 = vrot.lane.b32.xlu0 %v858, 127
        %v927 = vpop.permute.xlu0 %926
        %928 = vrot.lane.b32.xlu0 %v859, 127
        %v929 = vpop.permute.xlu0 %928
        %930 = vrot.lane.b32.xlu0 %v860, 127
        %v931 = vpop.permute.xlu0 %930
        %932 = vrot.lane.b32.xlu0 %v861, 127
        %v933 = vpop.permute.xlu0 %932
        %934 = vrot.lane.b32.xlu0 %v862, 127
        %v935 = vpop.permute.xlu0 %934
        %936 = vrot.lane.b32.xlu0 %v863, 127
        %v937 = vpop.permute.xlu0 %936
        %938 = vrot.lane.b32.xlu0 %v864, 127
        %v939 = vpop.permute.xlu0 %938
        %940 = vrot.lane.b32.xlu0 %v865, 127
        %v941 = vpop.permute.xlu0 %940
        %942 = vrot.lane.b32.xlu0 %v866, 127
        %v943 = vpop.permute.xlu0 %942
        %944 = vrot.lane.b32.xlu0 %v867, 127
        %v945 = vpop.permute.xlu0 %944
        %946 = vrot.lane.b32.xlu0 %v868, 127
        %v947 = vpop.permute.xlu0 %946
        %948 = vrot.lane.b32.xlu0 %v869, 127
        %v949 = vpop.permute.xlu0 %948
        %950 = vrot.lane.b32.xlu0 %v870, 127
        %v951 = vpop.permute.xlu0 %950
        %952 = vrot.lane.b32.xlu0 %v871, 127
        %v953 = vpop.permute.xlu0 %952
        %954 = vrot.lane.b32.xlu0 %v872, 127
        %v955 = vpop.permute.xlu0 %954
        %956 = vrot.lane.b32.xlu0 %v873, 127
        %v957 = vpop.permute.xlu0 %956
        %958 = vrot.lane.b32.xlu0 %v874, 127
        %v959 = vpop.permute.xlu0 %958
        %960 = vrot.lane.b32.xlu0 %v875, 127
        %v961 = vpop.permute.xlu0 %960
        %962 = vrot.lane.b32.xlu0 %v876, 127
        %v963 = vpop.permute.xlu0 %962
        %964 = vrot.lane.b32.xlu0 %v877, 127
        %v965 = vpop.permute.xlu0 %964
        %966 = vrot.lane.b32.xlu0 %v878, 127
        %v967 = vpop.permute.xlu0 %966
        %968 = vrot.lane.b32.xlu0 %v879, 127
        %v969 = vpop.permute.xlu0 %968
        %970 = vrot.lane.b32.xlu0 %v880, 127
        %v971 = vpop.permute.xlu0 %970
        %972 = vrot.lane.b32.xlu0 %v881, 127
        %v973 = vpop.permute.xlu0 %972
        %974 = vrot.lane.b32.xlu0 %v882, 127
        %v975 = vpop.permute.xlu0 %974
        %976 = vrot.lane.b32.xlu0 %v883, 127
        %v977 = vpop.permute.xlu0 %976
        %978 = vrot.lane.b32.xlu0 %v884, 127
        %v979 = vpop.permute.xlu0 %978
        %980 = vrot.lane.b32.xlu0 %v885, 127
        %v981 = vpop.permute.xlu0 %980
        %vm982 = vcmask 1039360
        %v983 = vsel %vm982, %v919, %v921
        %v984 = vsel %vm982, %v921, %v923
        %v985 = vsel %vm982, %v923, %v925
        %v986 = vsel %vm982, %v925, %v927
        %v987 = vsel %vm982, %v927, %v929
        %v988 = vsel %vm982, %v929, %v931
        %v989 = vsel %vm982, %v931, %v933
        %v990 = vsel %vm982, %v935, %v937
        %v991 = vsel %vm982, %v937, %v939
        %v992 = vsel %vm982, %v939, %v941
        %v993 = vsel %vm982, %v941, %v943
        %v994 = vsel %vm982, %v943, %v945
        %v995 = vsel %vm982, %v945, %v947
        %v996 = vsel %vm982, %v947, %v949
        %v997 = vsel %vm982, %v951, %v953
        %v998 = vsel %vm982, %v953, %v955
        %v999 = vsel %vm982, %v955, %v957
        %v1000 = vsel %vm982, %v957, %v959
        %v1001 = vsel %vm982, %v959, %v961
        %v1002 = vsel %vm982, %v961, %v963
        %v1003 = vsel %vm982, %v963, %v965
        %v1004 = vsel %vm982, %v967, %v969
        %v1005 = vsel %vm982, %v969, %v971
        %v1006 = vsel %vm982, %v971, %v973
        %v1007 = vsel %vm982, %v973, %v975
        %v1008 = vsel %vm982, %v975, %v977
        %v1009 = vsel %vm982, %v977, %v979
        %v1010 = vsel %vm982, %v979, %v981
        %v1039 = vadd.f32 %v759, %v983
        %v1040 = vadd.f32 %v760, %v984
        %v1041 = vadd.f32 %v761, %v985
        %v1042 = vadd.f32 %v762, %v986
        %v1043 = vadd.f32 %v763, %v987
        %v1044 = vadd.f32 %v764, %v988
        %v1045 = vadd.f32 %v765, %v989
        %v1046 = vadd.f32 %v766, %v990
        %v1047 = vadd.f32 %v767, %v991
        %v1048 = vadd.f32 %v768, %v992
        %v1049 = vadd.f32 %v769, %v993
        %v1050 = vadd.f32 %v770, %v994
        %v1051 = vadd.f32 %v771, %v995
        %v1052 = vadd.f32 %v772, %v996
        %v1053 = vadd.f32 %v773, %v997
        %v1054 = vadd.f32 %v774, %v998
        %v1055 = vadd.f32 %v775, %v999
        %v1056 = vadd.f32 %v776, %v1000
        %v1057 = vadd.f32 %v777, %v1001
        %v1058 = vadd.f32 %v778, %v1002
        %v1059 = vadd.f32 %v779, %v1003
        %v1060 = vadd.f32 %v780, %v1004
        %v1061 = vadd.f32 %v781, %v1005
        %v1062 = vadd.f32 %v782, %v1006
        %v1063 = vadd.f32 %v783, %v1007
        %v1064 = vadd.f32 %v784, %v1008
        %v1065 = vadd.f32 %v785, %v1009
        %v1066 = vadd.f32 %v786, %v1010
        %s1067 = scalar_lea.vmem %s1, 64
        %v1068 = vld [vmem:[%s1067] sm:$0xff]
        %v1069 = vld [vmem:[%s1067 + $0x8] sm:$0xff]
        %v1070 = vld [vmem:[%s1067 + $0x10] sm:$0xff]
        %v1071 = vld [vmem:[%s1067 + $0x18] sm:$0xff]
        %1073 = vset.pattern.permute.xlu0 0
        %1074 = vperm.xlu0 %1073, %v1068
        %v1075 = vpop.permute.xlu0 %1074
        %1078 = vset.pattern.permute.xlu0 0
        %1079 = vperm.xlu0 %1078, %v1069
        %v1080 = vpop.permute.xlu0 %1079
        %1083 = vset.pattern.permute.xlu0 0
        %1084 = vperm.xlu0 %1083, %v1070
        %v1085 = vpop.permute.xlu0 %1084
        %1088 = vset.pattern.permute.xlu0 0
        %1089 = vperm.xlu0 %1088, %v1071
        %v1090 = vpop.permute.xlu0 %1089
        %v1092 = vmul.f32 %v1075, %v817
        %v1093 = vmul.f32 %v1075, %v821
        %v1094 = vmul.f32 %v1075, %v825
        %v1095 = vmul.f32 %v1075, %v829
        %v1096 = vmul.f32 %v1075, %v833
        %v1097 = vmul.f32 %v1075, %v837
        %v1098 = vmul.f32 %v1075, %v841
        %v1099 = vmul.f32 %v1075, %v845
        %v1100 = vmul.f32 %v1080, %v817
        %v1101 = vmul.f32 %v1080, %v821
        %v1102 = vmul.f32 %v1080, %v825
        %v1103 = vmul.f32 %v1080, %v829
        %v1104 = vmul.f32 %v1080, %v833
        %v1105 = vmul.f32 %v1080, %v837
        %v1106 = vmul.f32 %v1080, %v841
        %v1107 = vmul.f32 %v1080, %v845
        %v1108 = vmul.f32 %v1085, %v817
        %v1109 = vmul.f32 %v1085, %v821
        %v1110 = vmul.f32 %v1085, %v825
        %v1111 = vmul.f32 %v1085, %v829
        %v1112 = vmul.f32 %v1085, %v833
        %v1113 = vmul.f32 %v1085, %v837
        %v1114 = vmul.f32 %v1085, %v841
        %v1115 = vmul.f32 %v1085, %v845
        %v1116 = vmul.f32 %v1090, %v817
        %v1117 = vmul.f32 %v1090, %v821
        %v1118 = vmul.f32 %v1090, %v825
        %v1119 = vmul.f32 %v1090, %v829
        %v1120 = vmul.f32 %v1090, %v833
        %v1121 = vmul.f32 %v1090, %v837
        %v1122 = vmul.f32 %v1090, %v841
        %v1123 = vmul.f32 %v1090, %v845
        %1156 = vrot.lane.b32.xlu0 %v1092, 126
        %v1157 = vpop.permute.xlu0 %1156
        %1158 = vrot.lane.b32.xlu0 %v1093, 126
        %v1159 = vpop.permute.xlu0 %1158
        %1160 = vrot.lane.b32.xlu0 %v1094, 126
        %v1161 = vpop.permute.xlu0 %1160
        %1162 = vrot.lane.b32.xlu0 %v1095, 126
        %v1163 = vpop.permute.xlu0 %1162
        %1164 = vrot.lane.b32.xlu0 %v1096, 126
        %v1165 = vpop.permute.xlu0 %1164
        %1166 = vrot.lane.b32.xlu0 %v1097, 126
        %v1167 = vpop.permute.xlu0 %1166
        %1168 = vrot.lane.b32.xlu0 %v1098, 126
        %v1169 = vpop.permute.xlu0 %1168
        %1170 = vrot.lane.b32.xlu0 %v1099, 126
        %v1171 = vpop.permute.xlu0 %1170
        %1172 = vrot.lane.b32.xlu0 %v1100, 126
        %v1173 = vpop.permute.xlu0 %1172
        %1174 = vrot.lane.b32.xlu0 %v1101, 126
        %v1175 = vpop.permute.xlu0 %1174
        %1176 = vrot.lane.b32.xlu0 %v1102, 126
        %v1177 = vpop.permute.xlu0 %1176
        %1178 = vrot.lane.b32.xlu0 %v1103, 126
        %v1179 = vpop.permute.xlu0 %1178
        %1180 = vrot.lane.b32.xlu0 %v1104, 126
        %v1181 = vpop.permute.xlu0 %1180
        %1182 = vrot.lane.b32.xlu0 %v1105, 126
        %v1183 = vpop.permute.xlu0 %1182
        %1184 = vrot.lane.b32.xlu0 %v1106, 126
        %v1185 = vpop.permute.xlu0 %1184
        %1186 = vrot.lane.b32.xlu0 %v1107, 126
        %v1187 = vpop.permute.xlu0 %1186
        %1188 = vrot.lane.b32.xlu0 %v1108, 126
        %v1189 = vpop.permute.xlu0 %1188
        %1190 = vrot.lane.b32.xlu0 %v1109, 126
        %v1191 = vpop.permute.xlu0 %1190
        %1192 = vrot.lane.b32.xlu0 %v1110, 126
        %v1193 = vpop.permute.xlu0 %1192
        %1194 = vrot.lane.b32.xlu0 %v1111, 126
        %v1195 = vpop.permute.xlu0 %1194
        %1196 = vrot.lane.b32.xlu0 %v1112, 126
        %v1197 = vpop.permute.xlu0 %1196
        %1198 = vrot.lane.b32.xlu0 %v1113, 126
        %v1199 = vpop.permute.xlu0 %1198
        %1200 = vrot.lane.b32.xlu0 %v1114, 126
        %v1201 = vpop.permute.xlu0 %1200
        %1202 = vrot.lane.b32.xlu0 %v1115, 126
        %v1203 = vpop.permute.xlu0 %1202
        %1204 = vrot.lane.b32.xlu0 %v1116, 126
        %v1205 = vpop.permute.xlu0 %1204
        %1206 = vrot.lane.b32.xlu0 %v1117, 126
        %v1207 = vpop.permute.xlu0 %1206
        %1208 = vrot.lane.b32.xlu0 %v1118, 126
        %v1209 = vpop.permute.xlu0 %1208
        %1210 = vrot.lane.b32.xlu0 %v1119, 126
        %v1211 = vpop.permute.xlu0 %1210
        %1212 = vrot.lane.b32.xlu0 %v1120, 126
        %v1213 = vpop.permute.xlu0 %1212
        %1214 = vrot.lane.b32.xlu0 %v1121, 126
        %v1215 = vpop.permute.xlu0 %1214
        %1216 = vrot.lane.b32.xlu0 %v1122, 126
        %v1217 = vpop.permute.xlu0 %1216
        %1218 = vrot.lane.b32.xlu0 %v1123, 126
        %v1219 = vpop.permute.xlu0 %1218
        %vm1220 = vcmask 1031168
        %v1221 = vsel %vm1220, %v1157, %v1159
        %v1222 = vsel %vm1220, %v1159, %v1161
        %v1223 = vsel %vm1220, %v1161, %v1163
        %v1224 = vsel %vm1220, %v1163, %v1165
        %v1225 = vsel %vm1220, %v1165, %v1167
        %v1226 = vsel %vm1220, %v1167, %v1169
        %v1227 = vsel %vm1220, %v1169, %v1171
        %v1228 = vsel %vm1220, %v1173, %v1175
        %v1229 = vsel %vm1220, %v1175, %v1177
        %v1230 = vsel %vm1220, %v1177, %v1179
        %v1231 = vsel %vm1220, %v1179, %v1181
        %v1232 = vsel %vm1220, %v1181, %v1183
        %v1233 = vsel %vm1220, %v1183, %v1185
        %v1234 = vsel %vm1220, %v1185, %v1187
        %v1235 = vsel %vm1220, %v1189, %v1191
        %v1236 = vsel %vm1220, %v1191, %v1193
        %v1237 = vsel %vm1220, %v1193, %v1195
        %v1238 = vsel %vm1220, %v1195, %v1197
        %v1239 = vsel %vm1220, %v1197, %v1199
        %v1240 = vsel %vm1220, %v1199, %v1201
        %v1241 = vsel %vm1220, %v1201, %v1203
        %v1242 = vsel %vm1220, %v1205, %v1207
        %v1243 = vsel %vm1220, %v1207, %v1209
        %v1244 = vsel %vm1220, %v1209, %v1211
        %v1245 = vsel %vm1220, %v1211, %v1213
        %v1246 = vsel %vm1220, %v1213, %v1215
        %v1247 = vsel %vm1220, %v1215, %v1217
        %v1248 = vsel %vm1220, %v1217, %v1219
        %v1277 = vadd.f32 %v1039, %v1221
        %v1278 = vadd.f32 %v1040, %v1222
        %v1279 = vadd.f32 %v1041, %v1223
        %v1280 = vadd.f32 %v1042, %v1224
        %v1281 = vadd.f32 %v1043, %v1225
        %v1282 = vadd.f32 %v1044, %v1226
        %v1283 = vadd.f32 %v1045, %v1227
        %v1284 = vadd.f32 %v1046, %v1228
        %v1285 = vadd.f32 %v1047, %v1229
        %v1286 = vadd.f32 %v1048, %v1230
        %v1287 = vadd.f32 %v1049, %v1231
        %v1288 = vadd.f32 %v1050, %v1232
        %v1289 = vadd.f32 %v1051, %v1233
        %v1290 = vadd.f32 %v1052, %v1234
        %v1291 = vadd.f32 %v1053, %v1235
        %v1292 = vadd.f32 %v1054, %v1236
        %v1293 = vadd.f32 %v1055, %v1237
        %v1294 = vadd.f32 %v1056, %v1238
        %v1295 = vadd.f32 %v1057, %v1239
        %v1296 = vadd.f32 %v1058, %v1240
        %v1297 = vadd.f32 %v1059, %v1241
        %v1298 = vadd.f32 %v1060, %v1242
        %v1299 = vadd.f32 %v1061, %v1243
        %v1300 = vadd.f32 %v1062, %v1244
        %v1301 = vadd.f32 %v1063, %v1245
        %v1302 = vadd.f32 %v1064, %v1246
        %v1303 = vadd.f32 %v1065, %v1247
        %v1304 = vadd.f32 %v1066, %v1248
        %s1305 = scalar_lea.vmem %s1, 96
        %v1306 = vld [vmem:[%s1305] sm:$0xff]
        %v1307 = vld [vmem:[%s1305 + $0x8] sm:$0xff]
        %v1308 = vld [vmem:[%s1305 + $0x10] sm:$0xff]
        %v1309 = vld [vmem:[%s1305 + $0x18] sm:$0xff]
        %1311 = vset.pattern.permute.xlu0 0
        %1312 = vperm.xlu0 %1311, %v1306
        %v1313 = vpop.permute.xlu0 %1312
        %1316 = vset.pattern.permute.xlu0 0
        %1317 = vperm.xlu0 %1316, %v1307
        %v1318 = vpop.permute.xlu0 %1317
        %1321 = vset.pattern.permute.xlu0 0
        %1322 = vperm.xlu0 %1321, %v1308
        %v1323 = vpop.permute.xlu0 %1322
        %1326 = vset.pattern.permute.xlu0 0
        %1327 = vperm.xlu0 %1326, %v1309
        %v1328 = vpop.permute.xlu0 %1327
        %v1330 = vmul.f32 %v1313, %v817
        %v1331 = vmul.f32 %v1313, %v821
        %v1332 = vmul.f32 %v1313, %v825
        %v1333 = vmul.f32 %v1313, %v829
        %v1334 = vmul.f32 %v1313, %v833
        %v1335 = vmul.f32 %v1313, %v837
        %v1336 = vmul.f32 %v1313, %v841
        %v1337 = vmul.f32 %v1313, %v845
        %v1338 = vmul.f32 %v1318, %v817
        %v1339 = vmul.f32 %v1318, %v821
        %v1340 = vmul.f32 %v1318, %v825
        %v1341 = vmul.f32 %v1318, %v829
        %v1342 = vmul.f32 %v1318, %v833
        %v1343 = vmul.f32 %v1318, %v837
        %v1344 = vmul.f32 %v1318, %v841
        %v1345 = vmul.f32 %v1318, %v845
        %v1346 = vmul.f32 %v1323, %v817
        %v1347 = vmul.f32 %v1323, %v821
        %v1348 = vmul.f32 %v1323, %v825
        %v1349 = vmul.f32 %v1323, %v829
        %v1350 = vmul.f32 %v1323, %v833
        %v1351 = vmul.f32 %v1323, %v837
        %v1352 = vmul.f32 %v1323, %v841
        %v1353 = vmul.f32 %v1323, %v845
        %v1354 = vmul.f32 %v1328, %v817
        %v1355 = vmul.f32 %v1328, %v821
        %v1356 = vmul.f32 %v1328, %v825
        %v1357 = vmul.f32 %v1328, %v829
        %v1358 = vmul.f32 %v1328, %v833
        %v1359 = vmul.f32 %v1328, %v837
        %v1360 = vmul.f32 %v1328, %v841
        %v1361 = vmul.f32 %v1328, %v845
        %1394 = vrot.lane.b32.xlu0 %v1330, 96
        %v1395 = vpop.permute.xlu0 %1394
        %1396 = vrot.lane.b32.xlu0 %v1331, 96
        %v1397 = vpop.permute.xlu0 %1396
        %1398 = vrot.lane.b32.xlu0 %v1332, 96
        %v1399 = vpop.permute.xlu0 %1398
        %1400 = vrot.lane.b32.xlu0 %v1333, 96
        %v1401 = vpop.permute.xlu0 %1400
        %1402 = vrot.lane.b32.xlu0 %v1334, 96
        %v1403 = vpop.permute.xlu0 %1402
        %1404 = vrot.lane.b32.xlu0 %v1335, 96
        %v1405 = vpop.permute.xlu0 %1404
        %1406 = vrot.lane.b32.xlu0 %v1336, 96
        %v1407 = vpop.permute.xlu0 %1406
        %1408 = vrot.lane.b32.xlu0 %v1337, 96
        %v1409 = vpop.permute.xlu0 %1408
        %1410 = vrot.lane.b32.xlu0 %v1338, 96
        %v1411 = vpop.permute.xlu0 %1410
        %1412 = vrot.lane.b32.xlu0 %v1339, 96
        %v1413 = vpop.permute.xlu0 %1412
        %1414 = vrot.lane.b32.xlu0 %v1340, 96
        %v1415 = vpop.permute.xlu0 %1414
        %1416 = vrot.lane.b32.xlu0 %v1341, 96
        %v1417 = vpop.permute.xlu0 %1416
        %1418 = vrot.lane.b32.xlu0 %v1342, 96
        %v1419 = vpop.permute.xlu0 %1418
        %1420 = vrot.lane.b32.xlu0 %v1343, 96
        %v1421 = vpop.permute.xlu0 %1420
        %1422 = vrot.lane.b32.xlu0 %v1344, 96
        %v1423 = vpop.permute.xlu0 %1422
        %1424 = vrot.lane.b32.xlu0 %v1345, 96
        %v1425 = vpop.permute.xlu0 %1424
        %1426 = vrot.lane.b32.xlu0 %v1346, 96
        %v1427 = vpop.permute.xlu0 %1426
        %1428 = vrot.lane.b32.xlu0 %v1347, 96
        %v1429 = vpop.permute.xlu0 %1428
        %1430 = vrot.lane.b32.xlu0 %v1348, 96
        %v1431 = vpop.permute.xlu0 %1430
        %1432 = vrot.lane.b32.xlu0 %v1349, 96
        %v1433 = vpop.permute.xlu0 %1432
        %1434 = vrot.lane.b32.xlu0 %v1350, 96
        %v1435 = vpop.permute.xlu0 %1434
        %1436 = vrot.lane.b32.xlu0 %v1351, 96
        %v1437 = vpop.permute.xlu0 %1436
        %1438 = vrot.lane.b32.xlu0 %v1352, 96
        %v1439 = vpop.permute.xlu0 %1438
        %1440 = vrot.lane.b32.xlu0 %v1353, 96
        %v1441 = vpop.permute.xlu0 %1440
        %1442 = vrot.lane.b32.xlu0 %v1354, 96
        %v1443 = vpop.permute.xlu0 %1442
        %1444 = vrot.lane.b32.xlu0 %v1355, 96
        %v1445 = vpop.permute.xlu0 %1444
        %1446 = vrot.lane.b32.xlu0 %v1356, 96
        %v1447 = vpop.permute.xlu0 %1446
        %1448 = vrot.lane.b32.xlu0 %v1357, 96
        %v1449 = vpop.permute.xlu0 %1448
        %1450 = vrot.lane.b32.xlu0 %v1358, 96
        %v1451 = vpop.permute.xlu0 %1450
        %1452 = vrot.lane.b32.xlu0 %v1359, 96
        %v1453 = vpop.permute.xlu0 %1452
        %1454 = vrot.lane.b32.xlu0 %v1360, 96
        %v1455 = vpop.permute.xlu0 %1454
        %1456 = vrot.lane.b32.xlu0 %v1361, 96
        %v1457 = vpop.permute.xlu0 %1456
        %vm1458 = vcmask 785408
        %v1459 = vsel %vm1458, %v1395, %v1397
        %v1460 = vsel %vm1458, %v1397, %v1399
        %v1461 = vsel %vm1458, %v1399, %v1401
        %v1462 = vsel %vm1458, %v1401, %v1403
        %v1463 = vsel %vm1458, %v1403, %v1405
        %v1464 = vsel %vm1458, %v1405, %v1407
        %v1465 = vsel %vm1458, %v1407, %v1409
        %v1466 = vsel %vm1458, %v1411, %v1413
        %v1467 = vsel %vm1458, %v1413, %v1415
        %v1468 = vsel %vm1458, %v1415, %v1417
        %v1469 = vsel %vm1458, %v1417, %v1419
        %v1470 = vsel %vm1458, %v1419, %v1421
        %v1471 = vsel %vm1458, %v1421, %v1423
        %v1472 = vsel %vm1458, %v1423, %v1425
        %v1473 = vsel %vm1458, %v1427, %v1429
        %v1474 = vsel %vm1458, %v1429, %v1431
        %v1475 = vsel %vm1458, %v1431, %v1433
        %v1476 = vsel %vm1458, %v1433, %v1435
        %v1477 = vsel %vm1458, %v1435, %v1437
        %v1478 = vsel %vm1458, %v1437, %v1439
        %v1479 = vsel %vm1458, %v1439, %v1441
        %v1480 = vsel %vm1458, %v1443, %v1445
        %v1481 = vsel %vm1458, %v1445, %v1447
        %v1482 = vsel %vm1458, %v1447, %v1449
        %v1483 = vsel %vm1458, %v1449, %v1451
        %v1484 = vsel %vm1458, %v1451, %v1453
        %v1485 = vsel %vm1458, %v1453, %v1455
        %v1486 = vsel %vm1458, %v1455, %v1457
        %v1515 = vadd.f32 %v1277, %v1459
        %v1516 = vadd.f32 %v1278, %v1460
        %v1517 = vadd.f32 %v1279, %v1461
        %v1518 = vadd.f32 %v1280, %v1462
        %v1519 = vadd.f32 %v1281, %v1463
        %v1520 = vadd.f32 %v1282, %v1464
        %v1521 = vadd.f32 %v1283, %v1465
        %v1522 = vadd.f32 %v1284, %v1466
        %v1523 = vadd.f32 %v1285, %v1467
        %v1524 = vadd.f32 %v1286, %v1468
        %v1525 = vadd.f32 %v1287, %v1469
        %v1526 = vadd.f32 %v1288, %v1470
        %v1527 = vadd.f32 %v1289, %v1471
        %v1528 = vadd.f32 %v1290, %v1472
        %v1529 = vadd.f32 %v1291, %v1473
        %v1530 = vadd.f32 %v1292, %v1474
        %v1531 = vadd.f32 %v1293, %v1475
        %v1532 = vadd.f32 %v1294, %v1476
        %v1533 = vadd.f32 %v1295, %v1477
        %v1534 = vadd.f32 %v1296, %v1478
        %v1535 = vadd.f32 %v1297, %v1479
        %v1536 = vadd.f32 %v1298, %v1480
        %v1537 = vadd.f32 %v1299, %v1481
        %v1538 = vadd.f32 %v1300, %v1482
        %v1539 = vadd.f32 %v1301, %v1483
        %v1540 = vadd.f32 %v1302, %v1484
        %v1541 = vadd.f32 %v1303, %v1485
        %v1542 = vadd.f32 %v1304, %v1486
        %s1543 = scalar_lea.vmem %s1, 128
        %v1544 = vld [vmem:[%s1543] sm:$0xff]
        %v1545 = vld [vmem:[%s1543 + $0x8] sm:$0xff]
        %v1546 = vld [vmem:[%s1543 + $0x10] sm:$0xff]
        %v1547 = vld [vmem:[%s1543 + $0x18] sm:$0xff]
        %1549 = vset.pattern.permute.xlu0 0
        %1550 = vperm.xlu0 %1549, %v1544
        %v1551 = vpop.permute.xlu0 %1550
        %1554 = vset.pattern.permute.xlu0 0
        %1555 = vperm.xlu0 %1554, %v1545
        %v1556 = vpop.permute.xlu0 %1555
        %1559 = vset.pattern.permute.xlu0 0
        %1560 = vperm.xlu0 %1559, %v1546
        %v1561 = vpop.permute.xlu0 %1560
        %1564 = vset.pattern.permute.xlu0 0
        %1565 = vperm.xlu0 %1564, %v1547
        %v1566 = vpop.permute.xlu0 %1565
        %v1568 = vmul.f32 %v1551, %v817
        %v1569 = vmul.f32 %v1551, %v821
        %v1570 = vmul.f32 %v1551, %v825
        %v1571 = vmul.f32 %v1551, %v829
        %v1572 = vmul.f32 %v1551, %v833
        %v1573 = vmul.f32 %v1551, %v837
        %v1574 = vmul.f32 %v1551, %v841
        %v1575 = vmul.f32 %v1551, %v845
        %v1576 = vmul.f32 %v1556, %v817
        %v1577 = vmul.f32 %v1556, %v821
        %v1578 = vmul.f32 %v1556, %v825
        %v1579 = vmul.f32 %v1556, %v829
        %v1580 = vmul.f32 %v1556, %v833
        %v1581 = vmul.f32 %v1556, %v837
        %v1582 = vmul.f32 %v1556, %v841
        %v1583 = vmul.f32 %v1556, %v845
        %v1584 = vmul.f32 %v1561, %v817
        %v1585 = vmul.f32 %v1561, %v821
        %v1586 = vmul.f32 %v1561, %v825
        %v1587 = vmul.f32 %v1561, %v829
        %v1588 = vmul.f32 %v1561, %v833
        %v1589 = vmul.f32 %v1561, %v837
        %v1590 = vmul.f32 %v1561, %v841
        %v1591 = vmul.f32 %v1561, %v845
        %v1592 = vmul.f32 %v1566, %v817
        %v1593 = vmul.f32 %v1566, %v821
        %v1594 = vmul.f32 %v1566, %v825
        %v1595 = vmul.f32 %v1566, %v829
        %v1596 = vmul.f32 %v1566, %v833
        %v1597 = vmul.f32 %v1566, %v837
        %v1598 = vmul.f32 %v1566, %v841
        %v1599 = vmul.f32 %v1566, %v845
        %1632 = vrot.lane.b32.xlu0 %v1568, 95
        %v1633 = vpop.permute.xlu0 %1632
        %1634 = vrot.lane.b32.xlu0 %v1569, 95
        %v1635 = vpop.permute.xlu0 %1634
        %1636 = vrot.lane.b32.xlu0 %v1570, 95
        %v1637 = vpop.permute.xlu0 %1636
        %1638 = vrot.lane.b32.xlu0 %v1571, 95
        %v1639 = vpop.permute.xlu0 %1638
        %1640 = vrot.lane.b32.xlu0 %v1572, 95
        %v1641 = vpop.permute.xlu0 %1640
        %1642 = vrot.lane.b32.xlu0 %v1573, 95
        %v1643 = vpop.permute.xlu0 %1642
        %1644 = vrot.lane.b32.xlu0 %v1574, 95
        %v1645 = vpop.permute.xlu0 %1644
        %1646 = vrot.lane.b32.xlu0 %v1575, 95
        %v1647 = vpop.permute.xlu0 %1646
        %1648 = vrot.lane.b32.xlu0 %v1576, 95
        %v1649 = vpop.permute.xlu0 %1648
        %1650 = vrot.lane.b32.xlu0 %v1577, 95
        %v1651 = vpop.permute.xlu0 %1650
        %1652 = vrot.lane.b32.xlu0 %v1578, 95
        %v1653 = vpop.permute.xlu0 %1652
        %1654 = vrot.lane.b32.xlu0 %v1579, 95
        %v1655 = vpop.permute.xlu0 %1654
        %1656 = vrot.lane.b32.xlu0 %v1580, 95
        %v1657 = vpop.permute.xlu0 %1656
        %1658 = vrot.lane.b32.xlu0 %v1581, 95
        %v1659 = vpop.permute.xlu0 %1658
        %1660 = vrot.lane.b32.xlu0 %v1582, 95
        %v1661 = vpop.permute.xlu0 %1660
        %1662 = vrot.lane.b32.xlu0 %v1583, 95
        %v1663 = vpop.permute.xlu0 %1662
        %1664 = vrot.lane.b32.xlu0 %v1584, 95
        %v1665 = vpop.permute.xlu0 %1664
        %1666 = vrot.lane.b32.xlu0 %v1585, 95
        %v1667 = vpop.permute.xlu0 %1666
        %1668 = vrot.lane.b32.xlu0 %v1586, 95
        %v1669 = vpop.permute.xlu0 %1668
        %1670 = vrot.lane.b32.xlu0 %v1587, 95
        %v1671 = vpop.permute.xlu0 %1670
        %1672 = vrot.lane.b32.xlu0 %v1588, 95
        %v1673 = vpop.permute.xlu0 %1672
        %1674 = vrot.lane.b32.xlu0 %v1589, 95
        %v1675 = vpop.permute.xlu0 %1674
        %1676 = vrot.lane.b32.xlu0 %v1590, 95
        %v1677 = vpop.permute.xlu0 %1676
        %1678 = vrot.lane.b32.xlu0 %v1591, 95
        %v1679 = vpop.permute.xlu0 %1678
        %1680 = vrot.lane.b32.xlu0 %v1592, 95
        %v1681 = vpop.permute.xlu0 %1680
        %1682 = vrot.lane.b32.xlu0 %v1593, 95
        %v1683 = vpop.permute.xlu0 %1682
        %1684 = vrot.lane.b32.xlu0 %v1594, 95
        %v1685 = vpop.permute.xlu0 %1684
        %1686 = vrot.lane.b32.xlu0 %v1595, 95
        %v1687 = vpop.permute.xlu0 %1686
        %1688 = vrot.lane.b32.xlu0 %v1596, 95
        %v1689 = vpop.permute.xlu0 %1688
        %1690 = vrot.lane.b32.xlu0 %v1597, 95
        %v1691 = vpop.permute.xlu0 %1690
        %1692 = vrot.lane.b32.xlu0 %v1598, 95
        %v1693 = vpop.permute.xlu0 %1692
        %1694 = vrot.lane.b32.xlu0 %v1599, 95
        %v1695 = vpop.permute.xlu0 %1694
        %vm1696 = vcmask 777216
        %v1697 = vsel %vm1696, %v1633, %v1635
        %v1698 = vsel %vm1696, %v1635, %v1637
        %v1699 = vsel %vm1696, %v1637, %v1639
        %v1700 = vsel %vm1696, %v1639, %v1641
        %v1701 = vsel %vm1696, %v1641, %v1643
        %v1702 = vsel %vm1696, %v1643, %v1645
        %v1703 = vsel %vm1696, %v1645, %v1647
        %v1704 = vsel %vm1696, %v1649, %v1651
        %v1705 = vsel %vm1696, %v1651, %v1653
        %v1706 = vsel %vm1696, %v1653, %v1655
        %v1707 = vsel %vm1696, %v1655, %v1657
        %v1708 = vsel %vm1696, %v1657, %v1659
        %v1709 = vsel %vm1696, %v1659, %v1661
        %v1710 = vsel %vm1696, %v1661, %v1663
        %v1711 = vsel %vm1696, %v1665, %v1667
        %v1712 = vsel %vm1696, %v1667, %v1669
        %v1713 = vsel %vm1696, %v1669, %v1671
        %v1714 = vsel %vm1696, %v1671, %v1673
        %v1715 = vsel %vm1696, %v1673, %v1675
        %v1716 = vsel %vm1696, %v1675, %v1677
        %v1717 = vsel %vm1696, %v1677, %v1679
        %v1718 = vsel %vm1696, %v1681, %v1683
        %v1719 = vsel %vm1696, %v1683, %v1685
        %v1720 = vsel %vm1696, %v1685, %v1687
        %v1721 = vsel %vm1696, %v1687, %v1689
        %v1722 = vsel %vm1696, %v1689, %v1691
        %v1723 = vsel %vm1696, %v1691, %v1693
        %v1724 = vsel %vm1696, %v1693, %v1695
        %v1753 = vadd.f32 %v1515, %v1697
        %v1754 = vadd.f32 %v1516, %v1698
        %v1755 = vadd.f32 %v1517, %v1699
        %v1756 = vadd.f32 %v1518, %v1700
        %v1757 = vadd.f32 %v1519, %v1701
        %v1758 = vadd.f32 %v1520, %v1702
        %v1759 = vadd.f32 %v1521, %v1703
        %v1760 = vadd.f32 %v1522, %v1704
        %v1761 = vadd.f32 %v1523, %v1705
        %v1762 = vadd.f32 %v1524, %v1706
        %v1763 = vadd.f32 %v1525, %v1707
        %v1764 = vadd.f32 %v1526, %v1708
        %v1765 = vadd.f32 %v1527, %v1709
        %v1766 = vadd.f32 %v1528, %v1710
        %v1767 = vadd.f32 %v1529, %v1711
        %v1768 = vadd.f32 %v1530, %v1712
        %v1769 = vadd.f32 %v1531, %v1713
        %v1770 = vadd.f32 %v1532, %v1714
        %v1771 = vadd.f32 %v1533, %v1715
        %v1772 = vadd.f32 %v1534, %v1716
        %v1773 = vadd.f32 %v1535, %v1717
        %v1774 = vadd.f32 %v1536, %v1718
        %v1775 = vadd.f32 %v1537, %v1719
        %v1776 = vadd.f32 %v1538, %v1720
        %v1777 = vadd.f32 %v1539, %v1721
        %v1778 = vadd.f32 %v1540, %v1722
        %v1779 = vadd.f32 %v1541, %v1723
        %v1780 = vadd.f32 %v1542, %v1724
        %s1781 = scalar_lea.vmem %s1, 160
        %v1782 = vld [vmem:[%s1781] sm:$0xff]
        %v1783 = vld [vmem:[%s1781 + $0x8] sm:$0xff]
        %v1784 = vld [vmem:[%s1781 + $0x10] sm:$0xff]
        %v1785 = vld [vmem:[%s1781 + $0x18] sm:$0xff]
        %1787 = vset.pattern.permute.xlu0 0
        %1788 = vperm.xlu0 %1787, %v1782
        %v1789 = vpop.permute.xlu0 %1788
        %1792 = vset.pattern.permute.xlu0 0
        %1793 = vperm.xlu0 %1792, %v1783
        %v1794 = vpop.permute.xlu0 %1793
        %1797 = vset.pattern.permute.xlu0 0
        %1798 = vperm.xlu0 %1797, %v1784
        %v1799 = vpop.permute.xlu0 %1798
        %1802 = vset.pattern.permute.xlu0 0
        %1803 = vperm.xlu0 %1802, %v1785
        %v1804 = vpop.permute.xlu0 %1803
        %v1806 = vmul.f32 %v1789, %v817
        %v1807 = vmul.f32 %v1789, %v821
        %v1808 = vmul.f32 %v1789, %v825
        %v1809 = vmul.f32 %v1789, %v829
        %v1810 = vmul.f32 %v1789, %v833
        %v1811 = vmul.f32 %v1789, %v837
        %v1812 = vmul.f32 %v1789, %v841
        %v1813 = vmul.f32 %v1789, %v845
        %v1814 = vmul.f32 %v1794, %v817
        %v1815 = vmul.f32 %v1794, %v821
        %v1816 = vmul.f32 %v1794, %v825
        %v1817 = vmul.f32 %v1794, %v829
        %v1818 = vmul.f32 %v1794, %v833
        %v1819 = vmul.f32 %v1794, %v837
        %v1820 = vmul.f32 %v1794, %v841
        %v1821 = vmul.f32 %v1794, %v845
        %v1822 = vmul.f32 %v1799, %v817
        %v1823 = vmul.f32 %v1799, %v821
        %v1824 = vmul.f32 %v1799, %v825
        %v1825 = vmul.f32 %v1799, %v829
        %v1826 = vmul.f32 %v1799, %v833
        %v1827 = vmul.f32 %v1799, %v837
        %v1828 = vmul.f32 %v1799, %v841
        %v1829 = vmul.f32 %v1799, %v845
        %v1830 = vmul.f32 %v1804, %v817
        %v1831 = vmul.f32 %v1804, %v821
        %v1832 = vmul.f32 %v1804, %v825
        %v1833 = vmul.f32 %v1804, %v829
        %v1834 = vmul.f32 %v1804, %v833
        %v1835 = vmul.f32 %v1804, %v837
        %v1836 = vmul.f32 %v1804, %v841
        %v1837 = vmul.f32 %v1804, %v845
        %1870 = vrot.lane.b32.xlu0 %v1806, 94
        %v1871 = vpop.permute.xlu0 %1870
        %1872 = vrot.lane.b32.xlu0 %v1807, 94
        %v1873 = vpop.permute.xlu0 %1872
        %1874 = vrot.lane.b32.xlu0 %v1808, 94
        %v1875 = vpop.permute.xlu0 %1874
        %1876 = vrot.lane.b32.xlu0 %v1809, 94
        %v1877 = vpop.permute.xlu0 %1876
        %1878 = vrot.lane.b32.xlu0 %v1810, 94
        %v1879 = vpop.permute.xlu0 %1878
        %1880 = vrot.lane.b32.xlu0 %v1811, 94
        %v1881 = vpop.permute.xlu0 %1880
        %1882 = vrot.lane.b32.xlu0 %v1812, 94
        %v1883 = vpop.permute.xlu0 %1882
        %1884 = vrot.lane.b32.xlu0 %v1813, 94
        %v1885 = vpop.permute.xlu0 %1884
        %1886 = vrot.lane.b32.xlu0 %v1814, 94
        %v1887 = vpop.permute.xlu0 %1886
        %1888 = vrot.lane.b32.xlu0 %v1815, 94
        %v1889 = vpop.permute.xlu0 %1888
        %1890 = vrot.lane.b32.xlu0 %v1816, 94
        %v1891 = vpop.permute.xlu0 %1890
        %1892 = vrot.lane.b32.xlu0 %v1817, 94
        %v1893 = vpop.permute.xlu0 %1892
        %1894 = vrot.lane.b32.xlu0 %v1818, 94
        %v1895 = vpop.permute.xlu0 %1894
        %1896 = vrot.lane.b32.xlu0 %v1819, 94
        %v1897 = vpop.permute.xlu0 %1896
        %1898 = vrot.lane.b32.xlu0 %v1820, 94
        %v1899 = vpop.permute.xlu0 %1898
        %1900 = vrot.lane.b32.xlu0 %v1821, 94
        %v1901 = vpop.permute.xlu0 %1900
        %1902 = vrot.lane.b32.xlu0 %v1822, 94
        %v1903 = vpop.permute.xlu0 %1902
        %1904 = vrot.lane.b32.xlu0 %v1823, 94
        %v1905 = vpop.permute.xlu0 %1904
        %1906 = vrot.lane.b32.xlu0 %v1824, 94
        %v1907 = vpop.permute.xlu0 %1906
        %1908 = vrot.lane.b32.xlu0 %v1825, 94
        %v1909 = vpop.permute.xlu0 %1908
        %1910 = vrot.lane.b32.xlu0 %v1826, 94
        %v1911 = vpop.permute.xlu0 %1910
        %1912 = vrot.lane.b32.xlu0 %v1827, 94
        %v1913 = vpop.permute.xlu0 %1912
        %1914 = vrot.lane.b32.xlu0 %v1828, 94
        %v1915 = vpop.permute.xlu0 %1914
        %1916 = vrot.lane.b32.xlu0 %v1829, 94
        %v1917 = vpop.permute.xlu0 %1916
        %1918 = vrot.lane.b32.xlu0 %v1830, 94
        %v1919 = vpop.permute.xlu0 %1918
        %1920 = vrot.lane.b32.xlu0 %v1831, 94
        %v1921 = vpop.permute.xlu0 %1920
        %1922 = vrot.lane.b32.xlu0 %v1832, 94
        %v1923 = vpop.permute.xlu0 %1922
        %1924 = vrot.lane.b32.xlu0 %v1833, 94
        %v1925 = vpop.permute.xlu0 %1924
        %1926 = vrot.lane.b32.xlu0 %v1834, 94
        %v1927 = vpop.permute.xlu0 %1926
        %1928 = vrot.lane.b32.xlu0 %v1835, 94
        %v1929 = vpop.permute.xlu0 %1928
        %1930 = vrot.lane.b32.xlu0 %v1836, 94
        %v1931 = vpop.permute.xlu0 %1930
        %1932 = vrot.lane.b32.xlu0 %v1837, 94
        %v1933 = vpop.permute.xlu0 %1932
        %vm1934 = vcmask 769024
        %v1935 = vsel %vm1934, %v1871, %v1873
        %v1936 = vsel %vm1934, %v1873, %v1875
        %v1937 = vsel %vm1934, %v1875, %v1877
        %v1938 = vsel %vm1934, %v1877, %v1879
        %v1939 = vsel %vm1934, %v1879, %v1881
        %v1940 = vsel %vm1934, %v1881, %v1883
        %v1941 = vsel %vm1934, %v1883, %v1885
        %v1942 = vsel %vm1934, %v1887, %v1889
        %v1943 = vsel %vm1934, %v1889, %v1891
        %v1944 = vsel %vm1934, %v1891, %v1893
        %v1945 = vsel %vm1934, %v1893, %v1895
        %v1946 = vsel %vm1934, %v1895, %v1897
        %v1947 = vsel %vm1934, %v1897, %v1899
        %v1948 = vsel %vm1934, %v1899, %v1901
        %v1949 = vsel %vm1934, %v1903, %v1905
        %v1950 = vsel %vm1934, %v1905, %v1907
        %v1951 = vsel %vm1934, %v1907, %v1909
        %v1952 = vsel %vm1934, %v1909, %v1911
        %v1953 = vsel %vm1934, %v1911, %v1913
        %v1954 = vsel %vm1934, %v1913, %v1915
        %v1955 = vsel %vm1934, %v1915, %v1917
        %v1956 = vsel %vm1934, %v1919, %v1921
        %v1957 = vsel %vm1934, %v1921, %v1923
        %v1958 = vsel %vm1934, %v1923, %v1925
        %v1959 = vsel %vm1934, %v1925, %v1927
        %v1960 = vsel %vm1934, %v1927, %v1929
        %v1961 = vsel %vm1934, %v1929, %v1931
        %v1962 = vsel %vm1934, %v1931, %v1933
        %v1991 = vadd.f32 %v1753, %v1935
        %v1992 = vadd.f32 %v1754, %v1936
        %v1993 = vadd.f32 %v1755, %v1937
        %v1994 = vadd.f32 %v1756, %v1938
        %v1995 = vadd.f32 %v1757, %v1939
        %v1996 = vadd.f32 %v1758, %v1940
        %v1997 = vadd.f32 %v1759, %v1941
        %v1998 = vadd.f32 %v1760, %v1942
        %v1999 = vadd.f32 %v1761, %v1943
        %v2000 = vadd.f32 %v1762, %v1944
        %v2001 = vadd.f32 %v1763, %v1945
        %v2002 = vadd.f32 %v1764, %v1946
        %v2003 = vadd.f32 %v1765, %v1947
        %v2004 = vadd.f32 %v1766, %v1948
        %v2005 = vadd.f32 %v1767, %v1949
        %v2006 = vadd.f32 %v1768, %v1950
        %v2007 = vadd.f32 %v1769, %v1951
        %v2008 = vadd.f32 %v1770, %v1952
        %v2009 = vadd.f32 %v1771, %v1953
        %v2010 = vadd.f32 %v1772, %v1954
        %v2011 = vadd.f32 %v1773, %v1955
        %v2012 = vadd.f32 %v1774, %v1956
        %v2013 = vadd.f32 %v1775, %v1957
        %v2014 = vadd.f32 %v1776, %v1958
        %v2015 = vadd.f32 %v1777, %v1959
        %v2016 = vadd.f32 %v1778, %v1960
        %v2017 = vadd.f32 %v1779, %v1961
        %v2018 = vadd.f32 %v1780, %v1962
        %s2019 = scalar_lea.vmem %s1, 192
        %v2020 = vld [vmem:[%s2019] sm:$0xff]
        %v2021 = vld [vmem:[%s2019 + $0x8] sm:$0xff]
        %v2022 = vld [vmem:[%s2019 + $0x10] sm:$0xff]
        %v2023 = vld [vmem:[%s2019 + $0x18] sm:$0xff]
        %2025 = vset.pattern.permute.xlu0 0
        %2026 = vperm.xlu0 %2025, %v2020
        %v2027 = vpop.permute.xlu0 %2026
        %2030 = vset.pattern.permute.xlu0 0
        %2031 = vperm.xlu0 %2030, %v2021
        %v2032 = vpop.permute.xlu0 %2031
        %2035 = vset.pattern.permute.xlu0 0
        %2036 = vperm.xlu0 %2035, %v2022
        %v2037 = vpop.permute.xlu0 %2036
        %2040 = vset.pattern.permute.xlu0 0
        %2041 = vperm.xlu0 %2040, %v2023
        %v2042 = vpop.permute.xlu0 %2041
        %v2044 = vmul.f32 %v2027, %v817
        %v2045 = vmul.f32 %v2027, %v821
        %v2046 = vmul.f32 %v2027, %v825
        %v2047 = vmul.f32 %v2027, %v829
        %v2048 = vmul.f32 %v2027, %v833
        %v2049 = vmul.f32 %v2027, %v837
        %v2050 = vmul.f32 %v2027, %v841
        %v2051 = vmul.f32 %v2027, %v845
        %v2052 = vmul.f32 %v2032, %v817
        %v2053 = vmul.f32 %v2032, %v821
        %v2054 = vmul.f32 %v2032, %v825
        %v2055 = vmul.f32 %v2032, %v829
        %v2056 = vmul.f32 %v2032, %v833
        %v2057 = vmul.f32 %v2032, %v837
        %v2058 = vmul.f32 %v2032, %v841
        %v2059 = vmul.f32 %v2032, %v845
        %v2060 = vmul.f32 %v2037, %v817
        %v2061 = vmul.f32 %v2037, %v821
        %v2062 = vmul.f32 %v2037, %v825
        %v2063 = vmul.f32 %v2037, %v829
        %v2064 = vmul.f32 %v2037, %v833
        %v2065 = vmul.f32 %v2037, %v837
        %v2066 = vmul.f32 %v2037, %v841
        %v2067 = vmul.f32 %v2037, %v845
        %v2068 = vmul.f32 %v2042, %v817
        %v2069 = vmul.f32 %v2042, %v821
        %v2070 = vmul.f32 %v2042, %v825
        %v2071 = vmul.f32 %v2042, %v829
        %v2072 = vmul.f32 %v2042, %v833
        %v2073 = vmul.f32 %v2042, %v837
        %v2074 = vmul.f32 %v2042, %v841
        %v2075 = vmul.f32 %v2042, %v845
        %2108 = vrot.lane.b32.xlu0 %v2044, 64
        %v2109 = vpop.permute.xlu0 %2108
        %2110 = vrot.lane.b32.xlu0 %v2045, 64
        %v2111 = vpop.permute.xlu0 %2110
        %2112 = vrot.lane.b32.xlu0 %v2046, 64
        %v2113 = vpop.permute.xlu0 %2112
        %2114 = vrot.lane.b32.xlu0 %v2047, 64
        %v2115 = vpop.permute.xlu0 %2114
        %2116 = vrot.lane.b32.xlu0 %v2048, 64
        %v2117 = vpop.permute.xlu0 %2116
        %2118 = vrot.lane.b32.xlu0 %v2049, 64
        %v2119 = vpop.permute.xlu0 %2118
        %2120 = vrot.lane.b32.xlu0 %v2050, 64
        %v2121 = vpop.permute.xlu0 %2120
        %2122 = vrot.lane.b32.xlu0 %v2051, 64
        %v2123 = vpop.permute.xlu0 %2122
        %2124 = vrot.lane.b32.xlu0 %v2052, 64
        %v2125 = vpop.permute.xlu0 %2124
        %2126 = vrot.lane.b32.xlu0 %v2053, 64
        %v2127 = vpop.permute.xlu0 %2126
        %2128 = vrot.lane.b32.xlu0 %v2054, 64
        %v2129 = vpop.permute.xlu0 %2128
        %2130 = vrot.lane.b32.xlu0 %v2055, 64
        %v2131 = vpop.permute.xlu0 %2130
        %2132 = vrot.lane.b32.xlu0 %v2056, 64
        %v2133 = vpop.permute.xlu0 %2132
        %2134 = vrot.lane.b32.xlu0 %v2057, 64
        %v2135 = vpop.permute.xlu0 %2134
        %2136 = vrot.lane.b32.xlu0 %v2058, 64
        %v2137 = vpop.permute.xlu0 %2136
        %2138 = vrot.lane.b32.xlu0 %v2059, 64
        %v2139 = vpop.permute.xlu0 %2138
        %2140 = vrot.lane.b32.xlu0 %v2060, 64
        %v2141 = vpop.permute.xlu0 %2140
        %2142 = vrot.lane.b32.xlu0 %v2061, 64
        %v2143 = vpop.permute.xlu0 %2142
        %2144 = vrot.lane.b32.xlu0 %v2062, 64
        %v2145 = vpop.permute.xlu0 %2144
        %2146 = vrot.lane.b32.xlu0 %v2063, 64
        %v2147 = vpop.permute.xlu0 %2146
        %2148 = vrot.lane.b32.xlu0 %v2064, 64
        %v2149 = vpop.permute.xlu0 %2148
        %2150 = vrot.lane.b32.xlu0 %v2065, 64
        %v2151 = vpop.permute.xlu0 %2150
        %2152 = vrot.lane.b32.xlu0 %v2066, 64
        %v2153 = vpop.permute.xlu0 %2152
        %2154 = vrot.lane.b32.xlu0 %v2067, 64
        %v2155 = vpop.permute.xlu0 %2154
        %2156 = vrot.lane.b32.xlu0 %v2068, 64
        %v2157 = vpop.permute.xlu0 %2156
        %2158 = vrot.lane.b32.xlu0 %v2069, 64
        %v2159 = vpop.permute.xlu0 %2158
        %2160 = vrot.lane.b32.xlu0 %v2070, 64
        %v2161 = vpop.permute.xlu0 %2160
        %2162 = vrot.lane.b32.xlu0 %v2071, 64
        %v2163 = vpop.permute.xlu0 %2162
        %2164 = vrot.lane.b32.xlu0 %v2072, 64
        %v2165 = vpop.permute.xlu0 %2164
        %2166 = vrot.lane.b32.xlu0 %v2073, 64
        %v2167 = vpop.permute.xlu0 %2166
        %2168 = vrot.lane.b32.xlu0 %v2074, 64
        %v2169 = vpop.permute.xlu0 %2168
        %2170 = vrot.lane.b32.xlu0 %v2075, 64
        %v2171 = vpop.permute.xlu0 %2170
        %vm2172 = vcmask 523264
        %v2173 = vsel %vm2172, %v2109, %v2111
        %v2174 = vsel %vm2172, %v2111, %v2113
        %v2175 = vsel %vm2172, %v2113, %v2115
        %v2176 = vsel %vm2172, %v2115, %v2117
        %v2177 = vsel %vm2172, %v2117, %v2119
        %v2178 = vsel %vm2172, %v2119, %v2121
        %v2179 = vsel %vm2172, %v2121, %v2123
        %v2180 = vsel %vm2172, %v2125, %v2127
        %v2181 = vsel %vm2172, %v2127, %v2129
        %v2182 = vsel %vm2172, %v2129, %v2131
        %v2183 = vsel %vm2172, %v2131, %v2133
        %v2184 = vsel %vm2172, %v2133, %v2135
        %v2185 = vsel %vm2172, %v2135, %v2137
        %v2186 = vsel %vm2172, %v2137, %v2139
        %v2187 = vsel %vm2172, %v2141, %v2143
        %v2188 = vsel %vm2172, %v2143, %v2145
        %v2189 = vsel %vm2172, %v2145, %v2147
        %v2190 = vsel %vm2172, %v2147, %v2149
        %v2191 = vsel %vm2172, %v2149, %v2151
        %v2192 = vsel %vm2172, %v2151, %v2153
        %v2193 = vsel %vm2172, %v2153, %v2155
        %v2194 = vsel %vm2172, %v2157, %v2159
        %v2195 = vsel %vm2172, %v2159, %v2161
        %v2196 = vsel %vm2172, %v2161, %v2163
        %v2197 = vsel %vm2172, %v2163, %v2165
        %v2198 = vsel %vm2172, %v2165, %v2167
        %v2199 = vsel %vm2172, %v2167, %v2169
        %v2200 = vsel %vm2172, %v2169, %v2171
        %v2229 = vadd.f32 %v1991, %v2173
        %v2230 = vadd.f32 %v1992, %v2174
        %v2231 = vadd.f32 %v1993, %v2175
        %v2232 = vadd.f32 %v1994, %v2176
        %v2233 = vadd.f32 %v1995, %v2177
        %v2234 = vadd.f32 %v1996, %v2178
        %v2235 = vadd.f32 %v1997, %v2179
        %v2236 = vadd.f32 %v1998, %v2180
        %v2237 = vadd.f32 %v1999, %v2181
        %v2238 = vadd.f32 %v2000, %v2182
        %v2239 = vadd.f32 %v2001, %v2183
        %v2240 = vadd.f32 %v2002, %v2184
        %v2241 = vadd.f32 %v2003, %v2185
        %v2242 = vadd.f32 %v2004, %v2186
        %v2243 = vadd.f32 %v2005, %v2187
        %v2244 = vadd.f32 %v2006, %v2188
        %v2245 = vadd.f32 %v2007, %v2189
        %v2246 = vadd.f32 %v2008, %v2190
        %v2247 = vadd.f32 %v2009, %v2191
        %v2248 = vadd.f32 %v2010, %v2192
        %v2249 = vadd.f32 %v2011, %v2193
        %v2250 = vadd.f32 %v2012, %v2194
        %v2251 = vadd.f32 %v2013, %v2195
        %v2252 = vadd.f32 %v2014, %v2196
        %v2253 = vadd.f32 %v2015, %v2197
        %v2254 = vadd.f32 %v2016, %v2198
        %v2255 = vadd.f32 %v2017, %v2199
        %v2256 = vadd.f32 %v2018, %v2200
        %s2257 = scalar_lea.vmem %s1, 224
        %v2258 = vld [vmem:[%s2257] sm:$0xff]
        %v2259 = vld [vmem:[%s2257 + $0x8] sm:$0xff]
        %v2260 = vld [vmem:[%s2257 + $0x10] sm:$0xff]
        %v2261 = vld [vmem:[%s2257 + $0x18] sm:$0xff]
        %2263 = vset.pattern.permute.xlu0 0
        %2264 = vperm.xlu0 %2263, %v2258
        %v2265 = vpop.permute.xlu0 %2264
        %2268 = vset.pattern.permute.xlu0 0
        %2269 = vperm.xlu0 %2268, %v2259
        %v2270 = vpop.permute.xlu0 %2269
        %2273 = vset.pattern.permute.xlu0 0
        %2274 = vperm.xlu0 %2273, %v2260
        %v2275 = vpop.permute.xlu0 %2274
        %2278 = vset.pattern.permute.xlu0 0
        %2279 = vperm.xlu0 %2278, %v2261
        %v2280 = vpop.permute.xlu0 %2279
        %v2282 = vmul.f32 %v2265, %v817
        %v2283 = vmul.f32 %v2265, %v821
        %v2284 = vmul.f32 %v2265, %v825
        %v2285 = vmul.f32 %v2265, %v829
        %v2286 = vmul.f32 %v2265, %v833
        %v2287 = vmul.f32 %v2265, %v837
        %v2288 = vmul.f32 %v2265, %v841
        %v2289 = vmul.f32 %v2265, %v845
        %v2290 = vmul.f32 %v2270, %v817
        %v2291 = vmul.f32 %v2270, %v821
        %v2292 = vmul.f32 %v2270, %v825
        %v2293 = vmul.f32 %v2270, %v829
        %v2294 = vmul.f32 %v2270, %v833
        %v2295 = vmul.f32 %v2270, %v837
        %v2296 = vmul.f32 %v2270, %v841
        %v2297 = vmul.f32 %v2270, %v845
        %v2298 = vmul.f32 %v2275, %v817
        %v2299 = vmul.f32 %v2275, %v821
        %v2300 = vmul.f32 %v2275, %v825
        %v2301 = vmul.f32 %v2275, %v829
        %v2302 = vmul.f32 %v2275, %v833
        %v2303 = vmul.f32 %v2275, %v837
        %v2304 = vmul.f32 %v2275, %v841
        %v2305 = vmul.f32 %v2275, %v845
        %v2306 = vmul.f32 %v2280, %v817
        %v2307 = vmul.f32 %v2280, %v821
        %v2308 = vmul.f32 %v2280, %v825
        %v2309 = vmul.f32 %v2280, %v829
        %v2310 = vmul.f32 %v2280, %v833
        %v2311 = vmul.f32 %v2280, %v837
        %v2312 = vmul.f32 %v2280, %v841
        %v2313 = vmul.f32 %v2280, %v845
        %2346 = vrot.lane.b32.xlu0 %v2282, 63
        %v2347 = vpop.permute.xlu0 %2346
        %2348 = vrot.lane.b32.xlu0 %v2283, 63
        %v2349 = vpop.permute.xlu0 %2348
        %2350 = vrot.lane.b32.xlu0 %v2284, 63
        %v2351 = vpop.permute.xlu0 %2350
        %2352 = vrot.lane.b32.xlu0 %v2285, 63
        %v2353 = vpop.permute.xlu0 %2352
        %2354 = vrot.lane.b32.xlu0 %v2286, 63
        %v2355 = vpop.permute.xlu0 %2354
        %2356 = vrot.lane.b32.xlu0 %v2287, 63
        %v2357 = vpop.permute.xlu0 %2356
        %2358 = vrot.lane.b32.xlu0 %v2288, 63
        %v2359 = vpop.permute.xlu0 %2358
        %2360 = vrot.lane.b32.xlu0 %v2289, 63
        %v2361 = vpop.permute.xlu0 %2360
        %2362 = vrot.lane.b32.xlu0 %v2290, 63
        %v2363 = vpop.permute.xlu0 %2362
        %2364 = vrot.lane.b32.xlu0 %v2291, 63
        %v2365 = vpop.permute.xlu0 %2364
        %2366 = vrot.lane.b32.xlu0 %v2292, 63
        %v2367 = vpop.permute.xlu0 %2366
        %2368 = vrot.lane.b32.xlu0 %v2293, 63
        %v2369 = vpop.permute.xlu0 %2368
        %2370 = vrot.lane.b32.xlu0 %v2294, 63
        %v2371 = vpop.permute.xlu0 %2370
        %2372 = vrot.lane.b32.xlu0 %v2295, 63
        %v2373 = vpop.permute.xlu0 %2372
        %2374 = vrot.lane.b32.xlu0 %v2296, 63
        %v2375 = vpop.permute.xlu0 %2374
        %2376 = vrot.lane.b32.xlu0 %v2297, 63
        %v2377 = vpop.permute.xlu0 %2376
        %2378 = vrot.lane.b32.xlu0 %v2298, 63
        %v2379 = vpop.permute.xlu0 %2378
        %2380 = vrot.lane.b32.xlu0 %v2299, 63
        %v2381 = vpop.permute.xlu0 %2380
        %2382 = vrot.lane.b32.xlu0 %v2300, 63
        %v2383 = vpop.permute.xlu0 %2382
        %2384 = vrot.lane.b32.xlu0 %v2301, 63
        %v2385 = vpop.permute.xlu0 %2384
        %2386 = vrot.lane.b32.xlu0 %v2302, 63
        %v2387 = vpop.permute.xlu0 %2386
        %2388 = vrot.lane.b32.xlu0 %v2303, 63
        %v2389 = vpop.permute.xlu0 %2388
        %2390 = vrot.lane.b32.xlu0 %v2304, 63
        %v2391 = vpop.permute.xlu0 %2390
        %2392 = vrot.lane.b32.xlu0 %v2305, 63
        %v2393 = vpop.permute.xlu0 %2392
        %2394 = vrot.lane.b32.xlu0 %v2306, 63
        %v2395 = vpop.permute.xlu0 %2394
        %2396 = vrot.lane.b32.xlu0 %v2307, 63
        %v2397 = vpop.permute.xlu0 %2396
        %2398 = vrot.lane.b32.xlu0 %v2308, 63
        %v2399 = vpop.permute.xlu0 %2398
        %2400 = vrot.lane.b32.xlu0 %v2309, 63
        %v2401 = vpop.permute.xlu0 %2400
        %2402 = vrot.lane.b32.xlu0 %v2310, 63
        %v2403 = vpop.permute.xlu0 %2402
        %2404 = vrot.lane.b32.xlu0 %v2311, 63
        %v2405 = vpop.permute.xlu0 %2404
        %2406 = vrot.lane.b32.xlu0 %v2312, 63
        %v2407 = vpop.permute.xlu0 %2406
        %2408 = vrot.lane.b32.xlu0 %v2313, 63
        %v2409 = vpop.permute.xlu0 %2408
        %vm2410 = vcmask 515072
        %v2411 = vsel %vm2410, %v2347, %v2349
        %v2412 = vsel %vm2410, %v2349, %v2351
        %v2413 = vsel %vm2410, %v2351, %v2353
        %v2414 = vsel %vm2410, %v2353, %v2355
        %v2415 = vsel %vm2410, %v2355, %v2357
        %v2416 = vsel %vm2410, %v2357, %v2359
        %v2417 = vsel %vm2410, %v2359, %v2361
        %v2418 = vsel %vm2410, %v2363, %v2365
        %v2419 = vsel %vm2410, %v2365, %v2367
        %v2420 = vsel %vm2410, %v2367, %v2369
        %v2421 = vsel %vm2410, %v2369, %v2371
        %v2422 = vsel %vm2410, %v2371, %v2373
        %v2423 = vsel %vm2410, %v2373, %v2375
        %v2424 = vsel %vm2410, %v2375, %v2377
        %v2425 = vsel %vm2410, %v2379, %v2381
        %v2426 = vsel %vm2410, %v2381, %v2383
        %v2427 = vsel %vm2410, %v2383, %v2385
        %v2428 = vsel %vm2410, %v2385, %v2387
        %v2429 = vsel %vm2410, %v2387, %v2389
        %v2430 = vsel %vm2410, %v2389, %v2391
        %v2431 = vsel %vm2410, %v2391, %v2393
        %v2432 = vsel %vm2410, %v2395, %v2397
        %v2433 = vsel %vm2410, %v2397, %v2399
        %v2434 = vsel %vm2410, %v2399, %v2401
        %v2435 = vsel %vm2410, %v2401, %v2403
        %v2436 = vsel %vm2410, %v2403, %v2405
        %v2437 = vsel %vm2410, %v2405, %v2407
        %v2438 = vsel %vm2410, %v2407, %v2409
        %v2467 = vadd.f32 %v2229, %v2411
        %v2468 = vadd.f32 %v2230, %v2412
        %v2469 = vadd.f32 %v2231, %v2413
        %v2470 = vadd.f32 %v2232, %v2414
        %v2471 = vadd.f32 %v2233, %v2415
        %v2472 = vadd.f32 %v2234, %v2416
        %v2473 = vadd.f32 %v2235, %v2417
        %v2474 = vadd.f32 %v2236, %v2418
        %v2475 = vadd.f32 %v2237, %v2419
        %v2476 = vadd.f32 %v2238, %v2420
        %v2477 = vadd.f32 %v2239, %v2421
        %v2478 = vadd.f32 %v2240, %v2422
        %v2479 = vadd.f32 %v2241, %v2423
        %v2480 = vadd.f32 %v2242, %v2424
        %v2481 = vadd.f32 %v2243, %v2425
        %v2482 = vadd.f32 %v2244, %v2426
        %v2483 = vadd.f32 %v2245, %v2427
        %v2484 = vadd.f32 %v2246, %v2428
        %v2485 = vadd.f32 %v2247, %v2429
        %v2486 = vadd.f32 %v2248, %v2430
        %v2487 = vadd.f32 %v2249, %v2431
        %v2488 = vadd.f32 %v2250, %v2432
        %v2489 = vadd.f32 %v2251, %v2433
        %v2490 = vadd.f32 %v2252, %v2434
        %v2491 = vadd.f32 %v2253, %v2435
        %v2492 = vadd.f32 %v2254, %v2436
        %v2493 = vadd.f32 %v2255, %v2437
        %v2494 = vadd.f32 %v2256, %v2438
        %s2495 = scalar_lea.vmem %s1, 256
        %v2496 = vld [vmem:[%s2495] sm:$0xff]
        %v2497 = vld [vmem:[%s2495 + $0x8] sm:$0xff]
        %v2498 = vld [vmem:[%s2495 + $0x10] sm:$0xff]
        %v2499 = vld [vmem:[%s2495 + $0x18] sm:$0xff]
        %2501 = vset.pattern.permute.xlu0 0
        %2502 = vperm.xlu0 %2501, %v2496
        %v2503 = vpop.permute.xlu0 %2502
        %2506 = vset.pattern.permute.xlu0 0
        %2507 = vperm.xlu0 %2506, %v2497
        %v2508 = vpop.permute.xlu0 %2507
        %2511 = vset.pattern.permute.xlu0 0
        %2512 = vperm.xlu0 %2511, %v2498
        %v2513 = vpop.permute.xlu0 %2512
        %2516 = vset.pattern.permute.xlu0 0
        %2517 = vperm.xlu0 %2516, %v2499
        %v2518 = vpop.permute.xlu0 %2517
        %v2520 = vmul.f32 %v2503, %v817
        %v2521 = vmul.f32 %v2503, %v821
        %v2522 = vmul.f32 %v2503, %v825
        %v2523 = vmul.f32 %v2503, %v829
        %v2524 = vmul.f32 %v2503, %v833
        %v2525 = vmul.f32 %v2503, %v837
        %v2526 = vmul.f32 %v2503, %v841
        %v2527 = vmul.f32 %v2503, %v845
        %v2528 = vmul.f32 %v2508, %v817
        %v2529 = vmul.f32 %v2508, %v821
        %v2530 = vmul.f32 %v2508, %v825
        %v2531 = vmul.f32 %v2508, %v829
        %v2532 = vmul.f32 %v2508, %v833
        %v2533 = vmul.f32 %v2508, %v837
        %v2534 = vmul.f32 %v2508, %v841
        %v2535 = vmul.f32 %v2508, %v845
        %v2536 = vmul.f32 %v2513, %v817
        %v2537 = vmul.f32 %v2513, %v821
        %v2538 = vmul.f32 %v2513, %v825
        %v2539 = vmul.f32 %v2513, %v829
        %v2540 = vmul.f32 %v2513, %v833
        %v2541 = vmul.f32 %v2513, %v837
        %v2542 = vmul.f32 %v2513, %v841
        %v2543 = vmul.f32 %v2513, %v845
        %v2544 = vmul.f32 %v2518, %v817
        %v2545 = vmul.f32 %v2518, %v821
        %v2546 = vmul.f32 %v2518, %v825
        %v2547 = vmul.f32 %v2518, %v829
        %v2548 = vmul.f32 %v2518, %v833
        %v2549 = vmul.f32 %v2518, %v837
        %v2550 = vmul.f32 %v2518, %v841
        %v2551 = vmul.f32 %v2518, %v845
        %2584 = vrot.lane.b32.xlu0 %v2520, 62
        %v2585 = vpop.permute.xlu0 %2584
        %2586 = vrot.lane.b32.xlu0 %v2521, 62
        %v2587 = vpop.permute.xlu0 %2586
        %2588 = vrot.lane.b32.xlu0 %v2522, 62
        %v2589 = vpop.permute.xlu0 %2588
        %2590 = vrot.lane.b32.xlu0 %v2523, 62
        %v2591 = vpop.permute.xlu0 %2590
        %2592 = vrot.lane.b32.xlu0 %v2524, 62
        %v2593 = vpop.permute.xlu0 %2592
        %2594 = vrot.lane.b32.xlu0 %v2525, 62
        %v2595 = vpop.permute.xlu0 %2594
        %2596 = vrot.lane.b32.xlu0 %v2526, 62
        %v2597 = vpop.permute.xlu0 %2596
        %2598 = vrot.lane.b32.xlu0 %v2527, 62
        %v2599 = vpop.permute.xlu0 %2598
        %2600 = vrot.lane.b32.xlu0 %v2528, 62
        %v2601 = vpop.permute.xlu0 %2600
        %2602 = vrot.lane.b32.xlu0 %v2529, 62
        %v2603 = vpop.permute.xlu0 %2602
        %2604 = vrot.lane.b32.xlu0 %v2530, 62
        %v2605 = vpop.permute.xlu0 %2604
        %2606 = vrot.lane.b32.xlu0 %v2531, 62
        %v2607 = vpop.permute.xlu0 %2606
        %2608 = vrot.lane.b32.xlu0 %v2532, 62
        %v2609 = vpop.permute.xlu0 %2608
        %2610 = vrot.lane.b32.xlu0 %v2533, 62
        %v2611 = vpop.permute.xlu0 %2610
        %2612 = vrot.lane.b32.xlu0 %v2534, 62
        %v2613 = vpop.permute.xlu0 %2612
        %2614 = vrot.lane.b32.xlu0 %v2535, 62
        %v2615 = vpop.permute.xlu0 %2614
        %2616 = vrot.lane.b32.xlu0 %v2536, 62
        %v2617 = vpop.permute.xlu0 %2616
        %2618 = vrot.lane.b32.xlu0 %v2537, 62
        %v2619 = vpop.permute.xlu0 %2618
        %2620 = vrot.lane.b32.xlu0 %v2538, 62
        %v2621 = vpop.permute.xlu0 %2620
        %2622 = vrot.lane.b32.xlu0 %v2539, 62
        %v2623 = vpop.permute.xlu0 %2622
        %2624 = vrot.lane.b32.xlu0 %v2540, 62
        %v2625 = vpop.permute.xlu0 %2624
        %2626 = vrot.lane.b32.xlu0 %v2541, 62
        %v2627 = vpop.permute.xlu0 %2626
        %2628 = vrot.lane.b32.xlu0 %v2542, 62
        %v2629 = vpop.permute.xlu0 %2628
        %2630 = vrot.lane.b32.xlu0 %v2543, 62
        %v2631 = vpop.permute.xlu0 %2630
        %2632 = vrot.lane.b32.xlu0 %v2544, 62
        %v2633 = vpop.permute.xlu0 %2632
        %2634 = vrot.lane.b32.xlu0 %v2545, 62
        %v2635 = vpop.permute.xlu0 %2634
        %2636 = vrot.lane.b32.xlu0 %v2546, 62
        %v2637 = vpop.permute.xlu0 %2636
        %2638 = vrot.lane.b32.xlu0 %v2547, 62
        %v2639 = vpop.permute.xlu0 %2638
        %2640 = vrot.lane.b32.xlu0 %v2548, 62
        %v2641 = vpop.permute.xlu0 %2640
        %2642 = vrot.lane.b32.xlu0 %v2549, 62
        %v2643 = vpop.permute.xlu0 %2642
        %2644 = vrot.lane.b32.xlu0 %v2550, 62
        %v2645 = vpop.permute.xlu0 %2644
        %2646 = vrot.lane.b32.xlu0 %v2551, 62
        %v2647 = vpop.permute.xlu0 %2646
        %vm2648 = vcmask 506880
        %v2649 = vsel %vm2648, %v2585, %v2587
        %v2650 = vsel %vm2648, %v2587, %v2589
        %v2651 = vsel %vm2648, %v2589, %v2591
        %v2652 = vsel %vm2648, %v2591, %v2593
        %v2653 = vsel %vm2648, %v2593, %v2595
        %v2654 = vsel %vm2648, %v2595, %v2597
        %v2655 = vsel %vm2648, %v2597, %v2599
        %v2656 = vsel %vm2648, %v2601, %v2603
        %v2657 = vsel %vm2648, %v2603, %v2605
        %v2658 = vsel %vm2648, %v2605, %v2607
        %v2659 = vsel %vm2648, %v2607, %v2609
        %v2660 = vsel %vm2648, %v2609, %v2611
        %v2661 = vsel %vm2648, %v2611, %v2613
        %v2662 = vsel %vm2648, %v2613, %v2615
        %v2663 = vsel %vm2648, %v2617, %v2619
        %v2664 = vsel %vm2648, %v2619, %v2621
        %v2665 = vsel %vm2648, %v2621, %v2623
        %v2666 = vsel %vm2648, %v2623, %v2625
        %v2667 = vsel %vm2648, %v2625, %v2627
        %v2668 = vsel %vm2648, %v2627, %v2629
        %v2669 = vsel %vm2648, %v2629, %v2631
        %v2670 = vsel %vm2648, %v2633, %v2635
        %v2671 = vsel %vm2648, %v2635, %v2637
        %v2672 = vsel %vm2648, %v2637, %v2639
        %v2673 = vsel %vm2648, %v2639, %v2641
        %v2674 = vsel %vm2648, %v2641, %v2643
        %v2675 = vsel %vm2648, %v2643, %v2645
        %v2676 = vsel %vm2648, %v2645, %v2647
        %v2705 = vadd.f32 %v2467, %v2649
        %v2706 = vadd.f32 %v2468, %v2650
        %v2707 = vadd.f32 %v2469, %v2651
        %v2708 = vadd.f32 %v2470, %v2652
        %v2709 = vadd.f32 %v2471, %v2653
        %v2710 = vadd.f32 %v2472, %v2654
        %v2711 = vadd.f32 %v2473, %v2655
        %v2712 = vadd.f32 %v2474, %v2656
        %v2713 = vadd.f32 %v2475, %v2657
        %v2714 = vadd.f32 %v2476, %v2658
        %v2715 = vadd.f32 %v2477, %v2659
        %v2716 = vadd.f32 %v2478, %v2660
        %v2717 = vadd.f32 %v2479, %v2661
        %v2718 = vadd.f32 %v2480, %v2662
        %v2719 = vadd.f32 %v2481, %v2663
        %v2720 = vadd.f32 %v2482, %v2664
        %v2721 = vadd.f32 %v2483, %v2665
        %v2722 = vadd.f32 %v2484, %v2666
        %v2723 = vadd.f32 %v2485, %v2667
        %v2724 = vadd.f32 %v2486, %v2668
        %v2725 = vadd.f32 %v2487, %v2669
        %v2726 = vadd.f32 %v2488, %v2670
        %v2727 = vadd.f32 %v2489, %v2671
        %v2728 = vadd.f32 %v2490, %v2672
        %v2729 = vadd.f32 %v2491, %v2673
        %v2730 = vadd.f32 %v2492, %v2674
        %v2731 = vadd.f32 %v2493, %v2675
        %v2732 = vadd.f32 %v2494, %v2676
        %v2733 = vld [vmem:[%s2] sm:$0xff]
        %v2734 = vld [vmem:[%s2 + $0x8] sm:$0xff]
        %v2735 = vld [vmem:[%s2 + $0x10] sm:$0xff]
        %v2736 = vld [vmem:[%s2 + $0x18] sm:$0xff]
        %2738 = vset.pattern.permute.xlu0 0
        %2739 = vperm.xlu0 %2738, %v2733
        %v2740 = vpop.permute.xlu0 %2739
        %2743 = vset.pattern.permute.xlu0 0
        %2744 = vperm.xlu0 %2743, %v2734
        %v2745 = vpop.permute.xlu0 %2744
        %2748 = vset.pattern.permute.xlu0 0
        %2749 = vperm.xlu0 %2748, %v2735
        %v2750 = vpop.permute.xlu0 %2749
        %2753 = vset.pattern.permute.xlu0 0
        %2754 = vperm.xlu0 %2753, %v2736
        %v2755 = vpop.permute.xlu0 %2754
        %v2757 = vadd.f32 %v2705, %v2740
        %v2758 = vadd.f32 %v2706, %v2740
        %v2759 = vadd.f32 %v2707, %v2740
        %v2760 = vadd.f32 %v2708, %v2740
        %v2761 = vadd.f32 %v2709, %v2740
        %v2762 = vadd.f32 %v2710, %v2740
        %v2763 = vadd.f32 %v2711, %v2740
        %v2764 = vadd.f32 %v2712, %v2745
        %v2765 = vadd.f32 %v2713, %v2745
        %v2766 = vadd.f32 %v2714, %v2745
        %v2767 = vadd.f32 %v2715, %v2745
        %v2768 = vadd.f32 %v2716, %v2745
        %v2769 = vadd.f32 %v2717, %v2745
        %v2770 = vadd.f32 %v2718, %v2745
        %v2771 = vadd.f32 %v2719, %v2750
        %v2772 = vadd.f32 %v2720, %v2750
        %v2773 = vadd.f32 %v2721, %v2750
        %v2774 = vadd.f32 %v2722, %v2750
        %v2775 = vadd.f32 %v2723, %v2750
        %v2776 = vadd.f32 %v2724, %v2750
        %v2777 = vadd.f32 %v2725, %v2750
        %v2778 = vadd.f32 %v2726, %v2755
        %v2779 = vadd.f32 %v2727, %v2755
        %v2780 = vadd.f32 %v2728, %v2755
        %v2781 = vadd.f32 %v2729, %v2755
        %v2782 = vadd.f32 %v2730, %v2755
        %v2783 = vadd.f32 %v2731, %v2755
        %v2784 = vadd.f32 %v2732, %v2755
        %v2785 = vmax.f32 %v2757, 0.0
        %v2786 = vmax.f32 %v2758, 0.0
        %v2787 = vmax.f32 %v2759, 0.0
        %v2788 = vmax.f32 %v2760, 0.0
        %v2789 = vmax.f32 %v2761, 0.0
        %v2790 = vmax.f32 %v2762, 0.0
        %v2791 = vmax.f32 %v2763, 0.0
        %v2792 = vmax.f32 %v2764, 0.0
        %v2793 = vmax.f32 %v2765, 0.0
        %v2794 = vmax.f32 %v2766, 0.0
        %v2795 = vmax.f32 %v2767, 0.0
        %v2796 = vmax.f32 %v2768, 0.0
        %v2797 = vmax.f32 %v2769, 0.0
        %v2798 = vmax.f32 %v2770, 0.0
        %v2799 = vmax.f32 %v2771, 0.0
        %v2800 = vmax.f32 %v2772, 0.0
        %v2801 = vmax.f32 %v2773, 0.0
        %v2802 = vmax.f32 %v2774, 0.0
        %v2803 = vmax.f32 %v2775, 0.0
        %v2804 = vmax.f32 %v2776, 0.0
        %v2805 = vmax.f32 %v2777, 0.0
        %v2806 = vmax.f32 %v2778, 0.0
        %v2807 = vmax.f32 %v2779, 0.0
        %v2808 = vmax.f32 %v2780, 0.0
        %v2809 = vmax.f32 %v2781, 0.0
        %v2810 = vmax.f32 %v2782, 0.0
        %v2811 = vmax.f32 %v2783, 0.0
        %v2812 = vmax.f32 %v2784, 0.0
        %v2813 = vpack.c.bf16 %v2792, %v2785
        %v2814 = vpack.c.bf16 %v2793, %v2786
        %v2815 = vpack.c.bf16 %v2794, %v2787
        %v2816 = vpack.c.bf16 %v2795, %v2788
        %v2817 = vpack.c.bf16 %v2796, %v2789
        %v2818 = vpack.c.bf16 %v2797, %v2790
        %v2819 = vpack.c.bf16 %v2798, %v2791
        %v2820 = vpack.c.bf16 %v2806, %v2799
        %v2821 = vpack.c.bf16 %v2807, %v2800
        %v2822 = vpack.c.bf16 %v2808, %v2801
        %v2823 = vpack.c.bf16 %v2809, %v2802
        %v2824 = vpack.c.bf16 %v2810, %v2803
        %v2825 = vpack.c.bf16 %v2811, %v2804
        %v2826 = vpack.c.bf16 %v2812, %v2805
        %2827 = vst [vmem:[#allocation3] sm:$0xff] %v2813
        %2828 = vst [vmem:[#allocation3 + $0x8] sm:$0xff] %v2814
        %2829 = vst [vmem:[#allocation3 + $0x10] sm:$0xff] %v2815
        %2830 = vst [vmem:[#allocation3 + $0x18] sm:$0xff] %v2816
        %2831 = vst [vmem:[#allocation3 + $0x20] sm:$0xff] %v2817
        %2832 = vst [vmem:[#allocation3 + $0x28] sm:$0xff] %v2818
        %2833 = vst [vmem:[#allocation3 + $0x30] sm:$0xff] %v2819
        %2834 = vst [vmem:[#allocation3 + $0x40] sm:$0xff] %v2820
        %2835 = vst [vmem:[#allocation3 + $0x48] sm:$0xff] %v2821
        %2836 = vst [vmem:[#allocation3 + $0x50] sm:$0xff] %v2822
        %2837 = vst [vmem:[#allocation3 + $0x58] sm:$0xff] %v2823
        %2838 = vst [vmem:[#allocation3 + $0x60] sm:$0xff] %v2824
        %2839 = vst [vmem:[#allocation3 + $0x68] sm:$0xff] %v2825
        %2840 = vst [vmem:[#allocation3 + $0x70] sm:$0xff] %v2826
        %2841 = vst [vmem:[#allocation3 + $0x38] sm:$0xff] 0
        %2842 = vst [vmem:[#allocation3 + $0x78] sm:$0xff] 0
        %v2843 = vld [vmem:[#allocation3] sm:$0xff]
        %v2844 = vld [vmem:[#allocation3 + $0x8] sm:$0xff]
        %v2845 = vld [vmem:[#allocation3 + $0x10] sm:$0xff]
        %v2846 = vld [vmem:[#allocation3 + $0x18] sm:$0xff]
        %v2847 = vld [vmem:[#allocation3 + $0x20] sm:$0xff]
        %v2848 = vld [vmem:[#allocation3 + $0x28] sm:$0xff]
        %v2849 = vld [vmem:[#allocation3 + $0x30] sm:$0xff]
        %v2850 = vld [vmem:[#allocation3 + $0x40] sm:$0xff]
        %v2851 = vld [vmem:[#allocation3 + $0x48] sm:$0xff]
        %v2852 = vld [vmem:[#allocation3 + $0x50] sm:$0xff]
        %v2853 = vld [vmem:[#allocation3 + $0x58] sm:$0xff]
        %v2854 = vld [vmem:[#allocation3 + $0x60] sm:$0xff]
        %v2855 = vld [vmem:[#allocation3 + $0x68] sm:$0xff]
        %v2856 = vld [vmem:[#allocation3 + $0x70] sm:$0xff]
        %v2857 = vld [vmem:[#allocation3] sm:$0xff]
        %v2858 = vld [vmem:[#allocation3 + $0x8] sm:$0xff]
        %v2859 = vld [vmem:[#allocation3 + $0x10] sm:$0xff]
        %v2860 = vld [vmem:[#allocation3 + $0x18] sm:$0xff]
        %v2861 = vld [vmem:[#allocation3 + $0x20] sm:$0xff]
        %v2862 = vld [vmem:[#allocation3 + $0x28] sm:$0xff]
        %v2863 = vld [vmem:[#allocation3 + $0x30] sm:$0xff]
        %v2864 = vld [vmem:[#allocation3 + $0x38] sm:$0xff]
        %v2865 = vld [vmem:[#allocation3 + $0x40] sm:$0xff]
        %v2866 = vld [vmem:[#allocation3 + $0x48] sm:$0xff]
        %v2867 = vld [vmem:[#allocation3 + $0x50] sm:$0xff]
        %v2868 = vld [vmem:[#allocation3 + $0x58] sm:$0xff]
        %v2869 = vld [vmem:[#allocation3 + $0x60] sm:$0xff]
        %v2870 = vld [vmem:[#allocation3 + $0x68] sm:$0xff]
        %v2871 = vld [vmem:[#allocation3 + $0x70] sm:$0xff]
        %v2872 = vld [vmem:[#allocation3 + $0x78] sm:$0xff]
        %2889 = vrot.lane.b32.xlu0 %v2857, 127
        %v2890 = vpop.permute.xlu0 %2889
        %2891 = vrot.lane.b32.xlu0 %v2858, 127
        %v2892 = vpop.permute.xlu0 %2891
        %2893 = vrot.lane.b32.xlu0 %v2859, 127
        %v2894 = vpop.permute.xlu0 %2893
        %2895 = vrot.lane.b32.xlu0 %v2860, 127
        %v2896 = vpop.permute.xlu0 %2895
        %2897 = vrot.lane.b32.xlu0 %v2861, 127
        %v2898 = vpop.permute.xlu0 %2897
        %2899 = vrot.lane.b32.xlu0 %v2862, 127
        %v2900 = vpop.permute.xlu0 %2899
        %2901 = vrot.lane.b32.xlu0 %v2863, 127
        %v2902 = vpop.permute.xlu0 %2901
        %2903 = vrot.lane.b32.xlu0 %v2864, 127
        %v2904 = vpop.permute.xlu0 %2903
        %2905 = vrot.lane.b32.xlu0 %v2865, 127
        %v2906 = vpop.permute.xlu0 %2905
        %2907 = vrot.lane.b32.xlu0 %v2866, 127
        %v2908 = vpop.permute.xlu0 %2907
        %2909 = vrot.lane.b32.xlu0 %v2867, 127
        %v2910 = vpop.permute.xlu0 %2909
        %2911 = vrot.lane.b32.xlu0 %v2868, 127
        %v2912 = vpop.permute.xlu0 %2911
        %2913 = vrot.lane.b32.xlu0 %v2869, 127
        %v2914 = vpop.permute.xlu0 %2913
        %2915 = vrot.lane.b32.xlu0 %v2870, 127
        %v2916 = vpop.permute.xlu0 %2915
        %2917 = vrot.lane.b32.xlu0 %v2871, 127
        %v2918 = vpop.permute.xlu0 %2917
        %2919 = vrot.lane.b32.xlu0 %v2872, 127
        %v2920 = vpop.permute.xlu0 %2919
        %vm2921 = vcmask 1039360
        %v2922 = vsel %vm2921, %v2890, %v2892
        %v2923 = vsel %vm2921, %v2892, %v2894
        %v2924 = vsel %vm2921, %v2894, %v2896
        %v2925 = vsel %vm2921, %v2896, %v2898
        %v2926 = vsel %vm2921, %v2898, %v2900
        %v2927 = vsel %vm2921, %v2900, %v2902
        %v2928 = vsel %vm2921, %v2902, %v2904
        %v2929 = vsel %vm2921, %v2906, %v2908
        %v2930 = vsel %vm2921, %v2908, %v2910
        %v2931 = vsel %vm2921, %v2910, %v2912
        %v2932 = vsel %vm2921, %v2912, %v2914
        %v2933 = vsel %vm2921, %v2914, %v2916
        %v2934 = vsel %vm2921, %v2916, %v2918
        %v2935 = vsel %vm2921, %v2918, %v2920
        %2950 = vrot.lane.b32.xlu0 %v2857, 126
        %v2951 = vpop.permute.xlu0 %2950
        %2952 = vrot.lane.b32.xlu0 %v2858, 126
        %v2953 = vpop.permute.xlu0 %2952
        %2954 = vrot.lane.b32.xlu0 %v2859, 126
        %v2955 = vpop.permute.xlu0 %2954
        %2956 = vrot.lane.b32.xlu0 %v2860, 126
        %v2957 = vpop.permute.xlu0 %2956
        %2958 = vrot.lane.b32.xlu0 %v2861, 126
        %v2959 = vpop.permute.xlu0 %2958
        %2960 = vrot.lane.b32.xlu0 %v2862, 126
        %v2961 = vpop.permute.xlu0 %2960
        %2962 = vrot.lane.b32.xlu0 %v2863, 126
        %v2963 = vpop.permute.xlu0 %2962
        %2964 = vrot.lane.b32.xlu0 %v2864, 126
        %v2965 = vpop.permute.xlu0 %2964
        %2966 = vrot.lane.b32.xlu0 %v2865, 126
        %v2967 = vpop.permute.xlu0 %2966
        %2968 = vrot.lane.b32.xlu0 %v2866, 126
        %v2969 = vpop.permute.xlu0 %2968
        %2970 = vrot.lane.b32.xlu0 %v2867, 126
        %v2971 = vpop.permute.xlu0 %2970
        %2972 = vrot.lane.b32.xlu0 %v2868, 126
        %v2973 = vpop.permute.xlu0 %2972
        %2974 = vrot.lane.b32.xlu0 %v2869, 126
        %v2975 = vpop.permute.xlu0 %2974
        %2976 = vrot.lane.b32.xlu0 %v2870, 126
        %v2977 = vpop.permute.xlu0 %2976
        %2978 = vrot.lane.b32.xlu0 %v2871, 126
        %v2979 = vpop.permute.xlu0 %2978
        %2980 = vrot.lane.b32.xlu0 %v2872, 126
        %v2981 = vpop.permute.xlu0 %2980
        %vm2982 = vcmask 1031168
        %v2983 = vsel %vm2982, %v2951, %v2953
        %v2984 = vsel %vm2982, %v2953, %v2955
        %v2985 = vsel %vm2982, %v2955, %v2957
        %v2986 = vsel %vm2982, %v2957, %v2959
        %v2987 = vsel %vm2982, %v2959, %v2961
        %v2988 = vsel %vm2982, %v2961, %v2963
        %v2989 = vsel %vm2982, %v2963, %v2965
        %v2990 = vsel %vm2982, %v2967, %v2969
        %v2991 = vsel %vm2982, %v2969, %v2971
        %v2992 = vsel %vm2982, %v2971, %v2973
        %v2993 = vsel %vm2982, %v2973, %v2975
        %v2994 = vsel %vm2982, %v2975, %v2977
        %v2995 = vsel %vm2982, %v2977, %v2979
        %v2996 = vsel %vm2982, %v2979, %v2981
        %3011 = vrot.lane.b32.xlu0 %v2857, 96
        %v3012 = vpop.permute.xlu0 %3011
        %3013 = vrot.lane.b32.xlu0 %v2858, 96
        %v3014 = vpop.permute.xlu0 %3013
        %3015 = vrot.lane.b32.xlu0 %v2859, 96
        %v3016 = vpop.permute.xlu0 %3015
        %3017 = vrot.lane.b32.xlu0 %v2860, 96
        %v3018 = vpop.permute.xlu0 %3017
        %3019 = vrot.lane.b32.xlu0 %v2861, 96
        %v3020 = vpop.permute.xlu0 %3019
        %3021 = vrot.lane.b32.xlu0 %v2862, 96
        %v3022 = vpop.permute.xlu0 %3021
        %3023 = vrot.lane.b32.xlu0 %v2863, 96
        %v3024 = vpop.permute.xlu0 %3023
        %3025 = vrot.lane.b32.xlu0 %v2864, 96
        %v3026 = vpop.permute.xlu0 %3025
        %3027 = vrot.lane.b32.xlu0 %v2865, 96
        %v3028 = vpop.permute.xlu0 %3027
        %3029 = vrot.lane.b32.xlu0 %v2866, 96
        %v3030 = vpop.permute.xlu0 %3029
        %3031 = vrot.lane.b32.xlu0 %v2867, 96
        %v3032 = vpop.permute.xlu0 %3031
        %3033 = vrot.lane.b32.xlu0 %v2868, 96
        %v3034 = vpop.permute.xlu0 %3033
        %3035 = vrot.lane.b32.xlu0 %v2869, 96
        %v3036 = vpop.permute.xlu0 %3035
        %3037 = vrot.lane.b32.xlu0 %v2870, 96
        %v3038 = vpop.permute.xlu0 %3037
        %3039 = vrot.lane.b32.xlu0 %v2871, 96
        %v3040 = vpop.permute.xlu0 %3039
        %3041 = vrot.lane.b32.xlu0 %v2872, 96
        %v3042 = vpop.permute.xlu0 %3041
        %vm3043 = vcmask 785408
        %v3044 = vsel %vm3043, %v3012, %v3014
        %v3045 = vsel %vm3043, %v3014, %v3016
        %v3046 = vsel %vm3043, %v3016, %v3018
        %v3047 = vsel %vm3043, %v3018, %v3020
        %v3048 = vsel %vm3043, %v3020, %v3022
        %v3049 = vsel %vm3043, %v3022, %v3024
        %v3050 = vsel %vm3043, %v3024, %v3026
        %v3051 = vsel %vm3043, %v3028, %v3030
        %v3052 = vsel %vm3043, %v3030, %v3032
        %v3053 = vsel %vm3043, %v3032, %v3034
        %v3054 = vsel %vm3043, %v3034, %v3036
        %v3055 = vsel %vm3043, %v3036, %v3038
        %v3056 = vsel %vm3043, %v3038, %v3040
        %v3057 = vsel %vm3043, %v3040, %v3042
        %3072 = vrot.lane.b32.xlu0 %v2857, 95
        %v3073 = vpop.permute.xlu0 %3072
        %3074 = vrot.lane.b32.xlu0 %v2858, 95
        %v3075 = vpop.permute.xlu0 %3074
        %3076 = vrot.lane.b32.xlu0 %v2859, 95
        %v3077 = vpop.permute.xlu0 %3076
        %3078 = vrot.lane.b32.xlu0 %v2860, 95
        %v3079 = vpop.permute.xlu0 %3078
        %3080 = vrot.lane.b32.xlu0 %v2861, 95
        %v3081 = vpop.permute.xlu0 %3080
        %3082 = vrot.lane.b32.xlu0 %v2862, 95
        %v3083 = vpop.permute.xlu0 %3082
        %3084 = vrot.lane.b32.xlu0 %v2863, 95
        %v3085 = vpop.permute.xlu0 %3084
        %3086 = vrot.lane.b32.xlu0 %v2864, 95
        %v3087 = vpop.permute.xlu0 %3086
        %3088 = vrot.lane.b32.xlu0 %v2865, 95
        %v3089 = vpop.permute.xlu0 %3088
        %3090 = vrot.lane.b32.xlu0 %v2866, 95
        %v3091 = vpop.permute.xlu0 %3090
        %3092 = vrot.lane.b32.xlu0 %v2867, 95
        %v3093 = vpop.permute.xlu0 %3092
        %3094 = vrot.lane.b32.xlu0 %v2868, 95
        %v3095 = vpop.permute.xlu0 %3094
        %3096 = vrot.lane.b32.xlu0 %v2869, 95
        %v3097 = vpop.permute.xlu0 %3096
        %3098 = vrot.lane.b32.xlu0 %v2870, 95
        %v3099 = vpop.permute.xlu0 %3098
        %3100 = vrot.lane.b32.xlu0 %v2871, 95
        %v3101 = vpop.permute.xlu0 %3100
        %3102 = vrot.lane.b32.xlu0 %v2872, 95
        %v3103 = vpop.permute.xlu0 %3102
        %vm3104 = vcmask 777216
        %v3105 = vsel %vm3104, %v3073, %v3075
        %v3106 = vsel %vm3104, %v3075, %v3077
        %v3107 = vsel %vm3104, %v3077, %v3079
        %v3108 = vsel %vm3104, %v3079, %v3081
        %v3109 = vsel %vm3104, %v3081, %v3083
        %v3110 = vsel %vm3104, %v3083, %v3085
        %v3111 = vsel %vm3104, %v3085, %v3087
        %v3112 = vsel %vm3104, %v3089, %v3091
        %v3113 = vsel %vm3104, %v3091, %v3093
        %v3114 = vsel %vm3104, %v3093, %v3095
        %v3115 = vsel %vm3104, %v3095, %v3097
        %v3116 = vsel %vm3104, %v3097, %v3099
        %v3117 = vsel %vm3104, %v3099, %v3101
        %v3118 = vsel %vm3104, %v3101, %v3103
        %3133 = vrot.lane.b32.xlu0 %v2857, 94
        %v3134 = vpop.permute.xlu0 %3133
        %3135 = vrot.lane.b32.xlu0 %v2858, 94
        %v3136 = vpop.permute.xlu0 %3135
        %3137 = vrot.lane.b32.xlu0 %v2859, 94
        %v3138 = vpop.permute.xlu0 %3137
        %3139 = vrot.lane.b32.xlu0 %v2860, 94
        %v3140 = vpop.permute.xlu0 %3139
        %3141 = vrot.lane.b32.xlu0 %v2861, 94
        %v3142 = vpop.permute.xlu0 %3141
        %3143 = vrot.lane.b32.xlu0 %v2862, 94
        %v3144 = vpop.permute.xlu0 %3143
        %3145 = vrot.lane.b32.xlu0 %v2863, 94
        %v3146 = vpop.permute.xlu0 %3145
        %3147 = vrot.lane.b32.xlu0 %v2864, 94
        %v3148 = vpop.permute.xlu0 %3147
        %3149 = vrot.lane.b32.xlu0 %v2865, 94
        %v3150 = vpop.permute.xlu0 %3149
        %3151 = vrot.lane.b32.xlu0 %v2866, 94
        %v3152 = vpop.permute.xlu0 %3151
        %3153 = vrot.lane.b32.xlu0 %v2867, 94
        %v3154 = vpop.permute.xlu0 %3153
        %3155 = vrot.lane.b32.xlu0 %v2868, 94
        %v3156 = vpop.permute.xlu0 %3155
        %3157 = vrot.lane.b32.xlu0 %v2869, 94
        %v3158 = vpop.permute.xlu0 %3157
        %3159 = vrot.lane.b32.xlu0 %v2870, 94
        %v3160 = vpop.permute.xlu0 %3159
        %3161 = vrot.lane.b32.xlu0 %v2871, 94
        %v3162 = vpop.permute.xlu0 %3161
        %3163 = vrot.lane.b32.xlu0 %v2872, 94
        %v3164 = vpop.permute.xlu0 %3163
        %vm3165 = vcmask 769024
        %v3166 = vsel %vm3165, %v3134, %v3136
        %v3167 = vsel %vm3165, %v3136, %v3138
        %v3168 = vsel %vm3165, %v3138, %v3140
        %v3169 = vsel %vm3165, %v3140, %v3142
        %v3170 = vsel %vm3165, %v3142, %v3144
        %v3171 = vsel %vm3165, %v3144, %v3146
        %v3172 = vsel %vm3165, %v3146, %v3148
        %v3173 = vsel %vm3165, %v3150, %v3152
        %v3174 = vsel %vm3165, %v3152, %v3154
        %v3175 = vsel %vm3165, %v3154, %v3156
        %v3176 = vsel %vm3165, %v3156, %v3158
        %v3177 = vsel %vm3165, %v3158, %v3160
        %v3178 = vsel %vm3165, %v3160, %v3162
        %v3179 = vsel %vm3165, %v3162, %v3164
        %3194 = vrot.lane.b32.xlu0 %v2857, 64
        %v3195 = vpop.permute.xlu0 %3194
        %3196 = vrot.lane.b32.xlu0 %v2858, 64
        %v3197 = vpop.permute.xlu0 %3196
        %3198 = vrot.lane.b32.xlu0 %v2859, 64
        %v3199 = vpop.permute.xlu0 %3198
        %3200 = vrot.lane.b32.xlu0 %v2860, 64
        %v3201 = vpop.permute.xlu0 %3200
        %3202 = vrot.lane.b32.xlu0 %v2861, 64
        %v3203 = vpop.permute.xlu0 %3202
        %3204 = vrot.lane.b32.xlu0 %v2862, 64
        %v3205 = vpop.permute.xlu0 %3204
        %3206 = vrot.lane.b32.xlu0 %v2863, 64
        %v3207 = vpop.permute.xlu0 %3206
        %3208 = vrot.lane.b32.xlu0 %v2864, 64
        %v3209 = vpop.permute.xlu0 %3208
        %3210 = vrot.lane.b32.xlu0 %v2865, 64
        %v3211 = vpop.permute.xlu0 %3210
        %3212 = vrot.lane.b32.xlu0 %v2866, 64
        %v3213 = vpop.permute.xlu0 %3212
        %3214 = vrot.lane.b32.xlu0 %v2867, 64
        %v3215 = vpop.permute.xlu0 %3214
        %3216 = vrot.lane.b32.xlu0 %v2868, 64
        %v3217 = vpop.permute.xlu0 %3216
        %3218 = vrot.lane.b32.xlu0 %v2869, 64
        %v3219 = vpop.permute.xlu0 %3218
        %3220 = vrot.lane.b32.xlu0 %v2870, 64
        %v3221 = vpop.permute.xlu0 %3220
        %3222 = vrot.lane.b32.xlu0 %v2871, 64
        %v3223 = vpop.permute.xlu0 %3222
        %3224 = vrot.lane.b32.xlu0 %v2872, 64
        %v3225 = vpop.permute.xlu0 %3224
        %vm3226 = vcmask 523264
        %v3227 = vsel %vm3226, %v3195, %v3197
        %v3228 = vsel %vm3226, %v3197, %v3199
        %v3229 = vsel %vm3226, %v3199, %v3201
        %v3230 = vsel %vm3226, %v3201, %v3203
        %v3231 = vsel %vm3226, %v3203, %v3205
        %v3232 = vsel %vm3226, %v3205, %v3207
        %v3233 = vsel %vm3226, %v3207, %v3209
        %v3234 = vsel %vm3226, %v3211, %v3213
        %v3235 = vsel %vm3226, %v3213, %v3215
        %v3236 = vsel %vm3226, %v3215, %v3217
        %v3237 = vsel %vm3226, %v3217, %v3219
        %v3238 = vsel %vm3226, %v3219, %v3221
        %v3239 = vsel %vm3226, %v3221, %v3223
        %v3240 = vsel %vm3226, %v3223, %v3225
        %3255 = vrot.lane.b32.xlu0 %v2857, 63
        %v3256 = vpop.permute.xlu0 %3255
        %3257 = vrot.lane.b32.xlu0 %v2858, 63
        %v3258 = vpop.permute.xlu0 %3257
        %3259 = vrot.lane.b32.xlu0 %v2859, 63
        %v3260 = vpop.permute.xlu0 %3259
        %3261 = vrot.lane.b32.xlu0 %v2860, 63
        %v3262 = vpop.permute.xlu0 %3261
        %3263 = vrot.lane.b32.xlu0 %v2861, 63
        %v3264 = vpop.permute.xlu0 %3263
        %3265 = vrot.lane.b32.xlu0 %v2862, 63
        %v3266 = vpop.permute.xlu0 %3265
        %3267 = vrot.lane.b32.xlu0 %v2863, 63
        %v3268 = vpop.permute.xlu0 %3267
        %3269 = vrot.lane.b32.xlu0 %v2864, 63
        %v3270 = vpop.permute.xlu0 %3269
        %3271 = vrot.lane.b32.xlu0 %v2865, 63
        %v3272 = vpop.permute.xlu0 %3271
        %3273 = vrot.lane.b32.xlu0 %v2866, 63
        %v3274 = vpop.permute.xlu0 %3273
        %3275 = vrot.lane.b32.xlu0 %v2867, 63
        %v3276 = vpop.permute.xlu0 %3275
        %3277 = vrot.lane.b32.xlu0 %v2868, 63
        %v3278 = vpop.permute.xlu0 %3277
        %3279 = vrot.lane.b32.xlu0 %v2869, 63
        %v3280 = vpop.permute.xlu0 %3279
        %3281 = vrot.lane.b32.xlu0 %v2870, 63
        %v3282 = vpop.permute.xlu0 %3281
        %3283 = vrot.lane.b32.xlu0 %v2871, 63
        %v3284 = vpop.permute.xlu0 %3283
        %3285 = vrot.lane.b32.xlu0 %v2872, 63
        %v3286 = vpop.permute.xlu0 %3285
        %vm3287 = vcmask 515072
        %v3288 = vsel %vm3287, %v3256, %v3258
        %v3289 = vsel %vm3287, %v3258, %v3260
        %v3290 = vsel %vm3287, %v3260, %v3262
        %v3291 = vsel %vm3287, %v3262, %v3264
        %v3292 = vsel %vm3287, %v3264, %v3266
        %v3293 = vsel %vm3287, %v3266, %v3268
        %v3294 = vsel %vm3287, %v3268, %v3270
        %v3295 = vsel %vm3287, %v3272, %v3274
        %v3296 = vsel %vm3287, %v3274, %v3276
        %v3297 = vsel %vm3287, %v3276, %v3278
        %v3298 = vsel %vm3287, %v3278, %v3280
        %v3299 = vsel %vm3287, %v3280, %v3282
        %v3300 = vsel %vm3287, %v3282, %v3284
        %v3301 = vsel %vm3287, %v3284, %v3286
        %3316 = vrot.lane.b32.xlu0 %v2857, 62
        %v3317 = vpop.permute.xlu0 %3316
        %3318 = vrot.lane.b32.xlu0 %v2858, 62
        %v3319 = vpop.permute.xlu0 %3318
        %3320 = vrot.lane.b32.xlu0 %v2859, 62
        %v3321 = vpop.permute.xlu0 %3320
        %3322 = vrot.lane.b32.xlu0 %v2860, 62
        %v3323 = vpop.permute.xlu0 %3322
        %3324 = vrot.lane.b32.xlu0 %v2861, 62
        %v3325 = vpop.permute.xlu0 %3324
        %3326 = vrot.lane.b32.xlu0 %v2862, 62
        %v3327 = vpop.permute.xlu0 %3326
        %3328 = vrot.lane.b32.xlu0 %v2863, 62
        %v3329 = vpop.permute.xlu0 %3328
        %3330 = vrot.lane.b32.xlu0 %v2864, 62
        %v3331 = vpop.permute.xlu0 %3330
        %3332 = vrot.lane.b32.xlu0 %v2865, 62
        %v3333 = vpop.permute.xlu0 %3332
        %3334 = vrot.lane.b32.xlu0 %v2866, 62
        %v3335 = vpop.permute.xlu0 %3334
        %3336 = vrot.lane.b32.xlu0 %v2867, 62
        %v3337 = vpop.permute.xlu0 %3336
        %3338 = vrot.lane.b32.xlu0 %v2868, 62
        %v3339 = vpop.permute.xlu0 %3338
        %3340 = vrot.lane.b32.xlu0 %v2869, 62
        %v3341 = vpop.permute.xlu0 %3340
        %3342 = vrot.lane.b32.xlu0 %v2870, 62
        %v3343 = vpop.permute.xlu0 %3342
        %3344 = vrot.lane.b32.xlu0 %v2871, 62
        %v3345 = vpop.permute.xlu0 %3344
        %3346 = vrot.lane.b32.xlu0 %v2872, 62
        %v3347 = vpop.permute.xlu0 %3346
        %vm3348 = vcmask 506880
        %v3349 = vsel %vm3348, %v3317, %v3319
        %v3350 = vsel %vm3348, %v3319, %v3321
        %v3351 = vsel %vm3348, %v3321, %v3323
        %v3352 = vsel %vm3348, %v3323, %v3325
        %v3353 = vsel %vm3348, %v3325, %v3327
        %v3354 = vsel %vm3348, %v3327, %v3329
        %v3355 = vsel %vm3348, %v3329, %v3331
        %v3356 = vsel %vm3348, %v3333, %v3335
        %v3357 = vsel %vm3348, %v3335, %v3337
        %v3358 = vsel %vm3348, %v3337, %v3339
        %v3359 = vsel %vm3348, %v3339, %v3341
        %v3360 = vsel %vm3348, %v3341, %v3343
        %v3361 = vsel %vm3348, %v3343, %v3345
        %v3362 = vsel %vm3348, %v3345, %v3347
        %v3377 = vld [vmem:[#allocation8] sm:$0xff]
        %v3378 = vld [vmem:[#allocation8 + $0x8] sm:$0xf]
        %v3379 = vld [vmem:[#allocation8 + $0xc] sm:$0xff]
        %v3380 = vld [vmem:[#allocation8 + $0x14] sm:$0xf]
        %v3381 = vld [vmem:[#allocation8 + $0x18] sm:$0xff]
        %v3382 = vld [vmem:[#allocation8 + $0x20] sm:$0xf]
        %v3383 = vld [vmem:[#allocation8 + $0x24] sm:$0xff]
        %v3384 = vld [vmem:[#allocation8 + $0x2c] sm:$0xf]
        %v3385 = vld [vmem:[#allocation8 + $0x30] sm:$0xff]
        %v3386 = vld [vmem:[#allocation8 + $0x38] sm:$0xf]
        %v3387 = vld [vmem:[#allocation8 + $0x3c] sm:$0xff]
        %v3388 = vld [vmem:[#allocation8 + $0x44] sm:$0xf]
        %v3389 = vld [vmem:[#allocation8 + $0x48] sm:$0xff]
        %v3390 = vld [vmem:[#allocation8 + $0x50] sm:$0xf]
        %v3391 = vld [vmem:[#allocation8 + $0x54] sm:$0xff]
        %v3392 = vld [vmem:[#allocation8 + $0x5c] sm:$0xf]
        %v3393 = vld [vmem:[%s4] sm:$0xff]
        %v3394 = vld [vmem:[%s4 + $0x8] sm:$0xff]
        %v3395 = vld [vmem:[%s4 + $0x10] sm:$0xff]
        %v3396 = vld [vmem:[%s4 + $0x18] sm:$0xff]
        %v3397 = vld [vmem:[%s4 + $0x20] sm:$0xff]
        %v3398 = vld [vmem:[%s4 + $0x28] sm:$0xff]
        %v3399 = vld [vmem:[%s4 + $0x30] sm:$0xff]
        %v3400 = vld [vmem:[%s4 + $0x38] sm:$0xff]
        %3402 = vset.pattern.permute.xlu0 0
        %3403 = vperm.xlu0 %3402, %v3393
        %v3404 = vpop.permute.xlu0 %3403
        %3407 = vset.pattern.permute.xlu0 0
        %3408 = vperm.xlu0 %3407, %v3394
        %v3409 = vpop.permute.xlu0 %3408
        %3412 = vset.pattern.permute.xlu0 0
        %3413 = vperm.xlu0 %3412, %v3395
        %v3414 = vpop.permute.xlu0 %3413
        %3417 = vset.pattern.permute.xlu0 0
        %3418 = vperm.xlu0 %3417, %v3396
        %v3419 = vpop.permute.xlu0 %3418
        %3422 = vset.pattern.permute.xlu0 0
        %3423 = vperm.xlu0 %3422, %v3397
        %v3424 = vpop.permute.xlu0 %3423
        %3427 = vset.pattern.permute.xlu0 0
        %3428 = vperm.xlu0 %3427, %v3398
        %v3429 = vpop.permute.xlu0 %3428
        %3432 = vset.pattern.permute.xlu0 0
        %3433 = vperm.xlu0 %3432, %v3399
        %v3434 = vpop.permute.xlu0 %3433
        %3437 = vset.pattern.permute.xlu0 0
        %3438 = vperm.xlu0 %3437, %v3400
        %v3439 = vpop.permute.xlu0 %3438
        %v3457 = vunpack.c.l.b16 %v3377
        %v3458 = vunpack.c.h.b16 %v3377
        %v3459 = vunpack.c.l.b16 %v3378
        %v3460 = vunpack.c.l.b16 %v3379
        %v3461 = vunpack.c.h.b16 %v3379
        %v3462 = vunpack.c.l.b16 %v3380
        %v3463 = vunpack.c.l.b16 %v3381
        %v3464 = vunpack.c.h.b16 %v3381
        %v3465 = vunpack.c.l.b16 %v3382
        %v3466 = vunpack.c.l.b16 %v3383
        %v3467 = vunpack.c.h.b16 %v3383
        %v3468 = vunpack.c.l.b16 %v3384
        %v3469 = vunpack.c.l.b16 %v3385
        %v3470 = vunpack.c.h.b16 %v3385
        %v3471 = vunpack.c.l.b16 %v3386
        %v3472 = vunpack.c.l.b16 %v3387
        %v3473 = vunpack.c.h.b16 %v3387
        %v3474 = vunpack.c.l.b16 %v3388
        %v3475 = vunpack.c.l.b16 %v3389
        %v3476 = vunpack.c.h.b16 %v3389
        %v3477 = vunpack.c.l.b16 %v3390
        %v3478 = vunpack.c.l.b16 %v3391
        %v3479 = vunpack.c.h.b16 %v3391
        %v3480 = vunpack.c.l.b16 %v3392
        %v3481 = vpack.c.b16 %v3460, %v3457
        %v3482 = vpack.c.b16 %v3461, %v3458
        %v3483 = vpack.c.b16 %v3462, %v3459
        %v3484 = vpack.c.b16 %v3466, %v3463
        %v3485 = vpack.c.b16 %v3467, %v3464
        %v3486 = vpack.c.b16 %v3468, %v3465
        %v3487 = vpack.c.b16 %v3472, %v3469
        %v3488 = vpack.c.b16 %v3473, %v3470
        %v3489 = vpack.c.b16 %v3474, %v3471
        %v3490 = vpack.c.b16 %v3478, %v3475
        %v3491 = vpack.c.b16 %v3479, %v3476
        %v3492 = vpack.c.b16 %v3480, %v3477
        %vm3501 = vcmask 261120
        %v3503 = vsel %vm3501, %v3483, 0
        %v3506 = vsel %vm3501, %v3486, 0
        %v3509 = vsel %vm3501, %v3489, 0
        %v3512 = vsel %vm3501, %v3492, 0
        %3514 = vmatprep.subr.bf16.mxu0 %v2844
        %3515 = vmatpush1.bf16.msra.mxu0 %v2843
        %3516 = vmatprep.subr.bf16.mxu0 %v2851
        %3517 = vmatpush1.bf16.msra.mxu0 %v2850
        %3518 = vmatprep.subr.bf16.mxu0 %v2923
        %3519 = vmatpush1.bf16.msra.mxu0 %v2922
        %3520 = vmatprep.subr.bf16.mxu0 %v2930
        %3521 = vmatpush1.bf16.msra.mxu0 %v2929
        %3522 = vmatprep.subr.bf16.mxu0 %v2984
        %3523 = vmatpush1.bf16.msra.mxu0 %v2983
        %3524 = vmatprep.subr.bf16.mxu0 %v2991
        %3525 = vmatpush1.bf16.msra.mxu0 %v2990
        %3526 = vmatprep.subr.bf16.mxu0 %v3045
        %3527 = vmatpush1.bf16.msra.mxu0 %v3044
        %3528 = vmatprep.subr.bf16.mxu0 %v3052
        %3529 = vmatpush1.bf16.msra.mxu0 %v3051
        %3530 = vmatprep.subr.bf16.mxu0 %v3106
        %3531 = vmatpush1.bf16.msra.mxu0 %v3105
        %3532 = vmatprep.subr.bf16.mxu0 %v3113
        %3533 = vmatpush1.bf16.msra.mxu0 %v3112
        %3534 = vmatprep.subr.bf16.mxu0 %v3167
        %3535 = vmatpush1.bf16.msra.mxu0 %v3166
        %3536 = vmatprep.subr.bf16.mxu0 %v3174
        %3537 = vmatpush1.bf16.msra.mxu0 %v3173
        %3538 = vmatprep.subr.bf16.mxu0 %v3228
        %3539 = vmatpush1.bf16.msra.mxu0 %v3227
        %3540 = vmatprep.subr.bf16.mxu0 %v3235
        %3541 = vmatpush1.bf16.msra.mxu0 %v3234
        %3542 = vmatprep.subr.bf16.mxu0 %v3289
        %3543 = vmatpush1.bf16.msra.mxu0 %v3288
        %3544 = vmatprep.subr.bf16.mxu0 %v3296
        %3545 = vmatpush1.bf16.msra.mxu0 %v3295
        %3546 = vmatprep.mubr.bf16.mxu0 %v3482
        %3547 = vmatmul.mubr.bf16.gmra.mrb[0].mxu0 %v3481
        %v3548 = vpop.f32.mrb[0].mxu0
        %v3549 = vadd.f32 %v3404, %v3548
        %v3550 = vpop.f32.mrb[0].mxu0
        %v3551 = vadd.f32 %v3404, %v3550
        %v3552 = vpop.f32.mrb[0].mxu0
        %v3553 = vadd.f32 %v3409, %v3552
        %v3554 = vpop.f32.mrb[0].mxu0
        %v3555 = vadd.f32 %v3409, %v3554
        %3556 = vmatprep.mubr.bf16.mxu0 %v3485
        %3557 = vmatmul.mubr.bf16.gmra.mrb[0].mxu0 %v3484
        %v3558 = vpop.f32.mrb[0].mxu0
        %v3559 = vadd.f32 %v3414, %v3558
        %v3560 = vpop.f32.mrb[0].mxu0
        %v3561 = vadd.f32 %v3414, %v3560
        %v3562 = vpop.f32.mrb[0].mxu0
        %v3563 = vadd.f32 %v3419, %v3562
        %v3564 = vpop.f32.mrb[0].mxu0
        %v3565 = vadd.f32 %v3419, %v3564
        %3566 = vmatprep.mubr.bf16.mxu0 %v3488
        %3567 = vmatmul.mubr.bf16.gmra.mrb[0].mxu0 %v3487
        %v3568 = vpop.f32.mrb[0].mxu0
        %v3569 = vadd.f32 %v3424, %v3568
        %v3570 = vpop.f32.mrb[0].mxu0
        %v3571 = vadd.f32 %v3424, %v3570
        %v3572 = vpop.f32.mrb[0].mxu0
        %v3573 = vadd.f32 %v3429, %v3572
        %v3574 = vpop.f32.mrb[0].mxu0
        %v3575 = vadd.f32 %v3429, %v3574
        %3576 = vmatprep.mubr.bf16.mxu0 %v3491
        %3577 = vmatmul.mubr.bf16.gmra.mrb[0].mxu0 %v3490
        %v3578 = vpop.f32.mrb[0].mxu0
        %v3579 = vadd.f32 %v3434, %v3578
        %v3580 = vpop.f32.mrb[0].mxu0
        %v3581 = vadd.f32 %v3434, %v3580
        %v3582 = vpop.f32.mrb[0].mxu0
        %v3583 = vadd.f32 %v3439, %v3582
        %v3584 = vpop.f32.mrb[0].mxu0
        %v3585 = vadd.f32 %v3439, %v3584
        %3586 = vdwg.mxu0
        %3587 = vmatprep.subr.bf16.mxu0 %v3350
        %3588 = vmatpush1.bf16.msra.mxu0 %v3349
        %3589 = vmatprep.subr.bf16.mxu0 %v3357
        %3590 = vmatpush1.bf16.msra.mxu0 %v3356
        %3591 = vmatprep.subr.bf16.mxu0 0
        %3592 = vmatpush1.bf16.msra.mxu0 0
        %3593 = vmatprep.subr.bf16.mxu0 0
        %3594 = vmatpush1.bf16.msra.mxu0 0
        %3595 = vmatprep.subr.bf16.mxu0 0
        %3596 = vmatpush1.bf16.msra.mxu0 0
        %3597 = vmatprep.subr.bf16.mxu0 0
        %3598 = vmatpush1.bf16.msra.mxu0 0
        %3599 = vmatprep.subr.bf16.mxu0 0
        %3600 = vmatpush1.bf16.msra.mxu0 0
        %3601 = vmatprep.subr.bf16.mxu0 0
        %3602 = vmatpush1.bf16.msra.mxu0 0
        %3603 = vmatprep.subr.bf16.mxu0 0
        %3604 = vmatpush1.bf16.msra.mxu0 0
        %3605 = vmatprep.subr.bf16.mxu0 0
        %3606 = vmatpush1.bf16.msra.mxu0 0
        %3607 = vmatprep.subr.bf16.mxu0 0
        %3608 = vmatpush1.bf16.msra.mxu0 0
        %3609 = vmatprep.subr.bf16.mxu0 0
        %3610 = vmatpush1.bf16.msra.mxu0 0
        %3611 = vmatprep.subr.bf16.mxu0 0
        %3612 = vmatpush1.bf16.msra.mxu0 0
        %3613 = vmatprep.subr.bf16.mxu0 0
        %3614 = vmatpush1.bf16.msra.mxu0 0
        %3615 = vmatprep.subr.bf16.mxu0 0
        %3616 = vmatpush1.bf16.msra.mxu0 0
        %3617 = vmatprep.subr.bf16.mxu0 0
        %3618 = vmatpush1.bf16.msra.mxu0 0
        %3619 = vmatprep.mubr.bf16.mxu0 0
        %3620 = vmatmul.mubr.bf16.gmra.mrb[0].mxu0 %v3503
        %v3621 = vpop.f32.mrb[0].mxu0
        %v3622 = vadd.f32 %v3549, %v3621
        %v3623 = vpop.f32.mrb[0].mxu0
        %v3624 = vadd.f32 %v3551, %v3623
        %v3625 = vpop.f32.mrb[0].mxu0
        %v3626 = vadd.f32 %v3553, %v3625
        %v3627 = vpop.f32.mrb[0].mxu0
        %v3628 = vadd.f32 %v3555, %v3627
        %3629 = vmatprep.mubr.bf16.mxu0 0
        %3630 = vmatmul.mubr.bf16.gmra.mrb[0].mxu0 %v3506
        %v3631 = vpop.f32.mrb[0].mxu0
        %v3632 = vadd.f32 %v3559, %v3631
        %v3633 = vpop.f32.mrb[0].mxu0
        %v3634 = vadd.f32 %v3561, %v3633
        %v3635 = vpop.f32.mrb[0].mxu0
        %v3636 = vadd.f32 %v3563, %v3635
        %v3637 = vpop.f32.mrb[0].mxu0
        %v3638 = vadd.f32 %v3565, %v3637
        %3639 = vmatprep.mubr.bf16.mxu0 0
        %3640 = vmatmul.mubr.bf16.gmra.mrb[0].mxu0 %v3509
        %v3641 = vpop.f32.mrb[0].mxu0
        %v3642 = vadd.f32 %v3569, %v3641
        %v3643 = vpop.f32.mrb[0].mxu0
        %v3644 = vadd.f32 %v3571, %v3643
        %v3645 = vpop.f32.mrb[0].mxu0
        %v3646 = vadd.f32 %v3573, %v3645
        %v3647 = vpop.f32.mrb[0].mxu0
        %v3648 = vadd.f32 %v3575, %v3647
        %3649 = vmatprep.mubr.bf16.mxu0 0
        %3650 = vmatmul.mubr.bf16.gmra.mrb[0].mxu0 %v3512
        %v3651 = vpop.f32.mrb[0].mxu0
        %v3652 = vadd.f32 %v3579, %v3651
        %v3653 = vpop.f32.mrb[0].mxu0
        %v3654 = vadd.f32 %v3581, %v3653
        %v3655 = vpop.f32.mrb[0].mxu0
        %v3656 = vadd.f32 %v3583, %v3655
        %v3657 = vpop.f32.mrb[0].mxu0
        %v3658 = vadd.f32 %v3585, %v3657
        %3659 = vdwg.mxu0
        %3660 = vmatprep.subr.bf16.mxu0 %v2846
        %3661 = vmatpush1.bf16.msra.mxu0 %v2845
        %3662 = vmatprep.subr.bf16.mxu0 %v2853
        %3663 = vmatpush1.bf16.msra.mxu0 %v2852
        %3664 = vmatprep.subr.bf16.mxu0 %v2925
        %3665 = vmatpush1.bf16.msra.mxu0 %v2924
        %3666 = vmatprep.subr.bf16.mxu0 %v2932
        %3667 = vmatpush1.bf16.msra.mxu0 %v2931
        %3668 = vmatprep.subr.bf16.mxu0 %v2986
        %3669 = vmatpush1.bf16.msra.mxu0 %v2985
        %3670 = vmatprep.subr.bf16.mxu0 %v2993
        %3671 = vmatpush1.bf16.msra.mxu0 %v2992
        %3672 = vmatprep.subr.bf16.mxu0 %v3047
        %3673 = vmatpush1.bf16.msra.mxu0 %v3046
        %3674 = vmatprep.subr.bf16.mxu0 %v3054
        %3675 = vmatpush1.bf16.msra.mxu0 %v3053
        %3676 = vmatprep.subr.bf16.mxu0 %v3108
        %3677 = vmatpush1.bf16.msra.mxu0 %v3107
        %3678 = vmatprep.subr.bf16.mxu0 %v3115
        %3679 = vmatpush1.bf16.msra.mxu0 %v3114
        %3680 = vmatprep.subr.bf16.mxu0 %v3169
        %3681 = vmatpush1.bf16.msra.mxu0 %v3168
        %3682 = vmatprep.subr.bf16.mxu0 %v3176
        %3683 = vmatpush1.bf16.msra.mxu0 %v3175
        %3684 = vmatprep.subr.bf16.mxu0 %v3230
        %3685 = vmatpush1.bf16.msra.mxu0 %v3229
        %3686 = vmatprep.subr.bf16.mxu0 %v3237
        %3687 = vmatpush1.bf16.msra.mxu0 %v3236
        %3688 = vmatprep.subr.bf16.mxu0 %v3291
        %3689 = vmatpush1.bf16.msra.mxu0 %v3290
        %3690 = vmatprep.subr.bf16.mxu0 %v3298
        %3691 = vmatpush1.bf16.msra.mxu0 %v3297
        %3692 = vmatprep.mubr.bf16.mxu0 %v3482
        %3693 = vmatmul.mubr.bf16.gmra.mrb[0].mxu0 %v3481
        %v3694 = vpop.f32.mrb[0].mxu0
        %v3695 = vadd.f32 %v3404, %v3694
        %v3696 = vpop.f32.mrb[0].mxu0
        %v3697 = vadd.f32 %v3404, %v3696
        %v3698 = vpop.f32.mrb[0].mxu0
        %v3699 = vadd.f32 %v3409, %v3698
        %v3700 = vpop.f32.mrb[0].mxu0
        %v3701 = vadd.f32 %v3409, %v3700
        %3702 = vmatprep.mubr.bf16.mxu0 %v3485
        %3703 = vmatmul.mubr.bf16.gmra.mrb[0].mxu0 %v3484
        %v3704 = vpop.f32.mrb[0].mxu0
        %v3705 = vadd.f32 %v3414, %v3704
        %v3706 = vpop.f32.mrb[0].mxu0
        %v3707 = vadd.f32 %v3414, %v3706
        %v3708 = vpop.f32.mrb[0].mxu0
        %v3709 = vadd.f32 %v3419, %v3708
        %v3710 = vpop.f32.mrb[0].mxu0
        %v3711 = vadd.f32 %v3419, %v3710
        %3712 = vmatprep.mubr.bf16.mxu0 %v3488
        %3713 = vmatmul.mubr.bf16.gmra.mrb[0].mxu0 %v3487
        %v3714 = vpop.f32.mrb[0].mxu0
        %v3715 = vadd.f32 %v3424, %v3714
        %v3716 = vpop.f32.mrb[0].mxu0
        %v3717 = vadd.f32 %v3424, %v3716
        %v3718 = vpop.f32.mrb[0].mxu0
        %v3719 = vadd.f32 %v3429, %v3718
        %v3720 = vpop.f32.mrb[0].mxu0
        %v3721 = vadd.f32 %v3429, %v3720
        %3722 = vmatprep.mubr.bf16.mxu0 %v3491
        %3723 = vmatmul.mubr.bf16.gmra.mrb[0].mxu0 %v3490
        %v3724 = vpop.f32.mrb[0].mxu0
        %v3725 = vadd.f32 %v3434, %v3724
        %v3726 = vpop.f32.mrb[0].mxu0
        %v3727 = vadd.f32 %v3434, %v3726
        %v3728 = vpop.f32.mrb[0].mxu0
        %v3729 = vadd.f32 %v3439, %v3728
        %v3730 = vpop.f32.mrb[0].mxu0
        %v3731 = vadd.f32 %v3439, %v3730
        %3732 = vdwg.mxu0
        %3733 = vmatprep.subr.bf16.mxu0 %v3352
        %3734 = vmatpush1.bf16.msra.mxu0 %v3351
        %3735 = vmatprep.subr.bf16.mxu0 %v3359
        %3736 = vmatpush1.bf16.msra.mxu0 %v3358
        %3737 = vmatprep.subr.bf16.mxu0 0
        %3738 = vmatpush1.bf16.msra.mxu0 0
        %3739 = vmatprep.subr.bf16.mxu0 0
        %3740 = vmatpush1.bf16.msra.mxu0 0
        %3741 = vmatprep.subr.bf16.mxu0 0
        %3742 = vmatpush1.bf16.msra.mxu0 0
        %3743 = vmatprep.subr.bf16.mxu0 0
        %3744 = vmatpush1.bf16.msra.mxu0 0
        %3745 = vmatprep.subr.bf16.mxu0 0
        %3746 = vmatpush1.bf16.msra.mxu0 0
        %3747 = vmatprep.subr.bf16.mxu0 0
        %3748 = vmatpush1.bf16.msra.mxu0 0
        %3749 = vmatprep.subr.bf16.mxu0 0
        %3750 = vmatpush1.bf16.msra.mxu0 0
        %3751 = vmatprep.subr.bf16.mxu0 0
        %3752 = vmatpush1.bf16.msra.mxu0 0
        %3753 = vmatprep.subr.bf16.mxu0 0
        %3754 = vmatpush1.bf16.msra.mxu0 0
        %3755 = vmatprep.subr.bf16.mxu0 0
        %3756 = vmatpush1.bf16.msra.mxu0 0
        %3757 = vmatprep.subr.bf16.mxu0 0
        %3758 = vmatpush1.bf16.msra.mxu0 0
        %3759 = vmatprep.subr.bf16.mxu0 0
        %3760 = vmatpush1.bf16.msra.mxu0 0
        %3761 = vmatprep.subr.bf16.mxu0 0
        %3762 = vmatpush1.bf16.msra.mxu0 0
        %3763 = vmatprep.subr.bf16.mxu0 0
        %3764 = vmatpush1.bf16.msra.mxu0 0
        %3765 = vmatprep.mubr.bf16.mxu0 0
        %3766 = vmatmul.mubr.bf16.gmra.mrb[0].mxu0 %v3503
        %v3767 = vpop.f32.mrb[0].mxu0
        %v3768 = vadd.f32 %v3695, %v3767
        %v3769 = vpop.f32.mrb[0].mxu0
        %v3770 = vadd.f32 %v3697, %v3769
        %v3771 = vpop.f32.mrb[0].mxu0
        %v3772 = vadd.f32 %v3699, %v3771
        %v3773 = vpop.f32.mrb[0].mxu0
        %v3774 = vadd.f32 %v3701, %v3773
        %3775 = vmatprep.mubr.bf16.mxu0 0
        %3776 = vmatmul.mubr.bf16.gmra.mrb[0].mxu0 %v3506
        %v3777 = vpop.f32.mrb[0].mxu0
        %v3778 = vadd.f32 %v3705, %v3777
        %v3779 = vpop.f32.mrb[0].mxu0
        %v3780 = vadd.f32 %v3707, %v3779
        %v3781 = vpop.f32.mrb[0].mxu0
        %v3782 = vadd.f32 %v3709, %v3781
        %v3783 = vpop.f32.mrb[0].mxu0
        %v3784 = vadd.f32 %v3711, %v3783
        %3785 = vmatprep.mubr.bf16.mxu0 0
        %3786 = vmatmul.mubr.bf16.gmra.mrb[0].mxu0 %v3509
        %v3787 = vpop.f32.mrb[0].mxu0
        %v3788 = vadd.f32 %v3715, %v3787
        %v3789 = vpop.f32.mrb[0].mxu0
        %v3790 = vadd.f32 %v3717, %v3789
        %v3791 = vpop.f32.mrb[0].mxu0
        %v3792 = vadd.f32 %v3719, %v3791
        %v3793 = vpop.f32.mrb[0].mxu0
        %v3794 = vadd.f32 %v3721, %v3793
        %3795 = vmatprep.mubr.bf16.mxu0 0
        %3796 = vmatmul.mubr.bf16.gmra.mrb[0].mxu0 %v3512
        %v3797 = vpop.f32.mrb[0].mxu0
        %v3798 = vadd.f32 %v3725, %v3797
        %v3799 = vpop.f32.mrb[0].mxu0
        %v3800 = vadd.f32 %v3727, %v3799
        %v3801 = vpop.f32.mrb[0].mxu0
        %v3802 = vadd.f32 %v3729, %v3801
        %v3803 = vpop.f32.mrb[0].mxu0
        %v3804 = vadd.f32 %v3731, %v3803
        %3805 = vdwg.mxu0
        %3806 = vmatprep.subr.bf16.mxu0 %v2848
        %3807 = vmatpush1.bf16.msra.mxu0 %v2847
        %3808 = vmatprep.subr.bf16.mxu0 %v2855
        %3809 = vmatpush1.bf16.msra.mxu0 %v2854
        %3810 = vmatprep.subr.bf16.mxu0 %v2927
        %3811 = vmatpush1.bf16.msra.mxu0 %v2926
        %3812 = vmatprep.subr.bf16.mxu0 %v2934
        %3813 = vmatpush1.bf16.msra.mxu0 %v2933
        %3814 = vmatprep.subr.bf16.mxu0 %v2988
        %3815 = vmatpush1.bf16.msra.mxu0 %v2987
        %3816 = vmatprep.subr.bf16.mxu0 %v2995
        %3817 = vmatpush1.bf16.msra.mxu0 %v2994
        %3818 = vmatprep.subr.bf16.mxu0 %v3049
        %3819 = vmatpush1.bf16.msra.mxu0 %v3048
        %3820 = vmatprep.subr.bf16.mxu0 %v3056
        %3821 = vmatpush1.bf16.msra.mxu0 %v3055
        %3822 = vmatprep.subr.bf16.mxu0 %v3110
        %3823 = vmatpush1.bf16.msra.mxu0 %v3109
        %3824 = vmatprep.subr.bf16.mxu0 %v3117
        %3825 = vmatpush1.bf16.msra.mxu0 %v3116
        %3826 = vmatprep.subr.bf16.mxu0 %v3171
        %3827 = vmatpush1.bf16.msra.mxu0 %v3170
        %3828 = vmatprep.subr.bf16.mxu0 %v3178
        %3829 = vmatpush1.bf16.msra.mxu0 %v3177
        %3830 = vmatprep.subr.bf16.mxu0 %v3232
        %3831 = vmatpush1.bf16.msra.mxu0 %v3231
        %3832 = vmatprep.subr.bf16.mxu0 %v3239
        %3833 = vmatpush1.bf16.msra.mxu0 %v3238
        %3834 = vmatprep.subr.bf16.mxu0 %v3293
        %3835 = vmatpush1.bf16.msra.mxu0 %v3292
        %3836 = vmatprep.subr.bf16.mxu0 %v3300
        %3837 = vmatpush1.bf16.msra.mxu0 %v3299
        %3838 = vmatprep.mubr.bf16.mxu0 %v3482
        %3839 = vmatmul.mubr.bf16.gmra.mrb[0].mxu0 %v3481
        %v3840 = vpop.f32.mrb[0].mxu0
        %v3841 = vadd.f32 %v3404, %v3840
        %v3842 = vpop.f32.mrb[0].mxu0
        %v3843 = vadd.f32 %v3404, %v3842
        %v3844 = vpop.f32.mrb[0].mxu0
        %v3845 = vadd.f32 %v3409, %v3844
        %v3846 = vpop.f32.mrb[0].mxu0
        %v3847 = vadd.f32 %v3409, %v3846
        %3848 = vmatprep.mubr.bf16.mxu0 %v3485
        %3849 = vmatmul.mubr.bf16.gmra.mrb[0].mxu0 %v3484
        %v3850 = vpop.f32.mrb[0].mxu0
        %v3851 = vadd.f32 %v3414, %v3850
        %v3852 = vpop.f32.mrb[0].mxu0
        %v3853 = vadd.f32 %v3414, %v3852
        %v3854 = vpop.f32.mrb[0].mxu0
        %v3855 = vadd.f32 %v3419, %v3854
        %v3856 = vpop.f32.mrb[0].mxu0
        %v3857 = vadd.f32 %v3419, %v3856
        %3858 = vmatprep.mubr.bf16.mxu0 %v3488
        %3859 = vmatmul.mubr.bf16.gmra.mrb[0].mxu0 %v3487
        %v3860 = vpop.f32.mrb[0].mxu0
        %v3861 = vadd.f32 %v3424, %v3860
        %v3862 = vpop.f32.mrb[0].mxu0
        %v3863 = vadd.f32 %v3424, %v3862
        %v3864 = vpop.f32.mrb[0].mxu0
        %v3865 = vadd.f32 %v3429, %v3864
        %v3866 = vpop.f32.mrb[0].mxu0
        %v3867 = vadd.f32 %v3429, %v3866
        %3868 = vmatprep.mubr.bf16.mxu0 %v3491
        %3869 = vmatmul.mubr.bf16.gmra.mrb[0].mxu0 %v3490
        %v3870 = vpop.f32.mrb[0].mxu0
        %v3871 = vadd.f32 %v3434, %v3870
        %v3872 = vpop.f32.mrb[0].mxu0
        %v3873 = vadd.f32 %v3434, %v3872
        %v3874 = vpop.f32.mrb[0].mxu0
        %v3875 = vadd.f32 %v3439, %v3874
        %v3876 = vpop.f32.mrb[0].mxu0
        %v3877 = vadd.f32 %v3439, %v3876
        %3878 = vdwg.mxu0
        %3879 = vmatprep.subr.bf16.mxu0 %v3354
        %3880 = vmatpush1.bf16.msra.mxu0 %v3353
        %3881 = vmatprep.subr.bf16.mxu0 %v3361
        %3882 = vmatpush1.bf16.msra.mxu0 %v3360
        %3883 = vmatprep.subr.bf16.mxu0 0
        %3884 = vmatpush1.bf16.msra.mxu0 0
        %3885 = vmatprep.subr.bf16.mxu0 0
        %3886 = vmatpush1.bf16.msra.mxu0 0
        %3887 = vmatprep.subr.bf16.mxu0 0
        %3888 = vmatpush1.bf16.msra.mxu0 0
        %3889 = vmatprep.subr.bf16.mxu0 0
        %3890 = vmatpush1.bf16.msra.mxu0 0
        %3891 = vmatprep.subr.bf16.mxu0 0
        %3892 = vmatpush1.bf16.msra.mxu0 0
        %3893 = vmatprep.subr.bf16.mxu0 0
        %3894 = vmatpush1.bf16.msra.mxu0 0
        %3895 = vmatprep.subr.bf16.mxu0 0
        %3896 = vmatpush1.bf16.msra.mxu0 0
        %3897 = vmatprep.subr.bf16.mxu0 0
        %3898 = vmatpush1.bf16.msra.mxu0 0
        %3899 = vmatprep.subr.bf16.mxu0 0
        %3900 = vmatpush1.bf16.msra.mxu0 0
        %3901 = vmatprep.subr.bf16.mxu0 0
        %3902 = vmatpush1.bf16.msra.mxu0 0
        %3903 = vmatprep.subr.bf16.mxu0 0
        %3904 = vmatpush1.bf16.msra.mxu0 0
        %3905 = vmatprep.subr.bf16.mxu0 0
        %3906 = vmatpush1.bf16.msra.mxu0 0
        %3907 = vmatprep.subr.bf16.mxu0 0
        %3908 = vmatpush1.bf16.msra.mxu0 0
        %3909 = vmatprep.subr.bf16.mxu0 0
        %3910 = vmatpush1.bf16.msra.mxu0 0
        %3911 = vmatprep.mubr.bf16.mxu0 0
        %3912 = vmatmul.mubr.bf16.gmra.mrb[0].mxu0 %v3503
        %v3913 = vpop.f32.mrb[0].mxu0
        %v3914 = vadd.f32 %v3841, %v3913
        %v3915 = vpop.f32.mrb[0].mxu0
        %v3916 = vadd.f32 %v3843, %v3915
        %v3917 = vpop.f32.mrb[0].mxu0
        %v3918 = vadd.f32 %v3845, %v3917
        %v3919 = vpop.f32.mrb[0].mxu0
        %v3920 = vadd.f32 %v3847, %v3919
        %3921 = vmatprep.mubr.bf16.mxu0 0
        %3922 = vmatmul.mubr.bf16.gmra.mrb[0].mxu0 %v3506
        %v3923 = vpop.f32.mrb[0].mxu0
        %v3924 = vadd.f32 %v3851, %v3923
        %v3925 = vpop.f32.mrb[0].mxu0
        %v3926 = vadd.f32 %v3853, %v3925
        %v3927 = vpop.f32.mrb[0].mxu0
        %v3928 = vadd.f32 %v3855, %v3927
        %v3929 = vpop.f32.mrb[0].mxu0
        %v3930 = vadd.f32 %v3857, %v3929
        %3931 = vmatprep.mubr.bf16.mxu0 0
        %3932 = vmatmul.mubr.bf16.gmra.mrb[0].mxu0 %v3509
        %v3933 = vpop.f32.mrb[0].mxu0
        %v3934 = vadd.f32 %v3861, %v3933
        %v3935 = vpop.f32.mrb[0].mxu0
        %v3936 = vadd.f32 %v3863, %v3935
        %v3937 = vpop.f32.mrb[0].mxu0
        %v3938 = vadd.f32 %v3865, %v3937
        %v3939 = vpop.f32.mrb[0].mxu0
        %v3940 = vadd.f32 %v3867, %v3939
        %3941 = vmatprep.mubr.bf16.mxu0 0
        %3942 = vmatmul.mubr.bf16.gmra.mrb[0].mxu0 %v3512
        %v3943 = vpop.f32.mrb[0].mxu0
        %v3944 = vadd.f32 %v3871, %v3943
        %v3945 = vpop.f32.mrb[0].mxu0
        %v3946 = vadd.f32 %v3873, %v3945
        %v3947 = vpop.f32.mrb[0].mxu0
        %v3948 = vadd.f32 %v3875, %v3947
        %v3949 = vpop.f32.mrb[0].mxu0
        %v3950 = vadd.f32 %v3877, %v3949
        %3951 = vdwg.mxu0
        %3952 = vmatprep.subr.bf16.mxu0 0
        %3953 = vmatpush1.bf16.msra.mxu0 %v2849
        %3954 = vmatprep.subr.bf16.mxu0 0
        %3955 = vmatpush1.bf16.msra.mxu0 %v2856
        %3956 = vmatprep.subr.bf16.mxu0 0
        %3957 = vmatpush1.bf16.msra.mxu0 %v2928
        %3958 = vmatprep.subr.bf16.mxu0 0
        %3959 = vmatpush1.bf16.msra.mxu0 %v2935
        %3960 = vmatprep.subr.bf16.mxu0 0
        %3961 = vmatpush1.bf16.msra.mxu0 %v2989
        %3962 = vmatprep.subr.bf16.mxu0 0
        %3963 = vmatpush1.bf16.msra.mxu0 %v2996
        %3964 = vmatprep.subr.bf16.mxu0 0
        %3965 = vmatpush1.bf16.msra.mxu0 %v3050
        %3966 = vmatprep.subr.bf16.mxu0 0
        %3967 = vmatpush1.bf16.msra.mxu0 %v3057
        %3968 = vmatprep.subr.bf16.mxu0 0
        %3969 = vmatpush1.bf16.msra.mxu0 %v3111
        %3970 = vmatprep.subr.bf16.mxu0 0
        %3971 = vmatpush1.bf16.msra.mxu0 %v3118
        %3972 = vmatprep.subr.bf16.mxu0 0
        %3973 = vmatpush1.bf16.msra.mxu0 %v3172
        %3974 = vmatprep.subr.bf16.mxu0 0
        %3975 = vmatpush1.bf16.msra.mxu0 %v3179
        %3976 = vmatprep.subr.bf16.mxu0 0
        %3977 = vmatpush1.bf16.msra.mxu0 %v3233
        %3978 = vmatprep.subr.bf16.mxu0 0
        %3979 = vmatpush1.bf16.msra.mxu0 %v3240
        %3980 = vmatprep.subr.bf16.mxu0 0
        %3981 = vmatpush1.bf16.msra.mxu0 %v3294
        %3982 = vmatprep.subr.bf16.mxu0 0
        %3983 = vmatpush1.bf16.msra.mxu0 %v3301
        %3984 = vmatprep.mubr.bf16.mxu0 %v3482
        %3985 = vmatmul.mubr.bf16.gmra.mrb[0].mxu0 %v3481
        %v3986 = vpop.f32.mrb[0].mxu0
        %v3987 = vadd.f32 %v3404, %v3986
        %v3988 = vpop.f32.mrb[0].mxu0
        %v3989 = vpop.f32.mrb[0].mxu0
        %v3990 = vadd.f32 %v3409, %v3989
        %v3991 = vpop.f32.mrb[0].mxu0
        %3992 = vmatprep.mubr.bf16.mxu0 %v3485
        %3993 = vmatmul.mubr.bf16.gmra.mrb[0].mxu0 %v3484
        %v3994 = vpop.f32.mrb[0].mxu0
        %v3995 = vadd.f32 %v3414, %v3994
        %v3996 = vpop.f32.mrb[0].mxu0
        %v3997 = vpop.f32.mrb[0].mxu0
        %v3998 = vadd.f32 %v3419, %v3997
        %v3999 = vpop.f32.mrb[0].mxu0
        %4000 = vmatprep.mubr.bf16.mxu0 %v3488
        %4001 = vmatmul.mubr.bf16.gmra.mrb[0].mxu0 %v3487
        %v4002 = vpop.f32.mrb[0].mxu0
        %v4003 = vadd.f32 %v3424, %v4002
        %v4004 = vpop.f32.mrb[0].mxu0
        %v4005 = vpop.f32.mrb[0].mxu0
        %v4006 = vadd.f32 %v3429, %v4005
        %v4007 = vpop.f32.mrb[0].mxu0
        %4008 = vmatprep.mubr.bf16.mxu0 %v3491
        %4009 = vmatmul.mubr.bf16.gmra.mrb[0].mxu0 %v3490
        %v4010 = vpop.f32.mrb[0].mxu0
        %v4011 = vadd.f32 %v3434, %v4010
        %v4012 = vpop.f32.mrb[0].mxu0
        %v4013 = vpop.f32.mrb[0].mxu0
        %v4014 = vadd.f32 %v3439, %v4013
        %v4015 = vpop.f32.mrb[0].mxu0
        %4016 = vdwg.mxu0
        %4017 = vmatprep.subr.bf16.mxu0 0
        %4018 = vmatpush1.bf16.msra.mxu0 %v3355
        %4019 = vmatprep.subr.bf16.mxu0 0
        %4020 = vmatpush1.bf16.msra.mxu0 %v3362
        %4021 = vmatprep.subr.bf16.mxu0 0
        %4022 = vmatpush1.bf16.msra.mxu0 0
        %4023 = vmatprep.subr.bf16.mxu0 0
        %4024 = vmatpush1.bf16.msra.mxu0 0
        %4025 = vmatprep.subr.bf16.mxu0 0
        %4026 = vmatpush1.bf16.msra.mxu0 0
        %4027 = vmatprep.subr.bf16.mxu0 0
        %4028 = vmatpush1.bf16.msra.mxu0 0
        %4029 = vmatprep.subr.bf16.mxu0 0
        %4030 = vmatpush1.bf16.msra.mxu0 0
        %4031 = vmatprep.subr.bf16.mxu0 0
        %4032 = vmatpush1.bf16.msra.mxu0 0
        %4033 = vmatprep.subr.bf16.mxu0 0
        %4034 = vmatpush1.bf16.msra.mxu0 0
        %4035 = vmatprep.subr.bf16.mxu0 0
        %4036 = vmatpush1.bf16.msra.mxu0 0
        %4037 = vmatprep.subr.bf16.mxu0 0
        %4038 = vmatpush1.bf16.msra.mxu0 0
        %4039 = vmatprep.subr.bf16.mxu0 0
        %4040 = vmatpush1.bf16.msra.mxu0 0
        %4041 = vmatprep.subr.bf16.mxu0 0
        %4042 = vmatpush1.bf16.msra.mxu0 0
        %4043 = vmatprep.subr.bf16.mxu0 0
        %4044 = vmatpush1.bf16.msra.mxu0 0
        %4045 = vmatprep.subr.bf16.mxu0 0
        %4046 = vmatpush1.bf16.msra.mxu0 0
        %4047 = vmatprep.subr.bf16.mxu0 0
        %4048 = vmatpush1.bf16.msra.mxu0 0
        %4049 = vmatprep.mubr.bf16.mxu0 0
        %4050 = vmatmul.mubr.bf16.gmra.mrb[0].mxu0 %v3503
        %v4051 = vpop.f32.mrb[0].mxu0
        %v4052 = vadd.f32 %v3987, %v4051
        %v4053 = vpop.f32.mrb[0].mxu0
        %v4054 = vpop.f32.mrb[0].mxu0
        %v4055 = vadd.f32 %v3990, %v4054
        %v4056 = vpop.f32.mrb[0].mxu0
        %4057 = vmatprep.mubr.bf16.mxu0 0
        %4058 = vmatmul.mubr.bf16.gmra.mrb[0].mxu0 %v3506
        %v4059 = vpop.f32.mrb[0].mxu0
        %v4060 = vadd.f32 %v3995, %v4059
        %v4061 = vpop.f32.mrb[0].mxu0
        %v4062 = vpop.f32.mrb[0].mxu0
        %v4063 = vadd.f32 %v3998, %v4062
        %v4064 = vpop.f32.mrb[0].mxu0
        %4065 = vmatprep.mubr.bf16.mxu0 0
        %4066 = vmatmul.mubr.bf16.gmra.mrb[0].mxu0 %v3509
        %v4067 = vpop.f32.mrb[0].mxu0
        %v4068 = vadd.f32 %v4003, %v4067
        %v4069 = vpop.f32.mrb[0].mxu0
        %v4070 = vpop.f32.mrb[0].mxu0
        %v4071 = vadd.f32 %v4006, %v4070
        %v4072 = vpop.f32.mrb[0].mxu0
        %4073 = vmatprep.mubr.bf16.mxu0 0
        %4074 = vmatmul.mubr.bf16.gmra.mrb[0].mxu0 %v3512
        %v4075 = vpop.f32.mrb[0].mxu0
        %v4076 = vadd.f32 %v4011, %v4075
        %v4077 = vpop.f32.mrb[0].mxu0
        %v4078 = vpop.f32.mrb[0].mxu0
        %v4079 = vadd.f32 %v4014, %v4078
        %v4080 = vpop.f32.mrb[0].mxu0
        %4081 = vdwg.mxu0
        %4082 = vst [vmem:[#allocation4] sm:$0xff] %v3622
        %4083 = vst [vmem:[#allocation4 + $0x8] sm:$0xff] %v3624
        %4084 = vst [vmem:[#allocation4 + $0x10] sm:$0xff] %v3768
        %4085 = vst [vmem:[#allocation4 + $0x18] sm:$0xff] %v3770
        %4086 = vst [vmem:[#allocation4 + $0x20] sm:$0xff] %v3914
        %4087 = vst [vmem:[#allocation4 + $0x28] sm:$0xff] %v3916
        %4088 = vst [vmem:[#allocation4 + $0x30] sm:$0xff] %v4052
        %4089 = vst [vmem:[#allocation4 + $0x40] sm:$0xff] %v3626
        %4090 = vst [vmem:[#allocation4 + $0x48] sm:$0xff] %v3628
        %4091 = vst [vmem:[#allocation4 + $0x50] sm:$0xff] %v3772
        %4092 = vst [vmem:[#allocation4 + $0x58] sm:$0xff] %v3774
        %4093 = vst [vmem:[#allocation4 + $0x60] sm:$0xff] %v3918
        %4094 = vst [vmem:[#allocation4 + $0x68] sm:$0xff] %v3920
        %4095 = vst [vmem:[#allocation4 + $0x70] sm:$0xff] %v4055
        %4096 = vst [vmem:[#allocation4 + $0x80] sm:$0xff] %v3632
        %4097 = vst [vmem:[#allocation4 + $0x88] sm:$0xff] %v3634
        %4098 = vst [vmem:[#allocation4 + $0x90] sm:$0xff] %v3778
        %4099 = vst [vmem:[#allocation4 + $0x98] sm:$0xff] %v3780
        %4100 = vst [vmem:[#allocation4 + $0xa0] sm:$0xff] %v3924
        %4101 = vst [vmem:[#allocation4 + $0xa8] sm:$0xff] %v3926
        %4102 = vst [vmem:[#allocation4 + $0xb0] sm:$0xff] %v4060
        %4103 = vst [vmem:[#allocation4 + $0xc0] sm:$0xff] %v3636
        %4104 = vst [vmem:[#allocation4 + $0xc8] sm:$0xff] %v3638
        %4105 = vst [vmem:[#allocation4 + $0xd0] sm:$0xff] %v3782
        %4106 = vst [vmem:[#allocation4 + $0xd8] sm:$0xff] %v3784
        %4107 = vst [vmem:[#allocation4 + $0xe0] sm:$0xff] %v3928
        %4108 = vst [vmem:[#allocation4 + $0xe8] sm:$0xff] %v3930
        %4109 = vst [vmem:[#allocation4 + $0xf0] sm:$0xff] %v4063
        %4110 = vst [vmem:[#allocation4 + $0x100] sm:$0xff] %v3642
        %4111 = vst [vmem:[#allocation4 + $0x108] sm:$0xff] %v3644
        %4112 = vst [vmem:[#allocation4 + $0x110] sm:$0xff] %v3788
        %4113 = vst [vmem:[#allocation4 + $0x118] sm:$0xff] %v3790
        %4114 = vst [vmem:[#allocation4 + $0x120] sm:$0xff] %v3934
        %4115 = vst [vmem:[#allocation4 + $0x128] sm:$0xff] %v3936
        %4116 = vst [vmem:[#allocation4 + $0x130] sm:$0xff] %v4068
        %4117 = vst [vmem:[#allocation4 + $0x140] sm:$0xff] %v3646
        %4118 = vst [vmem:[#allocation4 + $0x148] sm:$0xff] %v3648
        %4119 = vst [vmem:[#allocation4 + $0x150] sm:$0xff] %v3792
        %4120 = vst [vmem:[#allocation4 + $0x158] sm:$0xff] %v3794
        %4121 = vst [vmem:[#allocation4 + $0x160] sm:$0xff] %v3938
        %4122 = vst [vmem:[#allocation4 + $0x168] sm:$0xff] %v3940
        %4123 = vst [vmem:[#allocation4 + $0x170] sm:$0xff] %v4071
        %4124 = vst [vmem:[#allocation4 + $0x180] sm:$0xff] %v3652
        %4125 = vst [vmem:[#allocation4 + $0x188] sm:$0xff] %v3654
        %4126 = vst [vmem:[#allocation4 + $0x190] sm:$0xff] %v3798
        %4127 = vst [vmem:[#allocation4 + $0x198] sm:$0xff] %v3800
        %4128 = vst [vmem:[#allocation4 + $0x1a0] sm:$0xff] %v3944
        %4129 = vst [vmem:[#allocation4 + $0x1a8] sm:$0xff] %v3946
        %4130 = vst [vmem:[#allocation4 + $0x1b0] sm:$0xff] %v4076
        %4131 = vst [vmem:[#allocation4 + $0x1c0] sm:$0xff] %v3656
        %4132 = vst [vmem:[#allocation4 + $0x1c8] sm:$0xff] %v3658
        %4133 = vst [vmem:[#allocation4 + $0x1d0] sm:$0xff] %v3802
        %4134 = vst [vmem:[#allocation4 + $0x1d8] sm:$0xff] %v3804
        %4135 = vst [vmem:[#allocation4 + $0x1e0] sm:$0xff] %v3948
        %4136 = vst [vmem:[#allocation4 + $0x1e8] sm:$0xff] %v3950
        %4137 = vst [vmem:[#allocation4 + $0x1f0] sm:$0xff] %v4079
        %4138 = vst [vmem:[#allocation4 + $0x38] sm:$0xff] 0.0
        %4139 = vst [vmem:[#allocation4 + $0x78] sm:$0xff] 0.0
        %4140 = vst [vmem:[#allocation4 + $0xb8] sm:$0xff] 0.0
        %4141 = vst [vmem:[#allocation4 + $0xf8] sm:$0xff] 0.0
        %4142 = vst [vmem:[#allocation4 + $0x138] sm:$0xff] 0.0
        %4143 = vst [vmem:[#allocation4 + $0x178] sm:$0xff] 0.0
        %4144 = vst [vmem:[#allocation4 + $0x1b8] sm:$0xff] 0.0
        %4145 = vst [vmem:[#allocation4 + $0x1f8] sm:$0xff] 0.0
        %v4146 = vld [vmem:[#allocation4] sm:$0xff]
        %v4147 = vld [vmem:[#allocation4 + $0x8] sm:$0xff]
        %v4148 = vld [vmem:[#allocation4 + $0x10] sm:$0xff]
        %v4149 = vld [vmem:[#allocation4 + $0x18] sm:$0xff]
        %v4150 = vld [vmem:[#allocation4 + $0x20] sm:$0xff]
        %v4151 = vld [vmem:[#allocation4 + $0x28] sm:$0xff]
        %v4152 = vld [vmem:[#allocation4 + $0x30] sm:$0xff]
        %v4153 = vld [vmem:[#allocation4 + $0x38] sm:$0xff]
        %v4154 = vld [vmem:[#allocation4 + $0x40] sm:$0xff]
        %v4155 = vld [vmem:[#allocation4 + $0x48] sm:$0xff]
        %v4156 = vld [vmem:[#allocation4 + $0x50] sm:$0xff]
        %v4157 = vld [vmem:[#allocation4 + $0x58] sm:$0xff]
        %v4158 = vld [vmem:[#allocation4 + $0x60] sm:$0xff]
        %v4159 = vld [vmem:[#allocation4 + $0x68] sm:$0xff]
        %v4160 = vld [vmem:[#allocation4 + $0x70] sm:$0xff]
        %v4161 = vld [vmem:[#allocation4 + $0x78] sm:$0xff]
        %v4162 = vld [vmem:[#allocation4 + $0x80] sm:$0xff]
        %v4163 = vld [vmem:[#allocation4 + $0x88] sm:$0xff]
        %v4164 = vld [vmem:[#allocation4 + $0x90] sm:$0xff]
        %v4165 = vld [vmem:[#allocation4 + $0x98] sm:$0xff]
        %v4166 = vld [vmem:[#allocation4 + $0xa0] sm:$0xff]
        %v4167 = vld [vmem:[#allocation4 + $0xa8] sm:$0xff]
        %v4168 = vld [vmem:[#allocation4 + $0xb0] sm:$0xff]
        %v4169 = vld [vmem:[#allocation4 + $0xb8] sm:$0xff]
        %v4170 = vld [vmem:[#allocation4 + $0xc0] sm:$0xff]
        %v4171 = vld [vmem:[#allocation4 + $0xc8] sm:$0xff]
        %v4172 = vld [vmem:[#allocation4 + $0xd0] sm:$0xff]
        %v4173 = vld [vmem:[#allocation4 + $0xd8] sm:$0xff]
        %v4174 = vld [vmem:[#allocation4 + $0xe0] sm:$0xff]
        %v4175 = vld [vmem:[#allocation4 + $0xe8] sm:$0xff]
        %v4176 = vld [vmem:[#allocation4 + $0xf0] sm:$0xff]
        %v4177 = vld [vmem:[#allocation4 + $0xf8] sm:$0xff]
        %v4178 = vld [vmem:[#allocation4 + $0x100] sm:$0xff]
        %v4179 = vld [vmem:[#allocation4 + $0x108] sm:$0xff]
        %v4180 = vld [vmem:[#allocation4 + $0x110] sm:$0xff]
        %v4181 = vld [vmem:[#allocation4 + $0x118] sm:$0xff]
        %v4182 = vld [vmem:[#allocation4 + $0x120] sm:$0xff]
        %v4183 = vld [vmem:[#allocation4 + $0x128] sm:$0xff]
        %v4184 = vld [vmem:[#allocation4 + $0x130] sm:$0xff]
        %v4185 = vld [vmem:[#allocation4 + $0x138] sm:$0xff]
        %v4186 = vld [vmem:[#allocation4 + $0x140] sm:$0xff]
        %v4187 = vld [vmem:[#allocation4 + $0x148] sm:$0xff]
        %v4188 = vld [vmem:[#allocation4 + $0x150] sm:$0xff]
        %v4189 = vld [vmem:[#allocation4 + $0x158] sm:$0xff]
        %v4190 = vld [vmem:[#allocation4 + $0x160] sm:$0xff]
        %v4191 = vld [vmem:[#allocation4 + $0x168] sm:$0xff]
        %v4192 = vld [vmem:[#allocation4 + $0x170] sm:$0xff]
        %v4193 = vld [vmem:[#allocation4 + $0x178] sm:$0xff]
        %v4194 = vld [vmem:[#allocation4 + $0x180] sm:$0xff]
        %v4195 = vld [vmem:[#allocation4 + $0x188] sm:$0xff]
        %v4196 = vld [vmem:[#allocation4 + $0x190] sm:$0xff]
        %v4197 = vld [vmem:[#allocation4 + $0x198] sm:$0xff]
        %v4198 = vld [vmem:[#allocation4 + $0x1a0] sm:$0xff]
        %v4199 = vld [vmem:[#allocation4 + $0x1a8] sm:$0xff]
        %v4200 = vld [vmem:[#allocation4 + $0x1b0] sm:$0xff]
        %v4201 = vld [vmem:[#allocation4 + $0x1b8] sm:$0xff]
        %v4202 = vld [vmem:[#allocation4 + $0x1c0] sm:$0xff]
        %v4203 = vld [vmem:[#allocation4 + $0x1c8] sm:$0xff]
        %v4204 = vld [vmem:[#allocation4 + $0x1d0] sm:$0xff]
        %v4205 = vld [vmem:[#allocation4 + $0x1d8] sm:$0xff]
        %v4206 = vld [vmem:[#allocation4 + $0x1e0] sm:$0xff]
        %v4207 = vld [vmem:[#allocation4 + $0x1e8] sm:$0xff]
        %v4208 = vld [vmem:[#allocation4 + $0x1f0] sm:$0xff]
        %v4209 = vld [vmem:[#allocation4 + $0x1f8] sm:$0xff]
        %4274 = vrot.lane.b32.xlu0 %v4146, 127
        %v4275 = vpop.permute.xlu0 %4274
        %4276 = vrot.lane.b32.xlu0 %v4147, 127
        %v4277 = vpop.permute.xlu0 %4276
        %4278 = vrot.lane.b32.xlu0 %v4148, 127
        %v4279 = vpop.permute.xlu0 %4278
        %4280 = vrot.lane.b32.xlu0 %v4149, 127
        %v4281 = vpop.permute.xlu0 %4280
        %4282 = vrot.lane.b32.xlu0 %v4150, 127
        %v4283 = vpop.permute.xlu0 %4282
        %4284 = vrot.lane.b32.xlu0 %v4151, 127
        %v4285 = vpop.permute.xlu0 %4284
        %4286 = vrot.lane.b32.xlu0 %v4152, 127
        %v4287 = vpop.permute.xlu0 %4286
        %4288 = vrot.lane.b32.xlu0 %v4153, 127
        %v4289 = vpop.permute.xlu0 %4288
        %4290 = vrot.lane.b32.xlu0 %v4154, 127
        %v4291 = vpop.permute.xlu0 %4290
        %4292 = vrot.lane.b32.xlu0 %v4155, 127
        %v4293 = vpop.permute.xlu0 %4292
        %4294 = vrot.lane.b32.xlu0 %v4156, 127
        %v4295 = vpop.permute.xlu0 %4294
        %4296 = vrot.lane.b32.xlu0 %v4157, 127
        %v4297 = vpop.permute.xlu0 %4296
        %4298 = vrot.lane.b32.xlu0 %v4158, 127
        %v4299 = vpop.permute.xlu0 %4298
        %4300 = vrot.lane.b32.xlu0 %v4159, 127
        %v4301 = vpop.permute.xlu0 %4300
        %4302 = vrot.lane.b32.xlu0 %v4160, 127
        %v4303 = vpop.permute.xlu0 %4302
        %4304 = vrot.lane.b32.xlu0 %v4161, 127
        %v4305 = vpop.permute.xlu0 %4304
        %4306 = vrot.lane.b32.xlu0 %v4162, 127
        %v4307 = vpop.permute.xlu0 %4306
        %4308 = vrot.lane.b32.xlu0 %v4163, 127
        %v4309 = vpop.permute.xlu0 %4308
        %4310 = vrot.lane.b32.xlu0 %v4164, 127
        %v4311 = vpop.permute.xlu0 %4310
        %4312 = vrot.lane.b32.xlu0 %v4165, 127
        %v4313 = vpop.permute.xlu0 %4312
        %4314 = vrot.lane.b32.xlu0 %v4166, 127
        %v4315 = vpop.permute.xlu0 %4314
        %4316 = vrot.lane.b32.xlu0 %v4167, 127
        %v4317 = vpop.permute.xlu0 %4316
        %4318 = vrot.lane.b32.xlu0 %v4168, 127
        %v4319 = vpop.permute.xlu0 %4318
        %4320 = vrot.lane.b32.xlu0 %v4169, 127
        %v4321 = vpop.permute.xlu0 %4320
        %4322 = vrot.lane.b32.xlu0 %v4170, 127
        %v4323 = vpop.permute.xlu0 %4322
        %4324 = vrot.lane.b32.xlu0 %v4171, 127
        %v4325 = vpop.permute.xlu0 %4324
        %4326 = vrot.lane.b32.xlu0 %v4172, 127
        %v4327 = vpop.permute.xlu0 %4326
        %4328 = vrot.lane.b32.xlu0 %v4173, 127
        %v4329 = vpop.permute.xlu0 %4328
        %4330 = vrot.lane.b32.xlu0 %v4174, 127
        %v4331 = vpop.permute.xlu0 %4330
        %4332 = vrot.lane.b32.xlu0 %v4175, 127
        %v4333 = vpop.permute.xlu0 %4332
        %4334 = vrot.lane.b32.xlu0 %v4176, 127
        %v4335 = vpop.permute.xlu0 %4334
        %4336 = vrot.lane.b32.xlu0 %v4177, 127
        %v4337 = vpop.permute.xlu0 %4336
        %4338 = vrot.lane.b32.xlu0 %v4178, 127
        %v4339 = vpop.permute.xlu0 %4338
        %4340 = vrot.lane.b32.xlu0 %v4179, 127
        %v4341 = vpop.permute.xlu0 %4340
        %4342 = vrot.lane.b32.xlu0 %v4180, 127
        %v4343 = vpop.permute.xlu0 %4342
        %4344 = vrot.lane.b32.xlu0 %v4181, 127
        %v4345 = vpop.permute.xlu0 %4344
        %4346 = vrot.lane.b32.xlu0 %v4182, 127
        %v4347 = vpop.permute.xlu0 %4346
        %4348 = vrot.lane.b32.xlu0 %v4183, 127
        %v4349 = vpop.permute.xlu0 %4348
        %4350 = vrot.lane.b32.xlu0 %v4184, 127
        %v4351 = vpop.permute.xlu0 %4350
        %4352 = vrot.lane.b32.xlu0 %v4185, 127
        %v4353 = vpop.permute.xlu0 %4352
        %4354 = vrot.lane.b32.xlu0 %v4186, 127
        %v4355 = vpop.permute.xlu0 %4354
        %4356 = vrot.lane.b32.xlu0 %v4187, 127
        %v4357 = vpop.permute.xlu0 %4356
        %4358 = vrot.lane.b32.xlu0 %v4188, 127
        %v4359 = vpop.permute.xlu0 %4358
        %4360 = vrot.lane.b32.xlu0 %v4189, 127
        %v4361 = vpop.permute.xlu0 %4360
        %4362 = vrot.lane.b32.xlu0 %v4190, 127
        %v4363 = vpop.permute.xlu0 %4362
        %4364 = vrot.lane.b32.xlu0 %v4191, 127
        %v4365 = vpop.permute.xlu0 %4364
        %4366 = vrot.lane.b32.xlu0 %v4192, 127
        %v4367 = vpop.permute.xlu0 %4366
        %4368 = vrot.lane.b32.xlu0 %v4193, 127
        %v4369 = vpop.permute.xlu0 %4368
        %4370 = vrot.lane.b32.xlu0 %v4194, 127
        %v4371 = vpop.permute.xlu0 %4370
        %4372 = vrot.lane.b32.xlu0 %v4195, 127
        %v4373 = vpop.permute.xlu0 %4372
        %4374 = vrot.lane.b32.xlu0 %v4196, 127
        %v4375 = vpop.permute.xlu0 %4374
        %4376 = vrot.lane.b32.xlu0 %v4197, 127
        %v4377 = vpop.permute.xlu0 %4376
        %4378 = vrot.lane.b32.xlu0 %v4198, 127
        %v4379 = vpop.permute.xlu0 %4378
        %4380 = vrot.lane.b32.xlu0 %v4199, 127
        %v4381 = vpop.permute.xlu0 %4380
        %4382 = vrot.lane.b32.xlu0 %v4200, 127
        %v4383 = vpop.permute.xlu0 %4382
        %4384 = vrot.lane.b32.xlu0 %v4201, 127
        %v4385 = vpop.permute.xlu0 %4384
        %4386 = vrot.lane.b32.xlu0 %v4202, 127
        %v4387 = vpop.permute.xlu0 %4386
        %4388 = vrot.lane.b32.xlu0 %v4203, 127
        %v4389 = vpop.permute.xlu0 %4388
        %4390 = vrot.lane.b32.xlu0 %v4204, 127
        %v4391 = vpop.permute.xlu0 %4390
        %4392 = vrot.lane.b32.xlu0 %v4205, 127
        %v4393 = vpop.permute.xlu0 %4392
        %4394 = vrot.lane.b32.xlu0 %v4206, 127
        %v4395 = vpop.permute.xlu0 %4394
        %4396 = vrot.lane.b32.xlu0 %v4207, 127
        %v4397 = vpop.permute.xlu0 %4396
        %4398 = vrot.lane.b32.xlu0 %v4208, 127
        %v4399 = vpop.permute.xlu0 %4398
        %4400 = vrot.lane.b32.xlu0 %v4209, 127
        %v4401 = vpop.permute.xlu0 %4400
        %v4402 = vsel %vm982, %v4275, %v4277
        %v4403 = vsel %vm982, %v4277, %v4279
        %v4404 = vsel %vm982, %v4279, %v4281
        %v4405 = vsel %vm982, %v4281, %v4283
        %v4406 = vsel %vm982, %v4283, %v4285
        %v4407 = vsel %vm982, %v4285, %v4287
        %v4408 = vsel %vm982, %v4287, %v4289
        %v4409 = vsel %vm982, %v4291, %v4293
        %v4410 = vsel %vm982, %v4293, %v4295
        %v4411 = vsel %vm982, %v4295, %v4297
        %v4412 = vsel %vm982, %v4297, %v4299
        %v4413 = vsel %vm982, %v4299, %v4301
        %v4414 = vsel %vm982, %v4301, %v4303
        %v4415 = vsel %vm982, %v4303, %v4305
        %v4416 = vsel %vm982, %v4307, %v4309
        %v4417 = vsel %vm982, %v4309, %v4311
        %v4418 = vsel %vm982, %v4311, %v4313
        %v4419 = vsel %vm982, %v4313, %v4315
        %v4420 = vsel %vm982, %v4315, %v4317
        %v4421 = vsel %vm982, %v4317, %v4319
        %v4422 = vsel %vm982, %v4319, %v4321
        %v4423 = vsel %vm982, %v4323, %v4325
        %v4424 = vsel %vm982, %v4325, %v4327
        %v4425 = vsel %vm982, %v4327, %v4329
        %v4426 = vsel %vm982, %v4329, %v4331
        %v4427 = vsel %vm982, %v4331, %v4333
        %v4428 = vsel %vm982, %v4333, %v4335
        %v4429 = vsel %vm982, %v4335, %v4337
        %v4430 = vsel %vm982, %v4339, %v4341
        %v4431 = vsel %vm982, %v4341, %v4343
        %v4432 = vsel %vm982, %v4343, %v4345
        %v4433 = vsel %vm982, %v4345, %v4347
        %v4434 = vsel %vm982, %v4347, %v4349
        %v4435 = vsel %vm982, %v4349, %v4351
        %v4436 = vsel %vm982, %v4351, %v4353
        %v4437 = vsel %vm982, %v4355, %v4357
        %v4438 = vsel %vm982, %v4357, %v4359
        %v4439 = vsel %vm982, %v4359, %v4361
        %v4440 = vsel %vm982, %v4361, %v4363
        %v4441 = vsel %vm982, %v4363, %v4365
        %v4442 = vsel %vm982, %v4365, %v4367
        %v4443 = vsel %vm982, %v4367, %v4369
        %v4444 = vsel %vm982, %v4371, %v4373
        %v4445 = vsel %vm982, %v4373, %v4375
        %v4446 = vsel %vm982, %v4375, %v4377
        %v4447 = vsel %vm982, %v4377, %v4379
        %v4448 = vsel %vm982, %v4379, %v4381
        %v4449 = vsel %vm982, %v4381, %v4383
        %v4450 = vsel %vm982, %v4383, %v4385
        %v4451 = vsel %vm982, %v4387, %v4389
        %v4452 = vsel %vm982, %v4389, %v4391
        %v4453 = vsel %vm982, %v4391, %v4393
        %v4454 = vsel %vm982, %v4393, %v4395
        %v4455 = vsel %vm982, %v4395, %v4397
        %v4456 = vsel %vm982, %v4397, %v4399
        %v4457 = vsel %vm982, %v4399, %v4401
        %v4514 = vmax.f32 %v3622, %v4402
        %v4515 = vmax.f32 %v3624, %v4403
        %v4516 = vmax.f32 %v3768, %v4404
        %v4517 = vmax.f32 %v3770, %v4405
        %v4518 = vmax.f32 %v3914, %v4406
        %v4519 = vmax.f32 %v3916, %v4407
        %v4520 = vmax.f32 %v4052, %v4408
        %v4521 = vmax.f32 %v3626, %v4409
        %v4522 = vmax.f32 %v3628, %v4410
        %v4523 = vmax.f32 %v3772, %v4411
        %v4524 = vmax.f32 %v3774, %v4412
        %v4525 = vmax.f32 %v3918, %v4413
        %v4526 = vmax.f32 %v3920, %v4414
        %v4527 = vmax.f32 %v4055, %v4415
        %v4528 = vmax.f32 %v3632, %v4416
        %v4529 = vmax.f32 %v3634, %v4417
        %v4530 = vmax.f32 %v3778, %v4418
        %v4531 = vmax.f32 %v3780, %v4419
        %v4532 = vmax.f32 %v3924, %v4420
        %v4533 = vmax.f32 %v3926, %v4421
        %v4534 = vmax.f32 %v4060, %v4422
        %v4535 = vmax.f32 %v3636, %v4423
        %v4536 = vmax.f32 %v3638, %v4424
        %v4537 = vmax.f32 %v3782, %v4425
        %v4538 = vmax.f32 %v3784, %v4426
        %v4539 = vmax.f32 %v3928, %v4427
        %v4540 = vmax.f32 %v3930, %v4428
        %v4541 = vmax.f32 %v4063, %v4429
        %v4542 = vmax.f32 %v3642, %v4430
        %v4543 = vmax.f32 %v3644, %v4431
        %v4544 = vmax.f32 %v3788, %v4432
        %v4545 = vmax.f32 %v3790, %v4433
        %v4546 = vmax.f32 %v3934, %v4434
        %v4547 = vmax.f32 %v3936, %v4435
        %v4548 = vmax.f32 %v4068, %v4436
        %v4549 = vmax.f32 %v3646, %v4437
        %v4550 = vmax.f32 %v3648, %v4438
        %v4551 = vmax.f32 %v3792, %v4439
        %v4552 = vmax.f32 %v3794, %v4440
        %v4553 = vmax.f32 %v3938, %v4441
        %v4554 = vmax.f32 %v3940, %v4442
        %v4555 = vmax.f32 %v4071, %v4443
        %v4556 = vmax.f32 %v3652, %v4444
        %v4557 = vmax.f32 %v3654, %v4445
        %v4558 = vmax.f32 %v3798, %v4446
        %v4559 = vmax.f32 %v3800, %v4447
        %v4560 = vmax.f32 %v3944, %v4448
        %v4561 = vmax.f32 %v3946, %v4449
        %v4562 = vmax.f32 %v4076, %v4450
        %v4563 = vmax.f32 %v3656, %v4451
        %v4564 = vmax.f32 %v3658, %v4452
        %v4565 = vmax.f32 %v3802, %v4453
        %v4566 = vmax.f32 %v3804, %v4454
        %v4567 = vmax.f32 %v3948, %v4455
        %v4568 = vmax.f32 %v3950, %v4456
        %v4569 = vmax.f32 %v4079, %v4457
        %v4578 = vmax.f32 %v4146, %v4402
        %v4579 = vmax.f32 %v4147, %v4403
        %v4580 = vmax.f32 %v4148, %v4404
        %v4581 = vmax.f32 %v4149, %v4405
        %v4582 = vmax.f32 %v4150, %v4406
        %v4583 = vmax.f32 %v4151, %v4407
        %v4584 = vmax.f32 %v4152, %v4408
        %v4585 = vmax.f32 %v4153, %v4289
        %v4586 = vmax.f32 %v4154, %v4409
        %v4587 = vmax.f32 %v4155, %v4410
        %v4588 = vmax.f32 %v4156, %v4411
        %v4589 = vmax.f32 %v4157, %v4412
        %v4590 = vmax.f32 %v4158, %v4413
        %v4591 = vmax.f32 %v4159, %v4414
        %v4592 = vmax.f32 %v4160, %v4415
        %v4593 = vmax.f32 %v4161, %v4305
        %v4594 = vmax.f32 %v4162, %v4416
        %v4595 = vmax.f32 %v4163, %v4417
        %v4596 = vmax.f32 %v4164, %v4418
        %v4597 = vmax.f32 %v4165, %v4419
        %v4598 = vmax.f32 %v4166, %v4420
        %v4599 = vmax.f32 %v4167, %v4421
        %v4600 = vmax.f32 %v4168, %v4422
        %v4601 = vmax.f32 %v4169, %v4321
        %v4602 = vmax.f32 %v4170, %v4423
        %v4603 = vmax.f32 %v4171, %v4424
        %v4604 = vmax.f32 %v4172, %v4425
        %v4605 = vmax.f32 %v4173, %v4426
        %v4606 = vmax.f32 %v4174, %v4427
        %v4607 = vmax.f32 %v4175, %v4428
        %v4608 = vmax.f32 %v4176, %v4429
        %v4609 = vmax.f32 %v4177, %v4337
        %v4610 = vmax.f32 %v4178, %v4430
        %v4611 = vmax.f32 %v4179, %v4431
        %v4612 = vmax.f32 %v4180, %v4432
        %v4613 = vmax.f32 %v4181, %v4433
        %v4614 = vmax.f32 %v4182, %v4434
        %v4615 = vmax.f32 %v4183, %v4435
        %v4616 = vmax.f32 %v4184, %v4436
        %v4617 = vmax.f32 %v4185, %v4353
        %v4618 = vmax.f32 %v4186, %v4437
        %v4619 = vmax.f32 %v4187, %v4438
        %v4620 = vmax.f32 %v4188, %v4439
        %v4621 = vmax.f32 %v4189, %v4440
        %v4622 = vmax.f32 %v4190, %v4441
        %v4623 = vmax.f32 %v4191, %v4442
        %v4624 = vmax.f32 %v4192, %v4443
        %v4625 = vmax.f32 %v4193, %v4369
        %v4626 = vmax.f32 %v4194, %v4444
        %v4627 = vmax.f32 %v4195, %v4445
        %v4628 = vmax.f32 %v4196, %v4446
        %v4629 = vmax.f32 %v4197, %v4447
        %v4630 = vmax.f32 %v4198, %v4448
        %v4631 = vmax.f32 %v4199, %v4449
        %v4632 = vmax.f32 %v4200, %v4450
        %v4633 = vmax.f32 %v4201, %v4385
        %v4634 = vmax.f32 %v4202, %v4451
        %v4635 = vmax.f32 %v4203, %v4452
        %v4636 = vmax.f32 %v4204, %v4453
        %v4637 = vmax.f32 %v4205, %v4454
        %v4638 = vmax.f32 %v4206, %v4455
        %v4639 = vmax.f32 %v4207, %v4456
        %v4640 = vmax.f32 %v4208, %v4457
        %v4641 = vmax.f32 %v4209, %v4401
        %4706 = vrot.lane.b32.xlu0 %v4578, 96
        %v4707 = vpop.permute.xlu0 %4706
        %4708 = vrot.lane.b32.xlu0 %v4579, 96
        %v4709 = vpop.permute.xlu0 %4708
        %4710 = vrot.lane.b32.xlu0 %v4580, 96
        %v4711 = vpop.permute.xlu0 %4710
        %4712 = vrot.lane.b32.xlu0 %v4581, 96
        %v4713 = vpop.permute.xlu0 %4712
        %4714 = vrot.lane.b32.xlu0 %v4582, 96
        %v4715 = vpop.permute.xlu0 %4714
        %4716 = vrot.lane.b32.xlu0 %v4583, 96
        %v4717 = vpop.permute.xlu0 %4716
        %4718 = vrot.lane.b32.xlu0 %v4584, 96
        %v4719 = vpop.permute.xlu0 %4718
        %4720 = vrot.lane.b32.xlu0 %v4585, 96
        %v4721 = vpop.permute.xlu0 %4720
        %4722 = vrot.lane.b32.xlu0 %v4586, 96
        %v4723 = vpop.permute.xlu0 %4722
        %4724 = vrot.lane.b32.xlu0 %v4587, 96
        %v4725 = vpop.permute.xlu0 %4724
        %4726 = vrot.lane.b32.xlu0 %v4588, 96
        %v4727 = vpop.permute.xlu0 %4726
        %4728 = vrot.lane.b32.xlu0 %v4589, 96
        %v4729 = vpop.permute.xlu0 %4728
        %4730 = vrot.lane.b32.xlu0 %v4590, 96
        %v4731 = vpop.permute.xlu0 %4730
        %4732 = vrot.lane.b32.xlu0 %v4591, 96
        %v4733 = vpop.permute.xlu0 %4732
        %4734 = vrot.lane.b32.xlu0 %v4592, 96
        %v4735 = vpop.permute.xlu0 %4734
        %4736 = vrot.lane.b32.xlu0 %v4593, 96
        %v4737 = vpop.permute.xlu0 %4736
        %4738 = vrot.lane.b32.xlu0 %v4594, 96
        %v4739 = vpop.permute.xlu0 %4738
        %4740 = vrot.lane.b32.xlu0 %v4595, 96
        %v4741 = vpop.permute.xlu0 %4740
        %4742 = vrot.lane.b32.xlu0 %v4596, 96
        %v4743 = vpop.permute.xlu0 %4742
        %4744 = vrot.lane.b32.xlu0 %v4597, 96
        %v4745 = vpop.permute.xlu0 %4744
        %4746 = vrot.lane.b32.xlu0 %v4598, 96
        %v4747 = vpop.permute.xlu0 %4746
        %4748 = vrot.lane.b32.xlu0 %v4599, 96
        %v4749 = vpop.permute.xlu0 %4748
        %4750 = vrot.lane.b32.xlu0 %v4600, 96
        %v4751 = vpop.permute.xlu0 %4750
        %4752 = vrot.lane.b32.xlu0 %v4601, 96
        %v4753 = vpop.permute.xlu0 %4752
        %4754 = vrot.lane.b32.xlu0 %v4602, 96
        %v4755 = vpop.permute.xlu0 %4754
        %4756 = vrot.lane.b32.xlu0 %v4603, 96
        %v4757 = vpop.permute.xlu0 %4756
        %4758 = vrot.lane.b32.xlu0 %v4604, 96
        %v4759 = vpop.permute.xlu0 %4758
        %4760 = vrot.lane.b32.xlu0 %v4605, 96
        %v4761 = vpop.permute.xlu0 %4760
        %4762 = vrot.lane.b32.xlu0 %v4606, 96
        %v4763 = vpop.permute.xlu0 %4762
        %4764 = vrot.lane.b32.xlu0 %v4607, 96
        %v4765 = vpop.permute.xlu0 %4764
        %4766 = vrot.lane.b32.xlu0 %v4608, 96
        %v4767 = vpop.permute.xlu0 %4766
        %4768 = vrot.lane.b32.xlu0 %v4609, 96
        %v4769 = vpop.permute.xlu0 %4768
        %4770 = vrot.lane.b32.xlu0 %v4610, 96
        %v4771 = vpop.permute.xlu0 %4770
        %4772 = vrot.lane.b32.xlu0 %v4611, 96
        %v4773 = vpop.permute.xlu0 %4772
        %4774 = vrot.lane.b32.xlu0 %v4612, 96
        %v4775 = vpop.permute.xlu0 %4774
        %4776 = vrot.lane.b32.xlu0 %v4613, 96
        %v4777 = vpop.permute.xlu0 %4776
        %4778 = vrot.lane.b32.xlu0 %v4614, 96
        %v4779 = vpop.permute.xlu0 %4778
        %4780 = vrot.lane.b32.xlu0 %v4615, 96
        %v4781 = vpop.permute.xlu0 %4780
        %4782 = vrot.lane.b32.xlu0 %v4616, 96
        %v4783 = vpop.permute.xlu0 %4782
        %4784 = vrot.lane.b32.xlu0 %v4617, 96
        %v4785 = vpop.permute.xlu0 %4784
        %4786 = vrot.lane.b32.xlu0 %v4618, 96
        %v4787 = vpop.permute.xlu0 %4786
        %4788 = vrot.lane.b32.xlu0 %v4619, 96
        %v4789 = vpop.permute.xlu0 %4788
        %4790 = vrot.lane.b32.xlu0 %v4620, 96
        %v4791 = vpop.permute.xlu0 %4790
        %4792 = vrot.lane.b32.xlu0 %v4621, 96
        %v4793 = vpop.permute.xlu0 %4792
        %4794 = vrot.lane.b32.xlu0 %v4622, 96
        %v4795 = vpop.permute.xlu0 %4794
        %4796 = vrot.lane.b32.xlu0 %v4623, 96
        %v4797 = vpop.permute.xlu0 %4796
        %4798 = vrot.lane.b32.xlu0 %v4624, 96
        %v4799 = vpop.permute.xlu0 %4798
        %4800 = vrot.lane.b32.xlu0 %v4625, 96
        %v4801 = vpop.permute.xlu0 %4800
        %4802 = vrot.lane.b32.xlu0 %v4626, 96
        %v4803 = vpop.permute.xlu0 %4802
        %4804 = vrot.lane.b32.xlu0 %v4627, 96
        %v4805 = vpop.permute.xlu0 %4804
        %4806 = vrot.lane.b32.xlu0 %v4628, 96
        %v4807 = vpop.permute.xlu0 %4806
        %4808 = vrot.lane.b32.xlu0 %v4629, 96
        %v4809 = vpop.permute.xlu0 %4808
        %4810 = vrot.lane.b32.xlu0 %v4630, 96
        %v4811 = vpop.permute.xlu0 %4810
        %4812 = vrot.lane.b32.xlu0 %v4631, 96
        %v4813 = vpop.permute.xlu0 %4812
        %4814 = vrot.lane.b32.xlu0 %v4632, 96
        %v4815 = vpop.permute.xlu0 %4814
        %4816 = vrot.lane.b32.xlu0 %v4633, 96
        %v4817 = vpop.permute.xlu0 %4816
        %4818 = vrot.lane.b32.xlu0 %v4634, 96
        %v4819 = vpop.permute.xlu0 %4818
        %4820 = vrot.lane.b32.xlu0 %v4635, 96
        %v4821 = vpop.permute.xlu0 %4820
        %4822 = vrot.lane.b32.xlu0 %v4636, 96
        %v4823 = vpop.permute.xlu0 %4822
        %4824 = vrot.lane.b32.xlu0 %v4637, 96
        %v4825 = vpop.permute.xlu0 %4824
        %4826 = vrot.lane.b32.xlu0 %v4638, 96
        %v4827 = vpop.permute.xlu0 %4826
        %4828 = vrot.lane.b32.xlu0 %v4639, 96
        %v4829 = vpop.permute.xlu0 %4828
        %4830 = vrot.lane.b32.xlu0 %v4640, 96
        %v4831 = vpop.permute.xlu0 %4830
        %4832 = vrot.lane.b32.xlu0 %v4641, 96
        %v4833 = vpop.permute.xlu0 %4832
        %v4834 = vsel %vm1458, %v4707, %v4709
        %v4835 = vsel %vm1458, %v4709, %v4711
        %v4836 = vsel %vm1458, %v4711, %v4713
        %v4837 = vsel %vm1458, %v4713, %v4715
        %v4838 = vsel %vm1458, %v4715, %v4717
        %v4839 = vsel %vm1458, %v4717, %v4719
        %v4840 = vsel %vm1458, %v4719, %v4721
        %v4841 = vsel %vm1458, %v4723, %v4725
        %v4842 = vsel %vm1458, %v4725, %v4727
        %v4843 = vsel %vm1458, %v4727, %v4729
        %v4844 = vsel %vm1458, %v4729, %v4731
        %v4845 = vsel %vm1458, %v4731, %v4733
        %v4846 = vsel %vm1458, %v4733, %v4735
        %v4847 = vsel %vm1458, %v4735, %v4737
        %v4848 = vsel %vm1458, %v4739, %v4741
        %v4849 = vsel %vm1458, %v4741, %v4743
        %v4850 = vsel %vm1458, %v4743, %v4745
        %v4851 = vsel %vm1458, %v4745, %v4747
        %v4852 = vsel %vm1458, %v4747, %v4749
        %v4853 = vsel %vm1458, %v4749, %v4751
        %v4854 = vsel %vm1458, %v4751, %v4753
        %v4855 = vsel %vm1458, %v4755, %v4757
        %v4856 = vsel %vm1458, %v4757, %v4759
        %v4857 = vsel %vm1458, %v4759, %v4761
        %v4858 = vsel %vm1458, %v4761, %v4763
        %v4859 = vsel %vm1458, %v4763, %v4765
        %v4860 = vsel %vm1458, %v4765, %v4767
        %v4861 = vsel %vm1458, %v4767, %v4769
        %v4862 = vsel %vm1458, %v4771, %v4773
        %v4863 = vsel %vm1458, %v4773, %v4775
        %v4864 = vsel %vm1458, %v4775, %v4777
        %v4865 = vsel %vm1458, %v4777, %v4779
        %v4866 = vsel %vm1458, %v4779, %v4781
        %v4867 = vsel %vm1458, %v4781, %v4783
        %v4868 = vsel %vm1458, %v4783, %v4785
        %v4869 = vsel %vm1458, %v4787, %v4789
        %v4870 = vsel %vm1458, %v4789, %v4791
        %v4871 = vsel %vm1458, %v4791, %v4793
        %v4872 = vsel %vm1458, %v4793, %v4795
        %v4873 = vsel %vm1458, %v4795, %v4797
        %v4874 = vsel %vm1458, %v4797, %v4799
        %v4875 = vsel %vm1458, %v4799, %v4801
        %v4876 = vsel %vm1458, %v4803, %v4805
        %v4877 = vsel %vm1458, %v4805, %v4807
        %v4878 = vsel %vm1458, %v4807, %v4809
        %v4879 = vsel %vm1458, %v4809, %v4811
        %v4880 = vsel %vm1458, %v4811, %v4813
        %v4881 = vsel %vm1458, %v4813, %v4815
        %v4882 = vsel %vm1458, %v4815, %v4817
        %v4883 = vsel %vm1458, %v4819, %v4821
        %v4884 = vsel %vm1458, %v4821, %v4823
        %v4885 = vsel %vm1458, %v4823, %v4825
        %v4886 = vsel %vm1458, %v4825, %v4827
        %v4887 = vsel %vm1458, %v4827, %v4829
        %v4888 = vsel %vm1458, %v4829, %v4831
        %v4889 = vsel %vm1458, %v4831, %v4833
        %v4946 = vmax.f32 %v4514, %v4834
        %v4947 = vmax.f32 %v4515, %v4835
        %v4948 = vmax.f32 %v4516, %v4836
        %v4949 = vmax.f32 %v4517, %v4837
        %v4950 = vmax.f32 %v4518, %v4838
        %v4951 = vmax.f32 %v4519, %v4839
        %v4952 = vmax.f32 %v4520, %v4840
        %v4953 = vmax.f32 %v4521, %v4841
        %v4954 = vmax.f32 %v4522, %v4842
        %v4955 = vmax.f32 %v4523, %v4843
        %v4956 = vmax.f32 %v4524, %v4844
        %v4957 = vmax.f32 %v4525, %v4845
        %v4958 = vmax.f32 %v4526, %v4846
        %v4959 = vmax.f32 %v4527, %v4847
        %v4960 = vmax.f32 %v4528, %v4848
        %v4961 = vmax.f32 %v4529, %v4849
        %v4962 = vmax.f32 %v4530, %v4850
        %v4963 = vmax.f32 %v4531, %v4851
        %v4964 = vmax.f32 %v4532, %v4852
        %v4965 = vmax.f32 %v4533, %v4853
        %v4966 = vmax.f32 %v4534, %v4854
        %v4967 = vmax.f32 %v4535, %v4855
        %v4968 = vmax.f32 %v4536, %v4856
        %v4969 = vmax.f32 %v4537, %v4857
        %v4970 = vmax.f32 %v4538, %v4858
        %v4971 = vmax.f32 %v4539, %v4859
        %v4972 = vmax.f32 %v4540, %v4860
        %v4973 = vmax.f32 %v4541, %v4861
        %v4974 = vmax.f32 %v4542, %v4862
        %v4975 = vmax.f32 %v4543, %v4863
        %v4976 = vmax.f32 %v4544, %v4864
        %v4977 = vmax.f32 %v4545, %v4865
        %v4978 = vmax.f32 %v4546, %v4866
        %v4979 = vmax.f32 %v4547, %v4867
        %v4980 = vmax.f32 %v4548, %v4868
        %v4981 = vmax.f32 %v4549, %v4869
        %v4982 = vmax.f32 %v4550, %v4870
        %v4983 = vmax.f32 %v4551, %v4871
        %v4984 = vmax.f32 %v4552, %v4872
        %v4985 = vmax.f32 %v4553, %v4873
        %v4986 = vmax.f32 %v4554, %v4874
        %v4987 = vmax.f32 %v4555, %v4875
        %v4988 = vmax.f32 %v4556, %v4876
        %v4989 = vmax.f32 %v4557, %v4877
        %v4990 = vmax.f32 %v4558, %v4878
        %v4991 = vmax.f32 %v4559, %v4879
        %v4992 = vmax.f32 %v4560, %v4880
        %v4993 = vmax.f32 %v4561, %v4881
        %v4994 = vmax.f32 %v4562, %v4882
        %v4995 = vmax.f32 %v4563, %v4883
        %v4996 = vmax.f32 %v4564, %v4884
        %v4997 = vmax.f32 %v4565, %v4885
        %v4998 = vmax.f32 %v4566, %v4886
        %v4999 = vmax.f32 %v4567, %v4887
        %v5000 = vmax.f32 %v4568, %v4888
        %v5001 = vmax.f32 %v4569, %v4889
        %v5002 = vpack.c.bf16 %v4953, %v4946
        %v5003 = vpack.c.bf16 %v4954, %v4947
        %v5004 = vpack.c.bf16 %v4955, %v4948
        %v5005 = vpack.c.bf16 %v4956, %v4949
        %v5006 = vpack.c.bf16 %v4957, %v4950
        %v5007 = vpack.c.bf16 %v4958, %v4951
        %v5008 = vpack.c.bf16 %v4959, %v4952
        %v5009 = vpack.c.bf16 %v4967, %v4960
        %v5010 = vpack.c.bf16 %v4968, %v4961
        %v5011 = vpack.c.bf16 %v4969, %v4962
        %v5012 = vpack.c.bf16 %v4970, %v4963
        %v5013 = vpack.c.bf16 %v4971, %v4964
        %v5014 = vpack.c.bf16 %v4972, %v4965
        %v5015 = vpack.c.bf16 %v4973, %v4966
        %v5016 = vpack.c.bf16 %v4981, %v4974
        %v5017 = vpack.c.bf16 %v4982, %v4975
        %v5018 = vpack.c.bf16 %v4983, %v4976
        %v5019 = vpack.c.bf16 %v4984, %v4977
        %v5020 = vpack.c.bf16 %v4985, %v4978
        %v5021 = vpack.c.bf16 %v4986, %v4979
        %v5022 = vpack.c.bf16 %v4987, %v4980
        %v5023 = vpack.c.bf16 %v4995, %v4988
        %v5024 = vpack.c.bf16 %v4996, %v4989
        %v5025 = vpack.c.bf16 %v4997, %v4990
        %v5026 = vpack.c.bf16 %v4998, %v4991
        %v5027 = vpack.c.bf16 %v4999, %v4992
        %v5028 = vpack.c.bf16 %v5000, %v4993
        %v5029 = vpack.c.bf16 %v5001, %v4994
        %v5030 = vld [vmem:[%s5] sm:$0xff]
        %v5031 = vld [vmem:[%s5 + $0x8] sm:$0xff]
        %v5032 = vld [vmem:[%s5 + $0x10] sm:$0xff]
        %v5033 = vld [vmem:[%s5 + $0x18] sm:$0xff]
        %v5034 = vld [vmem:[%s5 + $0x20] sm:$0xff]
        %v5035 = vld [vmem:[%s5 + $0x28] sm:$0xff]
        %v5036 = vld [vmem:[%s5 + $0x30] sm:$0xff]
        %v5037 = vld [vmem:[%s5 + $0x38] sm:$0xff]
        %v5038 = vld [vmem:[%s5 + $0x40] sm:$0xff]
        %v5039 = vld [vmem:[%s5 + $0x48] sm:$0xff]
        %v5040 = vld [vmem:[%s5 + $0x50] sm:$0xff]
        %v5041 = vld [vmem:[%s5 + $0x58] sm:$0xff]
        %v5042 = vld [vmem:[%s5 + $0x60] sm:$0xff]
        %v5043 = vld [vmem:[%s5 + $0x68] sm:$0xff]
        %v5044 = vld [vmem:[%s5 + $0x70] sm:$0xff]
        %v5045 = vld [vmem:[%s5 + $0x78] sm:$0xff]
        %v5046 = vld [vmem:[%s5 + $0x80] sm:$0xff]
        %v5047 = vld [vmem:[%s5 + $0x88] sm:$0xff]
        %v5048 = vld [vmem:[%s5 + $0x90] sm:$0xff]
        %v5049 = vld [vmem:[%s5 + $0x98] sm:$0xff]
        %v5050 = vld [vmem:[%s5 + $0xa0] sm:$0xff]
        %v5051 = vld [vmem:[%s5 + $0xa8] sm:$0xff]
        %v5052 = vld [vmem:[%s5 + $0xb0] sm:$0xff]
        %v5053 = vld [vmem:[%s5 + $0xb8] sm:$0xff]
        %v5054 = vld [vmem:[%s5 + $0xc0] sm:$0xff]
        %v5055 = vld [vmem:[%s5 + $0xc8] sm:$0xff]
        %v5056 = vld [vmem:[%s5 + $0xd0] sm:$0xff]
        %v5057 = vld [vmem:[%s5 + $0xd8] sm:$0xff]
        %v5058 = vld [vmem:[%s5 + $0xe0] sm:$0xff]
        %v5059 = vld [vmem:[%s5 + $0xe8] sm:$0xff]
        %v5060 = vld [vmem:[%s5 + $0xf0] sm:$0xff]
        %v5061 = vld [vmem:[%s5 + $0xf8] sm:$0xff]
        %v5062 = vld [vmem:[%s5 + $0x100] sm:$0xff]
        %v5063 = vld [vmem:[%s5 + $0x108] sm:$0xff]
        %v5064 = vld [vmem:[%s5 + $0x110] sm:$0xff]
        %v5065 = vld [vmem:[%s5 + $0x118] sm:$0xff]
        %v5066 = vld [vmem:[%s5 + $0x120] sm:$0xff]
        %v5067 = vld [vmem:[%s5 + $0x128] sm:$0xff]
        %v5068 = vld [vmem:[%s5 + $0x130] sm:$0xff]
        %v5069 = vld [vmem:[%s5 + $0x138] sm:$0xff]
        %v5070 = vld [vmem:[%s5 + $0x140] sm:$0xff]
        %v5071 = vld [vmem:[%s5 + $0x148] sm:$0xff]
        %v5072 = vld [vmem:[%s5 + $0x150] sm:$0xff]
        %v5073 = vld [vmem:[%s5 + $0x158] sm:$0xff]
        %v5074 = vld [vmem:[%s5 + $0x160] sm:$0xff]
        %v5075 = vld [vmem:[%s5 + $0x168] sm:$0xff]
        %v5076 = vld [vmem:[%s5 + $0x170] sm:$0xff]
        %v5077 = vld [vmem:[%s5 + $0x178] sm:$0xff]
        %v5078 = vld [vmem:[%s5 + $0x180] sm:$0xff]
        %v5079 = vld [vmem:[%s5 + $0x188] sm:$0xff]
        %v5080 = vld [vmem:[%s5 + $0x190] sm:$0xff]
        %v5081 = vld [vmem:[%s5 + $0x198] sm:$0xff]
        %v5082 = vld [vmem:[%s5 + $0x1a0] sm:$0xff]
        %v5083 = vld [vmem:[%s5 + $0x1a8] sm:$0xff]
        %v5084 = vld [vmem:[%s5 + $0x1b0] sm:$0xff]
        %v5085 = vld [vmem:[%s5 + $0x1b8] sm:$0xff]
        %v5086 = vld [vmem:[%s5 + $0x1c0] sm:$0xff]
        %v5087 = vld [vmem:[%s5 + $0x1c8] sm:$0xff]
        %v5088 = vld [vmem:[%s5 + $0x1d0] sm:$0xff]
        %v5089 = vld [vmem:[%s5 + $0x1d8] sm:$0xff]
        %v5090 = vld [vmem:[%s5 + $0x1e0] sm:$0xff]
        %v5091 = vld [vmem:[%s5 + $0x1e8] sm:$0xff]
        %v5092 = vld [vmem:[%s5 + $0x1f0] sm:$0xff]
        %v5093 = vld [vmem:[%s5 + $0x1f8] sm:$0xff]
        %v5094 = vld [vmem:[%s5 + $0x200] sm:$0xff]
        %v5095 = vld [vmem:[%s5 + $0x208] sm:$0xff]
        %v5096 = vld [vmem:[%s5 + $0x210] sm:$0xff]
        %v5097 = vld [vmem:[%s5 + $0x218] sm:$0xff]
        %v5098 = vld [vmem:[%s5 + $0x220] sm:$0xff]
        %v5099 = vld [vmem:[%s5 + $0x228] sm:$0xff]
        %v5100 = vld [vmem:[%s5 + $0x230] sm:$0xff]
        %v5101 = vld [vmem:[%s5 + $0x238] sm:$0xff]
        %v5102 = vld [vmem:[%s5 + $0x240] sm:$0xff]
        %v5103 = vld [vmem:[%s5 + $0x248] sm:$0xff]
        %v5104 = vld [vmem:[%s5 + $0x250] sm:$0xff]
        %v5105 = vld [vmem:[%s5 + $0x258] sm:$0xff]
        %v5106 = vld [vmem:[%s5 + $0x260] sm:$0xff]
        %v5107 = vld [vmem:[%s5 + $0x268] sm:$0xff]
        %v5108 = vld [vmem:[%s5 + $0x270] sm:$0xff]
        %v5109 = vld [vmem:[%s5 + $0x278] sm:$0xff]
        %v5110 = vld [vmem:[%s5 + $0x280] sm:$0xff]
        %v5111 = vld [vmem:[%s5 + $0x288] sm:$0xff]
        %v5112 = vld [vmem:[%s5 + $0x290] sm:$0xff]
        %v5113 = vld [vmem:[%s5 + $0x298] sm:$0xff]
        %v5114 = vld [vmem:[%s5 + $0x2a0] sm:$0xff]
        %v5115 = vld [vmem:[%s5 + $0x2a8] sm:$0xff]
        %v5116 = vld [vmem:[%s5 + $0x2b0] sm:$0xff]
        %v5117 = vld [vmem:[%s5 + $0x2b8] sm:$0xff]
        %v5118 = vld [vmem:[%s5 + $0x2c0] sm:$0xff]
        %v5119 = vld [vmem:[%s5 + $0x2c8] sm:$0xff]
        %v5120 = vld [vmem:[%s5 + $0x2d0] sm:$0xff]
        %v5121 = vld [vmem:[%s5 + $0x2d8] sm:$0xff]
        %v5122 = vld [vmem:[%s5 + $0x2e0] sm:$0xff]
        %v5123 = vld [vmem:[%s5 + $0x2e8] sm:$0xff]
        %v5124 = vld [vmem:[%s5 + $0x2f0] sm:$0xff]
        %v5125 = vld [vmem:[%s5 + $0x2f8] sm:$0xff]
        %v5126 = vld [vmem:[%s5 + $0x300] sm:$0xff]
        %v5127 = vld [vmem:[%s5 + $0x308] sm:$0xff]
        %v5128 = vld [vmem:[%s5 + $0x310] sm:$0xff]
        %v5129 = vld [vmem:[%s5 + $0x318] sm:$0xff]
        %v5130 = vld [vmem:[%s5 + $0x320] sm:$0xff]
        %v5131 = vld [vmem:[%s5 + $0x328] sm:$0xff]
        %v5132 = vld [vmem:[%s5 + $0x330] sm:$0xff]
        %v5133 = vld [vmem:[%s5 + $0x338] sm:$0xff]
        %v5134 = vld [vmem:[%s5 + $0x340] sm:$0xff]
        %v5135 = vld [vmem:[%s5 + $0x348] sm:$0xff]
        %v5136 = vld [vmem:[%s5 + $0x350] sm:$0xff]
        %v5137 = vld [vmem:[%s5 + $0x358] sm:$0xff]
        %v5138 = vld [vmem:[%s5 + $0x360] sm:$0xff]
        %v5139 = vld [vmem:[%s5 + $0x368] sm:$0xff]
        %v5140 = vld [vmem:[%s5 + $0x370] sm:$0xff]
        %v5141 = vld [vmem:[%s5 + $0x378] sm:$0xff]
        %v5254 = vunpack.c.l.b16 %v5030
        %v5255 = vunpack.c.h.b16 %v5030
        %v5256 = vunpack.c.l.b16 %v5031
        %v5257 = vunpack.c.h.b16 %v5031
        %v5258 = vunpack.c.l.b16 %v5032
        %v5259 = vunpack.c.h.b16 %v5032
        %v5260 = vunpack.c.l.b16 %v5033
        %v5261 = vunpack.c.h.b16 %v5033
        %v5262 = vunpack.c.l.b16 %v5034
        %v5263 = vunpack.c.h.b16 %v5034
        %v5264 = vunpack.c.l.b16 %v5035
        %v5265 = vunpack.c.h.b16 %v5035
        %v5266 = vunpack.c.l.b16 %v5036
        %v5267 = vunpack.c.h.b16 %v5036
        %v5268 = vunpack.c.l.b16 %v5037
        %v5269 = vunpack.c.h.b16 %v5037
        %v5270 = vunpack.c.l.b16 %v5038
        %v5271 = vunpack.c.h.b16 %v5038
        %v5272 = vunpack.c.l.b16 %v5039
        %v5273 = vunpack.c.h.b16 %v5039
        %v5274 = vunpack.c.l.b16 %v5040
        %v5275 = vunpack.c.h.b16 %v5040
        %v5276 = vunpack.c.l.b16 %v5041
        %v5277 = vunpack.c.h.b16 %v5041
        %v5278 = vunpack.c.l.b16 %v5042
        %v5279 = vunpack.c.h.b16 %v5042
        %v5280 = vunpack.c.l.b16 %v5043
        %v5281 = vunpack.c.h.b16 %v5043
        %v5282 = vunpack.c.l.b16 %v5044
        %v5283 = vunpack.c.h.b16 %v5044
        %v5284 = vunpack.c.l.b16 %v5045
        %v5285 = vunpack.c.h.b16 %v5045
        %v5286 = vunpack.c.l.b16 %v5046
        %v5287 = vunpack.c.h.b16 %v5046
        %v5288 = vunpack.c.l.b16 %v5047
        %v5289 = vunpack.c.h.b16 %v5047
        %v5290 = vunpack.c.l.b16 %v5048
        %v5291 = vunpack.c.h.b16 %v5048
        %v5292 = vunpack.c.l.b16 %v5049
        %v5293 = vunpack.c.h.b16 %v5049
        %v5294 = vunpack.c.l.b16 %v5050
        %v5295 = vunpack.c.h.b16 %v5050
        %v5296 = vunpack.c.l.b16 %v5051
        %v5297 = vunpack.c.h.b16 %v5051
        %v5298 = vunpack.c.l.b16 %v5052
        %v5299 = vunpack.c.h.b16 %v5052
        %v5300 = vunpack.c.l.b16 %v5053
        %v5301 = vunpack.c.h.b16 %v5053
        %v5302 = vunpack.c.l.b16 %v5054
        %v5303 = vunpack.c.h.b16 %v5054
        %v5304 = vunpack.c.l.b16 %v5055
        %v5305 = vunpack.c.h.b16 %v5055
        %v5306 = vunpack.c.l.b16 %v5056
        %v5307 = vunpack.c.h.b16 %v5056
        %v5308 = vunpack.c.l.b16 %v5057
        %v5309 = vunpack.c.h.b16 %v5057
        %v5310 = vunpack.c.l.b16 %v5058
        %v5311 = vunpack.c.h.b16 %v5058
        %v5312 = vunpack.c.l.b16 %v5059
        %v5313 = vunpack.c.h.b16 %v5059
        %v5314 = vunpack.c.l.b16 %v5060
        %v5315 = vunpack.c.h.b16 %v5060
        %v5316 = vunpack.c.l.b16 %v5061
        %v5317 = vunpack.c.h.b16 %v5061
        %v5318 = vunpack.c.l.b16 %v5062
        %v5319 = vunpack.c.h.b16 %v5062
        %v5320 = vunpack.c.l.b16 %v5063
        %v5321 = vunpack.c.h.b16 %v5063
        %v5322 = vunpack.c.l.b16 %v5064
        %v5323 = vunpack.c.h.b16 %v5064
        %v5324 = vunpack.c.l.b16 %v5065
        %v5325 = vunpack.c.h.b16 %v5065
        %v5326 = vunpack.c.l.b16 %v5066
        %v5327 = vunpack.c.h.b16 %v5066
        %v5328 = vunpack.c.l.b16 %v5067
        %v5329 = vunpack.c.h.b16 %v5067
        %v5330 = vunpack.c.l.b16 %v5068
        %v5331 = vunpack.c.h.b16 %v5068
        %v5332 = vunpack.c.l.b16 %v5069
        %v5333 = vunpack.c.h.b16 %v5069
        %v5334 = vunpack.c.l.b16 %v5070
        %v5335 = vunpack.c.h.b16 %v5070
        %v5336 = vunpack.c.l.b16 %v5071
        %v5337 = vunpack.c.h.b16 %v5071
        %v5338 = vunpack.c.l.b16 %v5072
        %v5339 = vunpack.c.h.b16 %v5072
        %v5340 = vunpack.c.l.b16 %v5073
        %v5341 = vunpack.c.h.b16 %v5073
        %v5342 = vunpack.c.l.b16 %v5074
        %v5343 = vunpack.c.h.b16 %v5074
        %v5344 = vunpack.c.l.b16 %v5075
        %v5345 = vunpack.c.h.b16 %v5075
        %v5346 = vunpack.c.l.b16 %v5076
        %v5347 = vunpack.c.h.b16 %v5076
        %v5348 = vunpack.c.l.b16 %v5077
        %v5349 = vunpack.c.h.b16 %v5077
        %v5350 = vunpack.c.l.b16 %v5078
        %v5351 = vunpack.c.h.b16 %v5078
        %v5352 = vunpack.c.l.b16 %v5079
        %v5353 = vunpack.c.h.b16 %v5079
        %v5354 = vunpack.c.l.b16 %v5080
        %v5355 = vunpack.c.h.b16 %v5080
        %v5356 = vunpack.c.l.b16 %v5081
        %v5357 = vunpack.c.h.b16 %v5081
        %v5358 = vunpack.c.l.b16 %v5082
        %v5359 = vunpack.c.h.b16 %v5082
        %v5360 = vunpack.c.l.b16 %v5083
        %v5361 = vunpack.c.h.b16 %v5083
        %v5362 = vunpack.c.l.b16 %v5084
        %v5363 = vunpack.c.h.b16 %v5084
        %v5364 = vunpack.c.l.b16 %v5085
        %v5365 = vunpack.c.h.b16 %v5085
        %v5366 = vunpack.c.l.b16 %v5086
        %v5367 = vunpack.c.h.b16 %v5086
        %v5368 = vunpack.c.l.b16 %v5087
        %v5369 = vunpack.c.h.b16 %v5087
        %v5370 = vunpack.c.l.b16 %v5088
        %v5371 = vunpack.c.h.b16 %v5088
        %v5372 = vunpack.c.l.b16 %v5089
        %v5373 = vunpack.c.h.b16 %v5089
        %v5374 = vunpack.c.l.b16 %v5090
        %v5375 = vunpack.c.h.b16 %v5090
        %v5376 = vunpack.c.l.b16 %v5091
        %v5377 = vunpack.c.h.b16 %v5091
        %v5378 = vunpack.c.l.b16 %v5092
        %v5379 = vunpack.c.h.b16 %v5092
        %v5380 = vunpack.c.l.b16 %v5093
        %v5381 = vunpack.c.h.b16 %v5093
        %v5382 = vunpack.c.l.b16 %v5094
        %v5383 = vunpack.c.h.b16 %v5094
        %v5384 = vunpack.c.l.b16 %v5095
        %v5385 = vunpack.c.h.b16 %v5095
        %v5386 = vunpack.c.l.b16 %v5096
        %v5387 = vunpack.c.h.b16 %v5096
        %v5388 = vunpack.c.l.b16 %v5097
        %v5389 = vunpack.c.h.b16 %v5097
        %v5390 = vunpack.c.l.b16 %v5098
        %v5391 = vunpack.c.h.b16 %v5098
        %v5392 = vunpack.c.l.b16 %v5099
        %v5393 = vunpack.c.h.b16 %v5099
        %v5394 = vunpack.c.l.b16 %v5100
        %v5395 = vunpack.c.h.b16 %v5100
        %v5396 = vunpack.c.l.b16 %v5101
        %v5397 = vunpack.c.h.b16 %v5101
        %v5398 = vunpack.c.l.b16 %v5102
        %v5399 = vunpack.c.h.b16 %v5102
        %v5400 = vunpack.c.l.b16 %v5103
        %v5401 = vunpack.c.h.b16 %v5103
        %v5402 = vunpack.c.l.b16 %v5104
        %v5403 = vunpack.c.h.b16 %v5104
        %v5404 = vunpack.c.l.b16 %v5105
        %v5405 = vunpack.c.h.b16 %v5105
        %v5406 = vunpack.c.l.b16 %v5106
        %v5407 = vunpack.c.h.b16 %v5106
        %v5408 = vunpack.c.l.b16 %v5107
        %v5409 = vunpack.c.h.b16 %v5107
        %v5410 = vunpack.c.l.b16 %v5108
        %v5411 = vunpack.c.h.b16 %v5108
        %v5412 = vunpack.c.l.b16 %v5109
        %v5413 = vunpack.c.h.b16 %v5109
        %v5414 = vunpack.c.l.b16 %v5110
        %v5415 = vunpack.c.h.b16 %v5110
        %v5416 = vunpack.c.l.b16 %v5111
        %v5417 = vunpack.c.h.b16 %v5111
        %v5418 = vunpack.c.l.b16 %v5112
        %v5419 = vunpack.c.h.b16 %v5112
        %v5420 = vunpack.c.l.b16 %v5113
        %v5421 = vunpack.c.h.b16 %v5113
        %v5422 = vunpack.c.l.b16 %v5114
        %v5423 = vunpack.c.h.b16 %v5114
        %v5424 = vunpack.c.l.b16 %v5115
        %v5425 = vunpack.c.h.b16 %v5115
        %v5426 = vunpack.c.l.b16 %v5116
        %v5427 = vunpack.c.h.b16 %v5116
        %v5428 = vunpack.c.l.b16 %v5117
        %v5429 = vunpack.c.h.b16 %v5117
        %v5430 = vunpack.c.l.b16 %v5118
        %v5431 = vunpack.c.h.b16 %v5118
        %v5432 = vunpack.c.l.b16 %v5119
        %v5433 = vunpack.c.h.b16 %v5119
        %v5434 = vunpack.c.l.b16 %v5120
        %v5435 = vunpack.c.h.b16 %v5120
        %v5436 = vunpack.c.l.b16 %v5121
        %v5437 = vunpack.c.h.b16 %v5121
        %v5438 = vunpack.c.l.b16 %v5122
        %v5439 = vunpack.c.h.b16 %v5122
        %v5440 = vunpack.c.l.b16 %v5123
        %v5441 = vunpack.c.h.b16 %v5123
        %v5442 = vunpack.c.l.b16 %v5124
        %v5443 = vunpack.c.h.b16 %v5124
        %v5444 = vunpack.c.l.b16 %v5125
        %v5445 = vunpack.c.h.b16 %v5125
        %v5446 = vunpack.c.l.b16 %v5126
        %v5447 = vunpack.c.h.b16 %v5126
        %v5448 = vunpack.c.l.b16 %v5127
        %v5449 = vunpack.c.h.b16 %v5127
        %v5450 = vunpack.c.l.b16 %v5128
        %v5451 = vunpack.c.h.b16 %v5128
        %v5452 = vunpack.c.l.b16 %v5129
        %v5453 = vunpack.c.h.b16 %v5129
        %v5454 = vunpack.c.l.b16 %v5130
        %v5455 = vunpack.c.h.b16 %v5130
        %v5456 = vunpack.c.l.b16 %v5131
        %v5457 = vunpack.c.h.b16 %v5131
        %v5458 = vunpack.c.l.b16 %v5132
        %v5459 = vunpack.c.h.b16 %v5132
        %v5460 = vunpack.c.l.b16 %v5133
        %v5461 = vunpack.c.h.b16 %v5133
        %v5462 = vunpack.c.l.b16 %v5134
        %v5463 = vunpack.c.h.b16 %v5134
        %v5464 = vunpack.c.l.b16 %v5135
        %v5465 = vunpack.c.h.b16 %v5135
        %v5466 = vunpack.c.l.b16 %v5136
        %v5467 = vunpack.c.h.b16 %v5136
        %v5468 = vunpack.c.l.b16 %v5137
        %v5469 = vunpack.c.h.b16 %v5137
        %v5470 = vunpack.c.l.b16 %v5138
        %v5471 = vunpack.c.h.b16 %v5138
        %v5472 = vunpack.c.l.b16 %v5139
        %v5473 = vunpack.c.h.b16 %v5139
        %v5474 = vunpack.c.l.b16 %v5140
        %v5475 = vunpack.c.h.b16 %v5140
        %v5476 = vunpack.c.l.b16 %v5141
        %v5477 = vunpack.c.h.b16 %v5141
        %v5478 = vpack.c.b16 %v5256, %v5254
        %v5479 = vpack.c.b16 %v5257, %v5255
        %v5480 = vpack.c.b16 %v5260, %v5258
        %v5481 = vpack.c.b16 %v5261, %v5259
        %v5482 = vpack.c.b16 %v5264, %v5262
        %v5483 = vpack.c.b16 %v5265, %v5263
        %v5484 = vpack.c.b16 %v5268, %v5266
        %v5485 = vpack.c.b16 %v5269, %v5267
        %v5486 = vpack.c.b16 %v5272, %v5270
        %v5487 = vpack.c.b16 %v5273, %v5271
        %v5488 = vpack.c.b16 %v5276, %v5274
        %v5489 = vpack.c.b16 %v5277, %v5275
        %v5490 = vpack.c.b16 %v5280, %v5278
        %v5491 = vpack.c.b16 %v5281, %v5279
        %v5492 = vpack.c.b16 %v5284, %v5282
        %v5493 = vpack.c.b16 %v5285, %v5283
        %v5494 = vpack.c.b16 %v5288, %v5286
        %v5495 = vpack.c.b16 %v5289, %v5287
        %v5496 = vpack.c.b16 %v5292, %v5290
        %v5497 = vpack.c.b16 %v5293, %v5291
        %v5498 = vpack.c.b16 %v5296, %v5294
        %v5499 = vpack.c.b16 %v5297, %v5295
        %v5500 = vpack.c.b16 %v5300, %v5298
        %v5501 = vpack.c.b16 %v5301, %v5299
        %v5502 = vpack.c.b16 %v5304, %v5302
        %v5503 = vpack.c.b16 %v5305, %v5303
        %v5504 = vpack.c.b16 %v5308, %v5306
        %v5505 = vpack.c.b16 %v5309, %v5307
        %v5506 = vpack.c.b16 %v5312, %v5310
        %v5507 = vpack.c.b16 %v5313, %v5311
        %v5508 = vpack.c.b16 %v5316, %v5314
        %v5509 = vpack.c.b16 %v5317, %v5315
        %v5510 = vpack.c.b16 %v5320, %v5318
        %v5511 = vpack.c.b16 %v5321, %v5319
        %v5512 = vpack.c.b16 %v5324, %v5322
        %v5513 = vpack.c.b16 %v5325, %v5323
        %v5514 = vpack.c.b16 %v5328, %v5326
        %v5515 = vpack.c.b16 %v5329, %v5327
        %v5516 = vpack.c.b16 %v5332, %v5330
        %v5517 = vpack.c.b16 %v5333, %v5331
        %v5518 = vpack.c.b16 %v5336, %v5334
        %v5519 = vpack.c.b16 %v5337, %v5335
        %v5520 = vpack.c.b16 %v5340, %v5338
        %v5521 = vpack.c.b16 %v5341, %v5339
        %v5522 = vpack.c.b16 %v5344, %v5342
        %v5523 = vpack.c.b16 %v5345, %v5343
        %v5524 = vpack.c.b16 %v5348, %v5346
        %v5525 = vpack.c.b16 %v5349, %v5347
        %v5526 = vpack.c.b16 %v5352, %v5350
        %v5527 = vpack.c.b16 %v5353, %v5351
        %v5528 = vpack.c.b16 %v5356, %v5354
        %v5529 = vpack.c.b16 %v5357, %v5355
        %v5530 = vpack.c.b16 %v5360, %v5358
        %v5531 = vpack.c.b16 %v5361, %v5359
        %v5532 = vpack.c.b16 %v5364, %v5362
        %v5533 = vpack.c.b16 %v5365, %v5363
        %v5534 = vpack.c.b16 %v5368, %v5366
        %v5535 = vpack.c.b16 %v5369, %v5367
        %v5536 = vpack.c.b16 %v5372, %v5370
        %v5537 = vpack.c.b16 %v5373, %v5371
        %v5538 = vpack.c.b16 %v5376, %v5374
        %v5539 = vpack.c.b16 %v5377, %v5375
        %v5540 = vpack.c.b16 %v5380, %v5378
        %v5541 = vpack.c.b16 %v5381, %v5379
        %v5542 = vpack.c.b16 %v5384, %v5382
        %v5543 = vpack.c.b16 %v5385, %v5383
        %v5544 = vpack.c.b16 %v5388, %v5386
        %v5545 = vpack.c.b16 %v5389, %v5387
        %v5546 = vpack.c.b16 %v5392, %v5390
        %v5547 = vpack.c.b16 %v5393, %v5391
        %v5548 = vpack.c.b16 %v5396, %v5394
        %v5549 = vpack.c.b16 %v5397, %v5395
        %v5550 = vpack.c.b16 %v5400, %v5398
        %v5551 = vpack.c.b16 %v5401, %v5399
        %v5552 = vpack.c.b16 %v5404, %v5402
        %v5553 = vpack.c.b16 %v5405, %v5403
        %v5554 = vpack.c.b16 %v5408, %v5406
        %v5555 = vpack.c.b16 %v5409, %v5407
        %v5556 = vpack.c.b16 %v5412, %v5410
        %v5557 = vpack.c.b16 %v5413, %v5411
        %v5558 = vpack.c.b16 %v5416, %v5414
        %v5559 = vpack.c.b16 %v5417, %v5415
        %v5560 = vpack.c.b16 %v5420, %v5418
        %v5561 = vpack.c.b16 %v5421, %v5419
        %v5562 = vpack.c.b16 %v5424, %v5422
        %v5563 = vpack.c.b16 %v5425, %v5423
        %v5564 = vpack.c.b16 %v5428, %v5426
        %v5565 = vpack.c.b16 %v5429, %v5427
        %v5566 = vpack.c.b16 %v5432, %v5430
        %v5567 = vpack.c.b16 %v5433, %v5431
        %v5568 = vpack.c.b16 %v5436, %v5434
        %v5569 = vpack.c.b16 %v5437, %v5435
        %v5570 = vpack.c.b16 %v5440, %v5438
        %v5571 = vpack.c.b16 %v5441, %v5439
        %v5572 = vpack.c.b16 %v5444, %v5442
        %v5573 = vpack.c.b16 %v5445, %v5443
        %v5574 = vpack.c.b16 %v5448, %v5446
        %v5575 = vpack.c.b16 %v5449, %v5447
        %v5576 = vpack.c.b16 %v5452, %v5450
        %v5577 = vpack.c.b16 %v5453, %v5451
        %v5578 = vpack.c.b16 %v5456, %v5454
        %v5579 = vpack.c.b16 %v5457, %v5455
        %v5580 = vpack.c.b16 %v5460, %v5458
        %v5581 = vpack.c.b16 %v5461, %v5459
        %v5582 = vpack.c.b16 %v5464, %v5462
        %v5583 = vpack.c.b16 %v5465, %v5463
        %v5584 = vpack.c.b16 %v5468, %v5466
        %v5585 = vpack.c.b16 %v5469, %v5467
        %v5586 = vpack.c.b16 %v5472, %v5470
        %v5587 = vpack.c.b16 %v5473, %v5471
        %v5588 = vpack.c.b16 %v5476, %v5474
        %v5589 = vpack.c.b16 %v5477, %v5475
        %5702 = vmatprep.subr.bf16.mxu0 %v5479
        %5703 = vmatpush1.bf16.msra.mxu0 %v5478
        %5704 = vmatprep.subr.bf16.mxu0 %v5481
        %5705 = vmatpush1.bf16.msra.mxu0 %v5480
        %5706 = vmatprep.subr.bf16.mxu0 %v5483
        %5707 = vmatpush1.bf16.msra.mxu0 %v5482
        %5708 = vmatprep.subr.bf16.mxu0 %v5485
        %5709 = vmatpush1.bf16.msra.mxu0 %v5484
        %5710 = vmatprep.subr.bf16.mxu0 %v5487
        %5711 = vmatpush1.bf16.msra.mxu0 %v5486
        %5712 = vmatprep.subr.bf16.mxu0 %v5489
        %5713 = vmatpush1.bf16.msra.mxu0 %v5488
        %5714 = vmatprep.subr.bf16.mxu0 %v5491
        %5715 = vmatpush1.bf16.msra.mxu0 %v5490
        %5716 = vmatprep.subr.bf16.mxu0 %v5493
        %5717 = vmatpush1.bf16.msra.mxu0 %v5492
        %5718 = vmatprep.subr.bf16.mxu0 %v5495
        %5719 = vmatpush1.bf16.msra.mxu0 %v5494
        %5720 = vmatprep.subr.bf16.mxu0 %v5497
        %5721 = vmatpush1.bf16.msra.mxu0 %v5496
        %5722 = vmatprep.subr.bf16.mxu0 %v5499
        %5723 = vmatpush1.bf16.msra.mxu0 %v5498
        %5724 = vmatprep.subr.bf16.mxu0 %v5501
        %5725 = vmatpush1.bf16.msra.mxu0 %v5500
        %5726 = vmatprep.subr.bf16.mxu0 %v5503
        %5727 = vmatpush1.bf16.msra.mxu0 %v5502
        %5728 = vmatprep.subr.bf16.mxu0 %v5505
        %5729 = vmatpush1.bf16.msra.mxu0 %v5504
        %5730 = vmatprep.subr.bf16.mxu0 %v5507
        %5731 = vmatpush1.bf16.msra.mxu0 %v5506
        %5732 = vmatprep.subr.bf16.mxu0 %v5509
        %5733 = vmatpush1.bf16.msra.mxu0 %v5508
        %5734 = vmatprep.mubr.bf16.mxu0 %v5003
        %5735 = vmatmul.mubr.bf16.gmra.mrb[0].mxu0 %v5002
        %v5736 = vpop.f32.mrb[0].mxu0
        %v5737 = vadd.f32 0.0, %v5736
        %v5738 = vpop.f32.mrb[0].mxu0
        %v5739 = vadd.f32 0.0, %v5738
        %v5740 = vpop.f32.mrb[0].mxu0
        %v5741 = vadd.f32 0.0, %v5740
        %v5742 = vpop.f32.mrb[0].mxu0
        %v5743 = vadd.f32 0.0, %v5742
        %5744 = vmatprep.mubr.bf16.mxu0 %v5010
        %5745 = vmatmul.mubr.bf16.gmra.mrb[0].mxu0 %v5009
        %v5746 = vpop.f32.mrb[0].mxu0
        %v5747 = vadd.f32 0.0, %v5746
        %v5748 = vpop.f32.mrb[0].mxu0
        %v5749 = vadd.f32 0.0, %v5748
        %v5750 = vpop.f32.mrb[0].mxu0
        %v5751 = vadd.f32 0.0, %v5750
        %v5752 = vpop.f32.mrb[0].mxu0
        %v5753 = vadd.f32 0.0, %v5752
        %5754 = vmatprep.mubr.bf16.mxu0 %v5017
        %5755 = vmatmul.mubr.bf16.gmra.mrb[0].mxu0 %v5016
        %v5756 = vpop.f32.mrb[0].mxu0
        %v5757 = vadd.f32 0.0, %v5756
        %v5758 = vpop.f32.mrb[0].mxu0
        %v5759 = vadd.f32 0.0, %v5758
        %v5760 = vpop.f32.mrb[0].mxu0
        %v5761 = vadd.f32 0.0, %v5760
        %v5762 = vpop.f32.mrb[0].mxu0
        %v5763 = vadd.f32 0.0, %v5762
        %5764 = vmatprep.mubr.bf16.mxu0 %v5024
        %5765 = vmatmul.mubr.bf16.gmra.mrb[0].mxu0 %v5023
        %v5766 = vpop.f32.mrb[0].mxu0
        %v5767 = vadd.f32 0.0, %v5766
        %v5768 = vpop.f32.mrb[0].mxu0
        %v5769 = vadd.f32 0.0, %v5768
        %v5770 = vpop.f32.mrb[0].mxu0
        %v5771 = vadd.f32 0.0, %v5770
        %v5772 = vpop.f32.mrb[0].mxu0
        %v5773 = vadd.f32 0.0, %v5772
        %5774 = vdwg.mxu0
        %5775 = vmatprep.subr.bf16.mxu0 %v5511
        %5776 = vmatpush1.bf16.msra.mxu0 %v5510
        %5777 = vmatprep.subr.bf16.mxu0 %v5513
        %5778 = vmatpush1.bf16.msra.mxu0 %v5512
        %5779 = vmatprep.subr.bf16.mxu0 %v5515
        %5780 = vmatpush1.bf16.msra.mxu0 %v5514
        %5781 = vmatprep.subr.bf16.mxu0 %v5517
        %5782 = vmatpush1.bf16.msra.mxu0 %v5516
        %5783 = vmatprep.subr.bf16.mxu0 %v5519
        %5784 = vmatpush1.bf16.msra.mxu0 %v5518
        %5785 = vmatprep.subr.bf16.mxu0 %v5521
        %5786 = vmatpush1.bf16.msra.mxu0 %v5520
        %5787 = vmatprep.subr.bf16.mxu0 %v5523
        %5788 = vmatpush1.bf16.msra.mxu0 %v5522
        %5789 = vmatprep.subr.bf16.mxu0 %v5525
        %5790 = vmatpush1.bf16.msra.mxu0 %v5524
        %5791 = vmatprep.subr.bf16.mxu0 %v5527
        %5792 = vmatpush1.bf16.msra.mxu0 %v5526
        %5793 = vmatprep.subr.bf16.mxu0 %v5529
        %5794 = vmatpush1.bf16.msra.mxu0 %v5528
        %5795 = vmatprep.subr.bf16.mxu0 %v5531
        %5796 = vmatpush1.bf16.msra.mxu0 %v5530
        %5797 = vmatprep.subr.bf16.mxu0 %v5533
        %5798 = vmatpush1.bf16.msra.mxu0 %v5532
        %5799 = vmatprep.subr.bf16.mxu0 %v5535
        %5800 = vmatpush1.bf16.msra.mxu0 %v5534
        %5801 = vmatprep.subr.bf16.mxu0 %v5537
        %5802 = vmatpush1.bf16.msra.mxu0 %v5536
        %5803 = vmatprep.subr.bf16.mxu0 %v5539
        %5804 = vmatpush1.bf16.msra.mxu0 %v5538
        %5805 = vmatprep.subr.bf16.mxu0 %v5541
        %5806 = vmatpush1.bf16.msra.mxu0 %v5540
        %5807 = vmatprep.mubr.bf16.mxu0 %v5005
        %5808 = vmatmul.mubr.bf16.gmra.mrb[0].mxu0 %v5004
        %v5809 = vpop.f32.mrb[0].mxu0
        %v5810 = vadd.f32 %v5737, %v5809
        %v5811 = vpop.f32.mrb[0].mxu0
        %v5812 = vadd.f32 %v5739, %v5811
        %v5813 = vpop.f32.mrb[0].mxu0
        %v5814 = vadd.f32 %v5741, %v5813
        %v5815 = vpop.f32.mrb[0].mxu0
        %v5816 = vadd.f32 %v5743, %v5815
        %5817 = vmatprep.mubr.bf16.mxu0 %v5012
        %5818 = vmatmul.mubr.bf16.gmra.mrb[0].mxu0 %v5011
        %v5819 = vpop.f32.mrb[0].mxu0
        %v5820 = vadd.f32 %v5747, %v5819
        %v5821 = vpop.f32.mrb[0].mxu0
        %v5822 = vadd.f32 %v5749, %v5821
        %v5823 = vpop.f32.mrb[0].mxu0
        %v5824 = vadd.f32 %v5751, %v5823
        %v5825 = vpop.f32.mrb[0].mxu0
        %v5826 = vadd.f32 %v5753, %v5825
        %5827 = vmatprep.mubr.bf16.mxu0 %v5019
        %5828 = vmatmul.mubr.bf16.gmra.mrb[0].mxu0 %v5018
        %v5829 = vpop.f32.mrb[0].mxu0
        %v5830 = vadd.f32 %v5757, %v5829
        %v5831 = vpop.f32.mrb[0].mxu0
        %v5832 = vadd.f32 %v5759, %v5831
        %v5833 = vpop.f32.mrb[0].mxu0
        %v5834 = vadd.f32 %v5761, %v5833
        %v5835 = vpop.f32.mrb[0].mxu0
        %v5836 = vadd.f32 %v5763, %v5835
        %5837 = vmatprep.mubr.bf16.mxu0 %v5026
        %5838 = vmatmul.mubr.bf16.gmra.mrb[0].mxu0 %v5025
        %v5839 = vpop.f32.mrb[0].mxu0
        %v5840 = vadd.f32 %v5767, %v5839
        %v5841 = vpop.f32.mrb[0].mxu0
        %v5842 = vadd.f32 %v5769, %v5841
        %v5843 = vpop.f32.mrb[0].mxu0
        %v5844 = vadd.f32 %v5771, %v5843
        %v5845 = vpop.f32.mrb[0].mxu0
        %v5846 = vadd.f32 %v5773, %v5845
        %5847 = vdwg.mxu0
        %5848 = vmatprep.subr.bf16.mxu0 %v5543
        %5849 = vmatpush1.bf16.msra.mxu0 %v5542
        %5850 = vmatprep.subr.bf16.mxu0 %v5545
        %5851 = vmatpush1.bf16.msra.mxu0 %v5544
        %5852 = vmatprep.subr.bf16.mxu0 %v5547
        %5853 = vmatpush1.bf16.msra.mxu0 %v5546
        %5854 = vmatprep.subr.bf16.mxu0 %v5549
        %5855 = vmatpush1.bf16.msra.mxu0 %v5548
        %5856 = vmatprep.subr.bf16.mxu0 %v5551
        %5857 = vmatpush1.bf16.msra.mxu0 %v5550
        %5858 = vmatprep.subr.bf16.mxu0 %v5553
        %5859 = vmatpush1.bf16.msra.mxu0 %v5552
        %5860 = vmatprep.subr.bf16.mxu0 %v5555
        %5861 = vmatpush1.bf16.msra.mxu0 %v5554
        %5862 = vmatprep.subr.bf16.mxu0 %v5557
        %5863 = vmatpush1.bf16.msra.mxu0 %v5556
        %5864 = vmatprep.subr.bf16.mxu0 %v5559
        %5865 = vmatpush1.bf16.msra.mxu0 %v5558
        %5866 = vmatprep.subr.bf16.mxu0 %v5561
        %5867 = vmatpush1.bf16.msra.mxu0 %v5560
        %5868 = vmatprep.subr.bf16.mxu0 %v5563
        %5869 = vmatpush1.bf16.msra.mxu0 %v5562
        %5870 = vmatprep.subr.bf16.mxu0 %v5565
        %5871 = vmatpush1.bf16.msra.mxu0 %v5564
        %5872 = vmatprep.subr.bf16.mxu0 %v5567
        %5873 = vmatpush1.bf16.msra.mxu0 %v5566
        %5874 = vmatprep.subr.bf16.mxu0 %v5569
        %5875 = vmatpush1.bf16.msra.mxu0 %v5568
        %5876 = vmatprep.subr.bf16.mxu0 %v5571
        %5877 = vmatpush1.bf16.msra.mxu0 %v5570
        %5878 = vmatprep.subr.bf16.mxu0 %v5573
        %5879 = vmatpush1.bf16.msra.mxu0 %v5572
        %5880 = vmatprep.mubr.bf16.mxu0 %v5007
        %5881 = vmatmul.mubr.bf16.gmra.mrb[0].mxu0 %v5006
        %v5882 = vpop.f32.mrb[0].mxu0
        %v5883 = vadd.f32 %v5810, %v5882
        %v5884 = vpop.f32.mrb[0].mxu0
        %v5885 = vadd.f32 %v5812, %v5884
        %v5886 = vpop.f32.mrb[0].mxu0
        %v5887 = vadd.f32 %v5814, %v5886
        %v5888 = vpop.f32.mrb[0].mxu0
        %v5889 = vadd.f32 %v5816, %v5888
        %5890 = vmatprep.mubr.bf16.mxu0 %v5014
        %5891 = vmatmul.mubr.bf16.gmra.mrb[0].mxu0 %v5013
        %v5892 = vpop.f32.mrb[0].mxu0
        %v5893 = vadd.f32 %v5820, %v5892
        %v5894 = vpop.f32.mrb[0].mxu0
        %v5895 = vadd.f32 %v5822, %v5894
        %v5896 = vpop.f32.mrb[0].mxu0
        %v5897 = vadd.f32 %v5824, %v5896
        %v5898 = vpop.f32.mrb[0].mxu0
        %v5899 = vadd.f32 %v5826, %v5898
        %5900 = vmatprep.mubr.bf16.mxu0 %v5021
        %5901 = vmatmul.mubr.bf16.gmra.mrb[0].mxu0 %v5020
        %v5902 = vpop.f32.mrb[0].mxu0
        %v5903 = vadd.f32 %v5830, %v5902
        %v5904 = vpop.f32.mrb[0].mxu0
        %v5905 = vadd.f32 %v5832, %v5904
        %v5906 = vpop.f32.mrb[0].mxu0
        %v5907 = vadd.f32 %v5834, %v5906
        %v5908 = vpop.f32.mrb[0].mxu0
        %v5909 = vadd.f32 %v5836, %v5908
        %5910 = vmatprep.mubr.bf16.mxu0 %v5028
        %5911 = vmatmul.mubr.bf16.gmra.mrb[0].mxu0 %v5027
        %v5912 = vpop.f32.mrb[0].mxu0
        %v5913 = vadd.f32 %v5840, %v5912
        %v5914 = vpop.f32.mrb[0].mxu0
        %v5915 = vadd.f32 %v5842, %v5914
        %v5916 = vpop.f32.mrb[0].mxu0
        %v5917 = vadd.f32 %v5844, %v5916
        %v5918 = vpop.f32.mrb[0].mxu0
        %v5919 = vadd.f32 %v5846, %v5918
        %5920 = vdwg.mxu0
        %5921 = vmatprep.subr.bf16.mxu0 %v5575
        %5922 = vmatpush1.bf16.msra.mxu0 %v5574
        %5923 = vmatprep.subr.bf16.mxu0 %v5577
        %5924 = vmatpush1.bf16.msra.mxu0 %v5576
        %5925 = vmatprep.subr.bf16.mxu0 %v5579
        %5926 = vmatpush1.bf16.msra.mxu0 %v5578
        %5927 = vmatprep.subr.bf16.mxu0 %v5581
        %5928 = vmatpush1.bf16.msra.mxu0 %v5580
        %5929 = vmatprep.subr.bf16.mxu0 %v5583
        %5930 = vmatpush1.bf16.msra.mxu0 %v5582
        %5931 = vmatprep.subr.bf16.mxu0 %v5585
        %5932 = vmatpush1.bf16.msra.mxu0 %v5584
        %5933 = vmatprep.subr.bf16.mxu0 %v5587
        %5934 = vmatpush1.bf16.msra.mxu0 %v5586
        %5935 = vmatprep.subr.bf16.mxu0 %v5589
        %5936 = vmatpush1.bf16.msra.mxu0 %v5588
        %5937 = vmatprep.subr.bf16.mxu0 0
        %5938 = vmatpush1.bf16.msra.mxu0 0
        %5939 = vmatprep.subr.bf16.mxu0 0
        %5940 = vmatpush1.bf16.msra.mxu0 0
        %5941 = vmatprep.subr.bf16.mxu0 0
        %5942 = vmatpush1.bf16.msra.mxu0 0
        %5943 = vmatprep.subr.bf16.mxu0 0
        %5944 = vmatpush1.bf16.msra.mxu0 0
        %5945 = vmatprep.subr.bf16.mxu0 0
        %5946 = vmatpush1.bf16.msra.mxu0 0
        %5947 = vmatprep.subr.bf16.mxu0 0
        %5948 = vmatpush1.bf16.msra.mxu0 0
        %5949 = vmatprep.subr.bf16.mxu0 0
        %5950 = vmatpush1.bf16.msra.mxu0 0
        %5951 = vmatprep.subr.bf16.mxu0 0
        %5952 = vmatpush1.bf16.msra.mxu0 0
        %5953 = vmatprep.mubr.bf16.mxu0 0
        %5954 = vmatmul.mubr.bf16.gmra.mrb[0].mxu0 %v5008
        %v5955 = vpop.f32.mrb[0].mxu0
        %v5956 = vadd.f32 %v5883, %v5955
        %v5957 = vpop.f32.mrb[0].mxu0
        %v5958 = vadd.f32 %v5885, %v5957
        %v5959 = vpop.f32.mrb[0].mxu0
        %v5960 = vadd.f32 %v5887, %v5959
        %v5961 = vpop.f32.mrb[0].mxu0
        %v5962 = vadd.f32 %v5889, %v5961
        %5963 = vmatprep.mubr.bf16.mxu0 0
        %5964 = vmatmul.mubr.bf16.gmra.mrb[0].mxu0 %v5015
        %v5965 = vpop.f32.mrb[0].mxu0
        %v5966 = vadd.f32 %v5893, %v5965
        %v5967 = vpop.f32.mrb[0].mxu0
        %v5968 = vadd.f32 %v5895, %v5967
        %v5969 = vpop.f32.mrb[0].mxu0
        %v5970 = vadd.f32 %v5897, %v5969
        %v5971 = vpop.f32.mrb[0].mxu0
        %v5972 = vadd.f32 %v5899, %v5971
        %5973 = vmatprep.mubr.bf16.mxu0 0
        %5974 = vmatmul.mubr.bf16.gmra.mrb[0].mxu0 %v5022
        %v5975 = vpop.f32.mrb[0].mxu0
        %v5976 = vadd.f32 %v5903, %v5975
        %v5977 = vpop.f32.mrb[0].mxu0
        %v5978 = vadd.f32 %v5905, %v5977
        %v5979 = vpop.f32.mrb[0].mxu0
        %v5980 = vadd.f32 %v5907, %v5979
        %v5981 = vpop.f32.mrb[0].mxu0
        %v5982 = vadd.f32 %v5909, %v5981
        %5983 = vmatprep.mubr.bf16.mxu0 0
        %5984 = vmatmul.mubr.bf16.gmra.mrb[0].mxu0 %v5029
        %v5985 = vpop.f32.mrb[0].mxu0
        %v5986 = vadd.f32 %v5913, %v5985
        %v5987 = vpop.f32.mrb[0].mxu0
        %v5988 = vadd.f32 %v5915, %v5987
        %v5989 = vpop.f32.mrb[0].mxu0
        %v5990 = vadd.f32 %v5917, %v5989
        %v5991 = vpop.f32.mrb[0].mxu0
        %v5992 = vadd.f32 %v5919, %v5991
        %5993 = vdwg.mxu0
        %v5996 = vcombine.low %v5956, %v5958
        %v5998 = vunpack.c.l.s4 1966171168
        %v5999 = vunpack.c.0.s8 %v5998
        %v6000 = vlaneseq
        %v6001 = vshrl.u32 %v6000, 7
        %v6002 = vsub.s32 %v5999, %v6001
        %v6003 = vrot.slane %v5996, %v6002
        %v6005 = vunpack.c.l.s4 1966171168
        %v6006 = vunpack.c.0.s8 %v6005
        %v6007 = vlaneseq
        %v6008 = vshrl.u32 %v6007, 7
        %v6009 = vsub.s32 %v6006, %v6008
        %v6010 = vrot.slane %v6003, %v6009
        %vm6012 = vcmp.lt.s32.totalorder %v388, 144
        %vm6013 = vmand %vm389, %vm6012
        %6014 = vst.msk [vmem:[#allocation5] sm:$0x3] %vm6013, %v6010
        %v6015 = vcombine.high %v6003, %v6003
        %v6017 = vunpack.c.l.s4 1966171168
        %v6018 = vunpack.c.0.s8 %v6017
        %v6019 = vlaneseq
        %v6020 = vshrl.u32 %v6019, 7
        %v6021 = vsub.s32 %v6018, %v6020
        %v6022 = vrot.slane %v6015, %v6021
        %6023 = vrot.lane.b32.xlu0 %v6022, 16
        %v6024 = vpop.permute.xlu0 %6023
        %v6025 = vrot.slane %v6024, 7
        %vm6026 = vcmask 130048
        %v6027 = vsel %vm6026, %v6025, %v6024
        %vm6029 = vcmp.ge.s32.totalorder %v388, 16
        %vm6030 = vcmp.lt.s32.totalorder %v388, 160
        %vm6031 = vmand %vm6029, %vm6030
        %6032 = vst.msk [vmem:[#allocation5 + $0x1] sm:$0x3] %vm6031, %v6027
        %v6033 = vcombine.high %v6010, %v6010
        %6034 = vrot.lane.b32.xlu0 %v6033, 32
        %v6035 = vpop.permute.xlu0 %6034
        %v6036 = vrot.slane %v6035, 7
        %v6037 = vsel %vm3501, %v6036, %v6035
        %vm6039 = vcmp.lt.s32.totalorder %v388, 176
        %vm6040 = vmand %vm419, %vm6039
        %6041 = vst.msk [vmem:[#allocation5 + $0x2] sm:$0x3] %vm6040, %v6037
        %v6042 = vcombine.high %v6022, %v6022
        %6043 = vrot.lane.b32.xlu0 %v6042, 48
        %v6044 = vpop.permute.xlu0 %6043
        %v6045 = vrot.slane %v6044, 7
        %vm6046 = vcmask 392192
        %v6047 = vsel %vm6046, %v6045, %v6044
        %vm6049 = vcmp.ge.s32.totalorder %v388, 48
        %vm6050 = vcmp.lt.s32.totalorder %v388, 192
        %vm6051 = vmand %vm6049, %vm6050
        %6052 = vst.msk [vmem:[#allocation5 + $0x3] sm:$0x3] %vm6051, %v6047
        %v6053 = vcombine.high %v5956, %v5958
        %v6055 = vunpack.c.l.s4 1966171168
        %v6056 = vunpack.c.0.s8 %v6055
        %v6057 = vlaneseq
        %v6058 = vshrl.u32 %v6057, 7
        %v6059 = vsub.s32 %v6056, %v6058
        %v6060 = vrot.slane %v6053, %v6059
        %v6062 = vunpack.c.l.s4 1966171168
        %v6063 = vunpack.c.0.s8 %v6062
        %v6064 = vlaneseq
        %v6065 = vshrl.u32 %v6064, 7
        %v6066 = vsub.s32 %v6063, %v6065
        %v6067 = vrot.slane %v6060, %v6066
        %6068 = vrot.lane.b32.xlu0 %v6067, 64
        %v6069 = vpop.permute.xlu0 %6068
        %v6070 = vrot.slane %v6069, 7
        %v6071 = vsel %vm2172, %v6070, %v6069
        %vm6073 = vcmp.lt.s32.totalorder %v388, 208
        %vm6074 = vmand %vm427, %vm6073
        %6075 = vst.msk [vmem:[#allocation5 + $0x4] sm:$0x3] %vm6074, %v6071
        %v6076 = vcombine.high %v6060, %v6060
        %v6078 = vunpack.c.l.s4 1966171168
        %v6079 = vunpack.c.0.s8 %v6078
        %v6080 = vlaneseq
        %v6081 = vshrl.u32 %v6080, 7
        %v6082 = vsub.s32 %v6079, %v6081
        %v6083 = vrot.slane %v6076, %v6082
        %6084 = vrot.lane.b32.xlu0 %v6083, 80
        %v6085 = vpop.permute.xlu0 %6084
        %v6086 = vrot.slane %v6085, 7
        %vm6087 = vcmask 654336
        %v6088 = vsel %vm6087, %v6086, %v6085
        %vm6090 = vcmp.ge.s32.totalorder %v388, 80
        %vm6091 = vcmp.lt.s32.totalorder %v388, 224
        %vm6092 = vmand %vm6090, %vm6091
        %6093 = vst.msk [vmem:[#allocation5 + $0x5] sm:$0x3] %vm6092, %v6088
        %v6094 = vcombine.high %v6067, %v6067
        %6095 = vrot.lane.b32.xlu0 %v6094, 96
        %v6096 = vpop.permute.xlu0 %6095
        %v6097 = vrot.slane %v6096, 7
        %v6098 = vsel %vm1458, %v6097, %v6096
        %vm6100 = vcmp.lt.s32.totalorder %v388, 240
        %vm6101 = vmand %vm435, %vm6100
        %6102 = vst.msk [vmem:[#allocation5 + $0x6] sm:$0x3] %vm6101, %v6098
        %v6103 = vcombine.high %v6083, %v6083
        %6104 = vrot.lane.b32.xlu0 %v6103, 112
        %v6105 = vpop.permute.xlu0 %6104
        %v6106 = vrot.slane %v6105, 7
        %vm6107 = vcmask 916480
        %v6108 = vsel %vm6107, %v6106, %v6105
        %vm6110 = vcmp.ge.s32.totalorder %v388, 112
        %vm6111 = vcmp.lt.s32.totalorder %v388, 256
        %vm6112 = vmand %vm6110, %vm6111
        %6113 = vst.msk [vmem:[#allocation5 + $0x7] sm:$0x3] %vm6112, %v6108
        %v6116 = vcombine.low %v5960, %v5962
        %v6118 = vunpack.c.l.s4 1966171168
        %v6119 = vunpack.c.0.s8 %v6118
        %v6120 = vlaneseq
        %v6121 = vshrl.u32 %v6120, 7
        %v6122 = vsub.s32 %v6119, %v6121
        %v6123 = vrot.slane %v6116, %v6122
        %v6125 = vunpack.c.l.s4 1966171168
        %v6126 = vunpack.c.0.s8 %v6125
        %v6127 = vlaneseq
        %v6128 = vshrl.u32 %v6127, 7
        %v6129 = vsub.s32 %v6126, %v6128
        %v6130 = vrot.slane %v6123, %v6129
        %6132 = vst.msk [vmem:[#allocation5 + $0x9] sm:$0x3] %vm6013, %v6130
        %v6133 = vcombine.high %v6123, %v6123
        %v6135 = vunpack.c.l.s4 1966171168
        %v6136 = vunpack.c.0.s8 %v6135
        %v6137 = vlaneseq
        %v6138 = vshrl.u32 %v6137, 7
        %v6139 = vsub.s32 %v6136, %v6138
        %v6140 = vrot.slane %v6133, %v6139
        %6141 = vrot.lane.b32.xlu0 %v6140, 16
        %v6142 = vpop.permute.xlu0 %6141
        %v6143 = vrot.slane %v6142, 7
        %v6144 = vsel %vm6026, %v6143, %v6142
        %6146 = vst.msk [vmem:[#allocation5 + $0xa] sm:$0x3] %vm6031, %v6144
        %v6147 = vcombine.high %v6130, %v6130
        %6148 = vrot.lane.b32.xlu0 %v6147, 32
        %v6149 = vpop.permute.xlu0 %6148
        %v6150 = vrot.slane %v6149, 7
        %v6151 = vsel %vm3501, %v6150, %v6149
        %6153 = vst.msk [vmem:[#allocation5 + $0xb] sm:$0x3] %vm6040, %v6151
        %v6154 = vcombine.high %v6140, %v6140
        %6155 = vrot.lane.b32.xlu0 %v6154, 48
        %v6156 = vpop.permute.xlu0 %6155
        %v6157 = vrot.slane %v6156, 7
        %v6158 = vsel %vm6046, %v6157, %v6156
        %6160 = vst.msk [vmem:[#allocation5 + $0xc] sm:$0x3] %vm6051, %v6158
        %v6161 = vcombine.high %v5960, %v5962
        %v6163 = vunpack.c.l.s4 1966171168
        %v6164 = vunpack.c.0.s8 %v6163
        %v6165 = vlaneseq
        %v6166 = vshrl.u32 %v6165, 7
        %v6167 = vsub.s32 %v6164, %v6166
        %v6168 = vrot.slane %v6161, %v6167
        %v6170 = vunpack.c.l.s4 1966171168
        %v6171 = vunpack.c.0.s8 %v6170
        %v6172 = vlaneseq
        %v6173 = vshrl.u32 %v6172, 7
        %v6174 = vsub.s32 %v6171, %v6173
        %v6175 = vrot.slane %v6168, %v6174
        %6176 = vrot.lane.b32.xlu0 %v6175, 64
        %v6177 = vpop.permute.xlu0 %6176
        %v6178 = vrot.slane %v6177, 7
        %v6179 = vsel %vm2172, %v6178, %v6177
        %6181 = vst.msk [vmem:[#allocation5 + $0xd] sm:$0x3] %vm6074, %v6179
        %v6182 = vcombine.high %v6168, %v6168
        %v6184 = vunpack.c.l.s4 1966171168
        %v6185 = vunpack.c.0.s8 %v6184
        %v6186 = vlaneseq
        %v6187 = vshrl.u32 %v6186, 7
        %v6188 = vsub.s32 %v6185, %v6187
        %v6189 = vrot.slane %v6182, %v6188
        %6190 = vrot.lane.b32.xlu0 %v6189, 80
        %v6191 = vpop.permute.xlu0 %6190
        %v6192 = vrot.slane %v6191, 7
        %v6193 = vsel %vm6087, %v6192, %v6191
        %6195 = vst.msk [vmem:[#allocation5 + $0xe] sm:$0x3] %vm6092, %v6193
        %v6196 = vcombine.high %v6175, %v6175
        %6197 = vrot.lane.b32.xlu0 %v6196, 96
        %v6198 = vpop.permute.xlu0 %6197
        %v6199 = vrot.slane %v6198, 7
        %v6200 = vsel %vm1458, %v6199, %v6198
        %6202 = vst.msk [vmem:[#allocation5 + $0xf] sm:$0x3] %vm6101, %v6200
        %v6203 = vcombine.high %v6189, %v6189
        %6204 = vrot.lane.b32.xlu0 %v6203, 112
        %v6205 = vpop.permute.xlu0 %6204
        %v6206 = vrot.slane %v6205, 7
        %v6207 = vsel %vm6107, %v6206, %v6205
        %6209 = vst.msk [vmem:[#allocation5 + $0x10] sm:$0x3] %vm6112, %v6207
        %v6212 = vcombine.low %v5966, %v5968
        %v6214 = vunpack.c.l.s4 1966171168
        %v6215 = vunpack.c.0.s8 %v6214
        %v6216 = vlaneseq
        %v6217 = vshrl.u32 %v6216, 7
        %v6218 = vsub.s32 %v6215, %v6217
        %v6219 = vrot.slane %v6212, %v6218
        %v6221 = vunpack.c.l.s4 1966171168
        %v6222 = vunpack.c.0.s8 %v6221
        %v6223 = vlaneseq
        %v6224 = vshrl.u32 %v6223, 7
        %v6225 = vsub.s32 %v6222, %v6224
        %v6226 = vrot.slane %v6219, %v6225
        %6228 = vst.msk [vmem:[#allocation5 + $0x12] sm:$0x3] %vm6013, %v6226
        %v6229 = vcombine.high %v6219, %v6219
        %v6231 = vunpack.c.l.s4 1966171168
        %v6232 = vunpack.c.0.s8 %v6231
        %v6233 = vlaneseq
        %v6234 = vshrl.u32 %v6233, 7
        %v6235 = vsub.s32 %v6232, %v6234
        %v6236 = vrot.slane %v6229, %v6235
        %6237 = vrot.lane.b32.xlu0 %v6236, 16
        %v6238 = vpop.permute.xlu0 %6237
        %v6239 = vrot.slane %v6238, 7
        %v6240 = vsel %vm6026, %v6239, %v6238
        %6242 = vst.msk [vmem:[#allocation5 + $0x13] sm:$0x3] %vm6031, %v6240
        %v6243 = vcombine.high %v6226, %v6226
        %6244 = vrot.lane.b32.xlu0 %v6243, 32
        %v6245 = vpop.permute.xlu0 %6244
        %v6246 = vrot.slane %v6245, 7
        %v6247 = vsel %vm3501, %v6246, %v6245
        %6249 = vst.msk [vmem:[#allocation5 + $0x14] sm:$0x3] %vm6040, %v6247
        %v6250 = vcombine.high %v6236, %v6236
        %6251 = vrot.lane.b32.xlu0 %v6250, 48
        %v6252 = vpop.permute.xlu0 %6251
        %v6253 = vrot.slane %v6252, 7
        %v6254 = vsel %vm6046, %v6253, %v6252
        %6256 = vst.msk [vmem:[#allocation5 + $0x15] sm:$0x3] %vm6051, %v6254
        %v6257 = vcombine.high %v5966, %v5968
        %v6259 = vunpack.c.l.s4 1966171168
        %v6260 = vunpack.c.0.s8 %v6259
        %v6261 = vlaneseq
        %v6262 = vshrl.u32 %v6261, 7
        %v6263 = vsub.s32 %v6260, %v6262
        %v6264 = vrot.slane %v6257, %v6263
        %v6266 = vunpack.c.l.s4 1966171168
        %v6267 = vunpack.c.0.s8 %v6266
        %v6268 = vlaneseq
        %v6269 = vshrl.u32 %v6268, 7
        %v6270 = vsub.s32 %v6267, %v6269
        %v6271 = vrot.slane %v6264, %v6270
        %6272 = vrot.lane.b32.xlu0 %v6271, 64
        %v6273 = vpop.permute.xlu0 %6272
        %v6274 = vrot.slane %v6273, 7
        %v6275 = vsel %vm2172, %v6274, %v6273
        %6277 = vst.msk [vmem:[#allocation5 + $0x16] sm:$0x3] %vm6074, %v6275
        %v6278 = vcombine.high %v6264, %v6264
        %v6280 = vunpack.c.l.s4 1966171168
        %v6281 = vunpack.c.0.s8 %v6280
        %v6282 = vlaneseq
        %v6283 = vshrl.u32 %v6282, 7
        %v6284 = vsub.s32 %v6281, %v6283
        %v6285 = vrot.slane %v6278, %v6284
        %6286 = vrot.lane.b32.xlu0 %v6285, 80
        %v6287 = vpop.permute.xlu0 %6286
        %v6288 = vrot.slane %v6287, 7
        %v6289 = vsel %vm6087, %v6288, %v6287
        %6291 = vst.msk [vmem:[#allocation5 + $0x17] sm:$0x3] %vm6092, %v6289
        %v6292 = vcombine.high %v6271, %v6271
        %6293 = vrot.lane.b32.xlu0 %v6292, 96
        %v6294 = vpop.permute.xlu0 %6293
        %v6295 = vrot.slane %v6294, 7
        %v6296 = vsel %vm1458, %v6295, %v6294
        %6298 = vst.msk [vmem:[#allocation5 + $0x18] sm:$0x3] %vm6101, %v6296
        %v6299 = vcombine.high %v6285, %v6285
        %6300 = vrot.lane.b32.xlu0 %v6299, 112
        %v6301 = vpop.permute.xlu0 %6300
        %v6302 = vrot.slane %v6301, 7
        %v6303 = vsel %vm6107, %v6302, %v6301
        %6305 = vst.msk [vmem:[#allocation5 + $0x19] sm:$0x3] %vm6112, %v6303
        %v6308 = vcombine.low %v5970, %v5972
        %v6310 = vunpack.c.l.s4 1966171168
        %v6311 = vunpack.c.0.s8 %v6310
        %v6312 = vlaneseq
        %v6313 = vshrl.u32 %v6312, 7
        %v6314 = vsub.s32 %v6311, %v6313
        %v6315 = vrot.slane %v6308, %v6314
        %v6317 = vunpack.c.l.s4 1966171168
        %v6318 = vunpack.c.0.s8 %v6317
        %v6319 = vlaneseq
        %v6320 = vshrl.u32 %v6319, 7
        %v6321 = vsub.s32 %v6318, %v6320
        %v6322 = vrot.slane %v6315, %v6321
        %6324 = vst.msk [vmem:[#allocation5 + $0x1b] sm:$0x3] %vm6013, %v6322
        %v6325 = vcombine.high %v6315, %v6315
        %v6327 = vunpack.c.l.s4 1966171168
        %v6328 = vunpack.c.0.s8 %v6327
        %v6329 = vlaneseq
        %v6330 = vshrl.u32 %v6329, 7
        %v6331 = vsub.s32 %v6328, %v6330
        %v6332 = vrot.slane %v6325, %v6331
        %6333 = vrot.lane.b32.xlu0 %v6332, 16
        %v6334 = vpop.permute.xlu0 %6333
        %v6335 = vrot.slane %v6334, 7
        %v6336 = vsel %vm6026, %v6335, %v6334
        %6338 = vst.msk [vmem:[#allocation5 + $0x1c] sm:$0x3] %vm6031, %v6336
        %v6339 = vcombine.high %v6322, %v6322
        %6340 = vrot.lane.b32.xlu0 %v6339, 32
        %v6341 = vpop.permute.xlu0 %6340
        %v6342 = vrot.slane %v6341, 7
        %v6343 = vsel %vm3501, %v6342, %v6341
        %6345 = vst.msk [vmem:[#allocation5 + $0x1d] sm:$0x3] %vm6040, %v6343
        %v6346 = vcombine.high %v6332, %v6332
        %6347 = vrot.lane.b32.xlu0 %v6346, 48
        %v6348 = vpop.permute.xlu0 %6347
        %v6349 = vrot.slane %v6348, 7
        %v6350 = vsel %vm6046, %v6349, %v6348
        %6352 = vst.msk [vmem:[#allocation5 + $0x1e] sm:$0x3] %vm6051, %v6350
        %v6353 = vcombine.high %v5970, %v5972
        %v6355 = vunpack.c.l.s4 1966171168
        %v6356 = vunpack.c.0.s8 %v6355
        %v6357 = vlaneseq
        %v6358 = vshrl.u32 %v6357, 7
        %v6359 = vsub.s32 %v6356, %v6358
        %v6360 = vrot.slane %v6353, %v6359
        %v6362 = vunpack.c.l.s4 1966171168
        %v6363 = vunpack.c.0.s8 %v6362
        %v6364 = vlaneseq
        %v6365 = vshrl.u32 %v6364, 7
        %v6366 = vsub.s32 %v6363, %v6365
        %v6367 = vrot.slane %v6360, %v6366
        %6368 = vrot.lane.b32.xlu0 %v6367, 64
        %v6369 = vpop.permute.xlu0 %6368
        %v6370 = vrot.slane %v6369, 7
        %v6371 = vsel %vm2172, %v6370, %v6369
        %6373 = vst.msk [vmem:[#allocation5 + $0x1f] sm:$0x3] %vm6074, %v6371
        %v6374 = vcombine.high %v6360, %v6360
        %v6376 = vunpack.c.l.s4 1966171168
        %v6377 = vunpack.c.0.s8 %v6376
        %v6378 = vlaneseq
        %v6379 = vshrl.u32 %v6378, 7
        %v6380 = vsub.s32 %v6377, %v6379
        %v6381 = vrot.slane %v6374, %v6380
        %6382 = vrot.lane.b32.xlu0 %v6381, 80
        %v6383 = vpop.permute.xlu0 %6382
        %v6384 = vrot.slane %v6383, 7
        %v6385 = vsel %vm6087, %v6384, %v6383
        %6387 = vst.msk [vmem:[#allocation5 + $0x20] sm:$0x3] %vm6092, %v6385
        %v6388 = vcombine.high %v6367, %v6367
        %6389 = vrot.lane.b32.xlu0 %v6388, 96
        %v6390 = vpop.permute.xlu0 %6389
        %v6391 = vrot.slane %v6390, 7
        %v6392 = vsel %vm1458, %v6391, %v6390
        %6394 = vst.msk [vmem:[#allocation5 + $0x21] sm:$0x3] %vm6101, %v6392
        %v6395 = vcombine.high %v6381, %v6381
        %6396 = vrot.lane.b32.xlu0 %v6395, 112
        %v6397 = vpop.permute.xlu0 %6396
        %v6398 = vrot.slane %v6397, 7
        %v6399 = vsel %vm6107, %v6398, %v6397
        %6401 = vst.msk [vmem:[#allocation5 + $0x22] sm:$0x3] %vm6112, %v6399
        %v6404 = vcombine.low %v5976, %v5978
        %v6406 = vunpack.c.l.s4 1966171168
        %v6407 = vunpack.c.0.s8 %v6406
        %v6408 = vlaneseq
        %v6409 = vshrl.u32 %v6408, 7
        %v6410 = vsub.s32 %v6407, %v6409
        %v6411 = vrot.slane %v6404, %v6410
        %v6413 = vunpack.c.l.s4 1966171168
        %v6414 = vunpack.c.0.s8 %v6413
        %v6415 = vlaneseq
        %v6416 = vshrl.u32 %v6415, 7
        %v6417 = vsub.s32 %v6414, %v6416
        %v6418 = vrot.slane %v6411, %v6417
        %6420 = vst.msk [vmem:[#allocation5 + $0x24] sm:$0x3] %vm6013, %v6418
        %v6421 = vcombine.high %v6411, %v6411
        %v6423 = vunpack.c.l.s4 1966171168
        %v6424 = vunpack.c.0.s8 %v6423
        %v6425 = vlaneseq
        %v6426 = vshrl.u32 %v6425, 7
        %v6427 = vsub.s32 %v6424, %v6426
        %v6428 = vrot.slane %v6421, %v6427
        %6429 = vrot.lane.b32.xlu0 %v6428, 16
        %v6430 = vpop.permute.xlu0 %6429
        %v6431 = vrot.slane %v6430, 7
        %v6432 = vsel %vm6026, %v6431, %v6430
        %6434 = vst.msk [vmem:[#allocation5 + $0x25] sm:$0x3] %vm6031, %v6432
        %v6435 = vcombine.high %v6418, %v6418
        %6436 = vrot.lane.b32.xlu0 %v6435, 32
        %v6437 = vpop.permute.xlu0 %6436
        %v6438 = vrot.slane %v6437, 7
        %v6439 = vsel %vm3501, %v6438, %v6437
        %6441 = vst.msk [vmem:[#allocation5 + $0x26] sm:$0x3] %vm6040, %v6439
        %v6442 = vcombine.high %v6428, %v6428
        %6443 = vrot.lane.b32.xlu0 %v6442, 48
        %v6444 = vpop.permute.xlu0 %6443
        %v6445 = vrot.slane %v6444, 7
        %v6446 = vsel %vm6046, %v6445, %v6444
        %6448 = vst.msk [vmem:[#allocation5 + $0x27] sm:$0x3] %vm6051, %v6446
        %v6449 = vcombine.high %v5976, %v5978
        %v6451 = vunpack.c.l.s4 1966171168
        %v6452 = vunpack.c.0.s8 %v6451
        %v6453 = vlaneseq
        %v6454 = vshrl.u32 %v6453, 7
        %v6455 = vsub.s32 %v6452, %v6454
        %v6456 = vrot.slane %v6449, %v6455
        %v6458 = vunpack.c.l.s4 1966171168
        %v6459 = vunpack.c.0.s8 %v6458
        %v6460 = vlaneseq
        %v6461 = vshrl.u32 %v6460, 7
        %v6462 = vsub.s32 %v6459, %v6461
        %v6463 = vrot.slane %v6456, %v6462
        %6464 = vrot.lane.b32.xlu0 %v6463, 64
        %v6465 = vpop.permute.xlu0 %6464
        %v6466 = vrot.slane %v6465, 7
        %v6467 = vsel %vm2172, %v6466, %v6465
        %6469 = vst.msk [vmem:[#allocation5 + $0x28] sm:$0x3] %vm6074, %v6467
        %v6470 = vcombine.high %v6456, %v6456
        %v6472 = vunpack.c.l.s4 1966171168
        %v6473 = vunpack.c.0.s8 %v6472
        %v6474 = vlaneseq
        %v6475 = vshrl.u32 %v6474, 7
        %v6476 = vsub.s32 %v6473, %v6475
        %v6477 = vrot.slane %v6470, %v6476
        %6478 = vrot.lane.b32.xlu0 %v6477, 80
        %v6479 = vpop.permute.xlu0 %6478
        %v6480 = vrot.slane %v6479, 7
        %v6481 = vsel %vm6087, %v6480, %v6479
        %6483 = vst.msk [vmem:[#allocation5 + $0x29] sm:$0x3] %vm6092, %v6481
        %v6484 = vcombine.high %v6463, %v6463
        %6485 = vrot.lane.b32.xlu0 %v6484, 96
        %v6486 = vpop.permute.xlu0 %6485
        %v6487 = vrot.slane %v6486, 7
        %v6488 = vsel %vm1458, %v6487, %v6486
        %6490 = vst.msk [vmem:[#allocation5 + $0x2a] sm:$0x3] %vm6101, %v6488
        %v6491 = vcombine.high %v6477, %v6477
        %6492 = vrot.lane.b32.xlu0 %v6491, 112
        %v6493 = vpop.permute.xlu0 %6492
        %v6494 = vrot.slane %v6493, 7
        %v6495 = vsel %vm6107, %v6494, %v6493
        %6497 = vst.msk [vmem:[#allocation5 + $0x2b] sm:$0x3] %vm6112, %v6495
        %v6500 = vcombine.low %v5980, %v5982
        %v6502 = vunpack.c.l.s4 1966171168
        %v6503 = vunpack.c.0.s8 %v6502
        %v6504 = vlaneseq
        %v6505 = vshrl.u32 %v6504, 7
        %v6506 = vsub.s32 %v6503, %v6505
        %v6507 = vrot.slane %v6500, %v6506
        %v6509 = vunpack.c.l.s4 1966171168
        %v6510 = vunpack.c.0.s8 %v6509
        %v6511 = vlaneseq
        %v6512 = vshrl.u32 %v6511, 7
        %v6513 = vsub.s32 %v6510, %v6512
        %v6514 = vrot.slane %v6507, %v6513
        %6516 = vst.msk [vmem:[#allocation5 + $0x2d] sm:$0x3] %vm6013, %v6514
        %v6517 = vcombine.high %v6507, %v6507
        %v6519 = vunpack.c.l.s4 1966171168
        %v6520 = vunpack.c.0.s8 %v6519
        %v6521 = vlaneseq
        %v6522 = vshrl.u32 %v6521, 7
        %v6523 = vsub.s32 %v6520, %v6522
        %v6524 = vrot.slane %v6517, %v6523
        %6525 = vrot.lane.b32.xlu0 %v6524, 16
        %v6526 = vpop.permute.xlu0 %6525
        %v6527 = vrot.slane %v6526, 7
        %v6528 = vsel %vm6026, %v6527, %v6526
        %6530 = vst.msk [vmem:[#allocation5 + $0x2e] sm:$0x3] %vm6031, %v6528
        %v6531 = vcombine.high %v6514, %v6514
        %6532 = vrot.lane.b32.xlu0 %v6531, 32
        %v6533 = vpop.permute.xlu0 %6532
        %v6534 = vrot.slane %v6533, 7
        %v6535 = vsel %vm3501, %v6534, %v6533
        %6537 = vst.msk [vmem:[#allocation5 + $0x2f] sm:$0x3] %vm6040, %v6535
        %v6538 = vcombine.high %v6524, %v6524
        %6539 = vrot.lane.b32.xlu0 %v6538, 48
        %v6540 = vpop.permute.xlu0 %6539
        %v6541 = vrot.slane %v6540, 7
        %v6542 = vsel %vm6046, %v6541, %v6540
        %6544 = vst.msk [vmem:[#allocation5 + $0x30] sm:$0x3] %vm6051, %v6542
        %v6545 = vcombine.high %v5980, %v5982
        %v6547 = vunpack.c.l.s4 1966171168
        %v6548 = vunpack.c.0.s8 %v6547
        %v6549 = vlaneseq
        %v6550 = vshrl.u32 %v6549, 7
        %v6551 = vsub.s32 %v6548, %v6550
        %v6552 = vrot.slane %v6545, %v6551
        %v6554 = vunpack.c.l.s4 1966171168
        %v6555 = vunpack.c.0.s8 %v6554
        %v6556 = vlaneseq
        %v6557 = vshrl.u32 %v6556, 7
        %v6558 = vsub.s32 %v6555, %v6557
        %v6559 = vrot.slane %v6552, %v6558
        %6560 = vrot.lane.b32.xlu0 %v6559, 64
        %v6561 = vpop.permute.xlu0 %6560
        %v6562 = vrot.slane %v6561, 7
        %v6563 = vsel %vm2172, %v6562, %v6561
        %6565 = vst.msk [vmem:[#allocation5 + $0x31] sm:$0x3] %vm6074, %v6563
        %v6566 = vcombine.high %v6552, %v6552
        %v6568 = vunpack.c.l.s4 1966171168
        %v6569 = vunpack.c.0.s8 %v6568
        %v6570 = vlaneseq
        %v6571 = vshrl.u32 %v6570, 7
        %v6572 = vsub.s32 %v6569, %v6571
        %v6573 = vrot.slane %v6566, %v6572
        %6574 = vrot.lane.b32.xlu0 %v6573, 80
        %v6575 = vpop.permute.xlu0 %6574
        %v6576 = vrot.slane %v6575, 7
        %v6577 = vsel %vm6087, %v6576, %v6575
        %6579 = vst.msk [vmem:[#allocation5 + $0x32] sm:$0x3] %vm6092, %v6577
        %v6580 = vcombine.high %v6559, %v6559
        %6581 = vrot.lane.b32.xlu0 %v6580, 96
        %v6582 = vpop.permute.xlu0 %6581
        %v6583 = vrot.slane %v6582, 7
        %v6584 = vsel %vm1458, %v6583, %v6582
        %6586 = vst.msk [vmem:[#allocation5 + $0x33] sm:$0x3] %vm6101, %v6584
        %v6587 = vcombine.high %v6573, %v6573
        %6588 = vrot.lane.b32.xlu0 %v6587, 112
        %v6589 = vpop.permute.xlu0 %6588
        %v6590 = vrot.slane %v6589, 7
        %v6591 = vsel %vm6107, %v6590, %v6589
        %6593 = vst.msk [vmem:[#allocation5 + $0x34] sm:$0x3] %vm6112, %v6591
        %v6596 = vcombine.low %v5986, %v5988
        %v6598 = vunpack.c.l.s4 1966171168
        %v6599 = vunpack.c.0.s8 %v6598
        %v6600 = vlaneseq
        %v6601 = vshrl.u32 %v6600, 7
        %v6602 = vsub.s32 %v6599, %v6601
        %v6603 = vrot.slane %v6596, %v6602
        %v6605 = vunpack.c.l.s4 1966171168
        %v6606 = vunpack.c.0.s8 %v6605
        %v6607 = vlaneseq
        %v6608 = vshrl.u32 %v6607, 7
        %v6609 = vsub.s32 %v6606, %v6608
        %v6610 = vrot.slane %v6603, %v6609
        %6612 = vst.msk [vmem:[#allocation5 + $0x36] sm:$0x3] %vm6013, %v6610
        %v6613 = vcombine.high %v6603, %v6603
        %v6615 = vunpack.c.l.s4 1966171168
        %v6616 = vunpack.c.0.s8 %v6615
        %v6617 = vlaneseq
        %v6618 = vshrl.u32 %v6617, 7
        %v6619 = vsub.s32 %v6616, %v6618
        %v6620 = vrot.slane %v6613, %v6619
        %6621 = vrot.lane.b32.xlu0 %v6620, 16
        %v6622 = vpop.permute.xlu0 %6621
        %v6623 = vrot.slane %v6622, 7
        %v6624 = vsel %vm6026, %v6623, %v6622
        %6626 = vst.msk [vmem:[#allocation5 + $0x37] sm:$0x3] %vm6031, %v6624
        %v6627 = vcombine.high %v6610, %v6610
        %6628 = vrot.lane.b32.xlu0 %v6627, 32
        %v6629 = vpop.permute.xlu0 %6628
        %v6630 = vrot.slane %v6629, 7
        %v6631 = vsel %vm3501, %v6630, %v6629
        %6633 = vst.msk [vmem:[#allocation5 + $0x38] sm:$0x3] %vm6040, %v6631
        %v6634 = vcombine.high %v6620, %v6620
        %6635 = vrot.lane.b32.xlu0 %v6634, 48
        %v6636 = vpop.permute.xlu0 %6635
        %v6637 = vrot.slane %v6636, 7
        %v6638 = vsel %vm6046, %v6637, %v6636
        %6640 = vst.msk [vmem:[#allocation5 + $0x39] sm:$0x3] %vm6051, %v6638
        %v6641 = vcombine.high %v5986, %v5988
        %v6643 = vunpack.c.l.s4 1966171168
        %v6644 = vunpack.c.0.s8 %v6643
        %v6645 = vlaneseq
        %v6646 = vshrl.u32 %v6645, 7
        %v6647 = vsub.s32 %v6644, %v6646
        %v6648 = vrot.slane %v6641, %v6647
        %v6650 = vunpack.c.l.s4 1966171168
        %v6651 = vunpack.c.0.s8 %v6650
        %v6652 = vlaneseq
        %v6653 = vshrl.u32 %v6652, 7
        %v6654 = vsub.s32 %v6651, %v6653
        %v6655 = vrot.slane %v6648, %v6654
        %6656 = vrot.lane.b32.xlu0 %v6655, 64
        %v6657 = vpop.permute.xlu0 %6656
        %v6658 = vrot.slane %v6657, 7
        %v6659 = vsel %vm2172, %v6658, %v6657
        %6661 = vst.msk [vmem:[#allocation5 + $0x3a] sm:$0x3] %vm6074, %v6659
        %v6662 = vcombine.high %v6648, %v6648
        %v6664 = vunpack.c.l.s4 1966171168
        %v6665 = vunpack.c.0.s8 %v6664
        %v6666 = vlaneseq
        %v6667 = vshrl.u32 %v6666, 7
        %v6668 = vsub.s32 %v6665, %v6667
        %v6669 = vrot.slane %v6662, %v6668
        %6670 = vrot.lane.b32.xlu0 %v6669, 80
        %v6671 = vpop.permute.xlu0 %6670
        %v6672 = vrot.slane %v6671, 7
        %v6673 = vsel %vm6087, %v6672, %v6671
        %6675 = vst.msk [vmem:[#allocation5 + $0x3b] sm:$0x3] %vm6092, %v6673
        %v6676 = vcombine.high %v6655, %v6655
        %6677 = vrot.lane.b32.xlu0 %v6676, 96
        %v6678 = vpop.permute.xlu0 %6677
        %v6679 = vrot.slane %v6678, 7
        %v6680 = vsel %vm1458, %v6679, %v6678
        %6682 = vst.msk [vmem:[#allocation5 + $0x3c] sm:$0x3] %vm6101, %v6680
        %v6683 = vcombine.high %v6669, %v6669
        %6684 = vrot.lane.b32.xlu0 %v6683, 112
        %v6685 = vpop.permute.xlu0 %6684
        %v6686 = vrot.slane %v6685, 7
        %v6687 = vsel %vm6107, %v6686, %v6685
        %6689 = vst.msk [vmem:[#allocation5 + $0x3d] sm:$0x3] %vm6112, %v6687
        %v6692 = vcombine.low %v5990, %v5992
        %v6694 = vunpack.c.l.s4 1966171168
        %v6695 = vunpack.c.0.s8 %v6694
        %v6696 = vlaneseq
        %v6697 = vshrl.u32 %v6696, 7
        %v6698 = vsub.s32 %v6695, %v6697
        %v6699 = vrot.slane %v6692, %v6698
        %v6701 = vunpack.c.l.s4 1966171168
        %v6702 = vunpack.c.0.s8 %v6701
        %v6703 = vlaneseq
        %v6704 = vshrl.u32 %v6703, 7
        %v6705 = vsub.s32 %v6702, %v6704
        %v6706 = vrot.slane %v6699, %v6705
        %6708 = vst.msk [vmem:[#allocation5 + $0x3f] sm:$0x3] %vm6013, %v6706
        %v6709 = vcombine.high %v6699, %v6699
        %v6711 = vunpack.c.l.s4 1966171168
        %v6712 = vunpack.c.0.s8 %v6711
        %v6713 = vlaneseq
        %v6714 = vshrl.u32 %v6713, 7
        %v6715 = vsub.s32 %v6712, %v6714
        %v6716 = vrot.slane %v6709, %v6715
        %6717 = vrot.lane.b32.xlu0 %v6716, 16
        %v6718 = vpop.permute.xlu0 %6717
        %v6719 = vrot.slane %v6718, 7
        %v6720 = vsel %vm6026, %v6719, %v6718
        %6722 = vst.msk [vmem:[#allocation5 + $0x40] sm:$0x3] %vm6031, %v6720
        %v6723 = vcombine.high %v6706, %v6706
        %6724 = vrot.lane.b32.xlu0 %v6723, 32
        %v6725 = vpop.permute.xlu0 %6724
        %v6726 = vrot.slane %v6725, 7
        %v6727 = vsel %vm3501, %v6726, %v6725
        %6729 = vst.msk [vmem:[#allocation5 + $0x41] sm:$0x3] %vm6040, %v6727
        %v6730 = vcombine.high %v6716, %v6716
        %6731 = vrot.lane.b32.xlu0 %v6730, 48
        %v6732 = vpop.permute.xlu0 %6731
        %v6733 = vrot.slane %v6732, 7
        %v6734 = vsel %vm6046, %v6733, %v6732
        %6736 = vst.msk [vmem:[#allocation5 + $0x42] sm:$0x3] %vm6051, %v6734
        %v6737 = vcombine.high %v5990, %v5992
        %v6739 = vunpack.c.l.s4 1966171168
        %v6740 = vunpack.c.0.s8 %v6739
        %v6741 = vlaneseq
        %v6742 = vshrl.u32 %v6741, 7
        %v6743 = vsub.s32 %v6740, %v6742
        %v6744 = vrot.slane %v6737, %v6743
        %v6746 = vunpack.c.l.s4 1966171168
        %v6747 = vunpack.c.0.s8 %v6746
        %v6748 = vlaneseq
        %v6749 = vshrl.u32 %v6748, 7
        %v6750 = vsub.s32 %v6747, %v6749
        %v6751 = vrot.slane %v6744, %v6750
        %6752 = vrot.lane.b32.xlu0 %v6751, 64
        %v6753 = vpop.permute.xlu0 %6752
        %v6754 = vrot.slane %v6753, 7
        %v6755 = vsel %vm2172, %v6754, %v6753
        %6757 = vst.msk [vmem:[#allocation5 + $0x43] sm:$0x3] %vm6074, %v6755
        %v6758 = vcombine.high %v6744, %v6744
        %v6760 = vunpack.c.l.s4 1966171168
        %v6761 = vunpack.c.0.s8 %v6760
        %v6762 = vlaneseq
        %v6763 = vshrl.u32 %v6762, 7
        %v6764 = vsub.s32 %v6761, %v6763
        %v6765 = vrot.slane %v6758, %v6764
        %6766 = vrot.lane.b32.xlu0 %v6765, 80
        %v6767 = vpop.permute.xlu0 %6766
        %v6768 = vrot.slane %v6767, 7
        %v6769 = vsel %vm6087, %v6768, %v6767
        %6771 = vst.msk [vmem:[#allocation5 + $0x44] sm:$0x3] %vm6092, %v6769
        %v6772 = vcombine.high %v6751, %v6751
        %6773 = vrot.lane.b32.xlu0 %v6772, 96
        %v6774 = vpop.permute.xlu0 %6773
        %v6775 = vrot.slane %v6774, 7
        %v6776 = vsel %vm1458, %v6775, %v6774
        %6778 = vst.msk [vmem:[#allocation5 + $0x45] sm:$0x3] %vm6101, %v6776
        %v6779 = vcombine.high %v6765, %v6765
        %6780 = vrot.lane.b32.xlu0 %v6779, 112
        %v6781 = vpop.permute.xlu0 %6780
        %v6782 = vrot.slane %v6781, 7
        %v6783 = vsel %vm6107, %v6782, %v6781
        %6785 = vst.msk [vmem:[#allocation5 + $0x46] sm:$0x3] %vm6112, %v6783
        %s6786 = smul.u32 4, 1152
        %s6787 = smul.u32 %s6786, 1
        %s6788 = sshll.u32 %s6787, 4
        %6789 = dma.done [#allocation7], %s6788
        %v6790 = vld [vmem:[#allocation5] sm:$0xff]
        %v6791 = vld [vmem:[#allocation5 + $0x8] sm:$0xff]
        %v6792 = vld [vmem:[#allocation5 + $0x10] sm:$0xff]
        %v6793 = vld [vmem:[#allocation5 + $0x18] sm:$0xff]
        %v6794 = vld [vmem:[#allocation5 + $0x20] sm:$0xff]
        %v6795 = vld [vmem:[#allocation5 + $0x28] sm:$0xff]
        %v6796 = vld [vmem:[#allocation5 + $0x30] sm:$0xff]
        %v6797 = vld [vmem:[#allocation5 + $0x38] sm:$0xff]
        %v6798 = vld [vmem:[#allocation5 + $0x40] sm:$0xff]
        %v6808 = vlaneseq
        %v6809 = vshrl.u32 %v6808, 7
        %v6810 = vsub.s32 0, %v6809
        %v6811 = vrot.slane %v6790, %v6810
        %v6812 = vlaneseq
        %v6813 = vshrl.u32 %v6812, 7
        %v6814 = vsub.s32 1, %v6813
        %v6815 = vrot.slane %v6790, %v6814
        %v6816 = vlaneseq
        %v6817 = vshrl.u32 %v6816, 7
        %v6818 = vsub.s32 2, %v6817
        %v6819 = vrot.slane %v6790, %v6818
        %v6820 = vlaneseq
        %v6821 = vshrl.u32 %v6820, 7
        %v6822 = vsub.s32 3, %v6821
        %v6823 = vrot.slane %v6790, %v6822
        %v6824 = vlaneseq
        %v6825 = vshrl.u32 %v6824, 7
        %v6826 = vsub.s32 4, %v6825
        %v6827 = vrot.slane %v6790, %v6826
        %v6828 = vlaneseq
        %v6829 = vshrl.u32 %v6828, 7
        %v6830 = vsub.s32 5, %v6829
        %v6831 = vrot.slane %v6790, %v6830
        %v6832 = vlaneseq
        %v6833 = vshrl.u32 %v6832, 7
        %v6834 = vsub.s32 6, %v6833
        %v6835 = vrot.slane %v6790, %v6834
        %v6836 = vlaneseq
        %v6837 = vshrl.u32 %v6836, 7
        %v6838 = vsub.s32 7, %v6837
        %v6839 = vrot.slane %v6790, %v6838
        %v6840 = vlaneseq
        %v6841 = vshrl.u32 %v6840, 7
        %v6842 = vsub.s32 0, %v6841
        %v6843 = vrot.slane %v6791, %v6842
        %v6844 = vlaneseq
        %v6845 = vshrl.u32 %v6844, 7
        %v6846 = vsub.s32 1, %v6845
        %v6847 = vrot.slane %v6791, %v6846
        %v6848 = vlaneseq
        %v6849 = vshrl.u32 %v6848, 7
        %v6850 = vsub.s32 2, %v6849
        %v6851 = vrot.slane %v6791, %v6850
        %v6852 = vlaneseq
        %v6853 = vshrl.u32 %v6852, 7
        %v6854 = vsub.s32 3, %v6853
        %v6855 = vrot.slane %v6791, %v6854
        %v6856 = vlaneseq
        %v6857 = vshrl.u32 %v6856, 7
        %v6858 = vsub.s32 4, %v6857
        %v6859 = vrot.slane %v6791, %v6858
        %v6860 = vlaneseq
        %v6861 = vshrl.u32 %v6860, 7
        %v6862 = vsub.s32 5, %v6861
        %v6863 = vrot.slane %v6791, %v6862
        %v6864 = vlaneseq
        %v6865 = vshrl.u32 %v6864, 7
        %v6866 = vsub.s32 6, %v6865
        %v6867 = vrot.slane %v6791, %v6866
        %v6868 = vlaneseq
        %v6869 = vshrl.u32 %v6868, 7
        %v6870 = vsub.s32 7, %v6869
        %v6871 = vrot.slane %v6791, %v6870
        %v6872 = vlaneseq
        %v6873 = vshrl.u32 %v6872, 7
        %v6874 = vsub.s32 0, %v6873
        %v6875 = vrot.slane %v6792, %v6874
        %v6876 = vlaneseq
        %v6877 = vshrl.u32 %v6876, 7
        %v6878 = vsub.s32 1, %v6877
        %v6879 = vrot.slane %v6792, %v6878
        %v6880 = vlaneseq
        %v6881 = vshrl.u32 %v6880, 7
        %v6882 = vsub.s32 2, %v6881
        %v6883 = vrot.slane %v6792, %v6882
        %v6884 = vlaneseq
        %v6885 = vshrl.u32 %v6884, 7
        %v6886 = vsub.s32 3, %v6885
        %v6887 = vrot.slane %v6792, %v6886
        %v6888 = vlaneseq
        %v6889 = vshrl.u32 %v6888, 7
        %v6890 = vsub.s32 4, %v6889
        %v6891 = vrot.slane %v6792, %v6890
        %v6892 = vlaneseq
        %v6893 = vshrl.u32 %v6892, 7
        %v6894 = vsub.s32 5, %v6893
        %v6895 = vrot.slane %v6792, %v6894
        %v6896 = vlaneseq
        %v6897 = vshrl.u32 %v6896, 7
        %v6898 = vsub.s32 6, %v6897
        %v6899 = vrot.slane %v6792, %v6898
        %v6900 = vlaneseq
        %v6901 = vshrl.u32 %v6900, 7
        %v6902 = vsub.s32 7, %v6901
        %v6903 = vrot.slane %v6792, %v6902
        %v6904 = vlaneseq
        %v6905 = vshrl.u32 %v6904, 7
        %v6906 = vsub.s32 0, %v6905
        %v6907 = vrot.slane %v6793, %v6906
        %v6908 = vlaneseq
        %v6909 = vshrl.u32 %v6908, 7
        %v6910 = vsub.s32 1, %v6909
        %v6911 = vrot.slane %v6793, %v6910
        %v6912 = vlaneseq
        %v6913 = vshrl.u32 %v6912, 7
        %v6914 = vsub.s32 2, %v6913
        %v6915 = vrot.slane %v6793, %v6914
        %v6916 = vlaneseq
        %v6917 = vshrl.u32 %v6916, 7
        %v6918 = vsub.s32 3, %v6917
        %v6919 = vrot.slane %v6793, %v6918
        %v6920 = vlaneseq
        %v6921 = vshrl.u32 %v6920, 7
        %v6922 = vsub.s32 4, %v6921
        %v6923 = vrot.slane %v6793, %v6922
        %v6924 = vlaneseq
        %v6925 = vshrl.u32 %v6924, 7
        %v6926 = vsub.s32 5, %v6925
        %v6927 = vrot.slane %v6793, %v6926
        %v6928 = vlaneseq
        %v6929 = vshrl.u32 %v6928, 7
        %v6930 = vsub.s32 6, %v6929
        %v6931 = vrot.slane %v6793, %v6930
        %v6932 = vlaneseq
        %v6933 = vshrl.u32 %v6932, 7
        %v6934 = vsub.s32 7, %v6933
        %v6935 = vrot.slane %v6793, %v6934
        %v6936 = vlaneseq
        %v6937 = vshrl.u32 %v6936, 7
        %v6938 = vsub.s32 0, %v6937
        %v6939 = vrot.slane %v6794, %v6938
        %v6940 = vlaneseq
        %v6941 = vshrl.u32 %v6940, 7
        %v6942 = vsub.s32 1, %v6941
        %v6943 = vrot.slane %v6794, %v6942
        %v6944 = vlaneseq
        %v6945 = vshrl.u32 %v6944, 7
        %v6946 = vsub.s32 2, %v6945
        %v6947 = vrot.slane %v6794, %v6946
        %v6948 = vlaneseq
        %v6949 = vshrl.u32 %v6948, 7
        %v6950 = vsub.s32 3, %v6949
        %v6951 = vrot.slane %v6794, %v6950
        %v6952 = vlaneseq
        %v6953 = vshrl.u32 %v6952, 7
        %v6954 = vsub.s32 4, %v6953
        %v6955 = vrot.slane %v6794, %v6954
        %v6956 = vlaneseq
        %v6957 = vshrl.u32 %v6956, 7
        %v6958 = vsub.s32 5, %v6957
        %v6959 = vrot.slane %v6794, %v6958
        %v6960 = vlaneseq
        %v6961 = vshrl.u32 %v6960, 7
        %v6962 = vsub.s32 6, %v6961
        %v6963 = vrot.slane %v6794, %v6962
        %v6964 = vlaneseq
        %v6965 = vshrl.u32 %v6964, 7
        %v6966 = vsub.s32 7, %v6965
        %v6967 = vrot.slane %v6794, %v6966
        %v6968 = vlaneseq
        %v6969 = vshrl.u32 %v6968, 7
        %v6970 = vsub.s32 0, %v6969
        %v6971 = vrot.slane %v6795, %v6970
        %v6972 = vlaneseq
        %v6973 = vshrl.u32 %v6972, 7
        %v6974 = vsub.s32 1, %v6973
        %v6975 = vrot.slane %v6795, %v6974
        %v6976 = vlaneseq
        %v6977 = vshrl.u32 %v6976, 7
        %v6978 = vsub.s32 2, %v6977
        %v6979 = vrot.slane %v6795, %v6978
        %v6980 = vlaneseq
        %v6981 = vshrl.u32 %v6980, 7
        %v6982 = vsub.s32 3, %v6981
        %v6983 = vrot.slane %v6795, %v6982
        %v6984 = vlaneseq
        %v6985 = vshrl.u32 %v6984, 7
        %v6986 = vsub.s32 4, %v6985
        %v6987 = vrot.slane %v6795, %v6986
        %v6988 = vlaneseq
        %v6989 = vshrl.u32 %v6988, 7
        %v6990 = vsub.s32 5, %v6989
        %v6991 = vrot.slane %v6795, %v6990
        %v6992 = vlaneseq
        %v6993 = vshrl.u32 %v6992, 7
        %v6994 = vsub.s32 6, %v6993
        %v6995 = vrot.slane %v6795, %v6994
        %v6996 = vlaneseq
        %v6997 = vshrl.u32 %v6996, 7
        %v6998 = vsub.s32 7, %v6997
        %v6999 = vrot.slane %v6795, %v6998
        %v7000 = vlaneseq
        %v7001 = vshrl.u32 %v7000, 7
        %v7002 = vsub.s32 0, %v7001
        %v7003 = vrot.slane %v6796, %v7002
        %v7004 = vlaneseq
        %v7005 = vshrl.u32 %v7004, 7
        %v7006 = vsub.s32 1, %v7005
        %v7007 = vrot.slane %v6796, %v7006
        %v7008 = vlaneseq
        %v7009 = vshrl.u32 %v7008, 7
        %v7010 = vsub.s32 2, %v7009
        %v7011 = vrot.slane %v6796, %v7010
        %v7012 = vlaneseq
        %v7013 = vshrl.u32 %v7012, 7
        %v7014 = vsub.s32 3, %v7013
        %v7015 = vrot.slane %v6796, %v7014
        %v7016 = vlaneseq
        %v7017 = vshrl.u32 %v7016, 7
        %v7018 = vsub.s32 4, %v7017
        %v7019 = vrot.slane %v6796, %v7018
        %v7020 = vlaneseq
        %v7021 = vshrl.u32 %v7020, 7
        %v7022 = vsub.s32 5, %v7021
        %v7023 = vrot.slane %v6796, %v7022
        %v7024 = vlaneseq
        %v7025 = vshrl.u32 %v7024, 7
        %v7026 = vsub.s32 6, %v7025
        %v7027 = vrot.slane %v6796, %v7026
        %v7028 = vlaneseq
        %v7029 = vshrl.u32 %v7028, 7
        %v7030 = vsub.s32 7, %v7029
        %v7031 = vrot.slane %v6796, %v7030
        %v7032 = vlaneseq
        %v7033 = vshrl.u32 %v7032, 7
        %v7034 = vsub.s32 0, %v7033
        %v7035 = vrot.slane %v6797, %v7034
        %v7036 = vlaneseq
        %v7037 = vshrl.u32 %v7036, 7
        %v7038 = vsub.s32 1, %v7037
        %v7039 = vrot.slane %v6797, %v7038
        %v7040 = vlaneseq
        %v7041 = vshrl.u32 %v7040, 7
        %v7042 = vsub.s32 2, %v7041
        %v7043 = vrot.slane %v6797, %v7042
        %v7044 = vlaneseq
        %v7045 = vshrl.u32 %v7044, 7
        %v7046 = vsub.s32 3, %v7045
        %v7047 = vrot.slane %v6797, %v7046
        %v7048 = vlaneseq
        %v7049 = vshrl.u32 %v7048, 7
        %v7050 = vsub.s32 4, %v7049
        %v7051 = vrot.slane %v6797, %v7050
        %v7052 = vlaneseq
        %v7053 = vshrl.u32 %v7052, 7
        %v7054 = vsub.s32 5, %v7053
        %v7055 = vrot.slane %v6797, %v7054
        %v7056 = vlaneseq
        %v7057 = vshrl.u32 %v7056, 7
        %v7058 = vsub.s32 6, %v7057
        %v7059 = vrot.slane %v6797, %v7058
        %v7060 = vlaneseq
        %v7061 = vshrl.u32 %v7060, 7
        %v7062 = vsub.s32 7, %v7061
        %v7063 = vrot.slane %v6797, %v7062
        %v7064 = vlaneseq
        %v7065 = vshrl.u32 %v7064, 7
        %v7066 = vsub.s32 0, %v7065
        %v7067 = vrot.slane %v6798, %v7066
        %v7068 = vlaneseq
        %v7069 = vshrl.u32 %v7068, 7
        %v7070 = vsub.s32 1, %v7069
        %v7071 = vrot.slane %v6798, %v7070
        %v7072 = vlaneseq
        %v7073 = vshrl.u32 %v7072, 7
        %v7074 = vsub.s32 2, %v7073
        %v7075 = vrot.slane %v6798, %v7074
        %v7076 = vlaneseq
        %v7077 = vshrl.u32 %v7076, 7
        %v7078 = vsub.s32 3, %v7077
        %v7079 = vrot.slane %v6798, %v7078
        %v7080 = vlaneseq
        %v7081 = vshrl.u32 %v7080, 7
        %v7082 = vsub.s32 4, %v7081
        %v7083 = vrot.slane %v6798, %v7082
        %v7084 = vlaneseq
        %v7085 = vshrl.u32 %v7084, 7
        %v7086 = vsub.s32 5, %v7085
        %v7087 = vrot.slane %v6798, %v7086
        %v7088 = vlaneseq
        %v7089 = vshrl.u32 %v7088, 7
        %v7090 = vsub.s32 6, %v7089
        %v7091 = vrot.slane %v6798, %v7090
        %v7092 = vlaneseq
        %v7093 = vshrl.u32 %v7092, 7
        %v7094 = vsub.s32 7, %v7093
        %v7095 = vrot.slane %v6798, %v7094
        %v7168 = vpack.c.bf16 %v6811, %v6811
        %v7169 = vpack.c.bf16 %v6815, %v6815
        %v7170 = vpack.c.bf16 %v6819, %v6819
        %v7171 = vpack.c.bf16 %v6823, %v6823
        %v7172 = vpack.c.bf16 %v6827, %v6827
        %v7173 = vpack.c.bf16 %v6831, %v6831
        %v7174 = vpack.c.bf16 %v6835, %v6835
        %v7175 = vpack.c.bf16 %v6839, %v6839
        %v7176 = vpack.c.bf16 %v6843, %v6843
        %v7177 = vpack.c.bf16 %v6847, %v6847
        %v7178 = vpack.c.bf16 %v6851, %v6851
        %v7179 = vpack.c.bf16 %v6855, %v6855
        %v7180 = vpack.c.bf16 %v6859, %v6859
        %v7181 = vpack.c.bf16 %v6863, %v6863
        %v7182 = vpack.c.bf16 %v6867, %v6867
        %v7183 = vpack.c.bf16 %v6871, %v6871
        %v7184 = vpack.c.bf16 %v6875, %v6875
        %v7185 = vpack.c.bf16 %v6879, %v6879
        %v7186 = vpack.c.bf16 %v6883, %v6883
        %v7187 = vpack.c.bf16 %v6887, %v6887
        %v7188 = vpack.c.bf16 %v6891, %v6891
        %v7189 = vpack.c.bf16 %v6895, %v6895
        %v7190 = vpack.c.bf16 %v6899, %v6899
        %v7191 = vpack.c.bf16 %v6903, %v6903
        %v7192 = vpack.c.bf16 %v6907, %v6907
        %v7193 = vpack.c.bf16 %v6911, %v6911
        %v7194 = vpack.c.bf16 %v6915, %v6915
        %v7195 = vpack.c.bf16 %v6919, %v6919
        %v7196 = vpack.c.bf16 %v6923, %v6923
        %v7197 = vpack.c.bf16 %v6927, %v6927
        %v7198 = vpack.c.bf16 %v6931, %v6931
        %v7199 = vpack.c.bf16 %v6935, %v6935
        %v7200 = vpack.c.bf16 %v6939, %v6939
        %v7201 = vpack.c.bf16 %v6943, %v6943
        %v7202 = vpack.c.bf16 %v6947, %v6947
        %v7203 = vpack.c.bf16 %v6951, %v6951
        %v7204 = vpack.c.bf16 %v6955, %v6955
        %v7205 = vpack.c.bf16 %v6959, %v6959
        %v7206 = vpack.c.bf16 %v6963, %v6963
        %v7207 = vpack.c.bf16 %v6967, %v6967
        %v7208 = vpack.c.bf16 %v6971, %v6971
        %v7209 = vpack.c.bf16 %v6975, %v6975
        %v7210 = vpack.c.bf16 %v6979, %v6979
        %v7211 = vpack.c.bf16 %v6983, %v6983
        %v7212 = vpack.c.bf16 %v6987, %v6987
        %v7213 = vpack.c.bf16 %v6991, %v6991
        %v7214 = vpack.c.bf16 %v6995, %v6995
        %v7215 = vpack.c.bf16 %v6999, %v6999
        %v7216 = vpack.c.bf16 %v7003, %v7003
        %v7217 = vpack.c.bf16 %v7007, %v7007
        %v7218 = vpack.c.bf16 %v7011, %v7011
        %v7219 = vpack.c.bf16 %v7015, %v7015
        %v7220 = vpack.c.bf16 %v7019, %v7019
        %v7221 = vpack.c.bf16 %v7023, %v7023
        %v7222 = vpack.c.bf16 %v7027, %v7027
        %v7223 = vpack.c.bf16 %v7031, %v7031
        %v7224 = vpack.c.bf16 %v7035, %v7035
        %v7225 = vpack.c.bf16 %v7039, %v7039
        %v7226 = vpack.c.bf16 %v7043, %v7043
        %v7227 = vpack.c.bf16 %v7047, %v7047
        %v7228 = vpack.c.bf16 %v7051, %v7051
        %v7229 = vpack.c.bf16 %v7055, %v7055
        %v7230 = vpack.c.bf16 %v7059, %v7059
        %v7231 = vpack.c.bf16 %v7063, %v7063
        %v7232 = vpack.c.bf16 %v7067, %v7067
        %v7233 = vpack.c.bf16 %v7071, %v7071
        %v7234 = vpack.c.bf16 %v7075, %v7075
        %v7235 = vpack.c.bf16 %v7079, %v7079
        %v7236 = vpack.c.bf16 %v7083, %v7083
        %v7237 = vpack.c.bf16 %v7087, %v7087
        %v7238 = vpack.c.bf16 %v7091, %v7091
        %v7239 = vpack.c.bf16 %v7095, %v7095
        %v7240 = vld [vmem:[#allocation6] sm:$0xff]
        %v7241 = vld [vmem:[#allocation6 + $0x8] sm:$0xff]
        %v7242 = vld [vmem:[#allocation6 + $0x10] sm:$0xff]
        %v7243 = vld [vmem:[#allocation6 + $0x18] sm:$0xff]
        %v7244 = vld [vmem:[#allocation6 + $0x20] sm:$0xff]
        %v7245 = vld [vmem:[#allocation6 + $0x28] sm:$0xff]
        %v7246 = vld [vmem:[#allocation6 + $0x30] sm:$0xff]
        %v7247 = vld [vmem:[#allocation6 + $0x38] sm:$0xff]
        %v7248 = vld [vmem:[#allocation6 + $0x40] sm:$0xff]
        %v7249 = vld [vmem:[#allocation6 + $0x48] sm:$0xff]
        %v7250 = vld [vmem:[#allocation6 + $0x50] sm:$0xff]
        %v7251 = vld [vmem:[#allocation6 + $0x58] sm:$0xff]
        %v7252 = vld [vmem:[#allocation6 + $0x60] sm:$0xff]
        %v7253 = vld [vmem:[#allocation6 + $0x68] sm:$0xff]
        %v7254 = vld [vmem:[#allocation6 + $0x70] sm:$0xff]
        %v7255 = vld [vmem:[#allocation6 + $0x78] sm:$0xff]
        %v7256 = vld [vmem:[#allocation6 + $0x80] sm:$0xff]
        %v7257 = vld [vmem:[#allocation6 + $0x88] sm:$0xff]
        %v7258 = vld [vmem:[#allocation6 + $0x90] sm:$0xff]
        %v7259 = vld [vmem:[#allocation6 + $0x98] sm:$0xff]
        %v7260 = vld [vmem:[#allocation6 + $0xa0] sm:$0xff]
        %v7261 = vld [vmem:[#allocation6 + $0xa8] sm:$0xff]
        %v7262 = vld [vmem:[#allocation6 + $0xb0] sm:$0xff]
        %v7263 = vld [vmem:[#allocation6 + $0xb8] sm:$0xff]
        %v7264 = vld [vmem:[#allocation6 + $0xc0] sm:$0xff]
        %v7265 = vld [vmem:[#allocation6 + $0xc8] sm:$0xff]
        %v7266 = vld [vmem:[#allocation6 + $0xd0] sm:$0xff]
        %v7267 = vld [vmem:[#allocation6 + $0xd8] sm:$0xff]
        %v7268 = vld [vmem:[#allocation6 + $0xe0] sm:$0xff]
        %v7269 = vld [vmem:[#allocation6 + $0xe8] sm:$0xff]
        %v7270 = vld [vmem:[#allocation6 + $0xf0] sm:$0xff]
        %v7271 = vld [vmem:[#allocation6 + $0xf8] sm:$0xff]
        %v7272 = vld [vmem:[#allocation6 + $0x100] sm:$0xff]
        %v7273 = vld [vmem:[#allocation6 + $0x108] sm:$0xff]
        %v7274 = vld [vmem:[#allocation6 + $0x110] sm:$0xff]
        %v7275 = vld [vmem:[#allocation6 + $0x118] sm:$0xff]
        %v7276 = vld [vmem:[#allocation6 + $0x120] sm:$0xff]
        %v7277 = vld [vmem:[#allocation6 + $0x128] sm:$0xff]
        %v7278 = vld [vmem:[#allocation6 + $0x130] sm:$0xff]
        %v7279 = vld [vmem:[#allocation6 + $0x138] sm:$0xff]
        %v7280 = vld [vmem:[#allocation6 + $0x140] sm:$0xff]
        %v7281 = vld [vmem:[#allocation6 + $0x148] sm:$0xff]
        %v7282 = vld [vmem:[#allocation6 + $0x150] sm:$0xff]
        %v7283 = vld [vmem:[#allocation6 + $0x158] sm:$0xff]
        %v7284 = vld [vmem:[#allocation6 + $0x160] sm:$0xff]
        %v7285 = vld [vmem:[#allocation6 + $0x168] sm:$0xff]
        %v7286 = vld [vmem:[#allocation6 + $0x170] sm:$0xff]
        %v7287 = vld [vmem:[#allocation6 + $0x178] sm:$0xff]
        %v7288 = vld [vmem:[#allocation6 + $0x180] sm:$0xff]
        %v7289 = vld [vmem:[#allocation6 + $0x188] sm:$0xff]
        %v7290 = vld [vmem:[#allocation6 + $0x190] sm:$0xff]
        %v7291 = vld [vmem:[#allocation6 + $0x198] sm:$0xff]
        %v7292 = vld [vmem:[#allocation6 + $0x1a0] sm:$0xff]
        %v7293 = vld [vmem:[#allocation6 + $0x1a8] sm:$0xff]
        %v7294 = vld [vmem:[#allocation6 + $0x1b0] sm:$0xff]
        %v7295 = vld [vmem:[#allocation6 + $0x1b8] sm:$0xff]
        %v7296 = vld [vmem:[#allocation6 + $0x1c0] sm:$0xff]
        %v7297 = vld [vmem:[#allocation6 + $0x1c8] sm:$0xff]
        %v7298 = vld [vmem:[#allocation6 + $0x1d0] sm:$0xff]
        %v7299 = vld [vmem:[#allocation6 + $0x1d8] sm:$0xff]
        %v7300 = vld [vmem:[#allocation6 + $0x1e0] sm:$0xff]
        %v7301 = vld [vmem:[#allocation6 + $0x1e8] sm:$0xff]
        %v7302 = vld [vmem:[#allocation6 + $0x1f0] sm:$0xff]
        %v7303 = vld [vmem:[#allocation6 + $0x1f8] sm:$0xff]
        %v7304 = vld [vmem:[#allocation6 + $0x200] sm:$0xff]
        %v7305 = vld [vmem:[#allocation6 + $0x208] sm:$0xff]
        %v7306 = vld [vmem:[#allocation6 + $0x210] sm:$0xff]
        %v7307 = vld [vmem:[#allocation6 + $0x218] sm:$0xff]
        %v7308 = vld [vmem:[#allocation6 + $0x220] sm:$0xff]
        %v7309 = vld [vmem:[#allocation6 + $0x228] sm:$0xff]
        %v7310 = vld [vmem:[#allocation6 + $0x230] sm:$0xff]
        %v7311 = vld [vmem:[#allocation6 + $0x238] sm:$0xff]
        %v7312 = vld [vmem:[#allocation6 + $0x240] sm:$0xff]
        %v7313 = vld [vmem:[#allocation6 + $0x248] sm:$0xff]
        %v7314 = vld [vmem:[#allocation6 + $0x250] sm:$0xff]
        %v7315 = vld [vmem:[#allocation6 + $0x258] sm:$0xff]
        %v7316 = vld [vmem:[#allocation6 + $0x260] sm:$0xff]
        %v7317 = vld [vmem:[#allocation6 + $0x268] sm:$0xff]
        %v7318 = vld [vmem:[#allocation6 + $0x270] sm:$0xff]
        %v7319 = vld [vmem:[#allocation6 + $0x278] sm:$0xff]
        %v7320 = vld [vmem:[#allocation6 + $0x280] sm:$0xff]
        %v7321 = vld [vmem:[#allocation6 + $0x288] sm:$0xff]
        %v7322 = vld [vmem:[#allocation6 + $0x290] sm:$0xff]
        %v7323 = vld [vmem:[#allocation6 + $0x298] sm:$0xff]
        %v7324 = vld [vmem:[#allocation6 + $0x2a0] sm:$0xff]
        %v7325 = vld [vmem:[#allocation6 + $0x2a8] sm:$0xff]
        %v7326 = vld [vmem:[#allocation6 + $0x2b0] sm:$0xff]
        %v7327 = vld [vmem:[#allocation6 + $0x2b8] sm:$0xff]
        %v7328 = vld [vmem:[#allocation6 + $0x2c0] sm:$0xff]
        %v7329 = vld [vmem:[#allocation6 + $0x2c8] sm:$0xff]
        %v7330 = vld [vmem:[#allocation6 + $0x2d0] sm:$0xff]
        %v7331 = vld [vmem:[#allocation6 + $0x2d8] sm:$0xff]
        %v7332 = vld [vmem:[#allocation6 + $0x2e0] sm:$0xff]
        %v7333 = vld [vmem:[#allocation6 + $0x2e8] sm:$0xff]
        %v7334 = vld [vmem:[#allocation6 + $0x2f0] sm:$0xff]
        %v7335 = vld [vmem:[#allocation6 + $0x2f8] sm:$0xff]
        %v7336 = vld [vmem:[#allocation6 + $0x300] sm:$0xff]
        %v7337 = vld [vmem:[#allocation6 + $0x308] sm:$0xff]
        %v7338 = vld [vmem:[#allocation6 + $0x310] sm:$0xff]
        %v7339 = vld [vmem:[#allocation6 + $0x318] sm:$0xff]
        %v7340 = vld [vmem:[#allocation6 + $0x320] sm:$0xff]
        %v7341 = vld [vmem:[#allocation6 + $0x328] sm:$0xff]
        %v7342 = vld [vmem:[#allocation6 + $0x330] sm:$0xff]
        %v7343 = vld [vmem:[#allocation6 + $0x338] sm:$0xff]
        %v7344 = vld [vmem:[#allocation6 + $0x340] sm:$0xff]
        %v7345 = vld [vmem:[#allocation6 + $0x348] sm:$0xff]
        %v7346 = vld [vmem:[#allocation6 + $0x350] sm:$0xff]
        %v7347 = vld [vmem:[#allocation6 + $0x358] sm:$0xff]
        %v7348 = vld [vmem:[#allocation6 + $0x360] sm:$0xff]
        %v7349 = vld [vmem:[#allocation6 + $0x368] sm:$0xff]
        %v7350 = vld [vmem:[#allocation6 + $0x370] sm:$0xff]
        %v7351 = vld [vmem:[#allocation6 + $0x378] sm:$0xff]
        %v7352 = vld [vmem:[#allocation6 + $0x380] sm:$0xff]
        %v7353 = vld [vmem:[#allocation6 + $0x388] sm:$0xff]
        %v7354 = vld [vmem:[#allocation6 + $0x390] sm:$0xff]
        %v7355 = vld [vmem:[#allocation6 + $0x398] sm:$0xff]
        %v7356 = vld [vmem:[#allocation6 + $0x3a0] sm:$0xff]
        %v7357 = vld [vmem:[#allocation6 + $0x3a8] sm:$0xff]
        %v7358 = vld [vmem:[#allocation6 + $0x3b0] sm:$0xff]
        %v7359 = vld [vmem:[#allocation6 + $0x3b8] sm:$0xff]
        %v7360 = vld [vmem:[#allocation6 + $0x3c0] sm:$0xff]
        %v7361 = vld [vmem:[#allocation6 + $0x3c8] sm:$0xff]
        %v7362 = vld [vmem:[#allocation6 + $0x3d0] sm:$0xff]
        %v7363 = vld [vmem:[#allocation6 + $0x3d8] sm:$0xff]
        %v7364 = vld [vmem:[#allocation6 + $0x3e0] sm:$0xff]
        %v7365 = vld [vmem:[#allocation6 + $0x3e8] sm:$0xff]
        %v7366 = vld [vmem:[#allocation6 + $0x3f0] sm:$0xff]
        %v7367 = vld [vmem:[#allocation6 + $0x3f8] sm:$0xff]
        %v7368 = vld [vmem:[#allocation6 + $0x400] sm:$0xff]
        %v7369 = vld [vmem:[#allocation6 + $0x408] sm:$0xff]
        %v7370 = vld [vmem:[#allocation6 + $0x410] sm:$0xff]
        %v7371 = vld [vmem:[#allocation6 + $0x418] sm:$0xff]
        %v7372 = vld [vmem:[#allocation6 + $0x420] sm:$0xff]
        %v7373 = vld [vmem:[#allocation6 + $0x428] sm:$0xff]
        %v7374 = vld [vmem:[#allocation6 + $0x430] sm:$0xff]
        %v7375 = vld [vmem:[#allocation6 + $0x438] sm:$0xff]
        %v7376 = vld [vmem:[#allocation6 + $0x440] sm:$0xff]
        %v7377 = vld [vmem:[#allocation6 + $0x448] sm:$0xff]
        %v7378 = vld [vmem:[#allocation6 + $0x450] sm:$0xff]
        %v7379 = vld [vmem:[#allocation6 + $0x458] sm:$0xff]
        %v7380 = vld [vmem:[#allocation6 + $0x460] sm:$0xff]
        %v7381 = vld [vmem:[#allocation6 + $0x468] sm:$0xff]
        %v7382 = vld [vmem:[#allocation6 + $0x470] sm:$0xff]
        %v7383 = vld [vmem:[#allocation6 + $0x478] sm:$0xff]
        %v7384 = vld [vmem:[#allocation6 + $0x480] sm:$0xff]
        %v7385 = vld [vmem:[#allocation6 + $0x488] sm:$0xff]
        %v7386 = vld [vmem:[#allocation6 + $0x490] sm:$0xff]
        %v7387 = vld [vmem:[#allocation6 + $0x498] sm:$0xff]
        %v7388 = vld [vmem:[#allocation6 + $0x4a0] sm:$0xff]
        %v7389 = vld [vmem:[#allocation6 + $0x4a8] sm:$0xff]
        %v7390 = vld [vmem:[#allocation6 + $0x4b0] sm:$0xff]
        %v7391 = vld [vmem:[#allocation6 + $0x4b8] sm:$0xff]
        %v7392 = vld [vmem:[#allocation6 + $0x4c0] sm:$0xff]
        %v7393 = vld [vmem:[#allocation6 + $0x4c8] sm:$0xff]
        %v7394 = vld [vmem:[#allocation6 + $0x4d0] sm:$0xff]
        %v7395 = vld [vmem:[#allocation6 + $0x4d8] sm:$0xff]
        %v7396 = vld [vmem:[#allocation6 + $0x4e0] sm:$0xff]
        %v7397 = vld [vmem:[#allocation6 + $0x4e8] sm:$0xff]
        %v7398 = vld [vmem:[#allocation6 + $0x4f0] sm:$0xff]
        %v7399 = vld [vmem:[#allocation6 + $0x4f8] sm:$0xff]
        %v7400 = vld [vmem:[#allocation6 + $0x500] sm:$0xff]
        %v7401 = vld [vmem:[#allocation6 + $0x508] sm:$0xff]
        %v7402 = vld [vmem:[#allocation6 + $0x510] sm:$0xff]
        %v7403 = vld [vmem:[#allocation6 + $0x518] sm:$0xff]
        %v7404 = vld [vmem:[#allocation6 + $0x520] sm:$0xff]
        %v7405 = vld [vmem:[#allocation6 + $0x528] sm:$0xff]
        %v7406 = vld [vmem:[#allocation6 + $0x530] sm:$0xff]
        %v7407 = vld [vmem:[#allocation6 + $0x538] sm:$0xff]
        %v7408 = vld [vmem:[#allocation6 + $0x540] sm:$0xff]
        %v7409 = vld [vmem:[#allocation6 + $0x548] sm:$0xff]
        %v7410 = vld [vmem:[#allocation6 + $0x550] sm:$0xff]
        %v7411 = vld [vmem:[#allocation6 + $0x558] sm:$0xff]
        %v7412 = vld [vmem:[#allocation6 + $0x560] sm:$0xff]
        %v7413 = vld [vmem:[#allocation6 + $0x568] sm:$0xff]
        %v7414 = vld [vmem:[#allocation6 + $0x570] sm:$0xff]
        %v7415 = vld [vmem:[#allocation6 + $0x578] sm:$0xff]
        %v7416 = vld [vmem:[#allocation6 + $0x580] sm:$0xff]
        %v7417 = vld [vmem:[#allocation6 + $0x588] sm:$0xff]
        %v7418 = vld [vmem:[#allocation6 + $0x590] sm:$0xff]
        %v7419 = vld [vmem:[#allocation6 + $0x598] sm:$0xff]
        %v7420 = vld [vmem:[#allocation6 + $0x5a0] sm:$0xff]
        %v7421 = vld [vmem:[#allocation6 + $0x5a8] sm:$0xff]
        %v7422 = vld [vmem:[#allocation6 + $0x5b0] sm:$0xff]
        %v7423 = vld [vmem:[#allocation6 + $0x5b8] sm:$0xff]
        %v7424 = vld [vmem:[#allocation6 + $0x5c0] sm:$0xff]
        %v7425 = vld [vmem:[#allocation6 + $0x5c8] sm:$0xff]
        %v7426 = vld [vmem:[#allocation6 + $0x5d0] sm:$0xff]
        %v7427 = vld [vmem:[#allocation6 + $0x5d8] sm:$0xff]
        %v7428 = vld [vmem:[#allocation6 + $0x5e0] sm:$0xff]
        %v7429 = vld [vmem:[#allocation6 + $0x5e8] sm:$0xff]
        %v7430 = vld [vmem:[#allocation6 + $0x5f0] sm:$0xff]
        %v7431 = vld [vmem:[#allocation6 + $0x5f8] sm:$0xff]
        %v7432 = vld [vmem:[#allocation6 + $0x600] sm:$0xff]
        %v7433 = vld [vmem:[#allocation6 + $0x608] sm:$0xff]
        %v7434 = vld [vmem:[#allocation6 + $0x610] sm:$0xff]
        %v7435 = vld [vmem:[#allocation6 + $0x618] sm:$0xff]
        %v7436 = vld [vmem:[#allocation6 + $0x620] sm:$0xff]
        %v7437 = vld [vmem:[#allocation6 + $0x628] sm:$0xff]
        %v7438 = vld [vmem:[#allocation6 + $0x630] sm:$0xff]
        %v7439 = vld [vmem:[#allocation6 + $0x638] sm:$0xff]
        %v7440 = vld [vmem:[#allocation6 + $0x640] sm:$0xff]
        %v7441 = vld [vmem:[#allocation6 + $0x648] sm:$0xff]
        %v7442 = vld [vmem:[#allocation6 + $0x650] sm:$0xff]
        %v7443 = vld [vmem:[#allocation6 + $0x658] sm:$0xff]
        %v7444 = vld [vmem:[#allocation6 + $0x660] sm:$0xff]
        %v7445 = vld [vmem:[#allocation6 + $0x668] sm:$0xff]
        %v7446 = vld [vmem:[#allocation6 + $0x670] sm:$0xff]
        %v7447 = vld [vmem:[#allocation6 + $0x678] sm:$0xff]
        %v7448 = vld [vmem:[#allocation6 + $0x680] sm:$0xff]
        %v7449 = vld [vmem:[#allocation6 + $0x688] sm:$0xff]
        %v7450 = vld [vmem:[#allocation6 + $0x690] sm:$0xff]
        %v7451 = vld [vmem:[#allocation6 + $0x698] sm:$0xff]
        %v7452 = vld [vmem:[#allocation6 + $0x6a0] sm:$0xff]
        %v7453 = vld [vmem:[#allocation6 + $0x6a8] sm:$0xff]
        %v7454 = vld [vmem:[#allocation6 + $0x6b0] sm:$0xff]
        %v7455 = vld [vmem:[#allocation6 + $0x6b8] sm:$0xff]
        %v7456 = vld [vmem:[#allocation6 + $0x6c0] sm:$0xff]
        %v7457 = vld [vmem:[#allocation6 + $0x6c8] sm:$0xff]
        %v7458 = vld [vmem:[#allocation6 + $0x6d0] sm:$0xff]
        %v7459 = vld [vmem:[#allocation6 + $0x6d8] sm:$0xff]
        %v7460 = vld [vmem:[#allocation6 + $0x6e0] sm:$0xff]
        %v7461 = vld [vmem:[#allocation6 + $0x6e8] sm:$0xff]
        %v7462 = vld [vmem:[#allocation6 + $0x6f0] sm:$0xff]
        %v7463 = vld [vmem:[#allocation6 + $0x6f8] sm:$0xff]
        %v7464 = vld [vmem:[#allocation6 + $0x700] sm:$0xff]
        %v7465 = vld [vmem:[#allocation6 + $0x708] sm:$0xff]
        %v7466 = vld [vmem:[#allocation6 + $0x710] sm:$0xff]
        %v7467 = vld [vmem:[#allocation6 + $0x718] sm:$0xff]
        %v7468 = vld [vmem:[#allocation6 + $0x720] sm:$0xff]
        %v7469 = vld [vmem:[#allocation6 + $0x728] sm:$0xff]
        %v7470 = vld [vmem:[#allocation6 + $0x730] sm:$0xff]
        %v7471 = vld [vmem:[#allocation6 + $0x738] sm:$0xff]
        %v7472 = vld [vmem:[#allocation6 + $0x740] sm:$0xff]
        %v7473 = vld [vmem:[#allocation6 + $0x748] sm:$0xff]
        %v7474 = vld [vmem:[#allocation6 + $0x750] sm:$0xff]
        %v7475 = vld [vmem:[#allocation6 + $0x758] sm:$0xff]
        %v7476 = vld [vmem:[#allocation6 + $0x760] sm:$0xff]
        %v7477 = vld [vmem:[#allocation6 + $0x768] sm:$0xff]
        %v7478 = vld [vmem:[#allocation6 + $0x770] sm:$0xff]
        %v7479 = vld [vmem:[#allocation6 + $0x778] sm:$0xff]
        %v7480 = vld [vmem:[#allocation6 + $0x780] sm:$0xff]
        %v7481 = vld [vmem:[#allocation6 + $0x788] sm:$0xff]
        %v7482 = vld [vmem:[#allocation6 + $0x790] sm:$0xff]
        %v7483 = vld [vmem:[#allocation6 + $0x798] sm:$0xff]
        %v7484 = vld [vmem:[#allocation6 + $0x7a0] sm:$0xff]
        %v7485 = vld [vmem:[#allocation6 + $0x7a8] sm:$0xff]
        %v7486 = vld [vmem:[#allocation6 + $0x7b0] sm:$0xff]
        %v7487 = vld [vmem:[#allocation6 + $0x7b8] sm:$0xff]
        %v7488 = vld [vmem:[#allocation6 + $0x7c0] sm:$0xff]
        %v7489 = vld [vmem:[#allocation6 + $0x7c8] sm:$0xff]
        %v7490 = vld [vmem:[#allocation6 + $0x7d0] sm:$0xff]
        %v7491 = vld [vmem:[#allocation6 + $0x7d8] sm:$0xff]
        %v7492 = vld [vmem:[#allocation6 + $0x7e0] sm:$0xff]
        %v7493 = vld [vmem:[#allocation6 + $0x7e8] sm:$0xff]
        %v7494 = vld [vmem:[#allocation6 + $0x7f0] sm:$0xff]
        %v7495 = vld [vmem:[#allocation6 + $0x7f8] sm:$0xff]
        %v7496 = vld [vmem:[#allocation6 + $0x800] sm:$0xff]
        %v7497 = vld [vmem:[#allocation6 + $0x808] sm:$0xff]
        %v7498 = vld [vmem:[#allocation6 + $0x810] sm:$0xff]
        %v7499 = vld [vmem:[#allocation6 + $0x818] sm:$0xff]
        %v7500 = vld [vmem:[#allocation6 + $0x820] sm:$0xff]
        %v7501 = vld [vmem:[#allocation6 + $0x828] sm:$0xff]
        %v7502 = vld [vmem:[#allocation6 + $0x830] sm:$0xff]
        %v7503 = vld [vmem:[#allocation6 + $0x838] sm:$0xff]
        %v7504 = vld [vmem:[#allocation6 + $0x840] sm:$0xff]
        %v7505 = vld [vmem:[#allocation6 + $0x848] sm:$0xff]
        %v7506 = vld [vmem:[#allocation6 + $0x850] sm:$0xff]
        %v7507 = vld [vmem:[#allocation6 + $0x858] sm:$0xff]
        %v7508 = vld [vmem:[#allocation6 + $0x860] sm:$0xff]
        %v7509 = vld [vmem:[#allocation6 + $0x868] sm:$0xff]
        %v7510 = vld [vmem:[#allocation6 + $0x870] sm:$0xff]
        %v7511 = vld [vmem:[#allocation6 + $0x878] sm:$0xff]
        %v7512 = vld [vmem:[#allocation6 + $0x880] sm:$0xff]
        %v7513 = vld [vmem:[#allocation6 + $0x888] sm:$0xff]
        %v7514 = vld [vmem:[#allocation6 + $0x890] sm:$0xff]
        %v7515 = vld [vmem:[#allocation6 + $0x898] sm:$0xff]
        %v7516 = vld [vmem:[#allocation6 + $0x8a0] sm:$0xff]
        %v7517 = vld [vmem:[#allocation6 + $0x8a8] sm:$0xff]
        %v7518 = vld [vmem:[#allocation6 + $0x8b0] sm:$0xff]
        %v7519 = vld [vmem:[#allocation6 + $0x8b8] sm:$0xff]
        %v7520 = vld [vmem:[#allocation6 + $0x8c0] sm:$0xff]
        %v7521 = vld [vmem:[#allocation6 + $0x8c8] sm:$0xff]
        %v7522 = vld [vmem:[#allocation6 + $0x8d0] sm:$0xff]
        %v7523 = vld [vmem:[#allocation6 + $0x8d8] sm:$0xff]
        %v7524 = vld [vmem:[#allocation6 + $0x8e0] sm:$0xff]
        %v7525 = vld [vmem:[#allocation6 + $0x8e8] sm:$0xff]
        %v7526 = vld [vmem:[#allocation6 + $0x8f0] sm:$0xff]
        %v7527 = vld [vmem:[#allocation6 + $0x8f8] sm:$0xff]
        %v7528 = vld [vmem:[#allocation6 + $0x900] sm:$0xff]
        %v7529 = vld [vmem:[#allocation6 + $0x908] sm:$0xff]
        %v7530 = vld [vmem:[#allocation6 + $0x910] sm:$0xff]
        %v7531 = vld [vmem:[#allocation6 + $0x918] sm:$0xff]
        %v7532 = vld [vmem:[#allocation6 + $0x920] sm:$0xff]
        %v7533 = vld [vmem:[#allocation6 + $0x928] sm:$0xff]
        %v7534 = vld [vmem:[#allocation6 + $0x930] sm:$0xff]
        %v7535 = vld [vmem:[#allocation6 + $0x938] sm:$0xff]
        %v7536 = vld [vmem:[#allocation6 + $0x940] sm:$0xff]
        %v7537 = vld [vmem:[#allocation6 + $0x948] sm:$0xff]
        %v7538 = vld [vmem:[#allocation6 + $0x950] sm:$0xff]
        %v7539 = vld [vmem:[#allocation6 + $0x958] sm:$0xff]
        %v7540 = vld [vmem:[#allocation6 + $0x960] sm:$0xff]
        %v7541 = vld [vmem:[#allocation6 + $0x968] sm:$0xff]
        %v7542 = vld [vmem:[#allocation6 + $0x970] sm:$0xff]
        %v7543 = vld [vmem:[#allocation6 + $0x978] sm:$0xff]
        %v7544 = vld [vmem:[#allocation6 + $0x980] sm:$0xff]
        %v7545 = vld [vmem:[#allocation6 + $0x988] sm:$0xff]
        %v7546 = vld [vmem:[#allocation6 + $0x990] sm:$0xff]
        %v7547 = vld [vmem:[#allocation6 + $0x998] sm:$0xff]
        %v7548 = vld [vmem:[#allocation6 + $0x9a0] sm:$0xff]
        %v7549 = vld [vmem:[#allocation6 + $0x9a8] sm:$0xff]
        %v7550 = vld [vmem:[#allocation6 + $0x9b0] sm:$0xff]
        %v7551 = vld [vmem:[#allocation6 + $0x9b8] sm:$0xff]
        %v7552 = vld [vmem:[#allocation6 + $0x9c0] sm:$0xff]
        %v7553 = vld [vmem:[#allocation6 + $0x9c8] sm:$0xff]
        %v7554 = vld [vmem:[#allocation6 + $0x9d0] sm:$0xff]
        %v7555 = vld [vmem:[#allocation6 + $0x9d8] sm:$0xff]
        %v7556 = vld [vmem:[#allocation6 + $0x9e0] sm:$0xff]
        %v7557 = vld [vmem:[#allocation6 + $0x9e8] sm:$0xff]
        %v7558 = vld [vmem:[#allocation6 + $0x9f0] sm:$0xff]
        %v7559 = vld [vmem:[#allocation6 + $0x9f8] sm:$0xff]
        %v7560 = vld [vmem:[#allocation6 + $0xa00] sm:$0xff]
        %v7561 = vld [vmem:[#allocation6 + $0xa08] sm:$0xff]
        %v7562 = vld [vmem:[#allocation6 + $0xa10] sm:$0xff]
        %v7563 = vld [vmem:[#allocation6 + $0xa18] sm:$0xff]
        %v7564 = vld [vmem:[#allocation6 + $0xa20] sm:$0xff]
        %v7565 = vld [vmem:[#allocation6 + $0xa28] sm:$0xff]
        %v7566 = vld [vmem:[#allocation6 + $0xa30] sm:$0xff]
        %v7567 = vld [vmem:[#allocation6 + $0xa38] sm:$0xff]
        %v7568 = vld [vmem:[#allocation6 + $0xa40] sm:$0xff]
        %v7569 = vld [vmem:[#allocation6 + $0xa48] sm:$0xff]
        %v7570 = vld [vmem:[#allocation6 + $0xa50] sm:$0xff]
        %v7571 = vld [vmem:[#allocation6 + $0xa58] sm:$0xff]
        %v7572 = vld [vmem:[#allocation6 + $0xa60] sm:$0xff]
        %v7573 = vld [vmem:[#allocation6 + $0xa68] sm:$0xff]
        %v7574 = vld [vmem:[#allocation6 + $0xa70] sm:$0xff]
        %v7575 = vld [vmem:[#allocation6 + $0xa78] sm:$0xff]
        %v7576 = vld [vmem:[#allocation6 + $0xa80] sm:$0xff]
        %v7577 = vld [vmem:[#allocation6 + $0xa88] sm:$0xff]
        %v7578 = vld [vmem:[#allocation6 + $0xa90] sm:$0xff]
        %v7579 = vld [vmem:[#allocation6 + $0xa98] sm:$0xff]
        %v7580 = vld [vmem:[#allocation6 + $0xaa0] sm:$0xff]
        %v7581 = vld [vmem:[#allocation6 + $0xaa8] sm:$0xff]
        %v7582 = vld [vmem:[#allocation6 + $0xab0] sm:$0xff]
        %v7583 = vld [vmem:[#allocation6 + $0xab8] sm:$0xff]
        %v7584 = vld [vmem:[#allocation6 + $0xac0] sm:$0xff]
        %v7585 = vld [vmem:[#allocation6 + $0xac8] sm:$0xff]
        %v7586 = vld [vmem:[#allocation6 + $0xad0] sm:$0xff]
        %v7587 = vld [vmem:[#allocation6 + $0xad8] sm:$0xff]
        %v7588 = vld [vmem:[#allocation6 + $0xae0] sm:$0xff]
        %v7589 = vld [vmem:[#allocation6 + $0xae8] sm:$0xff]
        %v7590 = vld [vmem:[#allocation6 + $0xaf0] sm:$0xff]
        %v7591 = vld [vmem:[#allocation6 + $0xaf8] sm:$0xff]
        %v7592 = vld [vmem:[#allocation6 + $0xb00] sm:$0xff]
        %v7593 = vld [vmem:[#allocation6 + $0xb08] sm:$0xff]
        %v7594 = vld [vmem:[#allocation6 + $0xb10] sm:$0xff]
        %v7595 = vld [vmem:[#allocation6 + $0xb18] sm:$0xff]
        %v7596 = vld [vmem:[#allocation6 + $0xb20] sm:$0xff]
        %v7597 = vld [vmem:[#allocation6 + $0xb28] sm:$0xff]
        %v7598 = vld [vmem:[#allocation6 + $0xb30] sm:$0xff]
        %v7599 = vld [vmem:[#allocation6 + $0xb38] sm:$0xff]
        %v7600 = vld [vmem:[#allocation6 + $0xb40] sm:$0xff]
        %v7601 = vld [vmem:[#allocation6 + $0xb48] sm:$0xff]
        %v7602 = vld [vmem:[#allocation6 + $0xb50] sm:$0xff]
        %v7603 = vld [vmem:[#allocation6 + $0xb58] sm:$0xff]
        %v7604 = vld [vmem:[#allocation6 + $0xb60] sm:$0xff]
        %v7605 = vld [vmem:[#allocation6 + $0xb68] sm:$0xff]
        %v7606 = vld [vmem:[#allocation6 + $0xb70] sm:$0xff]
        %v7607 = vld [vmem:[#allocation6 + $0xb78] sm:$0xff]
        %v7608 = vld [vmem:[#allocation6 + $0xb80] sm:$0xff]
        %v7609 = vld [vmem:[#allocation6 + $0xb88] sm:$0xff]
        %v7610 = vld [vmem:[#allocation6 + $0xb90] sm:$0xff]
        %v7611 = vld [vmem:[#allocation6 + $0xb98] sm:$0xff]
        %v7612 = vld [vmem:[#allocation6 + $0xba0] sm:$0xff]
        %v7613 = vld [vmem:[#allocation6 + $0xba8] sm:$0xff]
        %v7614 = vld [vmem:[#allocation6 + $0xbb0] sm:$0xff]
        %v7615 = vld [vmem:[#allocation6 + $0xbb8] sm:$0xff]
        %v7616 = vld [vmem:[#allocation6 + $0xbc0] sm:$0xff]
        %v7617 = vld [vmem:[#allocation6 + $0xbc8] sm:$0xff]
        %v7618 = vld [vmem:[#allocation6 + $0xbd0] sm:$0xff]
        %v7619 = vld [vmem:[#allocation6 + $0xbd8] sm:$0xff]
        %v7620 = vld [vmem:[#allocation6 + $0xbe0] sm:$0xff]
        %v7621 = vld [vmem:[#allocation6 + $0xbe8] sm:$0xff]
        %v7622 = vld [vmem:[#allocation6 + $0xbf0] sm:$0xff]
        %v7623 = vld [vmem:[#allocation6 + $0xbf8] sm:$0xff]
        %v7624 = vld [vmem:[#allocation6 + $0xc00] sm:$0xff]
        %v7625 = vld [vmem:[#allocation6 + $0xc08] sm:$0xff]
        %v7626 = vld [vmem:[#allocation6 + $0xc10] sm:$0xff]
        %v7627 = vld [vmem:[#allocation6 + $0xc18] sm:$0xff]
        %v7628 = vld [vmem:[#allocation6 + $0xc20] sm:$0xff]
        %v7629 = vld [vmem:[#allocation6 + $0xc28] sm:$0xff]
        %v7630 = vld [vmem:[#allocation6 + $0xc30] sm:$0xff]
        %v7631 = vld [vmem:[#allocation6 + $0xc38] sm:$0xff]
        %v7632 = vld [vmem:[#allocation6 + $0xc40] sm:$0xff]
        %v7633 = vld [vmem:[#allocation6 + $0xc48] sm:$0xff]
        %v7634 = vld [vmem:[#allocation6 + $0xc50] sm:$0xff]
        %v7635 = vld [vmem:[#allocation6 + $0xc58] sm:$0xff]
        %v7636 = vld [vmem:[#allocation6 + $0xc60] sm:$0xff]
        %v7637 = vld [vmem:[#allocation6 + $0xc68] sm:$0xff]
        %v7638 = vld [vmem:[#allocation6 + $0xc70] sm:$0xff]
        %v7639 = vld [vmem:[#allocation6 + $0xc78] sm:$0xff]
        %v7640 = vld [vmem:[#allocation6 + $0xc80] sm:$0xff]
        %v7641 = vld [vmem:[#allocation6 + $0xc88] sm:$0xff]
        %v7642 = vld [vmem:[#allocation6 + $0xc90] sm:$0xff]
        %v7643 = vld [vmem:[#allocation6 + $0xc98] sm:$0xff]
        %v7644 = vld [vmem:[#allocation6 + $0xca0] sm:$0xff]
        %v7645 = vld [vmem:[#allocation6 + $0xca8] sm:$0xff]
        %v7646 = vld [vmem:[#allocation6 + $0xcb0] sm:$0xff]
        %v7647 = vld [vmem:[#allocation6 + $0xcb8] sm:$0xff]
        %v7648 = vld [vmem:[#allocation6 + $0xcc0] sm:$0xff]
        %v7649 = vld [vmem:[#allocation6 + $0xcc8] sm:$0xff]
        %v7650 = vld [vmem:[#allocation6 + $0xcd0] sm:$0xff]
        %v7651 = vld [vmem:[#allocation6 + $0xcd8] sm:$0xff]
        %v7652 = vld [vmem:[#allocation6 + $0xce0] sm:$0xff]
        %v7653 = vld [vmem:[#allocation6 + $0xce8] sm:$0xff]
        %v7654 = vld [vmem:[#allocation6 + $0xcf0] sm:$0xff]
        %v7655 = vld [vmem:[#allocation6 + $0xcf8] sm:$0xff]
        %v7656 = vld [vmem:[#allocation6 + $0xd00] sm:$0xff]
        %v7657 = vld [vmem:[#allocation6 + $0xd08] sm:$0xff]
        %v7658 = vld [vmem:[#allocation6 + $0xd10] sm:$0xff]
        %v7659 = vld [vmem:[#allocation6 + $0xd18] sm:$0xff]
        %v7660 = vld [vmem:[#allocation6 + $0xd20] sm:$0xff]
        %v7661 = vld [vmem:[#allocation6 + $0xd28] sm:$0xff]
        %v7662 = vld [vmem:[#allocation6 + $0xd30] sm:$0xff]
        %v7663 = vld [vmem:[#allocation6 + $0xd38] sm:$0xff]
        %v7664 = vld [vmem:[#allocation6 + $0xd40] sm:$0xff]
        %v7665 = vld [vmem:[#allocation6 + $0xd48] sm:$0xff]
        %v7666 = vld [vmem:[#allocation6 + $0xd50] sm:$0xff]
        %v7667 = vld [vmem:[#allocation6 + $0xd58] sm:$0xff]
        %v7668 = vld [vmem:[#allocation6 + $0xd60] sm:$0xff]
        %v7669 = vld [vmem:[#allocation6 + $0xd68] sm:$0xff]
        %v7670 = vld [vmem:[#allocation6 + $0xd70] sm:$0xff]
        %v7671 = vld [vmem:[#allocation6 + $0xd78] sm:$0xff]
        %v7672 = vld [vmem:[#allocation6 + $0xd80] sm:$0xff]
        %v7673 = vld [vmem:[#allocation6 + $0xd88] sm:$0xff]
        %v7674 = vld [vmem:[#allocation6 + $0xd90] sm:$0xff]
        %v7675 = vld [vmem:[#allocation6 + $0xd98] sm:$0xff]
        %v7676 = vld [vmem:[#allocation6 + $0xda0] sm:$0xff]
        %v7677 = vld [vmem:[#allocation6 + $0xda8] sm:$0xff]
        %v7678 = vld [vmem:[#allocation6 + $0xdb0] sm:$0xff]
        %v7679 = vld [vmem:[#allocation6 + $0xdb8] sm:$0xff]
        %v7680 = vld [vmem:[#allocation6 + $0xdc0] sm:$0xff]
        %v7681 = vld [vmem:[#allocation6 + $0xdc8] sm:$0xff]
        %v7682 = vld [vmem:[#allocation6 + $0xdd0] sm:$0xff]
        %v7683 = vld [vmem:[#allocation6 + $0xdd8] sm:$0xff]
        %v7684 = vld [vmem:[#allocation6 + $0xde0] sm:$0xff]
        %v7685 = vld [vmem:[#allocation6 + $0xde8] sm:$0xff]
        %v7686 = vld [vmem:[#allocation6 + $0xdf0] sm:$0xff]
        %v7687 = vld [vmem:[#allocation6 + $0xdf8] sm:$0xff]
        %v7688 = vld [vmem:[#allocation6 + $0xe00] sm:$0xff]
        %v7689 = vld [vmem:[#allocation6 + $0xe08] sm:$0xff]
        %v7690 = vld [vmem:[#allocation6 + $0xe10] sm:$0xff]
        %v7691 = vld [vmem:[#allocation6 + $0xe18] sm:$0xff]
        %v7692 = vld [vmem:[#allocation6 + $0xe20] sm:$0xff]
        %v7693 = vld [vmem:[#allocation6 + $0xe28] sm:$0xff]
        %v7694 = vld [vmem:[#allocation6 + $0xe30] sm:$0xff]
        %v7695 = vld [vmem:[#allocation6 + $0xe38] sm:$0xff]
        %v7696 = vld [vmem:[#allocation6 + $0xe40] sm:$0xff]
        %v7697 = vld [vmem:[#allocation6 + $0xe48] sm:$0xff]
        %v7698 = vld [vmem:[#allocation6 + $0xe50] sm:$0xff]
        %v7699 = vld [vmem:[#allocation6 + $0xe58] sm:$0xff]
        %v7700 = vld [vmem:[#allocation6 + $0xe60] sm:$0xff]
        %v7701 = vld [vmem:[#allocation6 + $0xe68] sm:$0xff]
        %v7702 = vld [vmem:[#allocation6 + $0xe70] sm:$0xff]
        %v7703 = vld [vmem:[#allocation6 + $0xe78] sm:$0xff]
        %v7704 = vld [vmem:[#allocation6 + $0xe80] sm:$0xff]
        %v7705 = vld [vmem:[#allocation6 + $0xe88] sm:$0xff]
        %v7706 = vld [vmem:[#allocation6 + $0xe90] sm:$0xff]
        %v7707 = vld [vmem:[#allocation6 + $0xe98] sm:$0xff]
        %v7708 = vld [vmem:[#allocation6 + $0xea0] sm:$0xff]
        %v7709 = vld [vmem:[#allocation6 + $0xea8] sm:$0xff]
        %v7710 = vld [vmem:[#allocation6 + $0xeb0] sm:$0xff]
        %v7711 = vld [vmem:[#allocation6 + $0xeb8] sm:$0xff]
        %v7712 = vld [vmem:[#allocation6 + $0xec0] sm:$0xff]
        %v7713 = vld [vmem:[#allocation6 + $0xec8] sm:$0xff]
        %v7714 = vld [vmem:[#allocation6 + $0xed0] sm:$0xff]
        %v7715 = vld [vmem:[#allocation6 + $0xed8] sm:$0xff]
        %v7716 = vld [vmem:[#allocation6 + $0xee0] sm:$0xff]
        %v7717 = vld [vmem:[#allocation6 + $0xee8] sm:$0xff]
        %v7718 = vld [vmem:[#allocation6 + $0xef0] sm:$0xff]
        %v7719 = vld [vmem:[#allocation6 + $0xef8] sm:$0xff]
        %v7720 = vld [vmem:[#allocation6 + $0xf00] sm:$0xff]
        %v7721 = vld [vmem:[#allocation6 + $0xf08] sm:$0xff]
        %v7722 = vld [vmem:[#allocation6 + $0xf10] sm:$0xff]
        %v7723 = vld [vmem:[#allocation6 + $0xf18] sm:$0xff]
        %v7724 = vld [vmem:[#allocation6 + $0xf20] sm:$0xff]
        %v7725 = vld [vmem:[#allocation6 + $0xf28] sm:$0xff]
        %v7726 = vld [vmem:[#allocation6 + $0xf30] sm:$0xff]
        %v7727 = vld [vmem:[#allocation6 + $0xf38] sm:$0xff]
        %v7728 = vld [vmem:[#allocation6 + $0xf40] sm:$0xff]
        %v7729 = vld [vmem:[#allocation6 + $0xf48] sm:$0xff]
        %v7730 = vld [vmem:[#allocation6 + $0xf50] sm:$0xff]
        %v7731 = vld [vmem:[#allocation6 + $0xf58] sm:$0xff]
        %v7732 = vld [vmem:[#allocation6 + $0xf60] sm:$0xff]
        %v7733 = vld [vmem:[#allocation6 + $0xf68] sm:$0xff]
        %v7734 = vld [vmem:[#allocation6 + $0xf70] sm:$0xff]
        %v7735 = vld [vmem:[#allocation6 + $0xf78] sm:$0xff]
        %v7736 = vld [vmem:[#allocation6 + $0xf80] sm:$0xff]
        %v7737 = vld [vmem:[#allocation6 + $0xf88] sm:$0xff]
        %v7738 = vld [vmem:[#allocation6 + $0xf90] sm:$0xff]
        %v7739 = vld [vmem:[#allocation6 + $0xf98] sm:$0xff]
        %v7740 = vld [vmem:[#allocation6 + $0xfa0] sm:$0xff]
        %v7741 = vld [vmem:[#allocation6 + $0xfa8] sm:$0xff]
        %v7742 = vld [vmem:[#allocation6 + $0xfb0] sm:$0xff]
        %v7743 = vld [vmem:[#allocation6 + $0xfb8] sm:$0xff]
        %v7744 = vld [vmem:[#allocation6 + $0xfc0] sm:$0xff]
        %v7745 = vld [vmem:[#allocation6 + $0xfc8] sm:$0xff]
        %v7746 = vld [vmem:[#allocation6 + $0xfd0] sm:$0xff]
        %v7747 = vld [vmem:[#allocation6 + $0xfd8] sm:$0xff]
        %v7748 = vld [vmem:[#allocation6 + $0xfe0] sm:$0xff]
        %v7749 = vld [vmem:[#allocation6 + $0xfe8] sm:$0xff]
        %v7750 = vld [vmem:[#allocation6 + $0xff0] sm:$0xff]
        %v7751 = vld [vmem:[#allocation6 + $0xff8] sm:$0xff]
        %v7752 = vld [vmem:[#allocation6 + $0x1000] sm:$0xff]
        %v7753 = vld [vmem:[#allocation6 + $0x1008] sm:$0xff]
        %v7754 = vld [vmem:[#allocation6 + $0x1010] sm:$0xff]
        %v7755 = vld [vmem:[#allocation6 + $0x1018] sm:$0xff]
        %v7756 = vld [vmem:[#allocation6 + $0x1020] sm:$0xff]
        %v7757 = vld [vmem:[#allocation6 + $0x1028] sm:$0xff]
        %v7758 = vld [vmem:[#allocation6 + $0x1030] sm:$0xff]
        %v7759 = vld [vmem:[#allocation6 + $0x1038] sm:$0xff]
        %v7760 = vld [vmem:[#allocation6 + $0x1040] sm:$0xff]
        %v7761 = vld [vmem:[#allocation6 + $0x1048] sm:$0xff]
        %v7762 = vld [vmem:[#allocation6 + $0x1050] sm:$0xff]
        %v7763 = vld [vmem:[#allocation6 + $0x1058] sm:$0xff]
        %v7764 = vld [vmem:[#allocation6 + $0x1060] sm:$0xff]
        %v7765 = vld [vmem:[#allocation6 + $0x1068] sm:$0xff]
        %v7766 = vld [vmem:[#allocation6 + $0x1070] sm:$0xff]
        %v7767 = vld [vmem:[#allocation6 + $0x1078] sm:$0xff]
        %v7768 = vld [vmem:[#allocation6 + $0x1080] sm:$0xff]
        %v7769 = vld [vmem:[#allocation6 + $0x1088] sm:$0xff]
        %v7770 = vld [vmem:[#allocation6 + $0x1090] sm:$0xff]
        %v7771 = vld [vmem:[#allocation6 + $0x1098] sm:$0xff]
        %v7772 = vld [vmem:[#allocation6 + $0x10a0] sm:$0xff]
        %v7773 = vld [vmem:[#allocation6 + $0x10a8] sm:$0xff]
        %v7774 = vld [vmem:[#allocation6 + $0x10b0] sm:$0xff]
        %v7775 = vld [vmem:[#allocation6 + $0x10b8] sm:$0xff]
        %v7776 = vld [vmem:[#allocation6 + $0x10c0] sm:$0xff]
        %v7777 = vld [vmem:[#allocation6 + $0x10c8] sm:$0xff]
        %v7778 = vld [vmem:[#allocation6 + $0x10d0] sm:$0xff]
        %v7779 = vld [vmem:[#allocation6 + $0x10d8] sm:$0xff]
        %v7780 = vld [vmem:[#allocation6 + $0x10e0] sm:$0xff]
        %v7781 = vld [vmem:[#allocation6 + $0x10e8] sm:$0xff]
        %v7782 = vld [vmem:[#allocation6 + $0x10f0] sm:$0xff]
        %v7783 = vld [vmem:[#allocation6 + $0x10f8] sm:$0xff]
        %v7784 = vld [vmem:[#allocation6 + $0x1100] sm:$0xff]
        %v7785 = vld [vmem:[#allocation6 + $0x1108] sm:$0xff]
        %v7786 = vld [vmem:[#allocation6 + $0x1110] sm:$0xff]
        %v7787 = vld [vmem:[#allocation6 + $0x1118] sm:$0xff]
        %v7788 = vld [vmem:[#allocation6 + $0x1120] sm:$0xff]
        %v7789 = vld [vmem:[#allocation6 + $0x1128] sm:$0xff]
        %v7790 = vld [vmem:[#allocation6 + $0x1130] sm:$0xff]
        %v7791 = vld [vmem:[#allocation6 + $0x1138] sm:$0xff]
        %v7792 = vld [vmem:[#allocation6 + $0x1140] sm:$0xff]
        %v7793 = vld [vmem:[#allocation6 + $0x1148] sm:$0xff]
        %v7794 = vld [vmem:[#allocation6 + $0x1150] sm:$0xff]
        %v7795 = vld [vmem:[#allocation6 + $0x1158] sm:$0xff]
        %v7796 = vld [vmem:[#allocation6 + $0x1160] sm:$0xff]
        %v7797 = vld [vmem:[#allocation6 + $0x1168] sm:$0xff]
        %v7798 = vld [vmem:[#allocation6 + $0x1170] sm:$0xff]
        %v7799 = vld [vmem:[#allocation6 + $0x1178] sm:$0xff]
        %v7800 = vld [vmem:[#allocation6 + $0x1180] sm:$0xff]
        %v7801 = vld [vmem:[#allocation6 + $0x1188] sm:$0xff]
        %v7802 = vld [vmem:[#allocation6 + $0x1190] sm:$0xff]
        %v7803 = vld [vmem:[#allocation6 + $0x1198] sm:$0xff]
        %v7804 = vld [vmem:[#allocation6 + $0x11a0] sm:$0xff]
        %v7805 = vld [vmem:[#allocation6 + $0x11a8] sm:$0xff]
        %v7806 = vld [vmem:[#allocation6 + $0x11b0] sm:$0xff]
        %v7807 = vld [vmem:[#allocation6 + $0x11b8] sm:$0xff]
        %v7808 = vld [vmem:[#allocation6 + $0x11c0] sm:$0xff]
        %v7809 = vld [vmem:[#allocation6 + $0x11c8] sm:$0xff]
        %v7810 = vld [vmem:[#allocation6 + $0x11d0] sm:$0xff]
        %v7811 = vld [vmem:[#allocation6 + $0x11d8] sm:$0xff]
        %v7812 = vld [vmem:[#allocation6 + $0x11e0] sm:$0xff]
        %v7813 = vld [vmem:[#allocation6 + $0x11e8] sm:$0xff]
        %v7814 = vld [vmem:[#allocation6 + $0x11f0] sm:$0xff]
        %v7815 = vld [vmem:[#allocation6 + $0x11f8] sm:$0xff]
        %v7816 = vld [vmem:[#allocation11] sm:$0x1]
        %7817 = vmatprep.subr.bf16.mxu0 0
        %7818 = vmatpush1.bf16.msra.mxu0 %v7240
        %7819 = vmatprep.subr.bf16.mxu0 0
        %7820 = vmatpush1.bf16.msra.mxu0 %v7241
        %7821 = vmatprep.subr.bf16.mxu0 0
        %7822 = vmatpush1.bf16.msra.mxu0 %v7242
        %7823 = vmatprep.subr.bf16.mxu0 0
        %7824 = vmatpush1.bf16.msra.mxu0 %v7243
        %7825 = vmatprep.subr.bf16.mxu0 0
        %7826 = vmatpush1.bf16.msra.mxu0 %v7244
        %7827 = vmatprep.subr.bf16.mxu0 0
        %7828 = vmatpush1.bf16.msra.mxu0 %v7245
        %7829 = vmatprep.subr.bf16.mxu0 0
        %7830 = vmatpush1.bf16.msra.mxu0 %v7246
        %7831 = vmatprep.subr.bf16.mxu0 0
        %7832 = vmatpush1.bf16.msra.mxu0 %v7247
        %7833 = vmatprep.subr.bf16.mxu0 0
        %7834 = vmatpush1.bf16.msra.mxu0 %v7248
        %7835 = vmatprep.subr.bf16.mxu0 0
        %7836 = vmatpush1.bf16.msra.mxu0 %v7249
        %7837 = vmatprep.subr.bf16.mxu0 0
        %7838 = vmatpush1.bf16.msra.mxu0 %v7250
        %7839 = vmatprep.subr.bf16.mxu0 0
        %7840 = vmatpush1.bf16.msra.mxu0 %v7251
        %7841 = vmatprep.subr.bf16.mxu0 0
        %7842 = vmatpush1.bf16.msra.mxu0 %v7252
        %7843 = vmatprep.subr.bf16.mxu0 0
        %7844 = vmatpush1.bf16.msra.mxu0 %v7253
        %7845 = vmatprep.subr.bf16.mxu0 0
        %7846 = vmatpush1.bf16.msra.mxu0 %v7254
        %7847 = vmatprep.subr.bf16.mxu0 0
        %7848 = vmatpush1.bf16.msra.mxu0 %v7255
        %7849 = vmatprep.mubr.bf16.mxu0 %v7169
        %7850 = vmatmul.mubr.bf16.gmra.mrb[0].mxu0 %v7168
        %v7851 = vpop.f32.mrb[0].mxu0
        %v7852 = vadd.f32 %v7816, %v7851
        %v7853 = vpop.f32.mrb[0].mxu0
        %v7854 = vpop.f32.mrb[0].mxu0
        %v7855 = vpop.f32.mrb[0].mxu0
        %7856 = vdwg.mxu0
        %7857 = vmatprep.subr.bf16.mxu0 0
        %7858 = vmatpush1.bf16.msra.mxu0 %v7256
        %7859 = vmatprep.subr.bf16.mxu0 0
        %7860 = vmatpush1.bf16.msra.mxu0 %v7257
        %7861 = vmatprep.subr.bf16.mxu0 0
        %7862 = vmatpush1.bf16.msra.mxu0 %v7258
        %7863 = vmatprep.subr.bf16.mxu0 0
        %7864 = vmatpush1.bf16.msra.mxu0 %v7259
        %7865 = vmatprep.subr.bf16.mxu0 0
        %7866 = vmatpush1.bf16.msra.mxu0 %v7260
        %7867 = vmatprep.subr.bf16.mxu0 0
        %7868 = vmatpush1.bf16.msra.mxu0 %v7261
        %7869 = vmatprep.subr.bf16.mxu0 0
        %7870 = vmatpush1.bf16.msra.mxu0 %v7262
        %7871 = vmatprep.subr.bf16.mxu0 0
        %7872 = vmatpush1.bf16.msra.mxu0 %v7263
        %7873 = vmatprep.subr.bf16.mxu0 0
        %7874 = vmatpush1.bf16.msra.mxu0 %v7264
        %7875 = vmatprep.subr.bf16.mxu0 0
        %7876 = vmatpush1.bf16.msra.mxu0 %v7265
        %7877 = vmatprep.subr.bf16.mxu0 0
        %7878 = vmatpush1.bf16.msra.mxu0 %v7266
        %7879 = vmatprep.subr.bf16.mxu0 0
        %7880 = vmatpush1.bf16.msra.mxu0 %v7267
        %7881 = vmatprep.subr.bf16.mxu0 0
        %7882 = vmatpush1.bf16.msra.mxu0 %v7268
        %7883 = vmatprep.subr.bf16.mxu0 0
        %7884 = vmatpush1.bf16.msra.mxu0 %v7269
        %7885 = vmatprep.subr.bf16.mxu0 0
        %7886 = vmatpush1.bf16.msra.mxu0 %v7270
        %7887 = vmatprep.subr.bf16.mxu0 0
        %7888 = vmatpush1.bf16.msra.mxu0 %v7271
        %7889 = vmatprep.mubr.bf16.mxu0 %v7171
        %7890 = vmatmul.mubr.bf16.gmra.mrb[0].mxu0 %v7170
        %v7891 = vpop.f32.mrb[0].mxu0
        %v7892 = vadd.f32 %v7852, %v7891
        %v7893 = vpop.f32.mrb[0].mxu0
        %v7894 = vpop.f32.mrb[0].mxu0
        %v7895 = vpop.f32.mrb[0].mxu0
        %7896 = vdwg.mxu0
        %7897 = vmatprep.subr.bf16.mxu0 0
        %7898 = vmatpush1.bf16.msra.mxu0 %v7272
        %7899 = vmatprep.subr.bf16.mxu0 0
        %7900 = vmatpush1.bf16.msra.mxu0 %v7273
        %7901 = vmatprep.subr.bf16.mxu0 0
        %7902 = vmatpush1.bf16.msra.mxu0 %v7274
        %7903 = vmatprep.subr.bf16.mxu0 0
        %7904 = vmatpush1.bf16.msra.mxu0 %v7275
        %7905 = vmatprep.subr.bf16.mxu0 0
        %7906 = vmatpush1.bf16.msra.mxu0 %v7276
        %7907 = vmatprep.subr.bf16.mxu0 0
        %7908 = vmatpush1.bf16.msra.mxu0 %v7277
        %7909 = vmatprep.subr.bf16.mxu0 0
        %7910 = vmatpush1.bf16.msra.mxu0 %v7278
        %7911 = vmatprep.subr.bf16.mxu0 0
        %7912 = vmatpush1.bf16.msra.mxu0 %v7279
        %7913 = vmatprep.subr.bf16.mxu0 0
        %7914 = vmatpush1.bf16.msra.mxu0 %v7280
        %7915 = vmatprep.subr.bf16.mxu0 0
        %7916 = vmatpush1.bf16.msra.mxu0 %v7281
        %7917 = vmatprep.subr.bf16.mxu0 0
        %7918 = vmatpush1.bf16.msra.mxu0 %v7282
        %7919 = vmatprep.subr.bf16.mxu0 0
        %7920 = vmatpush1.bf16.msra.mxu0 %v7283
        %7921 = vmatprep.subr.bf16.mxu0 0
        %7922 = vmatpush1.bf16.msra.mxu0 %v7284
        %7923 = vmatprep.subr.bf16.mxu0 0
        %7924 = vmatpush1.bf16.msra.mxu0 %v7285
        %7925 = vmatprep.subr.bf16.mxu0 0
        %7926 = vmatpush1.bf16.msra.mxu0 %v7286
        %7927 = vmatprep.subr.bf16.mxu0 0
        %7928 = vmatpush1.bf16.msra.mxu0 %v7287
        %7929 = vmatprep.mubr.bf16.mxu0 %v7173
        %7930 = vmatmul.mubr.bf16.gmra.mrb[0].mxu0 %v7172
        %v7931 = vpop.f32.mrb[0].mxu0
        %v7932 = vadd.f32 %v7892, %v7931
        %v7933 = vpop.f32.mrb[0].mxu0
        %v7934 = vpop.f32.mrb[0].mxu0
        %v7935 = vpop.f32.mrb[0].mxu0
        %7936 = vdwg.mxu0
        %7937 = vmatprep.subr.bf16.mxu0 0
        %7938 = vmatpush1.bf16.msra.mxu0 %v7288
        %7939 = vmatprep.subr.bf16.mxu0 0
        %7940 = vmatpush1.bf16.msra.mxu0 %v7289
        %7941 = vmatprep.subr.bf16.mxu0 0
        %7942 = vmatpush1.bf16.msra.mxu0 %v7290
        %7943 = vmatprep.subr.bf16.mxu0 0
        %7944 = vmatpush1.bf16.msra.mxu0 %v7291
        %7945 = vmatprep.subr.bf16.mxu0 0
        %7946 = vmatpush1.bf16.msra.mxu0 %v7292
        %7947 = vmatprep.subr.bf16.mxu0 0
        %7948 = vmatpush1.bf16.msra.mxu0 %v7293
        %7949 = vmatprep.subr.bf16.mxu0 0
        %7950 = vmatpush1.bf16.msra.mxu0 %v7294
        %7951 = vmatprep.subr.bf16.mxu0 0
        %7952 = vmatpush1.bf16.msra.mxu0 %v7295
        %7953 = vmatprep.subr.bf16.mxu0 0
        %7954 = vmatpush1.bf16.msra.mxu0 %v7296
        %7955 = vmatprep.subr.bf16.mxu0 0
        %7956 = vmatpush1.bf16.msra.mxu0 %v7297
        %7957 = vmatprep.subr.bf16.mxu0 0
        %7958 = vmatpush1.bf16.msra.mxu0 %v7298
        %7959 = vmatprep.subr.bf16.mxu0 0
        %7960 = vmatpush1.bf16.msra.mxu0 %v7299
        %7961 = vmatprep.subr.bf16.mxu0 0
        %7962 = vmatpush1.bf16.msra.mxu0 %v7300
        %7963 = vmatprep.subr.bf16.mxu0 0
        %7964 = vmatpush1.bf16.msra.mxu0 %v7301
        %7965 = vmatprep.subr.bf16.mxu0 0
        %7966 = vmatpush1.bf16.msra.mxu0 %v7302
        %7967 = vmatprep.subr.bf16.mxu0 0
        %7968 = vmatpush1.bf16.msra.mxu0 %v7303
        %7969 = vmatprep.mubr.bf16.mxu0 %v7175
        %7970 = vmatmul.mubr.bf16.gmra.mrb[0].mxu0 %v7174
        %v7971 = vpop.f32.mrb[0].mxu0
        %v7972 = vadd.f32 %v7932, %v7971
        %v7973 = vpop.f32.mrb[0].mxu0
        %v7974 = vpop.f32.mrb[0].mxu0
        %v7975 = vpop.f32.mrb[0].mxu0
        %7976 = vdwg.mxu0
        %7977 = vmatprep.subr.bf16.mxu0 0
        %7978 = vmatpush1.bf16.msra.mxu0 %v7304
        %7979 = vmatprep.subr.bf16.mxu0 0
        %7980 = vmatpush1.bf16.msra.mxu0 %v7305
        %7981 = vmatprep.subr.bf16.mxu0 0
        %7982 = vmatpush1.bf16.msra.mxu0 %v7306
        %7983 = vmatprep.subr.bf16.mxu0 0
        %7984 = vmatpush1.bf16.msra.mxu0 %v7307
        %7985 = vmatprep.subr.bf16.mxu0 0
        %7986 = vmatpush1.bf16.msra.mxu0 %v7308
        %7987 = vmatprep.subr.bf16.mxu0 0
        %7988 = vmatpush1.bf16.msra.mxu0 %v7309
        %7989 = vmatprep.subr.bf16.mxu0 0
        %7990 = vmatpush1.bf16.msra.mxu0 %v7310
        %7991 = vmatprep.subr.bf16.mxu0 0
        %7992 = vmatpush1.bf16.msra.mxu0 %v7311
        %7993 = vmatprep.subr.bf16.mxu0 0
        %7994 = vmatpush1.bf16.msra.mxu0 %v7312
        %7995 = vmatprep.subr.bf16.mxu0 0
        %7996 = vmatpush1.bf16.msra.mxu0 %v7313
        %7997 = vmatprep.subr.bf16.mxu0 0
        %7998 = vmatpush1.bf16.msra.mxu0 %v7314
        %7999 = vmatprep.subr.bf16.mxu0 0
        %8000 = vmatpush1.bf16.msra.mxu0 %v7315
        %8001 = vmatprep.subr.bf16.mxu0 0
        %8002 = vmatpush1.bf16.msra.mxu0 %v7316
        %8003 = vmatprep.subr.bf16.mxu0 0
        %8004 = vmatpush1.bf16.msra.mxu0 %v7317
        %8005 = vmatprep.subr.bf16.mxu0 0
        %8006 = vmatpush1.bf16.msra.mxu0 %v7318
        %8007 = vmatprep.subr.bf16.mxu0 0
        %8008 = vmatpush1.bf16.msra.mxu0 %v7319
        %8009 = vmatprep.mubr.bf16.mxu0 %v7177
        %8010 = vmatmul.mubr.bf16.gmra.mrb[0].mxu0 %v7176
        %v8011 = vpop.f32.mrb[0].mxu0
        %v8012 = vadd.f32 %v7972, %v8011
        %v8013 = vpop.f32.mrb[0].mxu0
        %v8014 = vpop.f32.mrb[0].mxu0
        %v8015 = vpop.f32.mrb[0].mxu0
        %8016 = vdwg.mxu0
        %8017 = vmatprep.subr.bf16.mxu0 0
        %8018 = vmatpush1.bf16.msra.mxu0 %v7320
        %8019 = vmatprep.subr.bf16.mxu0 0
        %8020 = vmatpush1.bf16.msra.mxu0 %v7321
        %8021 = vmatprep.subr.bf16.mxu0 0
        %8022 = vmatpush1.bf16.msra.mxu0 %v7322
        %8023 = vmatprep.subr.bf16.mxu0 0
        %8024 = vmatpush1.bf16.msra.mxu0 %v7323
        %8025 = vmatprep.subr.bf16.mxu0 0
        %8026 = vmatpush1.bf16.msra.mxu0 %v7324
        %8027 = vmatprep.subr.bf16.mxu0 0
        %8028 = vmatpush1.bf16.msra.mxu0 %v7325
        %8029 = vmatprep.subr.bf16.mxu0 0
        %8030 = vmatpush1.bf16.msra.mxu0 %v7326
        %8031 = vmatprep.subr.bf16.mxu0 0
        %8032 = vmatpush1.bf16.msra.mxu0 %v7327
        %8033 = vmatprep.subr.bf16.mxu0 0
        %8034 = vmatpush1.bf16.msra.mxu0 %v7328
        %8035 = vmatprep.subr.bf16.mxu0 0
        %8036 = vmatpush1.bf16.msra.mxu0 %v7329
        %8037 = vmatprep.subr.bf16.mxu0 0
        %8038 = vmatpush1.bf16.msra.mxu0 %v7330
        %8039 = vmatprep.subr.bf16.mxu0 0
        %8040 = vmatpush1.bf16.msra.mxu0 %v7331
        %8041 = vmatprep.subr.bf16.mxu0 0
        %8042 = vmatpush1.bf16.msra.mxu0 %v7332
        %8043 = vmatprep.subr.bf16.mxu0 0
        %8044 = vmatpush1.bf16.msra.mxu0 %v7333
        %8045 = vmatprep.subr.bf16.mxu0 0
        %8046 = vmatpush1.bf16.msra.mxu0 %v7334
        %8047 = vmatprep.subr.bf16.mxu0 0
        %8048 = vmatpush1.bf16.msra.mxu0 %v7335
        %8049 = vmatprep.mubr.bf16.mxu0 %v7179
        %8050 = vmatmul.mubr.bf16.gmra.mrb[0].mxu0 %v7178
        %v8051 = vpop.f32.mrb[0].mxu0
        %v8052 = vadd.f32 %v8012, %v8051
        %v8053 = vpop.f32.mrb[0].mxu0
        %v8054 = vpop.f32.mrb[0].mxu0
        %v8055 = vpop.f32.mrb[0].mxu0
        %8056 = vdwg.mxu0
        %8057 = vmatprep.subr.bf16.mxu0 0
        %8058 = vmatpush1.bf16.msra.mxu0 %v7336
        %8059 = vmatprep.subr.bf16.mxu0 0
        %8060 = vmatpush1.bf16.msra.mxu0 %v7337
        %8061 = vmatprep.subr.bf16.mxu0 0
        %8062 = vmatpush1.bf16.msra.mxu0 %v7338
        %8063 = vmatprep.subr.bf16.mxu0 0
        %8064 = vmatpush1.bf16.msra.mxu0 %v7339
        %8065 = vmatprep.subr.bf16.mxu0 0
        %8066 = vmatpush1.bf16.msra.mxu0 %v7340
        %8067 = vmatprep.subr.bf16.mxu0 0
        %8068 = vmatpush1.bf16.msra.mxu0 %v7341
        %8069 = vmatprep.subr.bf16.mxu0 0
        %8070 = vmatpush1.bf16.msra.mxu0 %v7342
        %8071 = vmatprep.subr.bf16.mxu0 0
        %8072 = vmatpush1.bf16.msra.mxu0 %v7343
        %8073 = vmatprep.subr.bf16.mxu0 0
        %8074 = vmatpush1.bf16.msra.mxu0 %v7344
        %8075 = vmatprep.subr.bf16.mxu0 0
        %8076 = vmatpush1.bf16.msra.mxu0 %v7345
        %8077 = vmatprep.subr.bf16.mxu0 0
        %8078 = vmatpush1.bf16.msra.mxu0 %v7346
        %8079 = vmatprep.subr.bf16.mxu0 0
        %8080 = vmatpush1.bf16.msra.mxu0 %v7347
        %8081 = vmatprep.subr.bf16.mxu0 0
        %8082 = vmatpush1.bf16.msra.mxu0 %v7348
        %8083 = vmatprep.subr.bf16.mxu0 0
        %8084 = vmatpush1.bf16.msra.mxu0 %v7349
        %8085 = vmatprep.subr.bf16.mxu0 0
        %8086 = vmatpush1.bf16.msra.mxu0 %v7350
        %8087 = vmatprep.subr.bf16.mxu0 0
        %8088 = vmatpush1.bf16.msra.mxu0 %v7351
        %8089 = vmatprep.mubr.bf16.mxu0 %v7181
        %8090 = vmatmul.mubr.bf16.gmra.mrb[0].mxu0 %v7180
        %v8091 = vpop.f32.mrb[0].mxu0
        %v8092 = vadd.f32 %v8052, %v8091
        %v8093 = vpop.f32.mrb[0].mxu0
        %v8094 = vpop.f32.mrb[0].mxu0
        %v8095 = vpop.f32.mrb[0].mxu0
        %8096 = vdwg.mxu0
        %8097 = vmatprep.subr.bf16.mxu0 0
        %8098 = vmatpush1.bf16.msra.mxu0 %v7352
        %8099 = vmatprep.subr.bf16.mxu0 0
        %8100 = vmatpush1.bf16.msra.mxu0 %v7353
        %8101 = vmatprep.subr.bf16.mxu0 0
        %8102 = vmatpush1.bf16.msra.mxu0 %v7354
        %8103 = vmatprep.subr.bf16.mxu0 0
        %8104 = vmatpush1.bf16.msra.mxu0 %v7355
        %8105 = vmatprep.subr.bf16.mxu0 0
        %8106 = vmatpush1.bf16.msra.mxu0 %v7356
        %8107 = vmatprep.subr.bf16.mxu0 0
        %8108 = vmatpush1.bf16.msra.mxu0 %v7357
        %8109 = vmatprep.subr.bf16.mxu0 0
        %8110 = vmatpush1.bf16.msra.mxu0 %v7358
        %8111 = vmatprep.subr.bf16.mxu0 0
        %8112 = vmatpush1.bf16.msra.mxu0 %v7359
        %8113 = vmatprep.subr.bf16.mxu0 0
        %8114 = vmatpush1.bf16.msra.mxu0 %v7360
        %8115 = vmatprep.subr.bf16.mxu0 0
        %8116 = vmatpush1.bf16.msra.mxu0 %v7361
        %8117 = vmatprep.subr.bf16.mxu0 0
        %8118 = vmatpush1.bf16.msra.mxu0 %v7362
        %8119 = vmatprep.subr.bf16.mxu0 0
        %8120 = vmatpush1.bf16.msra.mxu0 %v7363
        %8121 = vmatprep.subr.bf16.mxu0 0
        %8122 = vmatpush1.bf16.msra.mxu0 %v7364
        %8123 = vmatprep.subr.bf16.mxu0 0
        %8124 = vmatpush1.bf16.msra.mxu0 %v7365
        %8125 = vmatprep.subr.bf16.mxu0 0
        %8126 = vmatpush1.bf16.msra.mxu0 %v7366
        %8127 = vmatprep.subr.bf16.mxu0 0
        %8128 = vmatpush1.bf16.msra.mxu0 %v7367
        %8129 = vmatprep.mubr.bf16.mxu0 %v7183
        %8130 = vmatmul.mubr.bf16.gmra.mrb[0].mxu0 %v7182
        %v8131 = vpop.f32.mrb[0].mxu0
        %v8132 = vadd.f32 %v8092, %v8131
        %v8133 = vpop.f32.mrb[0].mxu0
        %v8134 = vpop.f32.mrb[0].mxu0
        %v8135 = vpop.f32.mrb[0].mxu0
        %8136 = vdwg.mxu0
        %8137 = vmatprep.subr.bf16.mxu0 0
        %8138 = vmatpush1.bf16.msra.mxu0 %v7368
        %8139 = vmatprep.subr.bf16.mxu0 0
        %8140 = vmatpush1.bf16.msra.mxu0 %v7369
        %8141 = vmatprep.subr.bf16.mxu0 0
        %8142 = vmatpush1.bf16.msra.mxu0 %v7370
        %8143 = vmatprep.subr.bf16.mxu0 0
        %8144 = vmatpush1.bf16.msra.mxu0 %v7371
        %8145 = vmatprep.subr.bf16.mxu0 0
        %8146 = vmatpush1.bf16.msra.mxu0 %v7372
        %8147 = vmatprep.subr.bf16.mxu0 0
        %8148 = vmatpush1.bf16.msra.mxu0 %v7373
        %8149 = vmatprep.subr.bf16.mxu0 0
        %8150 = vmatpush1.bf16.msra.mxu0 %v7374
        %8151 = vmatprep.subr.bf16.mxu0 0
        %8152 = vmatpush1.bf16.msra.mxu0 %v7375
        %8153 = vmatprep.subr.bf16.mxu0 0
        %8154 = vmatpush1.bf16.msra.mxu0 %v7376
        %8155 = vmatprep.subr.bf16.mxu0 0
        %8156 = vmatpush1.bf16.msra.mxu0 %v7377
        %8157 = vmatprep.subr.bf16.mxu0 0
        %8158 = vmatpush1.bf16.msra.mxu0 %v7378
        %8159 = vmatprep.subr.bf16.mxu0 0
        %8160 = vmatpush1.bf16.msra.mxu0 %v7379
        %8161 = vmatprep.subr.bf16.mxu0 0
        %8162 = vmatpush1.bf16.msra.mxu0 %v7380
        %8163 = vmatprep.subr.bf16.mxu0 0
        %8164 = vmatpush1.bf16.msra.mxu0 %v7381
        %8165 = vmatprep.subr.bf16.mxu0 0
        %8166 = vmatpush1.bf16.msra.mxu0 %v7382
        %8167 = vmatprep.subr.bf16.mxu0 0
        %8168 = vmatpush1.bf16.msra.mxu0 %v7383
        %8169 = vmatprep.mubr.bf16.mxu0 %v7185
        %8170 = vmatmul.mubr.bf16.gmra.mrb[0].mxu0 %v7184
        %v8171 = vpop.f32.mrb[0].mxu0
        %v8172 = vadd.f32 %v8132, %v8171
        %v8173 = vpop.f32.mrb[0].mxu0
        %v8174 = vpop.f32.mrb[0].mxu0
        %v8175 = vpop.f32.mrb[0].mxu0
        %8176 = vdwg.mxu0
        %8177 = vmatprep.subr.bf16.mxu0 0
        %8178 = vmatpush1.bf16.msra.mxu0 %v7384
        %8179 = vmatprep.subr.bf16.mxu0 0
        %8180 = vmatpush1.bf16.msra.mxu0 %v7385
        %8181 = vmatprep.subr.bf16.mxu0 0
        %8182 = vmatpush1.bf16.msra.mxu0 %v7386
        %8183 = vmatprep.subr.bf16.mxu0 0
        %8184 = vmatpush1.bf16.msra.mxu0 %v7387
        %8185 = vmatprep.subr.bf16.mxu0 0
        %8186 = vmatpush1.bf16.msra.mxu0 %v7388
        %8187 = vmatprep.subr.bf16.mxu0 0
        %8188 = vmatpush1.bf16.msra.mxu0 %v7389
        %8189 = vmatprep.subr.bf16.mxu0 0
        %8190 = vmatpush1.bf16.msra.mxu0 %v7390
        %8191 = vmatprep.subr.bf16.mxu0 0
        %8192 = vmatpush1.bf16.msra.mxu0 %v7391
        %8193 = vmatprep.subr.bf16.mxu0 0
        %8194 = vmatpush1.bf16.msra.mxu0 %v7392
        %8195 = vmatprep.subr.bf16.mxu0 0
        %8196 = vmatpush1.bf16.msra.mxu0 %v7393
        %8197 = vmatprep.subr.bf16.mxu0 0
        %8198 = vmatpush1.bf16.msra.mxu0 %v7394
        %8199 = vmatprep.subr.bf16.mxu0 0
        %8200 = vmatpush1.bf16.msra.mxu0 %v7395
        %8201 = vmatprep.subr.bf16.mxu0 0
        %8202 = vmatpush1.bf16.msra.mxu0 %v7396
        %8203 = vmatprep.subr.bf16.mxu0 0
        %8204 = vmatpush1.bf16.msra.mxu0 %v7397
        %8205 = vmatprep.subr.bf16.mxu0 0
        %8206 = vmatpush1.bf16.msra.mxu0 %v7398
        %8207 = vmatprep.subr.bf16.mxu0 0
        %8208 = vmatpush1.bf16.msra.mxu0 %v7399
        %8209 = vmatprep.mubr.bf16.mxu0 %v7187
        %8210 = vmatmul.mubr.bf16.gmra.mrb[0].mxu0 %v7186
        %v8211 = vpop.f32.mrb[0].mxu0
        %v8212 = vadd.f32 %v8172, %v8211
        %v8213 = vpop.f32.mrb[0].mxu0
        %v8214 = vpop.f32.mrb[0].mxu0
        %v8215 = vpop.f32.mrb[0].mxu0
        %8216 = vdwg.mxu0
        %8217 = vmatprep.subr.bf16.mxu0 0
        %8218 = vmatpush1.bf16.msra.mxu0 %v7400
        %8219 = vmatprep.subr.bf16.mxu0 0
        %8220 = vmatpush1.bf16.msra.mxu0 %v7401
        %8221 = vmatprep.subr.bf16.mxu0 0
        %8222 = vmatpush1.bf16.msra.mxu0 %v7402
        %8223 = vmatprep.subr.bf16.mxu0 0
        %8224 = vmatpush1.bf16.msra.mxu0 %v7403
        %8225 = vmatprep.subr.bf16.mxu0 0
        %8226 = vmatpush1.bf16.msra.mxu0 %v7404
        %8227 = vmatprep.subr.bf16.mxu0 0
        %8228 = vmatpush1.bf16.msra.mxu0 %v7405
        %8229 = vmatprep.subr.bf16.mxu0 0
        %8230 = vmatpush1.bf16.msra.mxu0 %v7406
        %8231 = vmatprep.subr.bf16.mxu0 0
        %8232 = vmatpush1.bf16.msra.mxu0 %v7407
        %8233 = vmatprep.subr.bf16.mxu0 0
        %8234 = vmatpush1.bf16.msra.mxu0 %v7408
        %8235 = vmatprep.subr.bf16.mxu0 0
        %8236 = vmatpush1.bf16.msra.mxu0 %v7409
        %8237 = vmatprep.subr.bf16.mxu0 0
        %8238 = vmatpush1.bf16.msra.mxu0 %v7410
        %8239 = vmatprep.subr.bf16.mxu0 0
        %8240 = vmatpush1.bf16.msra.mxu0 %v7411
        %8241 = vmatprep.subr.bf16.mxu0 0
        %8242 = vmatpush1.bf16.msra.mxu0 %v7412
        %8243 = vmatprep.subr.bf16.mxu0 0
        %8244 = vmatpush1.bf16.msra.mxu0 %v7413
        %8245 = vmatprep.subr.bf16.mxu0 0
        %8246 = vmatpush1.bf16.msra.mxu0 %v7414
        %8247 = vmatprep.subr.bf16.mxu0 0
        %8248 = vmatpush1.bf16.msra.mxu0 %v7415
        %8249 = vmatprep.mubr.bf16.mxu0 %v7189
        %8250 = vmatmul.mubr.bf16.gmra.mrb[0].mxu0 %v7188
        %v8251 = vpop.f32.mrb[0].mxu0
        %v8252 = vadd.f32 %v8212, %v8251
        %v8253 = vpop.f32.mrb[0].mxu0
        %v8254 = vpop.f32.mrb[0].mxu0
        %v8255 = vpop.f32.mrb[0].mxu0
        %8256 = vdwg.mxu0
        %8257 = vmatprep.subr.bf16.mxu0 0
        %8258 = vmatpush1.bf16.msra.mxu0 %v7416
        %8259 = vmatprep.subr.bf16.mxu0 0
        %8260 = vmatpush1.bf16.msra.mxu0 %v7417
        %8261 = vmatprep.subr.bf16.mxu0 0
        %8262 = vmatpush1.bf16.msra.mxu0 %v7418
        %8263 = vmatprep.subr.bf16.mxu0 0
        %8264 = vmatpush1.bf16.msra.mxu0 %v7419
        %8265 = vmatprep.subr.bf16.mxu0 0
        %8266 = vmatpush1.bf16.msra.mxu0 %v7420
        %8267 = vmatprep.subr.bf16.mxu0 0
        %8268 = vmatpush1.bf16.msra.mxu0 %v7421
        %8269 = vmatprep.subr.bf16.mxu0 0
        %8270 = vmatpush1.bf16.msra.mxu0 %v7422
        %8271 = vmatprep.subr.bf16.mxu0 0
        %8272 = vmatpush1.bf16.msra.mxu0 %v7423
        %8273 = vmatprep.subr.bf16.mxu0 0
        %8274 = vmatpush1.bf16.msra.mxu0 %v7424
        %8275 = vmatprep.subr.bf16.mxu0 0
        %8276 = vmatpush1.bf16.msra.mxu0 %v7425
        %8277 = vmatprep.subr.bf16.mxu0 0
        %8278 = vmatpush1.bf16.msra.mxu0 %v7426
        %8279 = vmatprep.subr.bf16.mxu0 0
        %8280 = vmatpush1.bf16.msra.mxu0 %v7427
        %8281 = vmatprep.subr.bf16.mxu0 0
        %8282 = vmatpush1.bf16.msra.mxu0 %v7428
        %8283 = vmatprep.subr.bf16.mxu0 0
        %8284 = vmatpush1.bf16.msra.mxu0 %v7429
        %8285 = vmatprep.subr.bf16.mxu0 0
        %8286 = vmatpush1.bf16.msra.mxu0 %v7430
        %8287 = vmatprep.subr.bf16.mxu0 0
        %8288 = vmatpush1.bf16.msra.mxu0 %v7431
        %8289 = vmatprep.mubr.bf16.mxu0 %v7191
        %8290 = vmatmul.mubr.bf16.gmra.mrb[0].mxu0 %v7190
        %v8291 = vpop.f32.mrb[0].mxu0
        %v8292 = vadd.f32 %v8252, %v8291
        %v8293 = vpop.f32.mrb[0].mxu0
        %v8294 = vpop.f32.mrb[0].mxu0
        %v8295 = vpop.f32.mrb[0].mxu0
        %8296 = vdwg.mxu0
        %8297 = vmatprep.subr.bf16.mxu0 0
        %8298 = vmatpush1.bf16.msra.mxu0 %v7432
        %8299 = vmatprep.subr.bf16.mxu0 0
        %8300 = vmatpush1.bf16.msra.mxu0 %v7433
        %8301 = vmatprep.subr.bf16.mxu0 0
        %8302 = vmatpush1.bf16.msra.mxu0 %v7434
        %8303 = vmatprep.subr.bf16.mxu0 0
        %8304 = vmatpush1.bf16.msra.mxu0 %v7435
        %8305 = vmatprep.subr.bf16.mxu0 0
        %8306 = vmatpush1.bf16.msra.mxu0 %v7436
        %8307 = vmatprep.subr.bf16.mxu0 0
        %8308 = vmatpush1.bf16.msra.mxu0 %v7437
        %8309 = vmatprep.subr.bf16.mxu0 0
        %8310 = vmatpush1.bf16.msra.mxu0 %v7438
        %8311 = vmatprep.subr.bf16.mxu0 0
        %8312 = vmatpush1.bf16.msra.mxu0 %v7439
        %8313 = vmatprep.subr.bf16.mxu0 0
        %8314 = vmatpush1.bf16.msra.mxu0 %v7440
        %8315 = vmatprep.subr.bf16.mxu0 0
        %8316 = vmatpush1.bf16.msra.mxu0 %v7441
        %8317 = vmatprep.subr.bf16.mxu0 0
        %8318 = vmatpush1.bf16.msra.mxu0 %v7442
        %8319 = vmatprep.subr.bf16.mxu0 0
        %8320 = vmatpush1.bf16.msra.mxu0 %v7443
        %8321 = vmatprep.subr.bf16.mxu0 0
        %8322 = vmatpush1.bf16.msra.mxu0 %v7444
        %8323 = vmatprep.subr.bf16.mxu0 0
        %8324 = vmatpush1.bf16.msra.mxu0 %v7445
        %8325 = vmatprep.subr.bf16.mxu0 0
        %8326 = vmatpush1.bf16.msra.mxu0 %v7446
        %8327 = vmatprep.subr.bf16.mxu0 0
        %8328 = vmatpush1.bf16.msra.mxu0 %v7447
        %8329 = vmatprep.mubr.bf16.mxu0 %v7193
        %8330 = vmatmul.mubr.bf16.gmra.mrb[0].mxu0 %v7192
        %v8331 = vpop.f32.mrb[0].mxu0
        %v8332 = vadd.f32 %v8292, %v8331
        %v8333 = vpop.f32.mrb[0].mxu0
        %v8334 = vpop.f32.mrb[0].mxu0
        %v8335 = vpop.f32.mrb[0].mxu0
        %8336 = vdwg.mxu0
        %8337 = vmatprep.subr.bf16.mxu0 0
        %8338 = vmatpush1.bf16.msra.mxu0 %v7448
        %8339 = vmatprep.subr.bf16.mxu0 0
        %8340 = vmatpush1.bf16.msra.mxu0 %v7449
        %8341 = vmatprep.subr.bf16.mxu0 0
        %8342 = vmatpush1.bf16.msra.mxu0 %v7450
        %8343 = vmatprep.subr.bf16.mxu0 0
        %8344 = vmatpush1.bf16.msra.mxu0 %v7451
        %8345 = vmatprep.subr.bf16.mxu0 0
        %8346 = vmatpush1.bf16.msra.mxu0 %v7452
        %8347 = vmatprep.subr.bf16.mxu0 0
        %8348 = vmatpush1.bf16.msra.mxu0 %v7453
        %8349 = vmatprep.subr.bf16.mxu0 0
        %8350 = vmatpush1.bf16.msra.mxu0 %v7454
        %8351 = vmatprep.subr.bf16.mxu0 0
        %8352 = vmatpush1.bf16.msra.mxu0 %v7455
        %8353 = vmatprep.subr.bf16.mxu0 0
        %8354 = vmatpush1.bf16.msra.mxu0 %v7456
        %8355 = vmatprep.subr.bf16.mxu0 0
        %8356 = vmatpush1.bf16.msra.mxu0 %v7457
        %8357 = vmatprep.subr.bf16.mxu0 0
        %8358 = vmatpush1.bf16.msra.mxu0 %v7458
        %8359 = vmatprep.subr.bf16.mxu0 0
        %8360 = vmatpush1.bf16.msra.mxu0 %v7459
        %8361 = vmatprep.subr.bf16.mxu0 0
        %8362 = vmatpush1.bf16.msra.mxu0 %v7460
        %8363 = vmatprep.subr.bf16.mxu0 0
        %8364 = vmatpush1.bf16.msra.mxu0 %v7461
        %8365 = vmatprep.subr.bf16.mxu0 0
        %8366 = vmatpush1.bf16.msra.mxu0 %v7462
        %8367 = vmatprep.subr.bf16.mxu0 0
        %8368 = vmatpush1.bf16.msra.mxu0 %v7463
        %8369 = vmatprep.mubr.bf16.mxu0 %v7195
        %8370 = vmatmul.mubr.bf16.gmra.mrb[0].mxu0 %v7194
        %v8371 = vpop.f32.mrb[0].mxu0
        %v8372 = vadd.f32 %v8332, %v8371
        %v8373 = vpop.f32.mrb[0].mxu0
        %v8374 = vpop.f32.mrb[0].mxu0
        %v8375 = vpop.f32.mrb[0].mxu0
        %8376 = vdwg.mxu0
        %8377 = vmatprep.subr.bf16.mxu0 0
        %8378 = vmatpush1.bf16.msra.mxu0 %v7464
        %8379 = vmatprep.subr.bf16.mxu0 0
        %8380 = vmatpush1.bf16.msra.mxu0 %v7465
        %8381 = vmatprep.subr.bf16.mxu0 0
        %8382 = vmatpush1.bf16.msra.mxu0 %v7466
        %8383 = vmatprep.subr.bf16.mxu0 0
        %8384 = vmatpush1.bf16.msra.mxu0 %v7467
        %8385 = vmatprep.subr.bf16.mxu0 0
        %8386 = vmatpush1.bf16.msra.mxu0 %v7468
        %8387 = vmatprep.subr.bf16.mxu0 0
        %8388 = vmatpush1.bf16.msra.mxu0 %v7469
        %8389 = vmatprep.subr.bf16.mxu0 0
        %8390 = vmatpush1.bf16.msra.mxu0 %v7470
        %8391 = vmatprep.subr.bf16.mxu0 0
        %8392 = vmatpush1.bf16.msra.mxu0 %v7471
        %8393 = vmatprep.subr.bf16.mxu0 0
        %8394 = vmatpush1.bf16.msra.mxu0 %v7472
        %8395 = vmatprep.subr.bf16.mxu0 0
        %8396 = vmatpush1.bf16.msra.mxu0 %v7473
        %8397 = vmatprep.subr.bf16.mxu0 0
        %8398 = vmatpush1.bf16.msra.mxu0 %v7474
        %8399 = vmatprep.subr.bf16.mxu0 0
        %8400 = vmatpush1.bf16.msra.mxu0 %v7475
        %8401 = vmatprep.subr.bf16.mxu0 0
        %8402 = vmatpush1.bf16.msra.mxu0 %v7476
        %8403 = vmatprep.subr.bf16.mxu0 0
        %8404 = vmatpush1.bf16.msra.mxu0 %v7477
        %8405 = vmatprep.subr.bf16.mxu0 0
        %8406 = vmatpush1.bf16.msra.mxu0 %v7478
        %8407 = vmatprep.subr.bf16.mxu0 0
        %8408 = vmatpush1.bf16.msra.mxu0 %v7479
        %8409 = vmatprep.mubr.bf16.mxu0 %v7197
        %8410 = vmatmul.mubr.bf16.gmra.mrb[0].mxu0 %v7196
        %v8411 = vpop.f32.mrb[0].mxu0
        %v8412 = vadd.f32 %v8372, %v8411
        %v8413 = vpop.f32.mrb[0].mxu0
        %v8414 = vpop.f32.mrb[0].mxu0
        %v8415 = vpop.f32.mrb[0].mxu0
        %8416 = vdwg.mxu0
        %8417 = vmatprep.subr.bf16.mxu0 0
        %8418 = vmatpush1.bf16.msra.mxu0 %v7480
        %8419 = vmatprep.subr.bf16.mxu0 0
        %8420 = vmatpush1.bf16.msra.mxu0 %v7481
        %8421 = vmatprep.subr.bf16.mxu0 0
        %8422 = vmatpush1.bf16.msra.mxu0 %v7482
        %8423 = vmatprep.subr.bf16.mxu0 0
        %8424 = vmatpush1.bf16.msra.mxu0 %v7483
        %8425 = vmatprep.subr.bf16.mxu0 0
        %8426 = vmatpush1.bf16.msra.mxu0 %v7484
        %8427 = vmatprep.subr.bf16.mxu0 0
        %8428 = vmatpush1.bf16.msra.mxu0 %v7485
        %8429 = vmatprep.subr.bf16.mxu0 0
        %8430 = vmatpush1.bf16.msra.mxu0 %v7486
        %8431 = vmatprep.subr.bf16.mxu0 0
        %8432 = vmatpush1.bf16.msra.mxu0 %v7487
        %8433 = vmatprep.subr.bf16.mxu0 0
        %8434 = vmatpush1.bf16.msra.mxu0 %v7488
        %8435 = vmatprep.subr.bf16.mxu0 0
        %8436 = vmatpush1.bf16.msra.mxu0 %v7489
        %8437 = vmatprep.subr.bf16.mxu0 0
        %8438 = vmatpush1.bf16.msra.mxu0 %v7490
        %8439 = vmatprep.subr.bf16.mxu0 0
        %8440 = vmatpush1.bf16.msra.mxu0 %v7491
        %8441 = vmatprep.subr.bf16.mxu0 0
        %8442 = vmatpush1.bf16.msra.mxu0 %v7492
        %8443 = vmatprep.subr.bf16.mxu0 0
        %8444 = vmatpush1.bf16.msra.mxu0 %v7493
        %8445 = vmatprep.subr.bf16.mxu0 0
        %8446 = vmatpush1.bf16.msra.mxu0 %v7494
        %8447 = vmatprep.subr.bf16.mxu0 0
        %8448 = vmatpush1.bf16.msra.mxu0 %v7495
        %8449 = vmatprep.mubr.bf16.mxu0 %v7199
        %8450 = vmatmul.mubr.bf16.gmra.mrb[0].mxu0 %v7198
        %v8451 = vpop.f32.mrb[0].mxu0
        %v8452 = vadd.f32 %v8412, %v8451
        %v8453 = vpop.f32.mrb[0].mxu0
        %v8454 = vpop.f32.mrb[0].mxu0
        %v8455 = vpop.f32.mrb[0].mxu0
        %8456 = vdwg.mxu0
        %8457 = vmatprep.subr.bf16.mxu0 0
        %8458 = vmatpush1.bf16.msra.mxu0 %v7496
        %8459 = vmatprep.subr.bf16.mxu0 0
        %8460 = vmatpush1.bf16.msra.mxu0 %v7497
        %8461 = vmatprep.subr.bf16.mxu0 0
        %8462 = vmatpush1.bf16.msra.mxu0 %v7498
        %8463 = vmatprep.subr.bf16.mxu0 0
        %8464 = vmatpush1.bf16.msra.mxu0 %v7499
        %8465 = vmatprep.subr.bf16.mxu0 0
        %8466 = vmatpush1.bf16.msra.mxu0 %v7500
        %8467 = vmatprep.subr.bf16.mxu0 0
        %8468 = vmatpush1.bf16.msra.mxu0 %v7501
        %8469 = vmatprep.subr.bf16.mxu0 0
        %8470 = vmatpush1.bf16.msra.mxu0 %v7502
        %8471 = vmatprep.subr.bf16.mxu0 0
        %8472 = vmatpush1.bf16.msra.mxu0 %v7503
        %8473 = vmatprep.subr.bf16.mxu0 0
        %8474 = vmatpush1.bf16.msra.mxu0 %v7504
        %8475 = vmatprep.subr.bf16.mxu0 0
        %8476 = vmatpush1.bf16.msra.mxu0 %v7505
        %8477 = vmatprep.subr.bf16.mxu0 0
        %8478 = vmatpush1.bf16.msra.mxu0 %v7506
        %8479 = vmatprep.subr.bf16.mxu0 0
        %8480 = vmatpush1.bf16.msra.mxu0 %v7507
        %8481 = vmatprep.subr.bf16.mxu0 0
        %8482 = vmatpush1.bf16.msra.mxu0 %v7508
        %8483 = vmatprep.subr.bf16.mxu0 0
        %8484 = vmatpush1.bf16.msra.mxu0 %v7509
        %8485 = vmatprep.subr.bf16.mxu0 0
        %8486 = vmatpush1.bf16.msra.mxu0 %v7510
        %8487 = vmatprep.subr.bf16.mxu0 0
        %8488 = vmatpush1.bf16.msra.mxu0 %v7511
        %8489 = vmatprep.mubr.bf16.mxu0 %v7201
        %8490 = vmatmul.mubr.bf16.gmra.mrb[0].mxu0 %v7200
        %v8491 = vpop.f32.mrb[0].mxu0
        %v8492 = vadd.f32 %v8452, %v8491
        %v8493 = vpop.f32.mrb[0].mxu0
        %v8494 = vpop.f32.mrb[0].mxu0
        %v8495 = vpop.f32.mrb[0].mxu0
        %8496 = vdwg.mxu0
        %8497 = vmatprep.subr.bf16.mxu0 0
        %8498 = vmatpush1.bf16.msra.mxu0 %v7512
        %8499 = vmatprep.subr.bf16.mxu0 0
        %8500 = vmatpush1.bf16.msra.mxu0 %v7513
        %8501 = vmatprep.subr.bf16.mxu0 0
        %8502 = vmatpush1.bf16.msra.mxu0 %v7514
        %8503 = vmatprep.subr.bf16.mxu0 0
        %8504 = vmatpush1.bf16.msra.mxu0 %v7515
        %8505 = vmatprep.subr.bf16.mxu0 0
        %8506 = vmatpush1.bf16.msra.mxu0 %v7516
        %8507 = vmatprep.subr.bf16.mxu0 0
        %8508 = vmatpush1.bf16.msra.mxu0 %v7517
        %8509 = vmatprep.subr.bf16.mxu0 0
        %8510 = vmatpush1.bf16.msra.mxu0 %v7518
        %8511 = vmatprep.subr.bf16.mxu0 0
        %8512 = vmatpush1.bf16.msra.mxu0 %v7519
        %8513 = vmatprep.subr.bf16.mxu0 0
        %8514 = vmatpush1.bf16.msra.mxu0 %v7520
        %8515 = vmatprep.subr.bf16.mxu0 0
        %8516 = vmatpush1.bf16.msra.mxu0 %v7521
        %8517 = vmatprep.subr.bf16.mxu0 0
        %8518 = vmatpush1.bf16.msra.mxu0 %v7522
        %8519 = vmatprep.subr.bf16.mxu0 0
        %8520 = vmatpush1.bf16.msra.mxu0 %v7523
        %8521 = vmatprep.subr.bf16.mxu0 0
        %8522 = vmatpush1.bf16.msra.mxu0 %v7524
        %8523 = vmatprep.subr.bf16.mxu0 0
        %8524 = vmatpush1.bf16.msra.mxu0 %v7525
        %8525 = vmatprep.subr.bf16.mxu0 0
        %8526 = vmatpush1.bf16.msra.mxu0 %v7526
        %8527 = vmatprep.subr.bf16.mxu0 0
        %8528 = vmatpush1.bf16.msra.mxu0 %v7527
        %8529 = vmatprep.mubr.bf16.mxu0 %v7203
        %8530 = vmatmul.mubr.bf16.gmra.mrb[0].mxu0 %v7202
        %v8531 = vpop.f32.mrb[0].mxu0
        %v8532 = vadd.f32 %v8492, %v8531
        %v8533 = vpop.f32.mrb[0].mxu0
        %v8534 = vpop.f32.mrb[0].mxu0
        %v8535 = vpop.f32.mrb[0].mxu0
        %8536 = vdwg.mxu0
        %8537 = vmatprep.subr.bf16.mxu0 0
        %8538 = vmatpush1.bf16.msra.mxu0 %v7528
        %8539 = vmatprep.subr.bf16.mxu0 0
        %8540 = vmatpush1.bf16.msra.mxu0 %v7529
        %8541 = vmatprep.subr.bf16.mxu0 0
        %8542 = vmatpush1.bf16.msra.mxu0 %v7530
        %8543 = vmatprep.subr.bf16.mxu0 0
        %8544 = vmatpush1.bf16.msra.mxu0 %v7531
        %8545 = vmatprep.subr.bf16.mxu0 0
        %8546 = vmatpush1.bf16.msra.mxu0 %v7532
        %8547 = vmatprep.subr.bf16.mxu0 0
        %8548 = vmatpush1.bf16.msra.mxu0 %v7533
        %8549 = vmatprep.subr.bf16.mxu0 0
        %8550 = vmatpush1.bf16.msra.mxu0 %v7534
        %8551 = vmatprep.subr.bf16.mxu0 0
        %8552 = vmatpush1.bf16.msra.mxu0 %v7535
        %8553 = vmatprep.subr.bf16.mxu0 0
        %8554 = vmatpush1.bf16.msra.mxu0 %v7536
        %8555 = vmatprep.subr.bf16.mxu0 0
        %8556 = vmatpush1.bf16.msra.mxu0 %v7537
        %8557 = vmatprep.subr.bf16.mxu0 0
        %8558 = vmatpush1.bf16.msra.mxu0 %v7538
        %8559 = vmatprep.subr.bf16.mxu0 0
        %8560 = vmatpush1.bf16.msra.mxu0 %v7539
        %8561 = vmatprep.subr.bf16.mxu0 0
        %8562 = vmatpush1.bf16.msra.mxu0 %v7540
        %8563 = vmatprep.subr.bf16.mxu0 0
        %8564 = vmatpush1.bf16.msra.mxu0 %v7541
        %8565 = vmatprep.subr.bf16.mxu0 0
        %8566 = vmatpush1.bf16.msra.mxu0 %v7542
        %8567 = vmatprep.subr.bf16.mxu0 0
        %8568 = vmatpush1.bf16.msra.mxu0 %v7543
        %8569 = vmatprep.mubr.bf16.mxu0 %v7205
        %8570 = vmatmul.mubr.bf16.gmra.mrb[0].mxu0 %v7204
        %v8571 = vpop.f32.mrb[0].mxu0
        %v8572 = vadd.f32 %v8532, %v8571
        %v8573 = vpop.f32.mrb[0].mxu0
        %v8574 = vpop.f32.mrb[0].mxu0
        %v8575 = vpop.f32.mrb[0].mxu0
        %8576 = vdwg.mxu0
        %8577 = vmatprep.subr.bf16.mxu0 0
        %8578 = vmatpush1.bf16.msra.mxu0 %v7544
        %8579 = vmatprep.subr.bf16.mxu0 0
        %8580 = vmatpush1.bf16.msra.mxu0 %v7545
        %8581 = vmatprep.subr.bf16.mxu0 0
        %8582 = vmatpush1.bf16.msra.mxu0 %v7546
        %8583 = vmatprep.subr.bf16.mxu0 0
        %8584 = vmatpush1.bf16.msra.mxu0 %v7547
        %8585 = vmatprep.subr.bf16.mxu0 0
        %8586 = vmatpush1.bf16.msra.mxu0 %v7548
        %8587 = vmatprep.subr.bf16.mxu0 0
        %8588 = vmatpush1.bf16.msra.mxu0 %v7549
        %8589 = vmatprep.subr.bf16.mxu0 0
        %8590 = vmatpush1.bf16.msra.mxu0 %v7550
        %8591 = vmatprep.subr.bf16.mxu0 0
        %8592 = vmatpush1.bf16.msra.mxu0 %v7551
        %8593 = vmatprep.subr.bf16.mxu0 0
        %8594 = vmatpush1.bf16.msra.mxu0 %v7552
        %8595 = vmatprep.subr.bf16.mxu0 0
        %8596 = vmatpush1.bf16.msra.mxu0 %v7553
        %8597 = vmatprep.subr.bf16.mxu0 0
        %8598 = vmatpush1.bf16.msra.mxu0 %v7554
        %8599 = vmatprep.subr.bf16.mxu0 0
        %8600 = vmatpush1.bf16.msra.mxu0 %v7555
        %8601 = vmatprep.subr.bf16.mxu0 0
        %8602 = vmatpush1.bf16.msra.mxu0 %v7556
        %8603 = vmatprep.subr.bf16.mxu0 0
        %8604 = vmatpush1.bf16.msra.mxu0 %v7557
        %8605 = vmatprep.subr.bf16.mxu0 0
        %8606 = vmatpush1.bf16.msra.mxu0 %v7558
        %8607 = vmatprep.subr.bf16.mxu0 0
        %8608 = vmatpush1.bf16.msra.mxu0 %v7559
        %8609 = vmatprep.mubr.bf16.mxu0 %v7207
        %8610 = vmatmul.mubr.bf16.gmra.mrb[0].mxu0 %v7206
        %v8611 = vpop.f32.mrb[0].mxu0
        %v8612 = vadd.f32 %v8572, %v8611
        %v8613 = vpop.f32.mrb[0].mxu0
        %v8614 = vpop.f32.mrb[0].mxu0
        %v8615 = vpop.f32.mrb[0].mxu0
        %8616 = vdwg.mxu0
        %8617 = vmatprep.subr.bf16.mxu0 0
        %8618 = vmatpush1.bf16.msra.mxu0 %v7560
        %8619 = vmatprep.subr.bf16.mxu0 0
        %8620 = vmatpush1.bf16.msra.mxu0 %v7561
        %8621 = vmatprep.subr.bf16.mxu0 0
        %8622 = vmatpush1.bf16.msra.mxu0 %v7562
        %8623 = vmatprep.subr.bf16.mxu0 0
        %8624 = vmatpush1.bf16.msra.mxu0 %v7563
        %8625 = vmatprep.subr.bf16.mxu0 0
        %8626 = vmatpush1.bf16.msra.mxu0 %v7564
        %8627 = vmatprep.subr.bf16.mxu0 0
        %8628 = vmatpush1.bf16.msra.mxu0 %v7565
        %8629 = vmatprep.subr.bf16.mxu0 0
        %8630 = vmatpush1.bf16.msra.mxu0 %v7566
        %8631 = vmatprep.subr.bf16.mxu0 0
        %8632 = vmatpush1.bf16.msra.mxu0 %v7567
        %8633 = vmatprep.subr.bf16.mxu0 0
        %8634 = vmatpush1.bf16.msra.mxu0 %v7568
        %8635 = vmatprep.subr.bf16.mxu0 0
        %8636 = vmatpush1.bf16.msra.mxu0 %v7569
        %8637 = vmatprep.subr.bf16.mxu0 0
        %8638 = vmatpush1.bf16.msra.mxu0 %v7570
        %8639 = vmatprep.subr.bf16.mxu0 0
        %8640 = vmatpush1.bf16.msra.mxu0 %v7571
        %8641 = vmatprep.subr.bf16.mxu0 0
        %8642 = vmatpush1.bf16.msra.mxu0 %v7572
        %8643 = vmatprep.subr.bf16.mxu0 0
        %8644 = vmatpush1.bf16.msra.mxu0 %v7573
        %8645 = vmatprep.subr.bf16.mxu0 0
        %8646 = vmatpush1.bf16.msra.mxu0 %v7574
        %8647 = vmatprep.subr.bf16.mxu0 0
        %8648 = vmatpush1.bf16.msra.mxu0 %v7575
        %8649 = vmatprep.mubr.bf16.mxu0 %v7209
        %8650 = vmatmul.mubr.bf16.gmra.mrb[0].mxu0 %v7208
        %v8651 = vpop.f32.mrb[0].mxu0
        %v8652 = vadd.f32 %v8612, %v8651
        %v8653 = vpop.f32.mrb[0].mxu0
        %v8654 = vpop.f32.mrb[0].mxu0
        %v8655 = vpop.f32.mrb[0].mxu0
        %8656 = vdwg.mxu0
        %8657 = vmatprep.subr.bf16.mxu0 0
        %8658 = vmatpush1.bf16.msra.mxu0 %v7576
        %8659 = vmatprep.subr.bf16.mxu0 0
        %8660 = vmatpush1.bf16.msra.mxu0 %v7577
        %8661 = vmatprep.subr.bf16.mxu0 0
        %8662 = vmatpush1.bf16.msra.mxu0 %v7578
        %8663 = vmatprep.subr.bf16.mxu0 0
        %8664 = vmatpush1.bf16.msra.mxu0 %v7579
        %8665 = vmatprep.subr.bf16.mxu0 0
        %8666 = vmatpush1.bf16.msra.mxu0 %v7580
        %8667 = vmatprep.subr.bf16.mxu0 0
        %8668 = vmatpush1.bf16.msra.mxu0 %v7581
        %8669 = vmatprep.subr.bf16.mxu0 0
        %8670 = vmatpush1.bf16.msra.mxu0 %v7582
        %8671 = vmatprep.subr.bf16.mxu0 0
        %8672 = vmatpush1.bf16.msra.mxu0 %v7583
        %8673 = vmatprep.subr.bf16.mxu0 0
        %8674 = vmatpush1.bf16.msra.mxu0 %v7584
        %8675 = vmatprep.subr.bf16.mxu0 0
        %8676 = vmatpush1.bf16.msra.mxu0 %v7585
        %8677 = vmatprep.subr.bf16.mxu0 0
        %8678 = vmatpush1.bf16.msra.mxu0 %v7586
        %8679 = vmatprep.subr.bf16.mxu0 0
        %8680 = vmatpush1.bf16.msra.mxu0 %v7587
        %8681 = vmatprep.subr.bf16.mxu0 0
        %8682 = vmatpush1.bf16.msra.mxu0 %v7588
        %8683 = vmatprep.subr.bf16.mxu0 0
        %8684 = vmatpush1.bf16.msra.mxu0 %v7589
        %8685 = vmatprep.subr.bf16.mxu0 0
        %8686 = vmatpush1.bf16.msra.mxu0 %v7590
        %8687 = vmatprep.subr.bf16.mxu0 0
        %8688 = vmatpush1.bf16.msra.mxu0 %v7591
        %8689 = vmatprep.mubr.bf16.mxu0 %v7211
        %8690 = vmatmul.mubr.bf16.gmra.mrb[0].mxu0 %v7210
        %v8691 = vpop.f32.mrb[0].mxu0
        %v8692 = vadd.f32 %v8652, %v8691
        %v8693 = vpop.f32.mrb[0].mxu0
        %v8694 = vpop.f32.mrb[0].mxu0
        %v8695 = vpop.f32.mrb[0].mxu0
        %8696 = vdwg.mxu0
        %8697 = vmatprep.subr.bf16.mxu0 0
        %8698 = vmatpush1.bf16.msra.mxu0 %v7592
        %8699 = vmatprep.subr.bf16.mxu0 0
        %8700 = vmatpush1.bf16.msra.mxu0 %v7593
        %8701 = vmatprep.subr.bf16.mxu0 0
        %8702 = vmatpush1.bf16.msra.mxu0 %v7594
        %8703 = vmatprep.subr.bf16.mxu0 0
        %8704 = vmatpush1.bf16.msra.mxu0 %v7595
        %8705 = vmatprep.subr.bf16.mxu0 0
        %8706 = vmatpush1.bf16.msra.mxu0 %v7596
        %8707 = vmatprep.subr.bf16.mxu0 0
        %8708 = vmatpush1.bf16.msra.mxu0 %v7597
        %8709 = vmatprep.subr.bf16.mxu0 0
        %8710 = vmatpush1.bf16.msra.mxu0 %v7598
        %8711 = vmatprep.subr.bf16.mxu0 0
        %8712 = vmatpush1.bf16.msra.mxu0 %v7599
        %8713 = vmatprep.subr.bf16.mxu0 0
        %8714 = vmatpush1.bf16.msra.mxu0 %v7600
        %8715 = vmatprep.subr.bf16.mxu0 0
        %8716 = vmatpush1.bf16.msra.mxu0 %v7601
        %8717 = vmatprep.subr.bf16.mxu0 0
        %8718 = vmatpush1.bf16.msra.mxu0 %v7602
        %8719 = vmatprep.subr.bf16.mxu0 0
        %8720 = vmatpush1.bf16.msra.mxu0 %v7603
        %8721 = vmatprep.subr.bf16.mxu0 0
        %8722 = vmatpush1.bf16.msra.mxu0 %v7604
        %8723 = vmatprep.subr.bf16.mxu0 0
        %8724 = vmatpush1.bf16.msra.mxu0 %v7605
        %8725 = vmatprep.subr.bf16.mxu0 0
        %8726 = vmatpush1.bf16.msra.mxu0 %v7606
        %8727 = vmatprep.subr.bf16.mxu0 0
        %8728 = vmatpush1.bf16.msra.mxu0 %v7607
        %8729 = vmatprep.mubr.bf16.mxu0 %v7213
        %8730 = vmatmul.mubr.bf16.gmra.mrb[0].mxu0 %v7212
        %v8731 = vpop.f32.mrb[0].mxu0
        %v8732 = vadd.f32 %v8692, %v8731
        %v8733 = vpop.f32.mrb[0].mxu0
        %v8734 = vpop.f32.mrb[0].mxu0
        %v8735 = vpop.f32.mrb[0].mxu0
        %8736 = vdwg.mxu0
        %8737 = vmatprep.subr.bf16.mxu0 0
        %8738 = vmatpush1.bf16.msra.mxu0 %v7608
        %8739 = vmatprep.subr.bf16.mxu0 0
        %8740 = vmatpush1.bf16.msra.mxu0 %v7609
        %8741 = vmatprep.subr.bf16.mxu0 0
        %8742 = vmatpush1.bf16.msra.mxu0 %v7610
        %8743 = vmatprep.subr.bf16.mxu0 0
        %8744 = vmatpush1.bf16.msra.mxu0 %v7611
        %8745 = vmatprep.subr.bf16.mxu0 0
        %8746 = vmatpush1.bf16.msra.mxu0 %v7612
        %8747 = vmatprep.subr.bf16.mxu0 0
        %8748 = vmatpush1.bf16.msra.mxu0 %v7613
        %8749 = vmatprep.subr.bf16.mxu0 0
        %8750 = vmatpush1.bf16.msra.mxu0 %v7614
        %8751 = vmatprep.subr.bf16.mxu0 0
        %8752 = vmatpush1.bf16.msra.mxu0 %v7615
        %8753 = vmatprep.subr.bf16.mxu0 0
        %8754 = vmatpush1.bf16.msra.mxu0 %v7616
        %8755 = vmatprep.subr.bf16.mxu0 0
        %8756 = vmatpush1.bf16.msra.mxu0 %v7617
        %8757 = vmatprep.subr.bf16.mxu0 0
        %8758 = vmatpush1.bf16.msra.mxu0 %v7618
        %8759 = vmatprep.subr.bf16.mxu0 0
        %8760 = vmatpush1.bf16.msra.mxu0 %v7619
        %8761 = vmatprep.subr.bf16.mxu0 0
        %8762 = vmatpush1.bf16.msra.mxu0 %v7620
        %8763 = vmatprep.subr.bf16.mxu0 0
        %8764 = vmatpush1.bf16.msra.mxu0 %v7621
        %8765 = vmatprep.subr.bf16.mxu0 0
        %8766 = vmatpush1.bf16.msra.mxu0 %v7622
        %8767 = vmatprep.subr.bf16.mxu0 0
        %8768 = vmatpush1.bf16.msra.mxu0 %v7623
        %8769 = vmatprep.mubr.bf16.mxu0 %v7215
        %8770 = vmatmul.mubr.bf16.gmra.mrb[0].mxu0 %v7214
        %v8771 = vpop.f32.mrb[0].mxu0
        %v8772 = vadd.f32 %v8732, %v8771
        %v8773 = vpop.f32.mrb[0].mxu0
        %v8774 = vpop.f32.mrb[0].mxu0
        %v8775 = vpop.f32.mrb[0].mxu0
        %8776 = vdwg.mxu0
        %8777 = vmatprep.subr.bf16.mxu0 0
        %8778 = vmatpush1.bf16.msra.mxu0 %v7624
        %8779 = vmatprep.subr.bf16.mxu0 0
        %8780 = vmatpush1.bf16.msra.mxu0 %v7625
        %8781 = vmatprep.subr.bf16.mxu0 0
        %8782 = vmatpush1.bf16.msra.mxu0 %v7626
        %8783 = vmatprep.subr.bf16.mxu0 0
        %8784 = vmatpush1.bf16.msra.mxu0 %v7627
        %8785 = vmatprep.subr.bf16.mxu0 0
        %8786 = vmatpush1.bf16.msra.mxu0 %v7628
        %8787 = vmatprep.subr.bf16.mxu0 0
        %8788 = vmatpush1.bf16.msra.mxu0 %v7629
        %8789 = vmatprep.subr.bf16.mxu0 0
        %8790 = vmatpush1.bf16.msra.mxu0 %v7630
        %8791 = vmatprep.subr.bf16.mxu0 0
        %8792 = vmatpush1.bf16.msra.mxu0 %v7631
        %8793 = vmatprep.subr.bf16.mxu0 0
        %8794 = vmatpush1.bf16.msra.mxu0 %v7632
        %8795 = vmatprep.subr.bf16.mxu0 0
        %8796 = vmatpush1.bf16.msra.mxu0 %v7633
        %8797 = vmatprep.subr.bf16.mxu0 0
        %8798 = vmatpush1.bf16.msra.mxu0 %v7634
        %8799 = vmatprep.subr.bf16.mxu0 0
        %8800 = vmatpush1.bf16.msra.mxu0 %v7635
        %8801 = vmatprep.subr.bf16.mxu0 0
        %8802 = vmatpush1.bf16.msra.mxu0 %v7636
        %8803 = vmatprep.subr.bf16.mxu0 0
        %8804 = vmatpush1.bf16.msra.mxu0 %v7637
        %8805 = vmatprep.subr.bf16.mxu0 0
        %8806 = vmatpush1.bf16.msra.mxu0 %v7638
        %8807 = vmatprep.subr.bf16.mxu0 0
        %8808 = vmatpush1.bf16.msra.mxu0 %v7639
        %8809 = vmatprep.mubr.bf16.mxu0 %v7217
        %8810 = vmatmul.mubr.bf16.gmra.mrb[0].mxu0 %v7216
        %v8811 = vpop.f32.mrb[0].mxu0
        %v8812 = vadd.f32 %v8772, %v8811
        %v8813 = vpop.f32.mrb[0].mxu0
        %v8814 = vpop.f32.mrb[0].mxu0
        %v8815 = vpop.f32.mrb[0].mxu0
        %8816 = vdwg.mxu0
        %8817 = vmatprep.subr.bf16.mxu0 0
        %8818 = vmatpush1.bf16.msra.mxu0 %v7640
        %8819 = vmatprep.subr.bf16.mxu0 0
        %8820 = vmatpush1.bf16.msra.mxu0 %v7641
        %8821 = vmatprep.subr.bf16.mxu0 0
        %8822 = vmatpush1.bf16.msra.mxu0 %v7642
        %8823 = vmatprep.subr.bf16.mxu0 0
        %8824 = vmatpush1.bf16.msra.mxu0 %v7643
        %8825 = vmatprep.subr.bf16.mxu0 0
        %8826 = vmatpush1.bf16.msra.mxu0 %v7644
        %8827 = vmatprep.subr.bf16.mxu0 0
        %8828 = vmatpush1.bf16.msra.mxu0 %v7645
        %8829 = vmatprep.subr.bf16.mxu0 0
        %8830 = vmatpush1.bf16.msra.mxu0 %v7646
        %8831 = vmatprep.subr.bf16.mxu0 0
        %8832 = vmatpush1.bf16.msra.mxu0 %v7647
        %8833 = vmatprep.subr.bf16.mxu0 0
        %8834 = vmatpush1.bf16.msra.mxu0 %v7648
        %8835 = vmatprep.subr.bf16.mxu0 0
        %8836 = vmatpush1.bf16.msra.mxu0 %v7649
        %8837 = vmatprep.subr.bf16.mxu0 0
        %8838 = vmatpush1.bf16.msra.mxu0 %v7650
        %8839 = vmatprep.subr.bf16.mxu0 0
        %8840 = vmatpush1.bf16.msra.mxu0 %v7651
        %8841 = vmatprep.subr.bf16.mxu0 0
        %8842 = vmatpush1.bf16.msra.mxu0 %v7652
        %8843 = vmatprep.subr.bf16.mxu0 0
        %8844 = vmatpush1.bf16.msra.mxu0 %v7653
        %8845 = vmatprep.subr.bf16.mxu0 0
        %8846 = vmatpush1.bf16.msra.mxu0 %v7654
        %8847 = vmatprep.subr.bf16.mxu0 0
        %8848 = vmatpush1.bf16.msra.mxu0 %v7655
        %8849 = vmatprep.mubr.bf16.mxu0 %v7219
        %8850 = vmatmul.mubr.bf16.gmra.mrb[0].mxu0 %v7218
        %v8851 = vpop.f32.mrb[0].mxu0
        %v8852 = vadd.f32 %v8812, %v8851
        %v8853 = vpop.f32.mrb[0].mxu0
        %v8854 = vpop.f32.mrb[0].mxu0
        %v8855 = vpop.f32.mrb[0].mxu0
        %8856 = vdwg.mxu0
        %8857 = vmatprep.subr.bf16.mxu0 0
        %8858 = vmatpush1.bf16.msra.mxu0 %v7656
        %8859 = vmatprep.subr.bf16.mxu0 0
        %8860 = vmatpush1.bf16.msra.mxu0 %v7657
        %8861 = vmatprep.subr.bf16.mxu0 0
        %8862 = vmatpush1.bf16.msra.mxu0 %v7658
        %8863 = vmatprep.subr.bf16.mxu0 0
        %8864 = vmatpush1.bf16.msra.mxu0 %v7659
        %8865 = vmatprep.subr.bf16.mxu0 0
        %8866 = vmatpush1.bf16.msra.mxu0 %v7660
        %8867 = vmatprep.subr.bf16.mxu0 0
        %8868 = vmatpush1.bf16.msra.mxu0 %v7661
        %8869 = vmatprep.subr.bf16.mxu0 0
        %8870 = vmatpush1.bf16.msra.mxu0 %v7662
        %8871 = vmatprep.subr.bf16.mxu0 0
        %8872 = vmatpush1.bf16.msra.mxu0 %v7663
        %8873 = vmatprep.subr.bf16.mxu0 0
        %8874 = vmatpush1.bf16.msra.mxu0 %v7664
        %8875 = vmatprep.subr.bf16.mxu0 0
        %8876 = vmatpush1.bf16.msra.mxu0 %v7665
        %8877 = vmatprep.subr.bf16.mxu0 0
        %8878 = vmatpush1.bf16.msra.mxu0 %v7666
        %8879 = vmatprep.subr.bf16.mxu0 0
        %8880 = vmatpush1.bf16.msra.mxu0 %v7667
        %8881 = vmatprep.subr.bf16.mxu0 0
        %8882 = vmatpush1.bf16.msra.mxu0 %v7668
        %8883 = vmatprep.subr.bf16.mxu0 0
        %8884 = vmatpush1.bf16.msra.mxu0 %v7669
        %8885 = vmatprep.subr.bf16.mxu0 0
        %8886 = vmatpush1.bf16.msra.mxu0 %v7670
        %8887 = vmatprep.subr.bf16.mxu0 0
        %8888 = vmatpush1.bf16.msra.mxu0 %v7671
        %8889 = vmatprep.mubr.bf16.mxu0 %v7221
        %8890 = vmatmul.mubr.bf16.gmra.mrb[0].mxu0 %v7220
        %v8891 = vpop.f32.mrb[0].mxu0
        %v8892 = vadd.f32 %v8852, %v8891
        %v8893 = vpop.f32.mrb[0].mxu0
        %v8894 = vpop.f32.mrb[0].mxu0
        %v8895 = vpop.f32.mrb[0].mxu0
        %8896 = vdwg.mxu0
        %8897 = vmatprep.subr.bf16.mxu0 0
        %8898 = vmatpush1.bf16.msra.mxu0 %v7672
        %8899 = vmatprep.subr.bf16.mxu0 0
        %8900 = vmatpush1.bf16.msra.mxu0 %v7673
        %8901 = vmatprep.subr.bf16.mxu0 0
        %8902 = vmatpush1.bf16.msra.mxu0 %v7674
        %8903 = vmatprep.subr.bf16.mxu0 0
        %8904 = vmatpush1.bf16.msra.mxu0 %v7675
        %8905 = vmatprep.subr.bf16.mxu0 0
        %8906 = vmatpush1.bf16.msra.mxu0 %v7676
        %8907 = vmatprep.subr.bf16.mxu0 0
        %8908 = vmatpush1.bf16.msra.mxu0 %v7677
        %8909 = vmatprep.subr.bf16.mxu0 0
        %8910 = vmatpush1.bf16.msra.mxu0 %v7678
        %8911 = vmatprep.subr.bf16.mxu0 0
        %8912 = vmatpush1.bf16.msra.mxu0 %v7679
        %8913 = vmatprep.subr.bf16.mxu0 0
        %8914 = vmatpush1.bf16.msra.mxu0 %v7680
        %8915 = vmatprep.subr.bf16.mxu0 0
        %8916 = vmatpush1.bf16.msra.mxu0 %v7681
        %8917 = vmatprep.subr.bf16.mxu0 0
        %8918 = vmatpush1.bf16.msra.mxu0 %v7682
        %8919 = vmatprep.subr.bf16.mxu0 0
        %8920 = vmatpush1.bf16.msra.mxu0 %v7683
        %8921 = vmatprep.subr.bf16.mxu0 0
        %8922 = vmatpush1.bf16.msra.mxu0 %v7684
        %8923 = vmatprep.subr.bf16.mxu0 0
        %8924 = vmatpush1.bf16.msra.mxu0 %v7685
        %8925 = vmatprep.subr.bf16.mxu0 0
        %8926 = vmatpush1.bf16.msra.mxu0 %v7686
        %8927 = vmatprep.subr.bf16.mxu0 0
        %8928 = vmatpush1.bf16.msra.mxu0 %v7687
        %8929 = vmatprep.mubr.bf16.mxu0 %v7223
        %8930 = vmatmul.mubr.bf16.gmra.mrb[0].mxu0 %v7222
        %v8931 = vpop.f32.mrb[0].mxu0
        %v8932 = vadd.f32 %v8892, %v8931
        %v8933 = vpop.f32.mrb[0].mxu0
        %v8934 = vpop.f32.mrb[0].mxu0
        %v8935 = vpop.f32.mrb[0].mxu0
        %8936 = vdwg.mxu0
        %8937 = vmatprep.subr.bf16.mxu0 0
        %8938 = vmatpush1.bf16.msra.mxu0 %v7688
        %8939 = vmatprep.subr.bf16.mxu0 0
        %8940 = vmatpush1.bf16.msra.mxu0 %v7689
        %8941 = vmatprep.subr.bf16.mxu0 0
        %8942 = vmatpush1.bf16.msra.mxu0 %v7690
        %8943 = vmatprep.subr.bf16.mxu0 0
        %8944 = vmatpush1.bf16.msra.mxu0 %v7691
        %8945 = vmatprep.subr.bf16.mxu0 0
        %8946 = vmatpush1.bf16.msra.mxu0 %v7692
        %8947 = vmatprep.subr.bf16.mxu0 0
        %8948 = vmatpush1.bf16.msra.mxu0 %v7693
        %8949 = vmatprep.subr.bf16.mxu0 0
        %8950 = vmatpush1.bf16.msra.mxu0 %v7694
        %8951 = vmatprep.subr.bf16.mxu0 0
        %8952 = vmatpush1.bf16.msra.mxu0 %v7695
        %8953 = vmatprep.subr.bf16.mxu0 0
        %8954 = vmatpush1.bf16.msra.mxu0 %v7696
        %8955 = vmatprep.subr.bf16.mxu0 0
        %8956 = vmatpush1.bf16.msra.mxu0 %v7697
        %8957 = vmatprep.subr.bf16.mxu0 0
        %8958 = vmatpush1.bf16.msra.mxu0 %v7698
        %8959 = vmatprep.subr.bf16.mxu0 0
        %8960 = vmatpush1.bf16.msra.mxu0 %v7699
        %8961 = vmatprep.subr.bf16.mxu0 0
        %8962 = vmatpush1.bf16.msra.mxu0 %v7700
        %8963 = vmatprep.subr.bf16.mxu0 0
        %8964 = vmatpush1.bf16.msra.mxu0 %v7701
        %8965 = vmatprep.subr.bf16.mxu0 0
        %8966 = vmatpush1.bf16.msra.mxu0 %v7702
        %8967 = vmatprep.subr.bf16.mxu0 0
        %8968 = vmatpush1.bf16.msra.mxu0 %v7703
        %8969 = vmatprep.mubr.bf16.mxu0 %v7225
        %8970 = vmatmul.mubr.bf16.gmra.mrb[0].mxu0 %v7224
        %v8971 = vpop.f32.mrb[0].mxu0
        %v8972 = vadd.f32 %v8932, %v8971
        %v8973 = vpop.f32.mrb[0].mxu0
        %v8974 = vpop.f32.mrb[0].mxu0
        %v8975 = vpop.f32.mrb[0].mxu0
        %8976 = vdwg.mxu0
        %8977 = vmatprep.subr.bf16.mxu0 0
        %8978 = vmatpush1.bf16.msra.mxu0 %v7704
        %8979 = vmatprep.subr.bf16.mxu0 0
        %8980 = vmatpush1.bf16.msra.mxu0 %v7705
        %8981 = vmatprep.subr.bf16.mxu0 0
        %8982 = vmatpush1.bf16.msra.mxu0 %v7706
        %8983 = vmatprep.subr.bf16.mxu0 0
        %8984 = vmatpush1.bf16.msra.mxu0 %v7707
        %8985 = vmatprep.subr.bf16.mxu0 0
        %8986 = vmatpush1.bf16.msra.mxu0 %v7708
        %8987 = vmatprep.subr.bf16.mxu0 0
        %8988 = vmatpush1.bf16.msra.mxu0 %v7709
        %8989 = vmatprep.subr.bf16.mxu0 0
        %8990 = vmatpush1.bf16.msra.mxu0 %v7710
        %8991 = vmatprep.subr.bf16.mxu0 0
        %8992 = vmatpush1.bf16.msra.mxu0 %v7711
        %8993 = vmatprep.subr.bf16.mxu0 0
        %8994 = vmatpush1.bf16.msra.mxu0 %v7712
        %8995 = vmatprep.subr.bf16.mxu0 0
        %8996 = vmatpush1.bf16.msra.mxu0 %v7713
        %8997 = vmatprep.subr.bf16.mxu0 0
        %8998 = vmatpush1.bf16.msra.mxu0 %v7714
        %8999 = vmatprep.subr.bf16.mxu0 0
        %9000 = vmatpush1.bf16.msra.mxu0 %v7715
        %9001 = vmatprep.subr.bf16.mxu0 0
        %9002 = vmatpush1.bf16.msra.mxu0 %v7716
        %9003 = vmatprep.subr.bf16.mxu0 0
        %9004 = vmatpush1.bf16.msra.mxu0 %v7717
        %9005 = vmatprep.subr.bf16.mxu0 0
        %9006 = vmatpush1.bf16.msra.mxu0 %v7718
        %9007 = vmatprep.subr.bf16.mxu0 0
        %9008 = vmatpush1.bf16.msra.mxu0 %v7719
        %9009 = vmatprep.mubr.bf16.mxu0 %v7227
        %9010 = vmatmul.mubr.bf16.gmra.mrb[0].mxu0 %v7226
        %v9011 = vpop.f32.mrb[0].mxu0
        %v9012 = vadd.f32 %v8972, %v9011
        %v9013 = vpop.f32.mrb[0].mxu0
        %v9014 = vpop.f32.mrb[0].mxu0
        %v9015 = vpop.f32.mrb[0].mxu0
        %9016 = vdwg.mxu0
        %9017 = vmatprep.subr.bf16.mxu0 0
        %9018 = vmatpush1.bf16.msra.mxu0 %v7720
        %9019 = vmatprep.subr.bf16.mxu0 0
        %9020 = vmatpush1.bf16.msra.mxu0 %v7721
        %9021 = vmatprep.subr.bf16.mxu0 0
        %9022 = vmatpush1.bf16.msra.mxu0 %v7722
        %9023 = vmatprep.subr.bf16.mxu0 0
        %9024 = vmatpush1.bf16.msra.mxu0 %v7723
        %9025 = vmatprep.subr.bf16.mxu0 0
        %9026 = vmatpush1.bf16.msra.mxu0 %v7724
        %9027 = vmatprep.subr.bf16.mxu0 0
        %9028 = vmatpush1.bf16.msra.mxu0 %v7725
        %9029 = vmatprep.subr.bf16.mxu0 0
        %9030 = vmatpush1.bf16.msra.mxu0 %v7726
        %9031 = vmatprep.subr.bf16.mxu0 0
        %9032 = vmatpush1.bf16.msra.mxu0 %v7727
        %9033 = vmatprep.subr.bf16.mxu0 0
        %9034 = vmatpush1.bf16.msra.mxu0 %v7728
        %9035 = vmatprep.subr.bf16.mxu0 0
        %9036 = vmatpush1.bf16.msra.mxu0 %v7729
        %9037 = vmatprep.subr.bf16.mxu0 0
        %9038 = vmatpush1.bf16.msra.mxu0 %v7730
        %9039 = vmatprep.subr.bf16.mxu0 0
        %9040 = vmatpush1.bf16.msra.mxu0 %v7731
        %9041 = vmatprep.subr.bf16.mxu0 0
        %9042 = vmatpush1.bf16.msra.mxu0 %v7732
        %9043 = vmatprep.subr.bf16.mxu0 0
        %9044 = vmatpush1.bf16.msra.mxu0 %v7733
        %9045 = vmatprep.subr.bf16.mxu0 0
        %9046 = vmatpush1.bf16.msra.mxu0 %v7734
        %9047 = vmatprep.subr.bf16.mxu0 0
        %9048 = vmatpush1.bf16.msra.mxu0 %v7735
        %9049 = vmatprep.mubr.bf16.mxu0 %v7229
        %9050 = vmatmul.mubr.bf16.gmra.mrb[0].mxu0 %v7228
        %v9051 = vpop.f32.mrb[0].mxu0
        %v9052 = vadd.f32 %v9012, %v9051
        %v9053 = vpop.f32.mrb[0].mxu0
        %v9054 = vpop.f32.mrb[0].mxu0
        %v9055 = vpop.f32.mrb[0].mxu0
        %9056 = vdwg.mxu0
        %9057 = vmatprep.subr.bf16.mxu0 0
        %9058 = vmatpush1.bf16.msra.mxu0 %v7736
        %9059 = vmatprep.subr.bf16.mxu0 0
        %9060 = vmatpush1.bf16.msra.mxu0 %v7737
        %9061 = vmatprep.subr.bf16.mxu0 0
        %9062 = vmatpush1.bf16.msra.mxu0 %v7738
        %9063 = vmatprep.subr.bf16.mxu0 0
        %9064 = vmatpush1.bf16.msra.mxu0 %v7739
        %9065 = vmatprep.subr.bf16.mxu0 0
        %9066 = vmatpush1.bf16.msra.mxu0 %v7740
        %9067 = vmatprep.subr.bf16.mxu0 0
        %9068 = vmatpush1.bf16.msra.mxu0 %v7741
        %9069 = vmatprep.subr.bf16.mxu0 0
        %9070 = vmatpush1.bf16.msra.mxu0 %v7742
        %9071 = vmatprep.subr.bf16.mxu0 0
        %9072 = vmatpush1.bf16.msra.mxu0 %v7743
        %9073 = vmatprep.subr.bf16.mxu0 0
        %9074 = vmatpush1.bf16.msra.mxu0 %v7744
        %9075 = vmatprep.subr.bf16.mxu0 0
        %9076 = vmatpush1.bf16.msra.mxu0 %v7745
        %9077 = vmatprep.subr.bf16.mxu0 0
        %9078 = vmatpush1.bf16.msra.mxu0 %v7746
        %9079 = vmatprep.subr.bf16.mxu0 0
        %9080 = vmatpush1.bf16.msra.mxu0 %v7747
        %9081 = vmatprep.subr.bf16.mxu0 0
        %9082 = vmatpush1.bf16.msra.mxu0 %v7748
        %9083 = vmatprep.subr.bf16.mxu0 0
        %9084 = vmatpush1.bf16.msra.mxu0 %v7749
        %9085 = vmatprep.subr.bf16.mxu0 0
        %9086 = vmatpush1.bf16.msra.mxu0 %v7750
        %9087 = vmatprep.subr.bf16.mxu0 0
        %9088 = vmatpush1.bf16.msra.mxu0 %v7751
        %9089 = vmatprep.mubr.bf16.mxu0 %v7231
        %9090 = vmatmul.mubr.bf16.gmra.mrb[0].mxu0 %v7230
        %v9091 = vpop.f32.mrb[0].mxu0
        %v9092 = vadd.f32 %v9052, %v9091
        %v9093 = vpop.f32.mrb[0].mxu0
        %v9094 = vpop.f32.mrb[0].mxu0
        %v9095 = vpop.f32.mrb[0].mxu0
        %9096 = vdwg.mxu0
        %9097 = vmatprep.subr.bf16.mxu0 0
        %9098 = vmatpush1.bf16.msra.mxu0 %v7752
        %9099 = vmatprep.subr.bf16.mxu0 0
        %9100 = vmatpush1.bf16.msra.mxu0 %v7753
        %9101 = vmatprep.subr.bf16.mxu0 0
        %9102 = vmatpush1.bf16.msra.mxu0 %v7754
        %9103 = vmatprep.subr.bf16.mxu0 0
        %9104 = vmatpush1.bf16.msra.mxu0 %v7755
        %9105 = vmatprep.subr.bf16.mxu0 0
        %9106 = vmatpush1.bf16.msra.mxu0 %v7756
        %9107 = vmatprep.subr.bf16.mxu0 0
        %9108 = vmatpush1.bf16.msra.mxu0 %v7757
        %9109 = vmatprep.subr.bf16.mxu0 0
        %9110 = vmatpush1.bf16.msra.mxu0 %v7758
        %9111 = vmatprep.subr.bf16.mxu0 0
        %9112 = vmatpush1.bf16.msra.mxu0 %v7759
        %9113 = vmatprep.subr.bf16.mxu0 0
        %9114 = vmatpush1.bf16.msra.mxu0 %v7760
        %9115 = vmatprep.subr.bf16.mxu0 0
        %9116 = vmatpush1.bf16.msra.mxu0 %v7761
        %9117 = vmatprep.subr.bf16.mxu0 0
        %9118 = vmatpush1.bf16.msra.mxu0 %v7762
        %9119 = vmatprep.subr.bf16.mxu0 0
        %9120 = vmatpush1.bf16.msra.mxu0 %v7763
        %9121 = vmatprep.subr.bf16.mxu0 0
        %9122 = vmatpush1.bf16.msra.mxu0 %v7764
        %9123 = vmatprep.subr.bf16.mxu0 0
        %9124 = vmatpush1.bf16.msra.mxu0 %v7765
        %9125 = vmatprep.subr.bf16.mxu0 0
        %9126 = vmatpush1.bf16.msra.mxu0 %v7766
        %9127 = vmatprep.subr.bf16.mxu0 0
        %9128 = vmatpush1.bf16.msra.mxu0 %v7767
        %9129 = vmatprep.mubr.bf16.mxu0 %v7233
        %9130 = vmatmul.mubr.bf16.gmra.mrb[0].mxu0 %v7232
        %v9131 = vpop.f32.mrb[0].mxu0
        %v9132 = vadd.f32 %v9092, %v9131
        %v9133 = vpop.f32.mrb[0].mxu0
        %v9134 = vpop.f32.mrb[0].mxu0
        %v9135 = vpop.f32.mrb[0].mxu0
        %9136 = vdwg.mxu0
        %9137 = vmatprep.subr.bf16.mxu0 0
        %9138 = vmatpush1.bf16.msra.mxu0 %v7768
        %9139 = vmatprep.subr.bf16.mxu0 0
        %9140 = vmatpush1.bf16.msra.mxu0 %v7769
        %9141 = vmatprep.subr.bf16.mxu0 0
        %9142 = vmatpush1.bf16.msra.mxu0 %v7770
        %9143 = vmatprep.subr.bf16.mxu0 0
        %9144 = vmatpush1.bf16.msra.mxu0 %v7771
        %9145 = vmatprep.subr.bf16.mxu0 0
        %9146 = vmatpush1.bf16.msra.mxu0 %v7772
        %9147 = vmatprep.subr.bf16.mxu0 0
        %9148 = vmatpush1.bf16.msra.mxu0 %v7773
        %9149 = vmatprep.subr.bf16.mxu0 0
        %9150 = vmatpush1.bf16.msra.mxu0 %v7774
        %9151 = vmatprep.subr.bf16.mxu0 0
        %9152 = vmatpush1.bf16.msra.mxu0 %v7775
        %9153 = vmatprep.subr.bf16.mxu0 0
        %9154 = vmatpush1.bf16.msra.mxu0 %v7776
        %9155 = vmatprep.subr.bf16.mxu0 0
        %9156 = vmatpush1.bf16.msra.mxu0 %v7777
        %9157 = vmatprep.subr.bf16.mxu0 0
        %9158 = vmatpush1.bf16.msra.mxu0 %v7778
        %9159 = vmatprep.subr.bf16.mxu0 0
        %9160 = vmatpush1.bf16.msra.mxu0 %v7779
        %9161 = vmatprep.subr.bf16.mxu0 0
        %9162 = vmatpush1.bf16.msra.mxu0 %v7780
        %9163 = vmatprep.subr.bf16.mxu0 0
        %9164 = vmatpush1.bf16.msra.mxu0 %v7781
        %9165 = vmatprep.subr.bf16.mxu0 0
        %9166 = vmatpush1.bf16.msra.mxu0 %v7782
        %9167 = vmatprep.subr.bf16.mxu0 0
        %9168 = vmatpush1.bf16.msra.mxu0 %v7783
        %9169 = vmatprep.mubr.bf16.mxu0 %v7235
        %9170 = vmatmul.mubr.bf16.gmra.mrb[0].mxu0 %v7234
        %v9171 = vpop.f32.mrb[0].mxu0
        %v9172 = vadd.f32 %v9132, %v9171
        %v9173 = vpop.f32.mrb[0].mxu0
        %v9174 = vpop.f32.mrb[0].mxu0
        %v9175 = vpop.f32.mrb[0].mxu0
        %9176 = vdwg.mxu0
        %9177 = vmatprep.subr.bf16.mxu0 0
        %9178 = vmatpush1.bf16.msra.mxu0 %v7784
        %9179 = vmatprep.subr.bf16.mxu0 0
        %9180 = vmatpush1.bf16.msra.mxu0 %v7785
        %9181 = vmatprep.subr.bf16.mxu0 0
        %9182 = vmatpush1.bf16.msra.mxu0 %v7786
        %9183 = vmatprep.subr.bf16.mxu0 0
        %9184 = vmatpush1.bf16.msra.mxu0 %v7787
        %9185 = vmatprep.subr.bf16.mxu0 0
        %9186 = vmatpush1.bf16.msra.mxu0 %v7788
        %9187 = vmatprep.subr.bf16.mxu0 0
        %9188 = vmatpush1.bf16.msra.mxu0 %v7789
        %9189 = vmatprep.subr.bf16.mxu0 0
        %9190 = vmatpush1.bf16.msra.mxu0 %v7790
        %9191 = vmatprep.subr.bf16.mxu0 0
        %9192 = vmatpush1.bf16.msra.mxu0 %v7791
        %9193 = vmatprep.subr.bf16.mxu0 0
        %9194 = vmatpush1.bf16.msra.mxu0 %v7792
        %9195 = vmatprep.subr.bf16.mxu0 0
        %9196 = vmatpush1.bf16.msra.mxu0 %v7793
        %9197 = vmatprep.subr.bf16.mxu0 0
        %9198 = vmatpush1.bf16.msra.mxu0 %v7794
        %9199 = vmatprep.subr.bf16.mxu0 0
        %9200 = vmatpush1.bf16.msra.mxu0 %v7795
        %9201 = vmatprep.subr.bf16.mxu0 0
        %9202 = vmatpush1.bf16.msra.mxu0 %v7796
        %9203 = vmatprep.subr.bf16.mxu0 0
        %9204 = vmatpush1.bf16.msra.mxu0 %v7797
        %9205 = vmatprep.subr.bf16.mxu0 0
        %9206 = vmatpush1.bf16.msra.mxu0 %v7798
        %9207 = vmatprep.subr.bf16.mxu0 0
        %9208 = vmatpush1.bf16.msra.mxu0 %v7799
        %9209 = vmatprep.mubr.bf16.mxu0 %v7237
        %9210 = vmatmul.mubr.bf16.gmra.mrb[0].mxu0 %v7236
        %v9211 = vpop.f32.mrb[0].mxu0
        %v9212 = vadd.f32 %v9172, %v9211
        %v9213 = vpop.f32.mrb[0].mxu0
        %v9214 = vpop.f32.mrb[0].mxu0
        %v9215 = vpop.f32.mrb[0].mxu0
        %9216 = vdwg.mxu0
        %9217 = vmatprep.subr.bf16.mxu0 0
        %9218 = vmatpush1.bf16.msra.mxu0 %v7800
        %9219 = vmatprep.subr.bf16.mxu0 0
        %9220 = vmatpush1.bf16.msra.mxu0 %v7801
        %9221 = vmatprep.subr.bf16.mxu0 0
        %9222 = vmatpush1.bf16.msra.mxu0 %v7802
        %9223 = vmatprep.subr.bf16.mxu0 0
        %9224 = vmatpush1.bf16.msra.mxu0 %v7803
        %9225 = vmatprep.subr.bf16.mxu0 0
        %9226 = vmatpush1.bf16.msra.mxu0 %v7804
        %9227 = vmatprep.subr.bf16.mxu0 0
        %9228 = vmatpush1.bf16.msra.mxu0 %v7805
        %9229 = vmatprep.subr.bf16.mxu0 0
        %9230 = vmatpush1.bf16.msra.mxu0 %v7806
        %9231 = vmatprep.subr.bf16.mxu0 0
        %9232 = vmatpush1.bf16.msra.mxu0 %v7807
        %9233 = vmatprep.subr.bf16.mxu0 0
        %9234 = vmatpush1.bf16.msra.mxu0 %v7808
        %9235 = vmatprep.subr.bf16.mxu0 0
        %9236 = vmatpush1.bf16.msra.mxu0 %v7809
        %9237 = vmatprep.subr.bf16.mxu0 0
        %9238 = vmatpush1.bf16.msra.mxu0 %v7810
        %9239 = vmatprep.subr.bf16.mxu0 0
        %9240 = vmatpush1.bf16.msra.mxu0 %v7811
        %9241 = vmatprep.subr.bf16.mxu0 0
        %9242 = vmatpush1.bf16.msra.mxu0 %v7812
        %9243 = vmatprep.subr.bf16.mxu0 0
        %9244 = vmatpush1.bf16.msra.mxu0 %v7813
        %9245 = vmatprep.subr.bf16.mxu0 0
        %9246 = vmatpush1.bf16.msra.mxu0 %v7814
        %9247 = vmatprep.subr.bf16.mxu0 0
        %9248 = vmatpush1.bf16.msra.mxu0 %v7815
        %9249 = vmatprep.mubr.bf16.mxu0 %v7239
        %9250 = vmatmul.mubr.bf16.gmra.mrb[0].mxu0 %v7238
        %v9251 = vpop.f32.mrb[0].mxu0
        %v9252 = vadd.f32 %v9212, %v9251
        %v9253 = vpop.f32.mrb[0].mxu0
        %v9254 = vpop.f32.mrb[0].mxu0
        %v9255 = vpop.f32.mrb[0].mxu0
        %9256 = vdwg.mxu0
        %v9257 = vmax.f32 %v9252, 0.0
        %v9258 = vld [vmem:[%s8] sm:$0xff]
        %v9259 = vld [vmem:[%s8 + $0x8] sm:$0xff]
        %v9260 = vld [vmem:[%s8 + $0x10] sm:$0xff]
        %v9261 = vld [vmem:[%s8 + $0x18] sm:$0xff]
        %v9262 = vld [vmem:[%s8 + $0x20] sm:$0xff]
        %v9263 = vld [vmem:[%s8 + $0x28] sm:$0xff]
        %v9264 = vld [vmem:[%s8 + $0x30] sm:$0xff]
        %v9265 = vld [vmem:[%s8 + $0x38] sm:$0xff]
        %v9266 = vld [vmem:[%s8 + $0x40] sm:$0xff]
        %v9267 = vld [vmem:[%s8 + $0x48] sm:$0xff]
        %v9268 = vld [vmem:[%s8 + $0x50] sm:$0xff]
        %v9269 = vld [vmem:[%s8 + $0x58] sm:$0xff]
        %v9270 = vld [vmem:[%s8 + $0x60] sm:$0xff]
        %v9271 = vld [vmem:[%s8 + $0x68] sm:$0xff]
        %v9272 = vld [vmem:[%s8 + $0x70] sm:$0xff]
        %v9273 = vld [vmem:[%s8 + $0x78] sm:$0xff]
        %v9274 = vld [vmem:[#allocation13] sm:$0x1]
        %9275 = vmatprep.subr.mxu0 0.0
        %9276 = vmatpush1.msra.mxu0 %v9258
        %9277 = vmatprep.subr.mxu0 0.0
        %9278 = vmatpush1.msra.mxu0 %v9259
        %9279 = vmatprep.subr.mxu0 0.0
        %9280 = vmatpush1.msra.mxu0 %v9260
        %9281 = vmatprep.subr.mxu0 0.0
        %9282 = vmatpush1.msra.mxu0 %v9261
        %9283 = vmatprep.subr.mxu0 0.0
        %9284 = vmatpush1.msra.mxu0 %v9262
        %9285 = vmatprep.subr.mxu0 0.0
        %9286 = vmatpush1.msra.mxu0 %v9263
        %9287 = vmatprep.subr.mxu0 0.0
        %9288 = vmatpush1.msra.mxu0 %v9264
        %9289 = vmatprep.subr.mxu0 0.0
        %9290 = vmatpush1.msra.mxu0 %v9265
        %9291 = vmatprep.subr.mxu0 0.0
        %9292 = vmatpush1.msra.mxu0 %v9266
        %9293 = vmatprep.subr.mxu0 0.0
        %9294 = vmatpush1.msra.mxu0 %v9267
        %9295 = vmatprep.subr.mxu0 0.0
        %9296 = vmatpush1.msra.mxu0 %v9268
        %9297 = vmatprep.subr.mxu0 0.0
        %9298 = vmatpush1.msra.mxu0 %v9269
        %9299 = vmatprep.subr.mxu0 0.0
        %9300 = vmatpush1.msra.mxu0 %v9270
        %9301 = vmatprep.subr.mxu0 0.0
        %9302 = vmatpush1.msra.mxu0 %v9271
        %9303 = vmatprep.subr.mxu0 0.0
        %9304 = vmatpush1.msra.mxu0 %v9272
        %9305 = vmatprep.subr.mxu0 0.0
        %9306 = vmatpush1.msra.mxu0 %v9273
        %9307 = vmatprep.subr.mxu0 0.0
        %9308 = vmatpush1.msra.mxu0 0.0
        %9309 = vmatprep.subr.mxu0 0.0
        %9310 = vmatpush1.msra.mxu0 0.0
        %9311 = vmatprep.subr.mxu0 0.0
        %9312 = vmatpush1.msra.mxu0 0.0
        %9313 = vmatprep.subr.mxu0 0.0
        %9314 = vmatpush1.msra.mxu0 0.0
        %9315 = vmatprep.subr.mxu0 0.0
        %9316 = vmatpush1.msra.mxu0 0.0
        %9317 = vmatprep.subr.mxu0 0.0
        %9318 = vmatpush1.msra.mxu0 0.0
        %9319 = vmatprep.subr.mxu0 0.0
        %9320 = vmatpush1.msra.mxu0 0.0
        %9321 = vmatprep.subr.mxu0 0.0
        %9322 = vmatpush1.msra.mxu0 0.0
        %9323 = vmatprep.subr.mxu0 0.0
        %9324 = vmatpush1.msra.mxu0 0.0
        %9325 = vmatprep.subr.mxu0 0.0
        %9326 = vmatpush1.msra.mxu0 0.0
        %9327 = vmatprep.subr.mxu0 0.0
        %9328 = vmatpush1.msra.mxu0 0.0
        %9329 = vmatprep.subr.mxu0 0.0
        %9330 = vmatpush1.msra.mxu0 0.0
        %9331 = vmatprep.subr.mxu0 0.0
        %9332 = vmatpush1.msra.mxu0 0.0
        %9333 = vmatprep.subr.mxu0 0.0
        %9334 = vmatpush1.msra.mxu0 0.0
        %9335 = vmatprep.subr.mxu0 0.0
        %9336 = vmatpush1.msra.mxu0 0.0
        %9337 = vmatprep.subr.mxu0 0.0
        %9338 = vmatpush1.msra.mxu0 0.0
        %9339 = vmatprep.mubr.f32.mxu0 0.0
        %9340 = vmatmul.mubr.f32.gmra.mrb[0].mxu0 %v9257
        %v9341 = vpop.f32.mrb[0].mxu0
        %v9342 = vadd.f32 %v9274, %v9341
        %v9343 = vpop.f32.mrb[0].mxu0
        %9344 = vdwg.mxu0
        %vm9345 = vcmask 73728
        %9346 = vst.msk [vmem:[%s365] sm:$0x1] %vm9345, %v9342
        %s9347 = sand.u32 %s228, 1
        %s9348 = scalar_lea.sflag [#allocation10], %s9347
        %s9349 = sand.u32 %s228, 1
        %s9350 = scalar_lea.vmem [#allocation14], %s9349
        // Predicated region
        $region73: #{net_forward.1} parent=55 // pred_check
          %p9351 = pneg %p238
        $region74: #{net_forward.1} parent=55 // pred_check_branch
          %9353 = sbr.rel (%p9351) target = $region76
        $region75: #{net_forward.1} parent=55 // pred_region
          %s9355 = ssub.s32 16, 16
          %9356 = vsyncadd %s9348, %s9355
          %s9357 = smul.addr %s26, 16
          %s9358 = scalar_lea.hbm %s10, %s9357
          %s9360 = sshll.u32 %s9350, 4
          %s9361 = int_to_ptr.vmem [resolvable:$true] %s9360
          %9363 = dma.vmem_to_hbm [thread:$0]  %s9361, 16, %s9358, %s9348
        $region76: #{net_forward.1} parent=55 // pred_fallthru
          _
      $region56: #{net_forward.1} parent=5 // pred_fallthru
        _
      %p9364 = scmp.le.s32.totalorder 2, %s21
      // Predicated region
      $region77: #{net_forward.1} parent=5 // pred_check
        %p9365 = pneg %p9364
      $region78: #{net_forward.1} parent=5 // pred_check_branch
        %9367 = sbr.rel (%p9365) target = $region80
      $region79: #{net_forward.1} parent=5 // pred_region
        %s9368 = ssub.s32 %s21, 2
        // Predicated region
        $region81: #{net_forward.1} parent=79 // pred_check
          %p9369 = pneg %p244
        $region82: #{net_forward.1} parent=79 // pred_check_branch
          %9371 = sbr.rel (%p9369) target = $region84
        $region83: #{net_forward.1} parent=79 // pred_region
          %s9372 = sand.u32 %s229, 1
          %s9373 = scalar_lea.sflag [#allocation10], %s9372
          %s9374 = sand.u32 %s229, 1
          %s9375 = scalar_lea.vmem [#allocation14], %s9374
          %9376 = dma.done %s9373, 16
        $region84: #{net_forward.1} parent=79 // pred_fallthru
          _
      $region80: #{net_forward.1} parent=5 // pred_fallthru
        _
    $region6: #{net_forward.1} parent=1 // loop_footer
      %s25 = sadd.s32 1, %s21
    $region7: #{net_forward.1} parent=1 // loop_footer_branch
      %20 = sbr.rel target = $region3
    $region8: #{net_forward.1} parent=1 // loop_exit
      _
    %9377 = vsyncpa [#allocation9], 1
    %s9378 = scalar_lea.sflag [#allocation9], 1
    %9379 = vsyncpa %s9378, 1
    %9380 = vsyncpa [#allocation12], 1
    %9381 = vsyncpa [#allocation10], 1
    %s9382 = scalar_lea.sflag [#allocation10], 1
    %9383 = vsyncpa %s9382, 1
  %9384 = vsyncmov [#allocation7]
  %s9385 = vpop.sfrf %9384
  %p9386 = scmp.eq.s32.totalorder %s9385, 0
  %p9387 = pneg %p9386
  %9389 = shalt.err (%p9387)

</llo_original>
